<compile_context>
chip_gen: v7x
topology: tpu7x:2x2x1
jax: 0.10.0
libtpu: 0.0.40
codegen_flags: <defaults>
</compile_context>

<pallas_src>
import functools

import jax
import jax.numpy as jnp
from jax.experimental import pallas as pl
from jax.experimental.pallas import tpu as pltpu

N_CLASSES = 10
FC_HIDDEN = 100
LANE = 128          # pad the 100-wide hidden and 10-wide logits to lane-dense 128


# ---------------------------------------------------------------------------
# In-kernel helpers
# ---------------------------------------------------------------------------
def _maxpool2x2(x):
    """2x2 / stride-2 max pool (floor mode) on an NHWC value; C stays on lanes."""
    nb, h, w, c = x.shape
    hp, wp = h // 2, w // 2
    x = x[:, :2 * hp, :2 * wp, :]
    x = x.reshape(nb, hp, 2, 2 * wp, c)                       # split H: leading dims only
    x = jnp.maximum(x[:, :, 0], x[:, :, 1])                   # (nb, hp, 2*wp, c)  VPU max
    x = x.reshape(nb, hp, wp, 2, c)                           # split W (sublane dim)
    return jnp.maximum(x[:, :, :, 0, :], x[:, :, :, 1, :])    # (nb, hp, wp, c)


def _net_fused_kernel(p1_ref, w1_ref, b1_ref, w2_ref, b2_ref,
                      wf1_ref, bf1_ref, wf2_ref, bf2_ref, o_ref,
                      *, n_classes):
    # p1_ref : (nb, Ho1, Wo1, 9)         conv1 im2col patches (taps on lanes)
    # w1_ref : (9, 64)     b1_ref: (1, 64)
    # w2_ref : (576, 128)  b2_ref: (1, 128)
    # wf1_ref: (Hp2, Wp2, 128, 128)      fc1, NHWC-ordered rows, padded 100->128
    # bf1_ref: (1, 128)
    # wf2_ref: (128, 128)  bf2_ref: (1, 128)   fc2 padded (100->128, 10->128)
    # o_ref  : (nb, 128)                 padded log-probs (first n_classes are real)
    nb, ho1, wo1, k1 = p1_ref.shape
    c1 = w1_ref.shape[1]                         # 64
    c2 = w2_ref.shape[1]                         # 128
    hp1, wp1 = ho1 // 2, wo1 // 2
    ho2, wo2 = hp1 - 2, wp1 - 2
    hp2, wp2 = wf1_ref.shape[0], wf1_ref.shape[1]
    hpad = wf1_ref.shape[3]                      # 128
    opad = wf2_ref.shape[1]                      # 128
    assert (ho2 // 2, wo2 // 2) == (hp2, wp2), "input spatial size inconsistent with fc1"

    # ---- conv1: single batched im2col matmul (M=nb*Ho1*Wo1, K=9, N=64) on the MXU ----
    p1 = p1_ref[...].reshape(nb * ho1 * wo1, k1)
    a1 = jnp.dot(p1, w1_ref[...], preferred_element_type=jnp.float32) + b1_ref[...]
    a1 = a1.reshape(nb, ho1, wo1, c1)
    a1 = jnp.maximum(_maxpool2x2(a1), 0.0)       # relu(max_pool2d(conv1(x), 2))

    # ---- conv2: build 9*64=576-wide patches on the lane axis, single K=576 matmul ----
    # TODO(synk): nn.Dropout2d(p=0.5) before the pool is training-only; eval identity here.
    cols = [a1[:, ky:ky + ho2, kx:kx + wo2, :]
            for ky in range(3) for kx in range(3)]
    p2 = jnp.concatenate(cols, axis=-1).reshape(nb * ho2 * wo2, 9 * c1)
    a2 = jnp.dot(p2, w2_ref[...], preferred_element_type=jnp.float32) + b2_ref[...]
    a2 = a2.reshape(nb, ho2, wo2, c2)
    a2 = jnp.maximum(_maxpool2x2(a2), 0.0)       # (nb, Hp2, Wp2, 128)

    # ---- fc1: PyTorch's NCHW flatten order is folded into wf1's pre-permuted rows, so
    # we consume the pooled NHWC map position-by-position with lane-dense K=128 dots
    # (no in-kernel flatten/relayout of the activations). ----
    h = jnp.zeros((nb, hpad), jnp.float32)
    for i in range(hp2):
        for j in range(wp2):
            h = h + jnp.dot(a2[:, i, j, :], wf1_ref[i, j],
                            preferred_element_type=jnp.float32)
    h = jnp.maximum(h + bf1_ref[...], 0.0)       # padded columns stay exactly 0
    # TODO(synk): F.dropout(x, training=self.training) is eval-mode identity here.

    # ---- fc2 + log_softmax over the n_classes real columns (rest is zero padding) ----
    logits = jnp.dot(h, wf2_ref[...], preferred_element_type=jnp.float32) + bf2_ref[...]
    col = jax.lax.broadcasted_iota(jnp.int32, (nb, opad), 1)
    valid = col < n_classes
    masked = jnp.where(valid, logits, -1e30)
    m = jnp.max(masked, axis=-1, keepdims=True)
    s = masked - m
    lse = jnp.log(jnp.sum(jnp.exp(s), axis=-1, keepdims=True))
    o_ref[...] = jnp.where(valid, s - lse, 0.0)  # lane-dense (nb, 128) store


# ---------------------------------------------------------------------------
# One-time parameter preparation (hoisted out of the per-forward path)
# ---------------------------------------------------------------------------
def prepare_params(params, hp2, wp2):
    c1 = params["conv1_w"].shape[0]              # 64
    c2 = params["conv2_w"].shape[0]              # 128
    hid = params["fc1_w"].shape[0]               # 100
    ncls = params["fc2_w"].shape[0]              # 10
    # conv weights: OIHW -> HWIO -> (KH*KW*Cin, Cout), row order (ky, kx, ci)
    w1 = jnp.transpose(params["conv1_w"], (2, 3, 1, 0)).reshape(9 * 1, c1)
    b1 = params["conv1_b"].reshape(1, c1)
    w2 = jnp.transpose(params["conv2_w"], (2, 3, 1, 0)).reshape(9 * c1, c2)
    b2 = params["conv2_b"].reshape(1, c2)
    # fc1: torch rows use NCHW flatten k = c*(Hp2*Wp2) + i*Wp2 + j; re-order to (i, j, c)
    # blocks so the kernel can consume the NHWC feature map directly; pad 100 -> 128.
    wf1 = params["fc1_w"].T.reshape(c2, hp2, wp2, hid)        # (c, i, j, out)
    wf1 = jnp.transpose(wf1, (1, 2, 0, 3))                    # (i, j, c, out)
    wf1 = jnp.pad(wf1, ((0, 0), (0, 0), (0, 0), (0, LANE - hid)))
    bf1 = jnp.pad(params["fc1_b"], (0, LANE - hid)).reshape(1, LANE)
    # fc2: (out,in) -> (in,out), zero-pad both dims to 128 (lane-dense MXU tiles/stores).
    wf2 = jnp.pad(params["fc2_w"].T, ((0, LANE - hid), (0, LANE - ncls)))
    bf2 = jnp.pad(params["fc2_b"], (0, LANE - ncls)).reshape(1, LANE)
    return dict(w1=w1, b1=b1, w2=w2, b2=b2, wf1=wf1, bf1=bf1, wf2=wf2, bf2=bf2)


def _im2col3x3(x):
    # x: (N, H, W) single-channel input -> (N, H-2, W-2, 9), tap order (ky, kx).
    # Runs in the XLA wrapper on the raw (tiny) network input: gives the kernel a
    # lane-dense-enough patch matrix instead of a Cin=1 (1-of-128 lanes) layout.
    n, h, w = x.shape
    ho, wo = h - 2, w - 2
    taps = [x[:, ky:ky + ho, kx:kx + wo] for ky in range(3) for kx in range(3)]
    return jnp.stack(taps, axis=-1)


# ---------------------------------------------------------------------------
# Forward
# ---------------------------------------------------------------------------
@jax.jit
def net_forward(prep, x_nchw):
    # x_nchw: (N, 1, H, W) float32, PyTorch NCHW convention.
    n = x_nchw.shape[0]
    patches1 = _im2col3x3(x_nchw[:, 0, :, :])            # (N, Ho1, Wo1, 9)
    ho1, wo1 = patches1.shape[1], patches1.shape[2]
    # Batch blocking: fold samples into the matmul M dim; >1 block only for larger
    # batches (shards across v7x's two TensorCores via the "parallel" grid axis).
    nb = 8 if n % 8 == 0 else n
    kernel = functools.partial(_net_fused_kernel, n_classes=N_CLASSES)
    out_pad = pl.pallas_call(
        kernel,
        out_shape=jax.ShapeDtypeStruct((n, LANE), jnp.float32),
        grid=(n // nb,),
        in_specs=[
            pl.BlockSpec((nb, ho1, wo1, 9), lambda g: (g, 0, 0, 0)),
            pl.BlockSpec(prep["w1"].shape, lambda g: (0, 0)),
            pl.BlockSpec(prep["b1"].shape, lambda g: (0, 0)),
            pl.BlockSpec(prep["w2"].shape, lambda g: (0, 0)),
            pl.BlockSpec(prep["b2"].shape, lambda g: (0, 0)),
            pl.BlockSpec(prep["wf1"].shape, lambda g: (0, 0, 0, 0)),
            pl.BlockSpec(prep["bf1"].shape, lambda g: (0, 0)),
            pl.BlockSpec(prep["wf2"].shape, lambda g: (0, 0)),
            pl.BlockSpec(prep["bf2"].shape, lambda g: (0, 0)),
        ],
        out_specs=pl.BlockSpec((nb, LANE), lambda g: (g, 0)),
        compiler_params=pltpu.CompilerParams(dimension_semantics=("parallel",)),
    )(patches1, prep["w1"], prep["b1"], prep["w2"], prep["b2"],
      prep["wf1"], prep["bf1"], prep["wf2"], prep["bf2"])
    return out_pad[:, :N_CLASSES]


# ---------------------------------------------------------------------------
# Parameters and a pure-JAX reference (for a numerics sanity check)
# ---------------------------------------------------------------------------
def init_params(key):
    ks = jax.random.split(key, 8)
    s = 0.1
    return {
        "conv1_w": jax.random.normal(ks[0], (64, 1, 3, 3), jnp.float32) * s,    # OIHW
        "conv1_b": jax.random.normal(ks[1], (64,), jnp.float32) * s,
        "conv2_w": jax.random.normal(ks[2], (128, 64, 3, 3), jnp.float32) * s,  # OIHW
        "conv2_b": jax.random.normal(ks[3], (128,), jnp.float32) * s,
        "fc1_w": jax.random.normal(ks[4], (100, 1024), jnp.float32) * s,        # (out, in)
        "fc1_b": jax.random.normal(ks[5], (100,), jnp.float32) * s,
        "fc2_w": jax.random.normal(ks[6], (10, 100), jnp.float32) * s,          # (out, in)
        "fc2_b": jax.random.normal(ks[7], (10,), jnp.float32) * s,
    }


def reference_forward(params, x_nchw):
    hi = jax.lax.Precision.HIGHEST
    x = jnp.transpose(x_nchw, (0, 2, 3, 1))

    def conv(v, w_oihw, b):
        w = jnp.transpose(w_oihw, (2, 3, 1, 0))
        y = jax.lax.conv_general_dilated(
            v, w, window_strides=(1, 1), padding="VALID",
            dimension_numbers=("NHWC", "HWIO", "NHWC"), precision=hi)
        return y + b

    def pool2(v):
        return jax.lax.reduce_window(v, -jnp.inf, jax.lax.max,
                                     (1, 2, 2, 1), (1, 2, 2, 1), "VALID")

    v = jnp.maximum(pool2(conv(x, params["conv1_w"], params["conv1_b"])), 0.0)
    v = jnp.maximum(pool2(conv(v, params["conv2_w"], params["conv2_b"])), 0.0)
    # TODO(synk): the reference module's x.view(-1, 320) is inconsistent with
    # fc1 = Linear(1024, 100); we flatten per-sample to fc1's declared width (1024)
    # in NCHW order and keep the batch dimension intact.
    v = jnp.transpose(v, (0, 3, 1, 2)).reshape(v.shape[0], -1)
    h = jnp.maximum(jnp.dot(v, params["fc1_w"].T, precision=hi) + params["fc1_b"], 0.0)
    logits = jnp.dot(h, params["fc2_w"].T, precision=hi) + params["fc2_b"]
    return jax.nn.log_softmax(logits, axis=-1)


if __name__ == "__main__":
    # Input (2, 1, 16, 24): conv1 -> 14x22, pool -> 7x11, conv2 -> 5x9, pool -> 2x4,
    # so per-sample flatten = 128*2*4 = 1024 = fc1.in_features, with batch kept intact.
    N, H, W = 2, 16, 24
    hp2 = ((H - 2) // 2 - 2) // 2
    wp2 = ((W - 2) // 2 - 2) // 2

    x = jax.random.normal(jax.random.PRNGKey(0), (N, 1, H, W), jnp.float32)
    params = init_params(jax.random.PRNGKey(42))
    assert hp2 * wp2 * params["conv2_w"].shape[0] == params["fc1_w"].shape[1]

    prep = prepare_params(params, hp2, wp2)      # one-time weight layout prep (hoisted)
    out = jax.block_until_ready(net_forward(prep, x))

    assert out.shape == (N, N_CLASSES), out.shape
    assert bool(jnp.all(jnp.isfinite(out)))
    # log_softmax rows must sum to ~1 in probability space
    assert bool(jnp.allclose(jnp.sum(jnp.exp(out), axis=-1), 1.0, atol=1e-5))
    # numerics vs. a pure-JAX reference of the same forward
    ref = reference_forward(params, x)
    assert bool(jnp.allclose(out, ref, atol=5e-2, rtol=5e-2)), (
        float(jnp.max(jnp.abs(out - ref))))
    print("KERNEL_OK")
</pallas_src>

<mosaic_0001>
module attributes {stable_mosaic.version = 11 : i64} {
  func.func @_net_fused_kernel(%arg0: i32, %arg1: memref<2x14x22x9xf32, #tpu.memory_space<vmem>>, %arg2: memref<9x64xf32, #tpu.memory_space<vmem>>, %arg3: memref<1x64xf32, #tpu.memory_space<vmem>>, %arg4: memref<576x128xf32, #tpu.memory_space<vmem>>, %arg5: memref<1x128xf32, #tpu.memory_space<vmem>>, %arg6: memref<2x4x128x128xf32, #tpu.memory_space<vmem>>, %arg7: memref<1x128xf32, #tpu.memory_space<vmem>>, %arg8: memref<128x128xf32, #tpu.memory_space<vmem>>, %arg9: memref<1x128xf32, #tpu.memory_space<vmem>>, %arg10: memref<2x128xf32, #tpu.memory_space<vmem>>) attributes {dimension_semantics = [#tpu.dimension_semantics<parallel>], iteration_bounds = array<i64: 1>, scalar_prefetch = 0 : i64, scratch_operands = 0 : i64, tpu.core_type = #tpu.core_type<tc>, window_params = [{transform_indices = @transform_0, window_bounds = array<i64: 2, 14, 22, 9>}, {pipeline_mode = #tpu.pipeline_mode<synchronous>, transform_indices = @transform_1, window_bounds = array<i64: 9, 64>}, {pipeline_mode = #tpu.pipeline_mode<synchronous>, transform_indices = @transform_2, window_bounds = array<i64: 1, 64>}, {pipeline_mode = #tpu.pipeline_mode<synchronous>, transform_indices = @transform_3, window_bounds = array<i64: 576, 128>}, {pipeline_mode = #tpu.pipeline_mode<synchronous>, transform_indices = @transform_4, window_bounds = array<i64: 1, 128>}, {pipeline_mode = #tpu.pipeline_mode<synchronous>, transform_indices = @transform_5, window_bounds = array<i64: 2, 4, 128, 128>}, {pipeline_mode = #tpu.pipeline_mode<synchronous>, transform_indices = @transform_6, window_bounds = array<i64: 1, 128>}, {pipeline_mode = #tpu.pipeline_mode<synchronous>, transform_indices = @transform_7, window_bounds = array<i64: 128, 128>}, {pipeline_mode = #tpu.pipeline_mode<synchronous>, transform_indices = @transform_8, window_bounds = array<i64: 1, 128>}, {transform_indices = @transform_9, window_bounds = array<i64: 2, 128>}]} {
    %c0 = arith.constant 0 : index
    %c0_0 = arith.constant 0 : index
    %c0_1 = arith.constant 0 : index
    %c0_2 = arith.constant 0 : index
    %0 = vector.load %arg1[%c0, %c0_0, %c0_1, %c0_2] : memref<2x14x22x9xf32, #tpu.memory_space<vmem>>, vector<2x14x22x9xf32>
    %1 = vector.shape_cast %0 : vector<2x14x22x9xf32> to vector<616x9xf32>
    %c0_3 = arith.constant 0 : index
    %c0_4 = arith.constant 0 : index
    %2 = vector.load %arg2[%c0_3, %c0_4] : memref<9x64xf32, #tpu.memory_space<vmem>>, vector<9x64xf32>
    %cst = arith.constant dense<0.000000e+00> : vector<616x64xf32>
    %3 = tpu.matmul %1, %2, %cst {dimension_numbers = #tpu.dot_dimension_numbers<[1], [0], [0], [1], [0, 0, 1, 1], [], []>} : vector<616x9xf32>, vector<9x64xf32>, vector<616x64xf32> -> vector<616x64xf32>
    %c0_5 = arith.constant 0 : index
    %c0_6 = arith.constant 0 : index
    %4 = vector.load %arg3[%c0_5, %c0_6] : memref<1x64xf32, #tpu.memory_space<vmem>>, vector<1x64xf32>
    %5 = vector.broadcast %4 : vector<1x64xf32> to vector<616x64xf32>
    %6 = arith.addf %3, %5 : vector<616x64xf32>
    %7 = vector.shape_cast %6 : vector<616x64xf32> to vector<2x14x22x64xf32>
    %8 = vector.shape_cast %7 : vector<2x14x22x64xf32> to vector<2x7x2x22x64xf32>
    %9 = vector.extract_strided_slice %8 {offsets = [0, 0, 0, 0, 0], sizes = [2, 7, 1, 22, 64], strides = [1, 1, 1, 1, 1]} : vector<2x7x2x22x64xf32> to vector<2x7x1x22x64xf32>
    %10 = vector.shape_cast %9 : vector<2x7x1x22x64xf32> to vector<2x7x22x64xf32>
    %11 = vector.extract_strided_slice %8 {offsets = [0, 0, 1, 0, 0], sizes = [2, 7, 1, 22, 64], strides = [1, 1, 1, 1, 1]} : vector<2x7x2x22x64xf32> to vector<2x7x1x22x64xf32>
    %12 = vector.shape_cast %11 : vector<2x7x1x22x64xf32> to vector<2x7x22x64xf32>
    %13 = arith.maximumf %10, %12 : vector<2x7x22x64xf32>
    %14 = vector.shape_cast %13 : vector<2x7x22x64xf32> to vector<2x7x11x2x64xf32>
    %15 = vector.extract_strided_slice %14 {offsets = [0, 0, 0, 0, 0], sizes = [2, 7, 11, 1, 64], strides = [1, 1, 1, 1, 1]} : vector<2x7x11x2x64xf32> to vector<2x7x11x1x64xf32>
    %16 = vector.shape_cast %15 : vector<2x7x11x1x64xf32> to vector<2x7x11x64xf32>
    %17 = vector.extract_strided_slice %14 {offsets = [0, 0, 0, 1, 0], sizes = [2, 7, 11, 1, 64], strides = [1, 1, 1, 1, 1]} : vector<2x7x11x2x64xf32> to vector<2x7x11x1x64xf32>
    %18 = vector.shape_cast %17 : vector<2x7x11x1x64xf32> to vector<2x7x11x64xf32>
    %19 = arith.maximumf %16, %18 : vector<2x7x11x64xf32>
    %cst_7 = arith.constant 0.000000e+00 : f32
    %20 = vector.broadcast %cst_7 : f32 to vector<2x7x11x64xf32>
    %21 = arith.maximumf %19, %20 : vector<2x7x11x64xf32>
    %22 = vector.extract_strided_slice %21 {offsets = [0, 0, 0, 0], sizes = [2, 5, 9, 64], strides = [1, 1, 1, 1]} : vector<2x7x11x64xf32> to vector<2x5x9x64xf32>
    %23 = vector.extract_strided_slice %21 {offsets = [0, 0, 1, 0], sizes = [2, 5, 9, 64], strides = [1, 1, 1, 1]} : vector<2x7x11x64xf32> to vector<2x5x9x64xf32>
    %24 = vector.extract_strided_slice %21 {offsets = [0, 0, 2, 0], sizes = [2, 5, 9, 64], strides = [1, 1, 1, 1]} : vector<2x7x11x64xf32> to vector<2x5x9x64xf32>
    %25 = vector.extract_strided_slice %21 {offsets = [0, 1, 0, 0], sizes = [2, 5, 9, 64], strides = [1, 1, 1, 1]} : vector<2x7x11x64xf32> to vector<2x5x9x64xf32>
    %26 = vector.extract_strided_slice %21 {offsets = [0, 1, 1, 0], sizes = [2, 5, 9, 64], strides = [1, 1, 1, 1]} : vector<2x7x11x64xf32> to vector<2x5x9x64xf32>
    %27 = vector.extract_strided_slice %21 {offsets = [0, 1, 2, 0], sizes = [2, 5, 9, 64], strides = [1, 1, 1, 1]} : vector<2x7x11x64xf32> to vector<2x5x9x64xf32>
    %28 = vector.extract_strided_slice %21 {offsets = [0, 2, 0, 0], sizes = [2, 5, 9, 64], strides = [1, 1, 1, 1]} : vector<2x7x11x64xf32> to vector<2x5x9x64xf32>
    %29 = vector.extract_strided_slice %21 {offsets = [0, 2, 1, 0], sizes = [2, 5, 9, 64], strides = [1, 1, 1, 1]} : vector<2x7x11x64xf32> to vector<2x5x9x64xf32>
    %30 = vector.extract_strided_slice %21 {offsets = [0, 2, 2, 0], sizes = [2, 5, 9, 64], strides = [1, 1, 1, 1]} : vector<2x7x11x64xf32> to vector<2x5x9x64xf32>
    %31 = tpu.concatenate %22, %23, %24, %25, %26, %27, %28, %29, %30 in 3 : vector<2x5x9x64xf32>, vector<2x5x9x64xf32>, vector<2x5x9x64xf32>, vector<2x5x9x64xf32>, vector<2x5x9x64xf32>, vector<2x5x9x64xf32>, vector<2x5x9x64xf32>, vector<2x5x9x64xf32>, vector<2x5x9x64xf32> -> vector<2x5x9x576xf32>
    %32 = vector.shape_cast %31 : vector<2x5x9x576xf32> to vector<90x576xf32>
    %c0_8 = arith.constant 0 : index
    %c0_9 = arith.constant 0 : index
    %33 = vector.load %arg4[%c0_8, %c0_9] : memref<576x128xf32, #tpu.memory_space<vmem>>, vector<576x128xf32>
    %cst_10 = arith.constant dense<0.000000e+00> : vector<90x128xf32>
    %34 = tpu.matmul %32, %33, %cst_10 {dimension_numbers = #tpu.dot_dimension_numbers<[1], [0], [0], [1], [0, 0, 1, 1], [], []>} : vector<90x576xf32>, vector<576x128xf32>, vector<90x128xf32> -> vector<90x128xf32>
    %c0_11 = arith.constant 0 : index
    %c0_12 = arith.constant 0 : index
    %35 = vector.load %arg5[%c0_11, %c0_12] : memref<1x128xf32, #tpu.memory_space<vmem>>, vector<1x128xf32>
    %36 = vector.broadcast %35 : vector<1x128xf32> to vector<90x128xf32>
    %37 = arith.addf %34, %36 : vector<90x128xf32>
    %38 = vector.shape_cast %37 : vector<90x128xf32> to vector<2x5x9x128xf32>
    %39 = vector.extract_strided_slice %38 {offsets = [0, 0, 0, 0], sizes = [2, 4, 8, 128], strides = [1, 1, 1, 1]} : vector<2x5x9x128xf32> to vector<2x4x8x128xf32>
    %40 = vector.shape_cast %39 : vector<2x4x8x128xf32> to vector<2x2x2x8x128xf32>
    %41 = vector.extract_strided_slice %40 {offsets = [0, 0, 0, 0, 0], sizes = [2, 2, 1, 8, 128], strides = [1, 1, 1, 1, 1]} : vector<2x2x2x8x128xf32> to vector<2x2x1x8x128xf32>
    %42 = vector.shape_cast %41 : vector<2x2x1x8x128xf32> to vector<2x2x8x128xf32>
    %43 = vector.extract_strided_slice %40 {offsets = [0, 0, 1, 0, 0], sizes = [2, 2, 1, 8, 128], strides = [1, 1, 1, 1, 1]} : vector<2x2x2x8x128xf32> to vector<2x2x1x8x128xf32>
    %44 = vector.shape_cast %43 : vector<2x2x1x8x128xf32> to vector<2x2x8x128xf32>
    %45 = arith.maximumf %42, %44 : vector<2x2x8x128xf32>
    %46 = vector.shape_cast %45 : vector<2x2x8x128xf32> to vector<2x2x4x2x128xf32>
    %47 = vector.extract_strided_slice %46 {offsets = [0, 0, 0, 0, 0], sizes = [2, 2, 4, 1, 128], strides = [1, 1, 1, 1, 1]} : vector<2x2x4x2x128xf32> to vector<2x2x4x1x128xf32>
    %48 = vector.shape_cast %47 : vector<2x2x4x1x128xf32> to vector<2x2x4x128xf32>
    %49 = vector.extract_strided_slice %46 {offsets = [0, 0, 0, 1, 0], sizes = [2, 2, 4, 1, 128], strides = [1, 1, 1, 1, 1]} : vector<2x2x4x2x128xf32> to vector<2x2x4x1x128xf32>
    %50 = vector.shape_cast %49 : vector<2x2x4x1x128xf32> to vector<2x2x4x128xf32>
    %51 = arith.maximumf %48, %50 : vector<2x2x4x128xf32>
    %cst_13 = arith.constant 0.000000e+00 : f32
    %52 = vector.broadcast %cst_13 : f32 to vector<2x2x4x128xf32>
    %53 = arith.maximumf %51, %52 : vector<2x2x4x128xf32>
    %cst_14 = arith.constant 0.000000e+00 : f32
    %54 = vector.broadcast %cst_14 : f32 to vector<2x128xf32>
    %55 = vector.extract_strided_slice %53 {offsets = [0, 0, 0, 0], sizes = [2, 1, 1, 128], strides = [1, 1, 1, 1]} : vector<2x2x4x128xf32> to vector<2x1x1x128xf32>
    %56 = vector.shape_cast %55 : vector<2x1x1x128xf32> to vector<2x128xf32>
    %c0_15 = arith.constant 0 : index
    %c0_16 = arith.constant 0 : index
    %c0_17 = arith.constant 0 : index
    %c0_18 = arith.constant 0 : index
    %57 = vector.load %arg6[%c0_15, %c0_16, %c0_17, %c0_18] : memref<2x4x128x128xf32, #tpu.memory_space<vmem>>, vector<1x1x128x128xf32>
    %58 = vector.shape_cast %57 : vector<1x1x128x128xf32> to vector<128x128xf32>
    %cst_19 = arith.constant dense<0.000000e+00> : vector<2x128xf32>
    %59 = tpu.matmul %56, %58, %cst_19 {dimension_numbers = #tpu.dot_dimension_numbers<[1], [0], [0], [1], [0, 0, 1, 1], [], []>} : vector<2x128xf32>, vector<128x128xf32>, vector<2x128xf32> -> vector<2x128xf32>
    %60 = arith.addf %54, %59 : vector<2x128xf32>
    %61 = vector.extract_strided_slice %53 {offsets = [0, 0, 1, 0], sizes = [2, 1, 1, 128], strides = [1, 1, 1, 1]} : vector<2x2x4x128xf32> to vector<2x1x1x128xf32>
    %62 = vector.shape_cast %61 : vector<2x1x1x128xf32> to vector<2x128xf32>
    %c0_20 = arith.constant 0 : index
    %c1 = arith.constant 1 : index
    %c0_21 = arith.constant 0 : index
    %c0_22 = arith.constant 0 : index
    %63 = vector.load %arg6[%c0_20, %c1, %c0_21, %c0_22] : memref<2x4x128x128xf32, #tpu.memory_space<vmem>>, vector<1x1x128x128xf32>
    %64 = vector.shape_cast %63 : vector<1x1x128x128xf32> to vector<128x128xf32>
    %cst_23 = arith.constant dense<0.000000e+00> : vector<2x128xf32>
    %65 = tpu.matmul %62, %64, %cst_23 {dimension_numbers = #tpu.dot_dimension_numbers<[1], [0], [0], [1], [0, 0, 1, 1], [], []>} : vector<2x128xf32>, vector<128x128xf32>, vector<2x128xf32> -> vector<2x128xf32>
    %66 = arith.addf %60, %65 : vector<2x128xf32>
    %67 = vector.extract_strided_slice %53 {offsets = [0, 0, 2, 0], sizes = [2, 1, 1, 128], strides = [1, 1, 1, 1]} : vector<2x2x4x128xf32> to vector<2x1x1x128xf32>
    %68 = vector.shape_cast %67 : vector<2x1x1x128xf32> to vector<2x128xf32>
    %c0_24 = arith.constant 0 : index
    %c2 = arith.constant 2 : index
    %c0_25 = arith.constant 0 : index
    %c0_26 = arith.constant 0 : index
    %69 = vector.load %arg6[%c0_24, %c2, %c0_25, %c0_26] : memref<2x4x128x128xf32, #tpu.memory_space<vmem>>, vector<1x1x128x128xf32>
    %70 = vector.shape_cast %69 : vector<1x1x128x128xf32> to vector<128x128xf32>
    %cst_27 = arith.constant dense<0.000000e+00> : vector<2x128xf32>
    %71 = tpu.matmul %68, %70, %cst_27 {dimension_numbers = #tpu.dot_dimension_numbers<[1], [0], [0], [1], [0, 0, 1, 1], [], []>} : vector<2x128xf32>, vector<128x128xf32>, vector<2x128xf32> -> vector<2x128xf32>
    %72 = arith.addf %66, %71 : vector<2x128xf32>
    %73 = vector.extract_strided_slice %53 {offsets = [0, 0, 3, 0], sizes = [2, 1, 1, 128], strides = [1, 1, 1, 1]} : vector<2x2x4x128xf32> to vector<2x1x1x128xf32>
    %74 = vector.shape_cast %73 : vector<2x1x1x128xf32> to vector<2x128xf32>
    %c0_28 = arith.constant 0 : index
    %c3 = arith.constant 3 : index
    %c0_29 = arith.constant 0 : index
    %c0_30 = arith.constant 0 : index
    %75 = vector.load %arg6[%c0_28, %c3, %c0_29, %c0_30] : memref<2x4x128x128xf32, #tpu.memory_space<vmem>>, vector<1x1x128x128xf32>
    %76 = vector.shape_cast %75 : vector<1x1x128x128xf32> to vector<128x128xf32>
    %cst_31 = arith.constant dense<0.000000e+00> : vector<2x128xf32>
    %77 = tpu.matmul %74, %76, %cst_31 {dimension_numbers = #tpu.dot_dimension_numbers<[1], [0], [0], [1], [0, 0, 1, 1], [], []>} : vector<2x128xf32>, vector<128x128xf32>, vector<2x128xf32> -> vector<2x128xf32>
    %78 = arith.addf %72, %77 : vector<2x128xf32>
    %79 = vector.extract_strided_slice %53 {offsets = [0, 1, 0, 0], sizes = [2, 1, 1, 128], strides = [1, 1, 1, 1]} : vector<2x2x4x128xf32> to vector<2x1x1x128xf32>
    %80 = vector.shape_cast %79 : vector<2x1x1x128xf32> to vector<2x128xf32>
    %c1_32 = arith.constant 1 : index
    %c0_33 = arith.constant 0 : index
    %c0_34 = arith.constant 0 : index
    %c0_35 = arith.constant 0 : index
    %81 = vector.load %arg6[%c1_32, %c0_33, %c0_34, %c0_35] : memref<2x4x128x128xf32, #tpu.memory_space<vmem>>, vector<1x1x128x128xf32>
    %82 = vector.shape_cast %81 : vector<1x1x128x128xf32> to vector<128x128xf32>
    %cst_36 = arith.constant dense<0.000000e+00> : vector<2x128xf32>
    %83 = tpu.matmul %80, %82, %cst_36 {dimension_numbers = #tpu.dot_dimension_numbers<[1], [0], [0], [1], [0, 0, 1, 1], [], []>} : vector<2x128xf32>, vector<128x128xf32>, vector<2x128xf32> -> vector<2x128xf32>
    %84 = arith.addf %78, %83 : vector<2x128xf32>
    %85 = vector.extract_strided_slice %53 {offsets = [0, 1, 1, 0], sizes = [2, 1, 1, 128], strides = [1, 1, 1, 1]} : vector<2x2x4x128xf32> to vector<2x1x1x128xf32>
    %86 = vector.shape_cast %85 : vector<2x1x1x128xf32> to vector<2x128xf32>
    %c1_37 = arith.constant 1 : index
    %c1_38 = arith.constant 1 : index
    %c0_39 = arith.constant 0 : index
    %c0_40 = arith.constant 0 : index
    %87 = vector.load %arg6[%c1_37, %c1_38, %c0_39, %c0_40] : memref<2x4x128x128xf32, #tpu.memory_space<vmem>>, vector<1x1x128x128xf32>
    %88 = vector.shape_cast %87 : vector<1x1x128x128xf32> to vector<128x128xf32>
    %cst_41 = arith.constant dense<0.000000e+00> : vector<2x128xf32>
    %89 = tpu.matmul %86, %88, %cst_41 {dimension_numbers = #tpu.dot_dimension_numbers<[1], [0], [0], [1], [0, 0, 1, 1], [], []>} : vector<2x128xf32>, vector<128x128xf32>, vector<2x128xf32> -> vector<2x128xf32>
    %90 = arith.addf %84, %89 : vector<2x128xf32>
    %91 = vector.extract_strided_slice %53 {offsets = [0, 1, 2, 0], sizes = [2, 1, 1, 128], strides = [1, 1, 1, 1]} : vector<2x2x4x128xf32> to vector<2x1x1x128xf32>
    %92 = vector.shape_cast %91 : vector<2x1x1x128xf32> to vector<2x128xf32>
    %c1_42 = arith.constant 1 : index
    %c2_43 = arith.constant 2 : index
    %c0_44 = arith.constant 0 : index
    %c0_45 = arith.constant 0 : index
    %93 = vector.load %arg6[%c1_42, %c2_43, %c0_44, %c0_45] : memref<2x4x128x128xf32, #tpu.memory_space<vmem>>, vector<1x1x128x128xf32>
    %94 = vector.shape_cast %93 : vector<1x1x128x128xf32> to vector<128x128xf32>
    %cst_46 = arith.constant dense<0.000000e+00> : vector<2x128xf32>
    %95 = tpu.matmul %92, %94, %cst_46 {dimension_numbers = #tpu.dot_dimension_numbers<[1], [0], [0], [1], [0, 0, 1, 1], [], []>} : vector<2x128xf32>, vector<128x128xf32>, vector<2x128xf32> -> vector<2x128xf32>
    %96 = arith.addf %90, %95 : vector<2x128xf32>
    %97 = vector.extract_strided_slice %53 {offsets = [0, 1, 3, 0], sizes = [2, 1, 1, 128], strides = [1, 1, 1, 1]} : vector<2x2x4x128xf32> to vector<2x1x1x128xf32>
    %98 = vector.shape_cast %97 : vector<2x1x1x128xf32> to vector<2x128xf32>
    %c1_47 = arith.constant 1 : index
    %c3_48 = arith.constant 3 : index
    %c0_49 = arith.constant 0 : index
    %c0_50 = arith.constant 0 : index
    %99 = vector.load %arg6[%c1_47, %c3_48, %c0_49, %c0_50] : memref<2x4x128x128xf32, #tpu.memory_space<vmem>>, vector<1x1x128x128xf32>
    %100 = vector.shape_cast %99 : vector<1x1x128x128xf32> to vector<128x128xf32>
    %cst_51 = arith.constant dense<0.000000e+00> : vector<2x128xf32>
    %101 = tpu.matmul %98, %100, %cst_51 {dimension_numbers = #tpu.dot_dimension_numbers<[1], [0], [0], [1], [0, 0, 1, 1], [], []>} : vector<2x128xf32>, vector<128x128xf32>, vector<2x128xf32> -> vector<2x128xf32>
    %102 = arith.addf %96, %101 : vector<2x128xf32>
    %c0_52 = arith.constant 0 : index
    %c0_53 = arith.constant 0 : index
    %103 = vector.load %arg7[%c0_52, %c0_53] : memref<1x128xf32, #tpu.memory_space<vmem>>, vector<1x128xf32>
    %104 = vector.broadcast %103 : vector<1x128xf32> to vector<2x128xf32>
    %105 = arith.addf %102, %104 : vector<2x128xf32>
    %cst_54 = arith.constant 0.000000e+00 : f32
    %106 = vector.broadcast %cst_54 : f32 to vector<2x128xf32>
    %107 = arith.maximumf %105, %106 : vector<2x128xf32>
    %c0_55 = arith.constant 0 : index
    %c0_56 = arith.constant 0 : index
    %108 = vector.load %arg8[%c0_55, %c0_56] : memref<128x128xf32, #tpu.memory_space<vmem>>, vector<128x128xf32>
    %cst_57 = arith.constant dense<0.000000e+00> : vector<2x128xf32>
    %109 = tpu.matmul %107, %108, %cst_57 {dimension_numbers = #tpu.dot_dimension_numbers<[1], [0], [0], [1], [0, 0, 1, 1], [], []>} : vector<2x128xf32>, vector<128x128xf32>, vector<2x128xf32> -> vector<2x128xf32>
    %c0_58 = arith.constant 0 : index
    %c0_59 = arith.constant 0 : index
    %110 = vector.load %arg9[%c0_58, %c0_59] : memref<1x128xf32, #tpu.memory_space<vmem>>, vector<1x128xf32>
    %111 = vector.broadcast %110 : vector<1x128xf32> to vector<2x128xf32>
    %112 = arith.addf %109, %111 : vector<2x128xf32>
    %113 = tpu.iota {dimensions = array<i32: 1>} : vector<2x128xi32>
    %c10_i32 = arith.constant 10 : i32
    %114 = vector.broadcast %c10_i32 : i32 to vector<2x128xi32>
    %115 = arith.cmpi slt, %113, %114 : vector<2x128xi32>
    %cst_60 = arith.constant -1.000000e+30 : f32
    %116 = vector.broadcast %cst_60 : f32 to vector<2x128xf32>
    %117 = arith.select %115, %112, %116 : vector<2x128xi1>, vector<2x128xf32>
    %cst_61 = arith.constant dense<0xFF800000> : vector<2xf32>
    %118 = vector.multi_reduction <maximumf>, %117, %cst_61 [1] : vector<2x128xf32> to vector<2xf32>
    %119 = vector.shape_cast %118 : vector<2xf32> to vector<2x1xf32>
    %120 = vector.broadcast %119 : vector<2x1xf32> to vector<2x128xf32>
    %121 = arith.subf %117, %120 : vector<2x128xf32>
    %122 = math.exp %121 : vector<2x128xf32>
    %cst_62 = arith.constant dense<0.000000e+00> : vector<2xf32>
    %123 = vector.multi_reduction <add>, %122, %cst_62 [1] : vector<2x128xf32> to vector<2xf32>
    %124 = vector.shape_cast %123 : vector<2xf32> to vector<2x1xf32>
    %125 = math.log %124 : vector<2x1xf32>
    %126 = vector.broadcast %125 : vector<2x1xf32> to vector<2x128xf32>
    %127 = arith.subf %121, %126 : vector<2x128xf32>
    %cst_63 = arith.constant 0.000000e+00 : f32
    %128 = vector.broadcast %cst_63 : f32 to vector<2x128xf32>
    %129 = arith.select %115, %127, %128 : vector<2x128xi1>, vector<2x128xf32>
    %c0_64 = arith.constant 0 : index
    %c0_65 = arith.constant 0 : index
    %130 = vector.load %arg10[%c0_64, %c0_65] : memref<2x128xf32, #tpu.memory_space<vmem>>, vector<2x128xf32>
    tpu.vector_store %arg10[%c0_64, %c0_65], %129 {strides = array<i32>} : memref<2x128xf32, #tpu.memory_space<vmem>>, vector<2x128xf32>,
    return
  }
  func.func @transform_0(%arg0: i32) -> (i32, i32, i32, i32) {
    %c0_i32 = arith.constant 0 : i32
    %c0_i32_0 = arith.constant 0 : i32
    %c0_i32_1 = arith.constant 0 : i32
    %c0_i32_2 = arith.constant 0 : i32
    return %arg0, %c0_i32, %c0_i32_0, %c0_i32_1 : i32, i32, i32, i32
  }
  func.func @transform_1(%arg0: i32) -> (i32, i32) {
    %c0_i32 = arith.constant 0 : i32
    %c0_i32_0 = arith.constant 0 : i32
    %c0_i32_1 = arith.constant 0 : i32
    return %c0_i32, %c0_i32_0 : i32, i32
  }
  func.func @transform_2(%arg0: i32) -> (i32, i32) {
    %c0_i32 = arith.constant 0 : i32
    %c0_i32_0 = arith.constant 0 : i32
    %c0_i32_1 = arith.constant 0 : i32
    return %c0_i32, %c0_i32_0 : i32, i32
  }
  func.func @transform_3(%arg0: i32) -> (i32, i32) {
    %c0_i32 = arith.constant 0 : i32
    %c0_i32_0 = arith.constant 0 : i32
    %c0_i32_1 = arith.constant 0 : i32
    return %c0_i32, %c0_i32_0 : i32, i32
  }
  func.func @transform_4(%arg0: i32) -> (i32, i32) {
    %c0_i32 = arith.constant 0 : i32
    %c0_i32_0 = arith.constant 0 : i32
    %c0_i32_1 = arith.constant 0 : i32
    return %c0_i32, %c0_i32_0 : i32, i32
  }
  func.func @transform_5(%arg0: i32) -> (i32, i32, i32, i32) {
    %c0_i32 = arith.constant 0 : i32
    %c0_i32_0 = arith.constant 0 : i32
    %c0_i32_1 = arith.constant 0 : i32
    %c0_i32_2 = arith.constant 0 : i32
    %c0_i32_3 = arith.constant 0 : i32
    return %c0_i32, %c0_i32_0, %c0_i32_1, %c0_i32_2 : i32, i32, i32, i32
  }
  func.func @transform_6(%arg0: i32) -> (i32, i32) {
    %c0_i32 = arith.constant 0 : i32
    %c0_i32_0 = arith.constant 0 : i32
    %c0_i32_1 = arith.constant 0 : i32
    return %c0_i32, %c0_i32_0 : i32, i32
  }
  func.func @transform_7(%arg0: i32) -> (i32, i32) {
    %c0_i32 = arith.constant 0 : i32
    %c0_i32_0 = arith.constant 0 : i32
    %c0_i32_1 = arith.constant 0 : i32
    return %c0_i32, %c0_i32_0 : i32, i32
  }
  func.func @transform_8(%arg0: i32) -> (i32, i32) {
    %c0_i32 = arith.constant 0 : i32
    %c0_i32_0 = arith.constant 0 : i32
    %c0_i32_1 = arith.constant 0 : i32
    return %c0_i32, %c0_i32_0 : i32, i32
  }
  func.func @transform_9(%arg0: i32) -> (i32, i32) {
    %c0_i32 = arith.constant 0 : i32
    %c0_i32_0 = arith.constant 0 : i32
    return %arg0, %c0_i32 : i32, i32
  }
}

</mosaic_0001>

<llo_original>
// kernel: net_forward.1
$region0: #{net_forward.1}
  #allocation0 [shape = 'u32[]', space=smem, size = 0x4, offset = 0x4, fixed_abs, tag = 'smem constant byte address 0x4 - core index']
  #allocation1 [shape = 'u32[144,128]{1,0:T(1,128)}', space=vmem, size = 0x12000, scoped, tag = 'internal scratch']
  %s0 = inlined_call_operand.vmem [shape: f32[2,14,22,9], index: 0, kind: input, shape index: {}]
  %s1 = inlined_call_operand.vmem [shape: f32[9,64], index: 1, kind: input, shape index: {}]
  %s2 = inlined_call_operand.vmem [shape: f32[1,64], index: 2, kind: input, shape index: {}]
  %s3 = inlined_call_operand.vmem [shape: f32[576,128], index: 3, kind: input, shape index: {}]
  %s4 = inlined_call_operand.vmem [shape: f32[1,128], index: 4, kind: input, shape index: {}]
  %s5 = inlined_call_operand.vmem [shape: f32[2,4,128,128], index: 5, kind: input, shape index: {}]
  %s6 = inlined_call_operand.vmem [shape: f32[1,128], index: 6, kind: input, shape index: {}]
  %s7 = inlined_call_operand.vmem [shape: f32[128,128], index: 7, kind: input, shape index: {}]
  %s8 = inlined_call_operand.vmem [shape: f32[1,128], index: 8, kind: input, shape index: {}]
  %s9 = inlined_call_operand.hbm [shape: f32[2,128], index: 9, kind: output, shape index: {}]
  %s10 = sld [smem:[#allocation0]]
  $region46: #{net_forward.1} parent=0
    _
  %s12 = ssub.s32 1, %s10
  %s13 = scalar_select 0, %s12, %s10
  $region1: #{net_forward.1} parent=0
    #allocation2 [shape = 'u8[1024]{0}', space=vmem, size = 0x400, scoped, tag = 'output window, operand 0, single buffered']
    #allocation3 [shape = 's32[1]{0}', space=sflag, size = 0x4, scoped, tag = 'scoped memory for net_forward.1']
    %14 = vsyncpa [#allocation3], 0
    // Predicated region
    $region2: #{net_forward.1} parent=1 // pred_check
      _
    $region3: #{net_forward.1} parent=1 // pred_check_branch
      %16 = sbr.rel (0) target = $region5
    $region4: #{net_forward.1} parent=1 // pred_region
      _
    $region5: #{net_forward.1} parent=1 // pred_fallthru
      _
    // Predicated region
    $region6: #{net_forward.1} parent=1 // pred_check
      _
    $region7: #{net_forward.1} parent=1 // pred_check_branch
      %18 = sbr.rel (0) target = $region9
    $region8: #{net_forward.1} parent=1 // pred_region
      _
    $region9: #{net_forward.1} parent=1 // pred_fallthru
      _
    // Predicated region
    $region10: #{net_forward.1} parent=1 // pred_check
      _
    $region11: #{net_forward.1} parent=1 // pred_check_branch
      %20 = sbr.rel (0) target = $region13
    $region12: #{net_forward.1} parent=1 // pred_region
      _
    $region13: #{net_forward.1} parent=1 // pred_fallthru
      _
    // Predicated region
    $region14: #{net_forward.1} parent=1 // pred_check
      _
    $region15: #{net_forward.1} parent=1 // pred_check_branch
      %22 = sbr.rel (0) target = $region17
    $region16: #{net_forward.1} parent=1 // pred_region
      _
    $region17: #{net_forward.1} parent=1 // pred_fallthru
      _
    // Predicated region
    $region18: #{net_forward.1} parent=1 // pred_check
      _
    $region19: #{net_forward.1} parent=1 // pred_check_branch
      %24 = sbr.rel (0) target = $region21
    $region20: #{net_forward.1} parent=1 // pred_region
      _
    $region21: #{net_forward.1} parent=1 // pred_fallthru
      _
    // Predicated region
    $region22: #{net_forward.1} parent=1 // pred_check
      _
    $region23: #{net_forward.1} parent=1 // pred_check_branch
      %26 = sbr.rel (0) target = $region25
    $region24: #{net_forward.1} parent=1 // pred_region
      _
    $region25: #{net_forward.1} parent=1 // pred_fallthru
      _
    // Predicated region
    $region26: #{net_forward.1} parent=1 // pred_check
      _
    $region27: #{net_forward.1} parent=1 // pred_check_branch
      %28 = sbr.rel (0) target = $region29
    $region28: #{net_forward.1} parent=1 // pred_region
      _
    $region29: #{net_forward.1} parent=1 // pred_fallthru
      _
    // Predicated region
    $region30: #{net_forward.1} parent=1 // pred_check
      _
    $region31: #{net_forward.1} parent=1 // pred_check_branch
      %30 = sbr.rel (0) target = $region33
    $region32: #{net_forward.1} parent=1 // pred_region
      _
    $region33: #{net_forward.1} parent=1 // pred_fallthru
      _
    // Predicated region
    $region34: #{net_forward.1} parent=1 // pred_check
      _
    $region35: #{net_forward.1} parent=1 // pred_check_branch
      %32 = sbr.rel (0) target = $region37
    $region36: #{net_forward.1} parent=1 // pred_region
      _
    $region37: #{net_forward.1} parent=1 // pred_fallthru
      _
    %v33 = vld [vmem:[%s0] sm:$0xff]
    %v34 = vld [vmem:[%s0 + $0x8] sm:$0xff]
    %v35 = vld [vmem:[%s0 + $0x10] sm:$0x3f]
    %v36 = vld [vmem:[%s0 + $0x18] sm:$0xff]
    %v37 = vld [vmem:[%s0 + $0x20] sm:$0xff]
    %v38 = vld [vmem:[%s0 + $0x28] sm:$0x3f]
    %v39 = vld [vmem:[%s0 + $0x30] sm:$0xff]
    %v40 = vld [vmem:[%s0 + $0x38] sm:$0xff]
    %v41 = vld [vmem:[%s0 + $0x40] sm:$0x3f]
    %v42 = vld [vmem:[%s0 + $0x48] sm:$0xff]
    %v43 = vld [vmem:[%s0 + $0x50] sm:$0xff]
    %v44 = vld [vmem:[%s0 + $0x58] sm:$0x3f]
    %v45 = vld [vmem:[%s0 + $0x60] sm:$0xff]
    %v46 = vld [vmem:[%s0 + $0x68] sm:$0xff]
    %v47 = vld [vmem:[%s0 + $0x70] sm:$0x3f]
    %v48 = vld [vmem:[%s0 + $0x78] sm:$0xff]
    %v49 = vld [vmem:[%s0 + $0x80] sm:$0xff]
    %v50 = vld [vmem:[%s0 + $0x88] sm:$0x3f]
    %v51 = vld [vmem:[%s0 + $0x90] sm:$0xff]
    %v52 = vld [vmem:[%s0 + $0x98] sm:$0xff]
    %v53 = vld [vmem:[%s0 + $0xa0] sm:$0x3f]
    %v54 = vld [vmem:[%s0 + $0xa8] sm:$0xff]
    %v55 = vld [vmem:[%s0 + $0xb0] sm:$0xff]
    %v56 = vld [vmem:[%s0 + $0xb8] sm:$0x3f]
    %v57 = vld [vmem:[%s0 + $0xc0] sm:$0xff]
    %v58 = vld [vmem:[%s0 + $0xc8] sm:$0xff]
    %v59 = vld [vmem:[%s0 + $0xd0] sm:$0x3f]
    %v60 = vld [vmem:[%s0 + $0xd8] sm:$0xff]
    %v61 = vld [vmem:[%s0 + $0xe0] sm:$0xff]
    %v62 = vld [vmem:[%s0 + $0xe8] sm:$0x3f]
    %v63 = vld [vmem:[%s0 + $0xf0] sm:$0xff]
    %v64 = vld [vmem:[%s0 + $0xf8] sm:$0xff]
    %v65 = vld [vmem:[%s0 + $0x100] sm:$0x3f]
    %v66 = vld [vmem:[%s0 + $0x108] sm:$0xff]
    %v67 = vld [vmem:[%s0 + $0x110] sm:$0xff]
    %v68 = vld [vmem:[%s0 + $0x118] sm:$0x3f]
    %v69 = vld [vmem:[%s0 + $0x120] sm:$0xff]
    %v70 = vld [vmem:[%s0 + $0x128] sm:$0xff]
    %v71 = vld [vmem:[%s0 + $0x130] sm:$0x3f]
    %v72 = vld [vmem:[%s0 + $0x138] sm:$0xff]
    %v73 = vld [vmem:[%s0 + $0x140] sm:$0xff]
    %v74 = vld [vmem:[%s0 + $0x148] sm:$0x3f]
    %v75 = vld [vmem:[%s0 + $0x150] sm:$0xff]
    %v76 = vld [vmem:[%s0 + $0x158] sm:$0xff]
    %v77 = vld [vmem:[%s0 + $0x160] sm:$0x3f]
    %v78 = vld [vmem:[%s0 + $0x168] sm:$0xff]
    %v79 = vld [vmem:[%s0 + $0x170] sm:$0xff]
    %v80 = vld [vmem:[%s0 + $0x178] sm:$0x3f]
    %v81 = vld [vmem:[%s0 + $0x180] sm:$0xff]
    %v82 = vld [vmem:[%s0 + $0x188] sm:$0xff]
    %v83 = vld [vmem:[%s0 + $0x190] sm:$0x3f]
    %v84 = vld [vmem:[%s0 + $0x198] sm:$0xff]
    %v85 = vld [vmem:[%s0 + $0x1a0] sm:$0xff]
    %v86 = vld [vmem:[%s0 + $0x1a8] sm:$0x3f]
    %v87 = vld [vmem:[%s0 + $0x1b0] sm:$0xff]
    %v88 = vld [vmem:[%s0 + $0x1b8] sm:$0xff]
    %v89 = vld [vmem:[%s0 + $0x1c0] sm:$0x3f]
    %v90 = vld [vmem:[%s0 + $0x1c8] sm:$0xff]
    %v91 = vld [vmem:[%s0 + $0x1d0] sm:$0xff]
    %v92 = vld [vmem:[%s0 + $0x1d8] sm:$0x3f]
    %v93 = vld [vmem:[%s0 + $0x1e0] sm:$0xff]
    %v94 = vld [vmem:[%s0 + $0x1e8] sm:$0xff]
    %v95 = vld [vmem:[%s0 + $0x1f0] sm:$0x3f]
    %v96 = vld [vmem:[%s0 + $0x1f8] sm:$0xff]
    %v97 = vld [vmem:[%s0 + $0x200] sm:$0xff]
    %v98 = vld [vmem:[%s0 + $0x208] sm:$0x3f]
    %v99 = vld [vmem:[%s0 + $0x210] sm:$0xff]
    %v100 = vld [vmem:[%s0 + $0x218] sm:$0xff]
    %v101 = vld [vmem:[%s0 + $0x220] sm:$0x3f]
    %v102 = vld [vmem:[%s0 + $0x228] sm:$0xff]
    %v103 = vld [vmem:[%s0 + $0x230] sm:$0xff]
    %v104 = vld [vmem:[%s0 + $0x238] sm:$0x3f]
    %v105 = vld [vmem:[%s0 + $0x240] sm:$0xff]
    %v106 = vld [vmem:[%s0 + $0x248] sm:$0xff]
    %v107 = vld [vmem:[%s0 + $0x250] sm:$0x3f]
    %v108 = vld [vmem:[%s0 + $0x258] sm:$0xff]
    %v109 = vld [vmem:[%s0 + $0x260] sm:$0xff]
    %v110 = vld [vmem:[%s0 + $0x268] sm:$0x3f]
    %v111 = vld [vmem:[%s0 + $0x270] sm:$0xff]
    %v112 = vld [vmem:[%s0 + $0x278] sm:$0xff]
    %v113 = vld [vmem:[%s0 + $0x280] sm:$0x3f]
    %v114 = vld [vmem:[%s0 + $0x288] sm:$0xff]
    %v115 = vld [vmem:[%s0 + $0x290] sm:$0xff]
    %v116 = vld [vmem:[%s0 + $0x298] sm:$0x3f]
    %v201 = vcombine.high %v33, %v33
    %v203 = vunpack.c.l.s4 1983009808
    %v204 = vunpack.c.0.s8 %v203
    %v205 = vlaneseq
    %v206 = vshrl.u32 %v205, 7
    %v207 = vsub.s32 %v204, %v206
    %v208 = vrot.slane %v33, %v207
    %v210 = vunpack.c.l.s4 1983009808
    %v211 = vunpack.c.0.s8 %v210
    %v212 = vlaneseq
    %v213 = vshrl.u32 %v212, 7
    %v214 = vsub.s32 %v211, %v213
    %v215 = vrot.slane %v201, %v214
    %v216 = vcombine.high %v208, %v208
    %v217 = vcombine.high %v215, %v215
    %v218 = vcombine.high %v34, %v34
    %v220 = vunpack.c.l.s4 1983009808
    %v221 = vunpack.c.0.s8 %v220
    %v222 = vlaneseq
    %v223 = vshrl.u32 %v222, 7
    %v224 = vsub.s32 %v221, %v223
    %v225 = vrot.slane %v34, %v224
    %v227 = vunpack.c.l.s4 1983009808
    %v228 = vunpack.c.0.s8 %v227
    %v229 = vlaneseq
    %v230 = vshrl.u32 %v229, 7
    %v231 = vsub.s32 %v228, %v230
    %v232 = vrot.slane %v218, %v231
    %v233 = vcombine.high %v225, %v225
    %v234 = vcombine.high %v232, %v232
    %v235 = vcombine.high %v35, %v35
    %v237 = vunpack.c.l.s4 1983009808
    %v238 = vunpack.c.0.s8 %v237
    %v239 = vlaneseq
    %v240 = vshrl.u32 %v239, 7
    %v241 = vsub.s32 %v238, %v240
    %v242 = vrot.slane %v35, %v241
    %v244 = vunpack.c.l.s4 1983009808
    %v245 = vunpack.c.0.s8 %v244
    %v246 = vlaneseq
    %v247 = vshrl.u32 %v246, 7
    %v248 = vsub.s32 %v245, %v247
    %v249 = vrot.slane %v235, %v248
    %v250 = vcombine.high %v242, %v242
    %v251 = vcombine.high %v36, %v36
    %v253 = vunpack.c.l.s4 1983009808
    %v254 = vunpack.c.0.s8 %v253
    %v255 = vlaneseq
    %v256 = vshrl.u32 %v255, 7
    %v257 = vsub.s32 %v254, %v256
    %v258 = vrot.slane %v36, %v257
    %v260 = vunpack.c.l.s4 1983009808
    %v261 = vunpack.c.0.s8 %v260
    %v262 = vlaneseq
    %v263 = vshrl.u32 %v262, 7
    %v264 = vsub.s32 %v261, %v263
    %v265 = vrot.slane %v251, %v264
    %v266 = vcombine.high %v258, %v258
    %v267 = vcombine.high %v265, %v265
    %v268 = vcombine.high %v37, %v37
    %v270 = vunpack.c.l.s4 1983009808
    %v271 = vunpack.c.0.s8 %v270
    %v272 = vlaneseq
    %v273 = vshrl.u32 %v272, 7
    %v274 = vsub.s32 %v271, %v273
    %v275 = vrot.slane %v37, %v274
    %v277 = vunpack.c.l.s4 1983009808
    %v278 = vunpack.c.0.s8 %v277
    %v279 = vlaneseq
    %v280 = vshrl.u32 %v279, 7
    %v281 = vsub.s32 %v278, %v280
    %v282 = vrot.slane %v268, %v281
    %v283 = vcombine.high %v275, %v275
    %v284 = vcombine.high %v282, %v282
    %v285 = vcombine.high %v38, %v38
    %v287 = vunpack.c.l.s4 1983009808
    %v288 = vunpack.c.0.s8 %v287
    %v289 = vlaneseq
    %v290 = vshrl.u32 %v289, 7
    %v291 = vsub.s32 %v288, %v290
    %v292 = vrot.slane %v38, %v291
    %v294 = vunpack.c.l.s4 1983009808
    %v295 = vunpack.c.0.s8 %v294
    %v296 = vlaneseq
    %v297 = vshrl.u32 %v296, 7
    %v298 = vsub.s32 %v295, %v297
    %v299 = vrot.slane %v285, %v298
    %v300 = vcombine.high %v292, %v292
    %v301 = vcombine.high %v39, %v39
    %v303 = vunpack.c.l.s4 1983009808
    %v304 = vunpack.c.0.s8 %v303
    %v305 = vlaneseq
    %v306 = vshrl.u32 %v305, 7
    %v307 = vsub.s32 %v304, %v306
    %v308 = vrot.slane %v39, %v307
    %v310 = vunpack.c.l.s4 1983009808
    %v311 = vunpack.c.0.s8 %v310
    %v312 = vlaneseq
    %v313 = vshrl.u32 %v312, 7
    %v314 = vsub.s32 %v311, %v313
    %v315 = vrot.slane %v301, %v314
    %v316 = vcombine.high %v308, %v308
    %v317 = vcombine.high %v315, %v315
    %v318 = vcombine.high %v40, %v40
    %v320 = vunpack.c.l.s4 1983009808
    %v321 = vunpack.c.0.s8 %v320
    %v322 = vlaneseq
    %v323 = vshrl.u32 %v322, 7
    %v324 = vsub.s32 %v321, %v323
    %v325 = vrot.slane %v40, %v324
    %v327 = vunpack.c.l.s4 1983009808
    %v328 = vunpack.c.0.s8 %v327
    %v329 = vlaneseq
    %v330 = vshrl.u32 %v329, 7
    %v331 = vsub.s32 %v328, %v330
    %v332 = vrot.slane %v318, %v331
    %v333 = vcombine.high %v325, %v325
    %v334 = vcombine.high %v332, %v332
    %v335 = vcombine.high %v41, %v41
    %v337 = vunpack.c.l.s4 1983009808
    %v338 = vunpack.c.0.s8 %v337
    %v339 = vlaneseq
    %v340 = vshrl.u32 %v339, 7
    %v341 = vsub.s32 %v338, %v340
    %v342 = vrot.slane %v41, %v341
    %v344 = vunpack.c.l.s4 1983009808
    %v345 = vunpack.c.0.s8 %v344
    %v346 = vlaneseq
    %v347 = vshrl.u32 %v346, 7
    %v348 = vsub.s32 %v345, %v347
    %v349 = vrot.slane %v335, %v348
    %v350 = vcombine.high %v342, %v342
    %v351 = vcombine.high %v42, %v42
    %v353 = vunpack.c.l.s4 1983009808
    %v354 = vunpack.c.0.s8 %v353
    %v355 = vlaneseq
    %v356 = vshrl.u32 %v355, 7
    %v357 = vsub.s32 %v354, %v356
    %v358 = vrot.slane %v42, %v357
    %v360 = vunpack.c.l.s4 1983009808
    %v361 = vunpack.c.0.s8 %v360
    %v362 = vlaneseq
    %v363 = vshrl.u32 %v362, 7
    %v364 = vsub.s32 %v361, %v363
    %v365 = vrot.slane %v351, %v364
    %v366 = vcombine.high %v358, %v358
    %v367 = vcombine.high %v365, %v365
    %v368 = vcombine.high %v43, %v43
    %v370 = vunpack.c.l.s4 1983009808
    %v371 = vunpack.c.0.s8 %v370
    %v372 = vlaneseq
    %v373 = vshrl.u32 %v372, 7
    %v374 = vsub.s32 %v371, %v373
    %v375 = vrot.slane %v43, %v374
    %v377 = vunpack.c.l.s4 1983009808
    %v378 = vunpack.c.0.s8 %v377
    %v379 = vlaneseq
    %v380 = vshrl.u32 %v379, 7
    %v381 = vsub.s32 %v378, %v380
    %v382 = vrot.slane %v368, %v381
    %v383 = vcombine.high %v375, %v375
    %v384 = vcombine.high %v382, %v382
    %v385 = vcombine.high %v44, %v44
    %v387 = vunpack.c.l.s4 1983009808
    %v388 = vunpack.c.0.s8 %v387
    %v389 = vlaneseq
    %v390 = vshrl.u32 %v389, 7
    %v391 = vsub.s32 %v388, %v390
    %v392 = vrot.slane %v44, %v391
    %v394 = vunpack.c.l.s4 1983009808
    %v395 = vunpack.c.0.s8 %v394
    %v396 = vlaneseq
    %v397 = vshrl.u32 %v396, 7
    %v398 = vsub.s32 %v395, %v397
    %v399 = vrot.slane %v385, %v398
    %v400 = vcombine.high %v392, %v392
    %v401 = vcombine.high %v45, %v45
    %v403 = vunpack.c.l.s4 1983009808
    %v404 = vunpack.c.0.s8 %v403
    %v405 = vlaneseq
    %v406 = vshrl.u32 %v405, 7
    %v407 = vsub.s32 %v404, %v406
    %v408 = vrot.slane %v45, %v407
    %v410 = vunpack.c.l.s4 1983009808
    %v411 = vunpack.c.0.s8 %v410
    %v412 = vlaneseq
    %v413 = vshrl.u32 %v412, 7
    %v414 = vsub.s32 %v411, %v413
    %v415 = vrot.slane %v401, %v414
    %v416 = vcombine.high %v408, %v408
    %v417 = vcombine.high %v415, %v415
    %v418 = vcombine.high %v46, %v46
    %v420 = vunpack.c.l.s4 1983009808
    %v421 = vunpack.c.0.s8 %v420
    %v422 = vlaneseq
    %v423 = vshrl.u32 %v422, 7
    %v424 = vsub.s32 %v421, %v423
    %v425 = vrot.slane %v46, %v424
    %v427 = vunpack.c.l.s4 1983009808
    %v428 = vunpack.c.0.s8 %v427
    %v429 = vlaneseq
    %v430 = vshrl.u32 %v429, 7
    %v431 = vsub.s32 %v428, %v430
    %v432 = vrot.slane %v418, %v431
    %v433 = vcombine.high %v425, %v425
    %v434 = vcombine.high %v432, %v432
    %v435 = vcombine.high %v47, %v47
    %v437 = vunpack.c.l.s4 1983009808
    %v438 = vunpack.c.0.s8 %v437
    %v439 = vlaneseq
    %v440 = vshrl.u32 %v439, 7
    %v441 = vsub.s32 %v438, %v440
    %v442 = vrot.slane %v47, %v441
    %v444 = vunpack.c.l.s4 1983009808
    %v445 = vunpack.c.0.s8 %v444
    %v446 = vlaneseq
    %v447 = vshrl.u32 %v446, 7
    %v448 = vsub.s32 %v445, %v447
    %v449 = vrot.slane %v435, %v448
    %v450 = vcombine.high %v442, %v442
    %v451 = vcombine.high %v48, %v48
    %v453 = vunpack.c.l.s4 1983009808
    %v454 = vunpack.c.0.s8 %v453
    %v455 = vlaneseq
    %v456 = vshrl.u32 %v455, 7
    %v457 = vsub.s32 %v454, %v456
    %v458 = vrot.slane %v48, %v457
    %v460 = vunpack.c.l.s4 1983009808
    %v461 = vunpack.c.0.s8 %v460
    %v462 = vlaneseq
    %v463 = vshrl.u32 %v462, 7
    %v464 = vsub.s32 %v461, %v463
    %v465 = vrot.slane %v451, %v464
    %v466 = vcombine.high %v458, %v458
    %v467 = vcombine.high %v465, %v465
    %v468 = vcombine.high %v49, %v49
    %v470 = vunpack.c.l.s4 1983009808
    %v471 = vunpack.c.0.s8 %v470
    %v472 = vlaneseq
    %v473 = vshrl.u32 %v472, 7
    %v474 = vsub.s32 %v471, %v473
    %v475 = vrot.slane %v49, %v474
    %v477 = vunpack.c.l.s4 1983009808
    %v478 = vunpack.c.0.s8 %v477
    %v479 = vlaneseq
    %v480 = vshrl.u32 %v479, 7
    %v481 = vsub.s32 %v478, %v480
    %v482 = vrot.slane %v468, %v481
    %v483 = vcombine.high %v475, %v475
    %v484 = vcombine.high %v482, %v482
    %v485 = vcombine.high %v50, %v50
    %v487 = vunpack.c.l.s4 1983009808
    %v488 = vunpack.c.0.s8 %v487
    %v489 = vlaneseq
    %v490 = vshrl.u32 %v489, 7
    %v491 = vsub.s32 %v488, %v490
    %v492 = vrot.slane %v50, %v491
    %v494 = vunpack.c.l.s4 1983009808
    %v495 = vunpack.c.0.s8 %v494
    %v496 = vlaneseq
    %v497 = vshrl.u32 %v496, 7
    %v498 = vsub.s32 %v495, %v497
    %v499 = vrot.slane %v485, %v498
    %v500 = vcombine.high %v492, %v492
    %v501 = vcombine.high %v51, %v51
    %v503 = vunpack.c.l.s4 1983009808
    %v504 = vunpack.c.0.s8 %v503
    %v505 = vlaneseq
    %v506 = vshrl.u32 %v505, 7
    %v507 = vsub.s32 %v504, %v506
    %v508 = vrot.slane %v51, %v507
    %v510 = vunpack.c.l.s4 1983009808
    %v511 = vunpack.c.0.s8 %v510
    %v512 = vlaneseq
    %v513 = vshrl.u32 %v512, 7
    %v514 = vsub.s32 %v511, %v513
    %v515 = vrot.slane %v501, %v514
    %v516 = vcombine.high %v508, %v508
    %v517 = vcombine.high %v515, %v515
    %v518 = vcombine.high %v52, %v52
    %v520 = vunpack.c.l.s4 1983009808
    %v521 = vunpack.c.0.s8 %v520
    %v522 = vlaneseq
    %v523 = vshrl.u32 %v522, 7
    %v524 = vsub.s32 %v521, %v523
    %v525 = vrot.slane %v52, %v524
    %v527 = vunpack.c.l.s4 1983009808
    %v528 = vunpack.c.0.s8 %v527
    %v529 = vlaneseq
    %v530 = vshrl.u32 %v529, 7
    %v531 = vsub.s32 %v528, %v530
    %v532 = vrot.slane %v518, %v531
    %v533 = vcombine.high %v525, %v525
    %v534 = vcombine.high %v532, %v532
    %v535 = vcombine.high %v53, %v53
    %v537 = vunpack.c.l.s4 1983009808
    %v538 = vunpack.c.0.s8 %v537
    %v539 = vlaneseq
    %v540 = vshrl.u32 %v539, 7
    %v541 = vsub.s32 %v538, %v540
    %v542 = vrot.slane %v53, %v541
    %v544 = vunpack.c.l.s4 1983009808
    %v545 = vunpack.c.0.s8 %v544
    %v546 = vlaneseq
    %v547 = vshrl.u32 %v546, 7
    %v548 = vsub.s32 %v545, %v547
    %v549 = vrot.slane %v535, %v548
    %v550 = vcombine.high %v542, %v542
    %v551 = vcombine.high %v54, %v54
    %v553 = vunpack.c.l.s4 1983009808
    %v554 = vunpack.c.0.s8 %v553
    %v555 = vlaneseq
    %v556 = vshrl.u32 %v555, 7
    %v557 = vsub.s32 %v554, %v556
    %v558 = vrot.slane %v54, %v557
    %v560 = vunpack.c.l.s4 1983009808
    %v561 = vunpack.c.0.s8 %v560
    %v562 = vlaneseq
    %v563 = vshrl.u32 %v562, 7
    %v564 = vsub.s32 %v561, %v563
    %v565 = vrot.slane %v551, %v564
    %v566 = vcombine.high %v558, %v558
    %v567 = vcombine.high %v565, %v565
    %v568 = vcombine.high %v55, %v55
    %v570 = vunpack.c.l.s4 1983009808
    %v571 = vunpack.c.0.s8 %v570
    %v572 = vlaneseq
    %v573 = vshrl.u32 %v572, 7
    %v574 = vsub.s32 %v571, %v573
    %v575 = vrot.slane %v55, %v574
    %v577 = vunpack.c.l.s4 1983009808
    %v578 = vunpack.c.0.s8 %v577
    %v579 = vlaneseq
    %v580 = vshrl.u32 %v579, 7
    %v581 = vsub.s32 %v578, %v580
    %v582 = vrot.slane %v568, %v581
    %v583 = vcombine.high %v575, %v575
    %v584 = vcombine.high %v582, %v582
    %v585 = vcombine.high %v56, %v56
    %v587 = vunpack.c.l.s4 1983009808
    %v588 = vunpack.c.0.s8 %v587
    %v589 = vlaneseq
    %v590 = vshrl.u32 %v589, 7
    %v591 = vsub.s32 %v588, %v590
    %v592 = vrot.slane %v56, %v591
    %v594 = vunpack.c.l.s4 1983009808
    %v595 = vunpack.c.0.s8 %v594
    %v596 = vlaneseq
    %v597 = vshrl.u32 %v596, 7
    %v598 = vsub.s32 %v595, %v597
    %v599 = vrot.slane %v585, %v598
    %v600 = vcombine.high %v592, %v592
    %v601 = vcombine.high %v57, %v57
    %v603 = vunpack.c.l.s4 1983009808
    %v604 = vunpack.c.0.s8 %v603
    %v605 = vlaneseq
    %v606 = vshrl.u32 %v605, 7
    %v607 = vsub.s32 %v604, %v606
    %v608 = vrot.slane %v57, %v607
    %v610 = vunpack.c.l.s4 1983009808
    %v611 = vunpack.c.0.s8 %v610
    %v612 = vlaneseq
    %v613 = vshrl.u32 %v612, 7
    %v614 = vsub.s32 %v611, %v613
    %v615 = vrot.slane %v601, %v614
    %v616 = vcombine.high %v608, %v608
    %v617 = vcombine.high %v615, %v615
    %v618 = vcombine.high %v58, %v58
    %v620 = vunpack.c.l.s4 1983009808
    %v621 = vunpack.c.0.s8 %v620
    %v622 = vlaneseq
    %v623 = vshrl.u32 %v622, 7
    %v624 = vsub.s32 %v621, %v623
    %v625 = vrot.slane %v58, %v624
    %v627 = vunpack.c.l.s4 1983009808
    %v628 = vunpack.c.0.s8 %v627
    %v629 = vlaneseq
    %v630 = vshrl.u32 %v629, 7
    %v631 = vsub.s32 %v628, %v630
    %v632 = vrot.slane %v618, %v631
    %v633 = vcombine.high %v625, %v625
    %v634 = vcombine.high %v632, %v632
    %v635 = vcombine.high %v59, %v59
    %v637 = vunpack.c.l.s4 1983009808
    %v638 = vunpack.c.0.s8 %v637
    %v639 = vlaneseq
    %v640 = vshrl.u32 %v639, 7
    %v641 = vsub.s32 %v638, %v640
    %v642 = vrot.slane %v59, %v641
    %v644 = vunpack.c.l.s4 1983009808
    %v645 = vunpack.c.0.s8 %v644
    %v646 = vlaneseq
    %v647 = vshrl.u32 %v646, 7
    %v648 = vsub.s32 %v645, %v647
    %v649 = vrot.slane %v635, %v648
    %v650 = vcombine.high %v642, %v642
    %v651 = vcombine.high %v60, %v60
    %v653 = vunpack.c.l.s4 1983009808
    %v654 = vunpack.c.0.s8 %v653
    %v655 = vlaneseq
    %v656 = vshrl.u32 %v655, 7
    %v657 = vsub.s32 %v654, %v656
    %v658 = vrot.slane %v60, %v657
    %v660 = vunpack.c.l.s4 1983009808
    %v661 = vunpack.c.0.s8 %v660
    %v662 = vlaneseq
    %v663 = vshrl.u32 %v662, 7
    %v664 = vsub.s32 %v661, %v663
    %v665 = vrot.slane %v651, %v664
    %v666 = vcombine.high %v658, %v658
    %v667 = vcombine.high %v665, %v665
    %v668 = vcombine.high %v61, %v61
    %v670 = vunpack.c.l.s4 1983009808
    %v671 = vunpack.c.0.s8 %v670
    %v672 = vlaneseq
    %v673 = vshrl.u32 %v672, 7
    %v674 = vsub.s32 %v671, %v673
    %v675 = vrot.slane %v61, %v674
    %v677 = vunpack.c.l.s4 1983009808
    %v678 = vunpack.c.0.s8 %v677
    %v679 = vlaneseq
    %v680 = vshrl.u32 %v679, 7
    %v681 = vsub.s32 %v678, %v680
    %v682 = vrot.slane %v668, %v681
    %v683 = vcombine.high %v675, %v675
    %v684 = vcombine.high %v682, %v682
    %v685 = vcombine.high %v62, %v62
    %v687 = vunpack.c.l.s4 1983009808
    %v688 = vunpack.c.0.s8 %v687
    %v689 = vlaneseq
    %v690 = vshrl.u32 %v689, 7
    %v691 = vsub.s32 %v688, %v690
    %v692 = vrot.slane %v62, %v691
    %v694 = vunpack.c.l.s4 1983009808
    %v695 = vunpack.c.0.s8 %v694
    %v696 = vlaneseq
    %v697 = vshrl.u32 %v696, 7
    %v698 = vsub.s32 %v695, %v697
    %v699 = vrot.slane %v685, %v698
    %v700 = vcombine.high %v692, %v692
    %v701 = vcombine.high %v63, %v63
    %v703 = vunpack.c.l.s4 1983009808
    %v704 = vunpack.c.0.s8 %v703
    %v705 = vlaneseq
    %v706 = vshrl.u32 %v705, 7
    %v707 = vsub.s32 %v704, %v706
    %v708 = vrot.slane %v63, %v707
    %v710 = vunpack.c.l.s4 1983009808
    %v711 = vunpack.c.0.s8 %v710
    %v712 = vlaneseq
    %v713 = vshrl.u32 %v712, 7
    %v714 = vsub.s32 %v711, %v713
    %v715 = vrot.slane %v701, %v714
    %v716 = vcombine.high %v708, %v708
    %v717 = vcombine.high %v715, %v715
    %v718 = vcombine.high %v64, %v64
    %v720 = vunpack.c.l.s4 1983009808
    %v721 = vunpack.c.0.s8 %v720
    %v722 = vlaneseq
    %v723 = vshrl.u32 %v722, 7
    %v724 = vsub.s32 %v721, %v723
    %v725 = vrot.slane %v64, %v724
    %v727 = vunpack.c.l.s4 1983009808
    %v728 = vunpack.c.0.s8 %v727
    %v729 = vlaneseq
    %v730 = vshrl.u32 %v729, 7
    %v731 = vsub.s32 %v728, %v730
    %v732 = vrot.slane %v718, %v731
    %v733 = vcombine.high %v725, %v725
    %v734 = vcombine.high %v732, %v732
    %v735 = vcombine.high %v65, %v65
    %v737 = vunpack.c.l.s4 1983009808
    %v738 = vunpack.c.0.s8 %v737
    %v739 = vlaneseq
    %v740 = vshrl.u32 %v739, 7
    %v741 = vsub.s32 %v738, %v740
    %v742 = vrot.slane %v65, %v741
    %v744 = vunpack.c.l.s4 1983009808
    %v745 = vunpack.c.0.s8 %v744
    %v746 = vlaneseq
    %v747 = vshrl.u32 %v746, 7
    %v748 = vsub.s32 %v745, %v747
    %v749 = vrot.slane %v735, %v748
    %v750 = vcombine.high %v742, %v742
    %v751 = vcombine.high %v66, %v66
    %v753 = vunpack.c.l.s4 1983009808
    %v754 = vunpack.c.0.s8 %v753
    %v755 = vlaneseq
    %v756 = vshrl.u32 %v755, 7
    %v757 = vsub.s32 %v754, %v756
    %v758 = vrot.slane %v66, %v757
    %v760 = vunpack.c.l.s4 1983009808
    %v761 = vunpack.c.0.s8 %v760
    %v762 = vlaneseq
    %v763 = vshrl.u32 %v762, 7
    %v764 = vsub.s32 %v761, %v763
    %v765 = vrot.slane %v751, %v764
    %v766 = vcombine.high %v758, %v758
    %v767 = vcombine.high %v765, %v765
    %v768 = vcombine.high %v67, %v67
    %v770 = vunpack.c.l.s4 1983009808
    %v771 = vunpack.c.0.s8 %v770
    %v772 = vlaneseq
    %v773 = vshrl.u32 %v772, 7
    %v774 = vsub.s32 %v771, %v773
    %v775 = vrot.slane %v67, %v774
    %v777 = vunpack.c.l.s4 1983009808
    %v778 = vunpack.c.0.s8 %v777
    %v779 = vlaneseq
    %v780 = vshrl.u32 %v779, 7
    %v781 = vsub.s32 %v778, %v780
    %v782 = vrot.slane %v768, %v781
    %v783 = vcombine.high %v775, %v775
    %v784 = vcombine.high %v782, %v782
    %v785 = vcombine.high %v68, %v68
    %v787 = vunpack.c.l.s4 1983009808
    %v788 = vunpack.c.0.s8 %v787
    %v789 = vlaneseq
    %v790 = vshrl.u32 %v789, 7
    %v791 = vsub.s32 %v788, %v790
    %v792 = vrot.slane %v68, %v791
    %v794 = vunpack.c.l.s4 1983009808
    %v795 = vunpack.c.0.s8 %v794
    %v796 = vlaneseq
    %v797 = vshrl.u32 %v796, 7
    %v798 = vsub.s32 %v795, %v797
    %v799 = vrot.slane %v785, %v798
    %v800 = vcombine.high %v792, %v792
    %v801 = vcombine.high %v69, %v69
    %v803 = vunpack.c.l.s4 1983009808
    %v804 = vunpack.c.0.s8 %v803
    %v805 = vlaneseq
    %v806 = vshrl.u32 %v805, 7
    %v807 = vsub.s32 %v804, %v806
    %v808 = vrot.slane %v69, %v807
    %v810 = vunpack.c.l.s4 1983009808
    %v811 = vunpack.c.0.s8 %v810
    %v812 = vlaneseq
    %v813 = vshrl.u32 %v812, 7
    %v814 = vsub.s32 %v811, %v813
    %v815 = vrot.slane %v801, %v814
    %v816 = vcombine.high %v808, %v808
    %v817 = vcombine.high %v815, %v815
    %v818 = vcombine.high %v70, %v70
    %v820 = vunpack.c.l.s4 1983009808
    %v821 = vunpack.c.0.s8 %v820
    %v822 = vlaneseq
    %v823 = vshrl.u32 %v822, 7
    %v824 = vsub.s32 %v821, %v823
    %v825 = vrot.slane %v70, %v824
    %v827 = vunpack.c.l.s4 1983009808
    %v828 = vunpack.c.0.s8 %v827
    %v829 = vlaneseq
    %v830 = vshrl.u32 %v829, 7
    %v831 = vsub.s32 %v828, %v830
    %v832 = vrot.slane %v818, %v831
    %v833 = vcombine.high %v825, %v825
    %v834 = vcombine.high %v832, %v832
    %v835 = vcombine.high %v71, %v71
    %v837 = vunpack.c.l.s4 1983009808
    %v838 = vunpack.c.0.s8 %v837
    %v839 = vlaneseq
    %v840 = vshrl.u32 %v839, 7
    %v841 = vsub.s32 %v838, %v840
    %v842 = vrot.slane %v71, %v841
    %v844 = vunpack.c.l.s4 1983009808
    %v845 = vunpack.c.0.s8 %v844
    %v846 = vlaneseq
    %v847 = vshrl.u32 %v846, 7
    %v848 = vsub.s32 %v845, %v847
    %v849 = vrot.slane %v835, %v848
    %v850 = vcombine.high %v842, %v842
    %v851 = vcombine.high %v72, %v72
    %v853 = vunpack.c.l.s4 1983009808
    %v854 = vunpack.c.0.s8 %v853
    %v855 = vlaneseq
    %v856 = vshrl.u32 %v855, 7
    %v857 = vsub.s32 %v854, %v856
    %v858 = vrot.slane %v72, %v857
    %v860 = vunpack.c.l.s4 1983009808
    %v861 = vunpack.c.0.s8 %v860
    %v862 = vlaneseq
    %v863 = vshrl.u32 %v862, 7
    %v864 = vsub.s32 %v861, %v863
    %v865 = vrot.slane %v851, %v864
    %v866 = vcombine.high %v858, %v858
    %v867 = vcombine.high %v865, %v865
    %v868 = vcombine.high %v73, %v73
    %v870 = vunpack.c.l.s4 1983009808
    %v871 = vunpack.c.0.s8 %v870
    %v872 = vlaneseq
    %v873 = vshrl.u32 %v872, 7
    %v874 = vsub.s32 %v871, %v873
    %v875 = vrot.slane %v73, %v874
    %v877 = vunpack.c.l.s4 1983009808
    %v878 = vunpack.c.0.s8 %v877
    %v879 = vlaneseq
    %v880 = vshrl.u32 %v879, 7
    %v881 = vsub.s32 %v878, %v880
    %v882 = vrot.slane %v868, %v881
    %v883 = vcombine.high %v875, %v875
    %v884 = vcombine.high %v882, %v882
    %v885 = vcombine.high %v74, %v74
    %v887 = vunpack.c.l.s4 1983009808
    %v888 = vunpack.c.0.s8 %v887
    %v889 = vlaneseq
    %v890 = vshrl.u32 %v889, 7
    %v891 = vsub.s32 %v888, %v890
    %v892 = vrot.slane %v74, %v891
    %v894 = vunpack.c.l.s4 1983009808
    %v895 = vunpack.c.0.s8 %v894
    %v896 = vlaneseq
    %v897 = vshrl.u32 %v896, 7
    %v898 = vsub.s32 %v895, %v897
    %v899 = vrot.slane %v885, %v898
    %v900 = vcombine.high %v892, %v892
    %v901 = vcombine.high %v75, %v75
    %v903 = vunpack.c.l.s4 1983009808
    %v904 = vunpack.c.0.s8 %v903
    %v905 = vlaneseq
    %v906 = vshrl.u32 %v905, 7
    %v907 = vsub.s32 %v904, %v906
    %v908 = vrot.slane %v75, %v907
    %v910 = vunpack.c.l.s4 1983009808
    %v911 = vunpack.c.0.s8 %v910
    %v912 = vlaneseq
    %v913 = vshrl.u32 %v912, 7
    %v914 = vsub.s32 %v911, %v913
    %v915 = vrot.slane %v901, %v914
    %v916 = vcombine.high %v908, %v908
    %v917 = vcombine.high %v915, %v915
    %v918 = vcombine.high %v76, %v76
    %v920 = vunpack.c.l.s4 1983009808
    %v921 = vunpack.c.0.s8 %v920
    %v922 = vlaneseq
    %v923 = vshrl.u32 %v922, 7
    %v924 = vsub.s32 %v921, %v923
    %v925 = vrot.slane %v76, %v924
    %v927 = vunpack.c.l.s4 1983009808
    %v928 = vunpack.c.0.s8 %v927
    %v929 = vlaneseq
    %v930 = vshrl.u32 %v929, 7
    %v931 = vsub.s32 %v928, %v930
    %v932 = vrot.slane %v918, %v931
    %v933 = vcombine.high %v925, %v925
    %v934 = vcombine.high %v932, %v932
    %v935 = vcombine.high %v77, %v77
    %v937 = vunpack.c.l.s4 1983009808
    %v938 = vunpack.c.0.s8 %v937
    %v939 = vlaneseq
    %v940 = vshrl.u32 %v939, 7
    %v941 = vsub.s32 %v938, %v940
    %v942 = vrot.slane %v77, %v941
    %v944 = vunpack.c.l.s4 1983009808
    %v945 = vunpack.c.0.s8 %v944
    %v946 = vlaneseq
    %v947 = vshrl.u32 %v946, 7
    %v948 = vsub.s32 %v945, %v947
    %v949 = vrot.slane %v935, %v948
    %v950 = vcombine.high %v942, %v942
    %v951 = vcombine.high %v78, %v78
    %v953 = vunpack.c.l.s4 1983009808
    %v954 = vunpack.c.0.s8 %v953
    %v955 = vlaneseq
    %v956 = vshrl.u32 %v955, 7
    %v957 = vsub.s32 %v954, %v956
    %v958 = vrot.slane %v78, %v957
    %v960 = vunpack.c.l.s4 1983009808
    %v961 = vunpack.c.0.s8 %v960
    %v962 = vlaneseq
    %v963 = vshrl.u32 %v962, 7
    %v964 = vsub.s32 %v961, %v963
    %v965 = vrot.slane %v951, %v964
    %v966 = vcombine.high %v958, %v958
    %v967 = vcombine.high %v965, %v965
    %v968 = vcombine.high %v79, %v79
    %v970 = vunpack.c.l.s4 1983009808
    %v971 = vunpack.c.0.s8 %v970
    %v972 = vlaneseq
    %v973 = vshrl.u32 %v972, 7
    %v974 = vsub.s32 %v971, %v973
    %v975 = vrot.slane %v79, %v974
    %v977 = vunpack.c.l.s4 1983009808
    %v978 = vunpack.c.0.s8 %v977
    %v979 = vlaneseq
    %v980 = vshrl.u32 %v979, 7
    %v981 = vsub.s32 %v978, %v980
    %v982 = vrot.slane %v968, %v981
    %v983 = vcombine.high %v975, %v975
    %v984 = vcombine.high %v982, %v982
    %v985 = vcombine.high %v80, %v80
    %v987 = vunpack.c.l.s4 1983009808
    %v988 = vunpack.c.0.s8 %v987
    %v989 = vlaneseq
    %v990 = vshrl.u32 %v989, 7
    %v991 = vsub.s32 %v988, %v990
    %v992 = vrot.slane %v80, %v991
    %v994 = vunpack.c.l.s4 1983009808
    %v995 = vunpack.c.0.s8 %v994
    %v996 = vlaneseq
    %v997 = vshrl.u32 %v996, 7
    %v998 = vsub.s32 %v995, %v997
    %v999 = vrot.slane %v985, %v998
    %v1000 = vcombine.high %v992, %v992
    %v1001 = vcombine.high %v81, %v81
    %v1003 = vunpack.c.l.s4 1983009808
    %v1004 = vunpack.c.0.s8 %v1003
    %v1005 = vlaneseq
    %v1006 = vshrl.u32 %v1005, 7
    %v1007 = vsub.s32 %v1004, %v1006
    %v1008 = vrot.slane %v81, %v1007
    %v1010 = vunpack.c.l.s4 1983009808
    %v1011 = vunpack.c.0.s8 %v1010
    %v1012 = vlaneseq
    %v1013 = vshrl.u32 %v1012, 7
    %v1014 = vsub.s32 %v1011, %v1013
    %v1015 = vrot.slane %v1001, %v1014
    %v1016 = vcombine.high %v1008, %v1008
    %v1017 = vcombine.high %v1015, %v1015
    %v1018 = vcombine.high %v82, %v82
    %v1020 = vunpack.c.l.s4 1983009808
    %v1021 = vunpack.c.0.s8 %v1020
    %v1022 = vlaneseq
    %v1023 = vshrl.u32 %v1022, 7
    %v1024 = vsub.s32 %v1021, %v1023
    %v1025 = vrot.slane %v82, %v1024
    %v1027 = vunpack.c.l.s4 1983009808
    %v1028 = vunpack.c.0.s8 %v1027
    %v1029 = vlaneseq
    %v1030 = vshrl.u32 %v1029, 7
    %v1031 = vsub.s32 %v1028, %v1030
    %v1032 = vrot.slane %v1018, %v1031
    %v1033 = vcombine.high %v1025, %v1025
    %v1034 = vcombine.high %v1032, %v1032
    %v1035 = vcombine.high %v83, %v83
    %v1037 = vunpack.c.l.s4 1983009808
    %v1038 = vunpack.c.0.s8 %v1037
    %v1039 = vlaneseq
    %v1040 = vshrl.u32 %v1039, 7
    %v1041 = vsub.s32 %v1038, %v1040
    %v1042 = vrot.slane %v83, %v1041
    %v1044 = vunpack.c.l.s4 1983009808
    %v1045 = vunpack.c.0.s8 %v1044
    %v1046 = vlaneseq
    %v1047 = vshrl.u32 %v1046, 7
    %v1048 = vsub.s32 %v1045, %v1047
    %v1049 = vrot.slane %v1035, %v1048
    %v1050 = vcombine.high %v1042, %v1042
    %v1051 = vcombine.high %v84, %v84
    %v1053 = vunpack.c.l.s4 1983009808
    %v1054 = vunpack.c.0.s8 %v1053
    %v1055 = vlaneseq
    %v1056 = vshrl.u32 %v1055, 7
    %v1057 = vsub.s32 %v1054, %v1056
    %v1058 = vrot.slane %v84, %v1057
    %v1060 = vunpack.c.l.s4 1983009808
    %v1061 = vunpack.c.0.s8 %v1060
    %v1062 = vlaneseq
    %v1063 = vshrl.u32 %v1062, 7
    %v1064 = vsub.s32 %v1061, %v1063
    %v1065 = vrot.slane %v1051, %v1064
    %v1066 = vcombine.high %v1058, %v1058
    %v1067 = vcombine.high %v1065, %v1065
    %v1068 = vcombine.high %v85, %v85
    %v1070 = vunpack.c.l.s4 1983009808
    %v1071 = vunpack.c.0.s8 %v1070
    %v1072 = vlaneseq
    %v1073 = vshrl.u32 %v1072, 7
    %v1074 = vsub.s32 %v1071, %v1073
    %v1075 = vrot.slane %v85, %v1074
    %v1077 = vunpack.c.l.s4 1983009808
    %v1078 = vunpack.c.0.s8 %v1077
    %v1079 = vlaneseq
    %v1080 = vshrl.u32 %v1079, 7
    %v1081 = vsub.s32 %v1078, %v1080
    %v1082 = vrot.slane %v1068, %v1081
    %v1083 = vcombine.high %v1075, %v1075
    %v1084 = vcombine.high %v1082, %v1082
    %v1085 = vcombine.high %v86, %v86
    %v1087 = vunpack.c.l.s4 1983009808
    %v1088 = vunpack.c.0.s8 %v1087
    %v1089 = vlaneseq
    %v1090 = vshrl.u32 %v1089, 7
    %v1091 = vsub.s32 %v1088, %v1090
    %v1092 = vrot.slane %v86, %v1091
    %v1094 = vunpack.c.l.s4 1983009808
    %v1095 = vunpack.c.0.s8 %v1094
    %v1096 = vlaneseq
    %v1097 = vshrl.u32 %v1096, 7
    %v1098 = vsub.s32 %v1095, %v1097
    %v1099 = vrot.slane %v1085, %v1098
    %v1100 = vcombine.high %v1092, %v1092
    %v1101 = vcombine.high %v87, %v87
    %v1103 = vunpack.c.l.s4 1983009808
    %v1104 = vunpack.c.0.s8 %v1103
    %v1105 = vlaneseq
    %v1106 = vshrl.u32 %v1105, 7
    %v1107 = vsub.s32 %v1104, %v1106
    %v1108 = vrot.slane %v87, %v1107
    %v1110 = vunpack.c.l.s4 1983009808
    %v1111 = vunpack.c.0.s8 %v1110
    %v1112 = vlaneseq
    %v1113 = vshrl.u32 %v1112, 7
    %v1114 = vsub.s32 %v1111, %v1113
    %v1115 = vrot.slane %v1101, %v1114
    %v1116 = vcombine.high %v1108, %v1108
    %v1117 = vcombine.high %v1115, %v1115
    %v1118 = vcombine.high %v88, %v88
    %v1120 = vunpack.c.l.s4 1983009808
    %v1121 = vunpack.c.0.s8 %v1120
    %v1122 = vlaneseq
    %v1123 = vshrl.u32 %v1122, 7
    %v1124 = vsub.s32 %v1121, %v1123
    %v1125 = vrot.slane %v88, %v1124
    %v1127 = vunpack.c.l.s4 1983009808
    %v1128 = vunpack.c.0.s8 %v1127
    %v1129 = vlaneseq
    %v1130 = vshrl.u32 %v1129, 7
    %v1131 = vsub.s32 %v1128, %v1130
    %v1132 = vrot.slane %v1118, %v1131
    %v1133 = vcombine.high %v1125, %v1125
    %v1134 = vcombine.high %v1132, %v1132
    %v1135 = vcombine.high %v89, %v89
    %v1137 = vunpack.c.l.s4 1983009808
    %v1138 = vunpack.c.0.s8 %v1137
    %v1139 = vlaneseq
    %v1140 = vshrl.u32 %v1139, 7
    %v1141 = vsub.s32 %v1138, %v1140
    %v1142 = vrot.slane %v89, %v1141
    %v1144 = vunpack.c.l.s4 1983009808
    %v1145 = vunpack.c.0.s8 %v1144
    %v1146 = vlaneseq
    %v1147 = vshrl.u32 %v1146, 7
    %v1148 = vsub.s32 %v1145, %v1147
    %v1149 = vrot.slane %v1135, %v1148
    %v1150 = vcombine.high %v1142, %v1142
    %v1151 = vcombine.high %v90, %v90
    %v1153 = vunpack.c.l.s4 1983009808
    %v1154 = vunpack.c.0.s8 %v1153
    %v1155 = vlaneseq
    %v1156 = vshrl.u32 %v1155, 7
    %v1157 = vsub.s32 %v1154, %v1156
    %v1158 = vrot.slane %v90, %v1157
    %v1160 = vunpack.c.l.s4 1983009808
    %v1161 = vunpack.c.0.s8 %v1160
    %v1162 = vlaneseq
    %v1163 = vshrl.u32 %v1162, 7
    %v1164 = vsub.s32 %v1161, %v1163
    %v1165 = vrot.slane %v1151, %v1164
    %v1166 = vcombine.high %v1158, %v1158
    %v1167 = vcombine.high %v1165, %v1165
    %v1168 = vcombine.high %v91, %v91
    %v1170 = vunpack.c.l.s4 1983009808
    %v1171 = vunpack.c.0.s8 %v1170
    %v1172 = vlaneseq
    %v1173 = vshrl.u32 %v1172, 7
    %v1174 = vsub.s32 %v1171, %v1173
    %v1175 = vrot.slane %v91, %v1174
    %v1177 = vunpack.c.l.s4 1983009808
    %v1178 = vunpack.c.0.s8 %v1177
    %v1179 = vlaneseq
    %v1180 = vshrl.u32 %v1179, 7
    %v1181 = vsub.s32 %v1178, %v1180
    %v1182 = vrot.slane %v1168, %v1181
    %v1183 = vcombine.high %v1175, %v1175
    %v1184 = vcombine.high %v1182, %v1182
    %v1185 = vcombine.high %v92, %v92
    %v1187 = vunpack.c.l.s4 1983009808
    %v1188 = vunpack.c.0.s8 %v1187
    %v1189 = vlaneseq
    %v1190 = vshrl.u32 %v1189, 7
    %v1191 = vsub.s32 %v1188, %v1190
    %v1192 = vrot.slane %v92, %v1191
    %v1194 = vunpack.c.l.s4 1983009808
    %v1195 = vunpack.c.0.s8 %v1194
    %v1196 = vlaneseq
    %v1197 = vshrl.u32 %v1196, 7
    %v1198 = vsub.s32 %v1195, %v1197
    %v1199 = vrot.slane %v1185, %v1198
    %v1200 = vcombine.high %v1192, %v1192
    %v1201 = vcombine.high %v93, %v93
    %v1203 = vunpack.c.l.s4 1983009808
    %v1204 = vunpack.c.0.s8 %v1203
    %v1205 = vlaneseq
    %v1206 = vshrl.u32 %v1205, 7
    %v1207 = vsub.s32 %v1204, %v1206
    %v1208 = vrot.slane %v93, %v1207
    %v1210 = vunpack.c.l.s4 1983009808
    %v1211 = vunpack.c.0.s8 %v1210
    %v1212 = vlaneseq
    %v1213 = vshrl.u32 %v1212, 7
    %v1214 = vsub.s32 %v1211, %v1213
    %v1215 = vrot.slane %v1201, %v1214
    %v1216 = vcombine.high %v1208, %v1208
    %v1217 = vcombine.high %v1215, %v1215
    %v1218 = vcombine.high %v94, %v94
    %v1220 = vunpack.c.l.s4 1983009808
    %v1221 = vunpack.c.0.s8 %v1220
    %v1222 = vlaneseq
    %v1223 = vshrl.u32 %v1222, 7
    %v1224 = vsub.s32 %v1221, %v1223
    %v1225 = vrot.slane %v94, %v1224
    %v1227 = vunpack.c.l.s4 1983009808
    %v1228 = vunpack.c.0.s8 %v1227
    %v1229 = vlaneseq
    %v1230 = vshrl.u32 %v1229, 7
    %v1231 = vsub.s32 %v1228, %v1230
    %v1232 = vrot.slane %v1218, %v1231
    %v1233 = vcombine.high %v1225, %v1225
    %v1234 = vcombine.high %v1232, %v1232
    %v1235 = vcombine.high %v95, %v95
    %v1237 = vunpack.c.l.s4 1983009808
    %v1238 = vunpack.c.0.s8 %v1237
    %v1239 = vlaneseq
    %v1240 = vshrl.u32 %v1239, 7
    %v1241 = vsub.s32 %v1238, %v1240
    %v1242 = vrot.slane %v95, %v1241
    %v1244 = vunpack.c.l.s4 1983009808
    %v1245 = vunpack.c.0.s8 %v1244
    %v1246 = vlaneseq
    %v1247 = vshrl.u32 %v1246, 7
    %v1248 = vsub.s32 %v1245, %v1247
    %v1249 = vrot.slane %v1235, %v1248
    %v1250 = vcombine.high %v1242, %v1242
    %v1251 = vcombine.high %v96, %v96
    %v1253 = vunpack.c.l.s4 1983009808
    %v1254 = vunpack.c.0.s8 %v1253
    %v1255 = vlaneseq
    %v1256 = vshrl.u32 %v1255, 7
    %v1257 = vsub.s32 %v1254, %v1256
    %v1258 = vrot.slane %v96, %v1257
    %v1260 = vunpack.c.l.s4 1983009808
    %v1261 = vunpack.c.0.s8 %v1260
    %v1262 = vlaneseq
    %v1263 = vshrl.u32 %v1262, 7
    %v1264 = vsub.s32 %v1261, %v1263
    %v1265 = vrot.slane %v1251, %v1264
    %v1266 = vcombine.high %v1258, %v1258
    %v1267 = vcombine.high %v1265, %v1265
    %v1268 = vcombine.high %v97, %v97
    %v1270 = vunpack.c.l.s4 1983009808
    %v1271 = vunpack.c.0.s8 %v1270
    %v1272 = vlaneseq
    %v1273 = vshrl.u32 %v1272, 7
    %v1274 = vsub.s32 %v1271, %v1273
    %v1275 = vrot.slane %v97, %v1274
    %v1277 = vunpack.c.l.s4 1983009808
    %v1278 = vunpack.c.0.s8 %v1277
    %v1279 = vlaneseq
    %v1280 = vshrl.u32 %v1279, 7
    %v1281 = vsub.s32 %v1278, %v1280
    %v1282 = vrot.slane %v1268, %v1281
    %v1283 = vcombine.high %v1275, %v1275
    %v1284 = vcombine.high %v1282, %v1282
    %v1285 = vcombine.high %v98, %v98
    %v1287 = vunpack.c.l.s4 1983009808
    %v1288 = vunpack.c.0.s8 %v1287
    %v1289 = vlaneseq
    %v1290 = vshrl.u32 %v1289, 7
    %v1291 = vsub.s32 %v1288, %v1290
    %v1292 = vrot.slane %v98, %v1291
    %v1294 = vunpack.c.l.s4 1983009808
    %v1295 = vunpack.c.0.s8 %v1294
    %v1296 = vlaneseq
    %v1297 = vshrl.u32 %v1296, 7
    %v1298 = vsub.s32 %v1295, %v1297
    %v1299 = vrot.slane %v1285, %v1298
    %v1300 = vcombine.high %v1292, %v1292
    %v1301 = vcombine.high %v99, %v99
    %v1303 = vunpack.c.l.s4 1983009808
    %v1304 = vunpack.c.0.s8 %v1303
    %v1305 = vlaneseq
    %v1306 = vshrl.u32 %v1305, 7
    %v1307 = vsub.s32 %v1304, %v1306
    %v1308 = vrot.slane %v99, %v1307
    %v1310 = vunpack.c.l.s4 1983009808
    %v1311 = vunpack.c.0.s8 %v1310
    %v1312 = vlaneseq
    %v1313 = vshrl.u32 %v1312, 7
    %v1314 = vsub.s32 %v1311, %v1313
    %v1315 = vrot.slane %v1301, %v1314
    %v1316 = vcombine.high %v1308, %v1308
    %v1317 = vcombine.high %v1315, %v1315
    %v1318 = vcombine.high %v100, %v100
    %v1320 = vunpack.c.l.s4 1983009808
    %v1321 = vunpack.c.0.s8 %v1320
    %v1322 = vlaneseq
    %v1323 = vshrl.u32 %v1322, 7
    %v1324 = vsub.s32 %v1321, %v1323
    %v1325 = vrot.slane %v100, %v1324
    %v1327 = vunpack.c.l.s4 1983009808
    %v1328 = vunpack.c.0.s8 %v1327
    %v1329 = vlaneseq
    %v1330 = vshrl.u32 %v1329, 7
    %v1331 = vsub.s32 %v1328, %v1330
    %v1332 = vrot.slane %v1318, %v1331
    %v1333 = vcombine.high %v1325, %v1325
    %v1334 = vcombine.high %v1332, %v1332
    %v1335 = vcombine.high %v101, %v101
    %v1337 = vunpack.c.l.s4 1983009808
    %v1338 = vunpack.c.0.s8 %v1337
    %v1339 = vlaneseq
    %v1340 = vshrl.u32 %v1339, 7
    %v1341 = vsub.s32 %v1338, %v1340
    %v1342 = vrot.slane %v101, %v1341
    %v1344 = vunpack.c.l.s4 1983009808
    %v1345 = vunpack.c.0.s8 %v1344
    %v1346 = vlaneseq
    %v1347 = vshrl.u32 %v1346, 7
    %v1348 = vsub.s32 %v1345, %v1347
    %v1349 = vrot.slane %v1335, %v1348
    %v1350 = vcombine.high %v1342, %v1342
    %v1351 = vcombine.high %v102, %v102
    %v1353 = vunpack.c.l.s4 1983009808
    %v1354 = vunpack.c.0.s8 %v1353
    %v1355 = vlaneseq
    %v1356 = vshrl.u32 %v1355, 7
    %v1357 = vsub.s32 %v1354, %v1356
    %v1358 = vrot.slane %v102, %v1357
    %v1360 = vunpack.c.l.s4 1983009808
    %v1361 = vunpack.c.0.s8 %v1360
    %v1362 = vlaneseq
    %v1363 = vshrl.u32 %v1362, 7
    %v1364 = vsub.s32 %v1361, %v1363
    %v1365 = vrot.slane %v1351, %v1364
    %v1366 = vcombine.high %v1358, %v1358
    %v1367 = vcombine.high %v1365, %v1365
    %v1368 = vcombine.high %v103, %v103
    %v1370 = vunpack.c.l.s4 1983009808
    %v1371 = vunpack.c.0.s8 %v1370
    %v1372 = vlaneseq
    %v1373 = vshrl.u32 %v1372, 7
    %v1374 = vsub.s32 %v1371, %v1373
    %v1375 = vrot.slane %v103, %v1374
    %v1377 = vunpack.c.l.s4 1983009808
    %v1378 = vunpack.c.0.s8 %v1377
    %v1379 = vlaneseq
    %v1380 = vshrl.u32 %v1379, 7
    %v1381 = vsub.s32 %v1378, %v1380
    %v1382 = vrot.slane %v1368, %v1381
    %v1383 = vcombine.high %v1375, %v1375
    %v1384 = vcombine.high %v1382, %v1382
    %v1385 = vcombine.high %v104, %v104
    %v1387 = vunpack.c.l.s4 1983009808
    %v1388 = vunpack.c.0.s8 %v1387
    %v1389 = vlaneseq
    %v1390 = vshrl.u32 %v1389, 7
    %v1391 = vsub.s32 %v1388, %v1390
    %v1392 = vrot.slane %v104, %v1391
    %v1394 = vunpack.c.l.s4 1983009808
    %v1395 = vunpack.c.0.s8 %v1394
    %v1396 = vlaneseq
    %v1397 = vshrl.u32 %v1396, 7
    %v1398 = vsub.s32 %v1395, %v1397
    %v1399 = vrot.slane %v1385, %v1398
    %v1400 = vcombine.high %v1392, %v1392
    %v1401 = vcombine.high %v105, %v105
    %v1403 = vunpack.c.l.s4 1983009808
    %v1404 = vunpack.c.0.s8 %v1403
    %v1405 = vlaneseq
    %v1406 = vshrl.u32 %v1405, 7
    %v1407 = vsub.s32 %v1404, %v1406
    %v1408 = vrot.slane %v105, %v1407
    %v1410 = vunpack.c.l.s4 1983009808
    %v1411 = vunpack.c.0.s8 %v1410
    %v1412 = vlaneseq
    %v1413 = vshrl.u32 %v1412, 7
    %v1414 = vsub.s32 %v1411, %v1413
    %v1415 = vrot.slane %v1401, %v1414
    %v1416 = vcombine.high %v1408, %v1408
    %v1417 = vcombine.high %v1415, %v1415
    %v1418 = vcombine.high %v106, %v106
    %v1420 = vunpack.c.l.s4 1983009808
    %v1421 = vunpack.c.0.s8 %v1420
    %v1422 = vlaneseq
    %v1423 = vshrl.u32 %v1422, 7
    %v1424 = vsub.s32 %v1421, %v1423
    %v1425 = vrot.slane %v106, %v1424
    %v1427 = vunpack.c.l.s4 1983009808
    %v1428 = vunpack.c.0.s8 %v1427
    %v1429 = vlaneseq
    %v1430 = vshrl.u32 %v1429, 7
    %v1431 = vsub.s32 %v1428, %v1430
    %v1432 = vrot.slane %v1418, %v1431
    %v1433 = vcombine.high %v1425, %v1425
    %v1434 = vcombine.high %v1432, %v1432
    %v1435 = vcombine.high %v107, %v107
    %v1437 = vunpack.c.l.s4 1983009808
    %v1438 = vunpack.c.0.s8 %v1437
    %v1439 = vlaneseq
    %v1440 = vshrl.u32 %v1439, 7
    %v1441 = vsub.s32 %v1438, %v1440
    %v1442 = vrot.slane %v107, %v1441
    %v1444 = vunpack.c.l.s4 1983009808
    %v1445 = vunpack.c.0.s8 %v1444
    %v1446 = vlaneseq
    %v1447 = vshrl.u32 %v1446, 7
    %v1448 = vsub.s32 %v1445, %v1447
    %v1449 = vrot.slane %v1435, %v1448
    %v1450 = vcombine.high %v1442, %v1442
    %v1451 = vcombine.high %v108, %v108
    %v1453 = vunpack.c.l.s4 1983009808
    %v1454 = vunpack.c.0.s8 %v1453
    %v1455 = vlaneseq
    %v1456 = vshrl.u32 %v1455, 7
    %v1457 = vsub.s32 %v1454, %v1456
    %v1458 = vrot.slane %v108, %v1457
    %v1460 = vunpack.c.l.s4 1983009808
    %v1461 = vunpack.c.0.s8 %v1460
    %v1462 = vlaneseq
    %v1463 = vshrl.u32 %v1462, 7
    %v1464 = vsub.s32 %v1461, %v1463
    %v1465 = vrot.slane %v1451, %v1464
    %v1466 = vcombine.high %v1458, %v1458
    %v1467 = vcombine.high %v1465, %v1465
    %v1468 = vcombine.high %v109, %v109
    %v1470 = vunpack.c.l.s4 1983009808
    %v1471 = vunpack.c.0.s8 %v1470
    %v1472 = vlaneseq
    %v1473 = vshrl.u32 %v1472, 7
    %v1474 = vsub.s32 %v1471, %v1473
    %v1475 = vrot.slane %v109, %v1474
    %v1477 = vunpack.c.l.s4 1983009808
    %v1478 = vunpack.c.0.s8 %v1477
    %v1479 = vlaneseq
    %v1480 = vshrl.u32 %v1479, 7
    %v1481 = vsub.s32 %v1478, %v1480
    %v1482 = vrot.slane %v1468, %v1481
    %v1483 = vcombine.high %v1475, %v1475
    %v1484 = vcombine.high %v1482, %v1482
    %v1485 = vcombine.high %v110, %v110
    %v1487 = vunpack.c.l.s4 1983009808
    %v1488 = vunpack.c.0.s8 %v1487
    %v1489 = vlaneseq
    %v1490 = vshrl.u32 %v1489, 7
    %v1491 = vsub.s32 %v1488, %v1490
    %v1492 = vrot.slane %v110, %v1491
    %v1494 = vunpack.c.l.s4 1983009808
    %v1495 = vunpack.c.0.s8 %v1494
    %v1496 = vlaneseq
    %v1497 = vshrl.u32 %v1496, 7
    %v1498 = vsub.s32 %v1495, %v1497
    %v1499 = vrot.slane %v1485, %v1498
    %v1500 = vcombine.high %v1492, %v1492
    %v1501 = vcombine.high %v111, %v111
    %v1503 = vunpack.c.l.s4 1983009808
    %v1504 = vunpack.c.0.s8 %v1503
    %v1505 = vlaneseq
    %v1506 = vshrl.u32 %v1505, 7
    %v1507 = vsub.s32 %v1504, %v1506
    %v1508 = vrot.slane %v111, %v1507
    %v1510 = vunpack.c.l.s4 1983009808
    %v1511 = vunpack.c.0.s8 %v1510
    %v1512 = vlaneseq
    %v1513 = vshrl.u32 %v1512, 7
    %v1514 = vsub.s32 %v1511, %v1513
    %v1515 = vrot.slane %v1501, %v1514
    %v1516 = vcombine.high %v1508, %v1508
    %v1517 = vcombine.high %v1515, %v1515
    %v1518 = vcombine.high %v112, %v112
    %v1520 = vunpack.c.l.s4 1983009808
    %v1521 = vunpack.c.0.s8 %v1520
    %v1522 = vlaneseq
    %v1523 = vshrl.u32 %v1522, 7
    %v1524 = vsub.s32 %v1521, %v1523
    %v1525 = vrot.slane %v112, %v1524
    %v1527 = vunpack.c.l.s4 1983009808
    %v1528 = vunpack.c.0.s8 %v1527
    %v1529 = vlaneseq
    %v1530 = vshrl.u32 %v1529, 7
    %v1531 = vsub.s32 %v1528, %v1530
    %v1532 = vrot.slane %v1518, %v1531
    %v1533 = vcombine.high %v1525, %v1525
    %v1534 = vcombine.high %v1532, %v1532
    %v1535 = vcombine.high %v113, %v113
    %v1537 = vunpack.c.l.s4 1983009808
    %v1538 = vunpack.c.0.s8 %v1537
    %v1539 = vlaneseq
    %v1540 = vshrl.u32 %v1539, 7
    %v1541 = vsub.s32 %v1538, %v1540
    %v1542 = vrot.slane %v113, %v1541
    %v1544 = vunpack.c.l.s4 1983009808
    %v1545 = vunpack.c.0.s8 %v1544
    %v1546 = vlaneseq
    %v1547 = vshrl.u32 %v1546, 7
    %v1548 = vsub.s32 %v1545, %v1547
    %v1549 = vrot.slane %v1535, %v1548
    %v1550 = vcombine.high %v1542, %v1542
    %v1551 = vcombine.high %v114, %v114
    %v1553 = vunpack.c.l.s4 1983009808
    %v1554 = vunpack.c.0.s8 %v1553
    %v1555 = vlaneseq
    %v1556 = vshrl.u32 %v1555, 7
    %v1557 = vsub.s32 %v1554, %v1556
    %v1558 = vrot.slane %v114, %v1557
    %v1560 = vunpack.c.l.s4 1983009808
    %v1561 = vunpack.c.0.s8 %v1560
    %v1562 = vlaneseq
    %v1563 = vshrl.u32 %v1562, 7
    %v1564 = vsub.s32 %v1561, %v1563
    %v1565 = vrot.slane %v1551, %v1564
    %v1566 = vcombine.high %v1558, %v1558
    %v1567 = vcombine.high %v1565, %v1565
    %v1568 = vcombine.high %v115, %v115
    %v1570 = vunpack.c.l.s4 1983009808
    %v1571 = vunpack.c.0.s8 %v1570
    %v1572 = vlaneseq
    %v1573 = vshrl.u32 %v1572, 7
    %v1574 = vsub.s32 %v1571, %v1573
    %v1575 = vrot.slane %v115, %v1574
    %v1577 = vunpack.c.l.s4 1983009808
    %v1578 = vunpack.c.0.s8 %v1577
    %v1579 = vlaneseq
    %v1580 = vshrl.u32 %v1579, 7
    %v1581 = vsub.s32 %v1578, %v1580
    %v1582 = vrot.slane %v1568, %v1581
    %v1583 = vcombine.high %v1575, %v1575
    %v1584 = vcombine.high %v1582, %v1582
    %v1585 = vcombine.high %v116, %v116
    %v1587 = vunpack.c.l.s4 1983009808
    %v1588 = vunpack.c.0.s8 %v1587
    %v1589 = vlaneseq
    %v1590 = vshrl.u32 %v1589, 7
    %v1591 = vsub.s32 %v1588, %v1590
    %v1592 = vrot.slane %v116, %v1591
    %v1594 = vunpack.c.l.s4 1983009808
    %v1595 = vunpack.c.0.s8 %v1594
    %v1596 = vlaneseq
    %v1597 = vshrl.u32 %v1596, 7
    %v1598 = vsub.s32 %v1595, %v1597
    %v1599 = vrot.slane %v1585, %v1598
    %v1600 = vcombine.high %v1592, %v1592
    %v1601 = vld [vmem:[%s1] sm:$0xff]
    %v1602 = vld [vmem:[%s1 + $0x8] sm:$0x1]
    %v1603 = vld [vmem:[%s2] sm:$0x1]
    %v1605 = vlaneseq
    %v1606 = vshrl.u32 %v1605, 7
    %v1607 = vsub.s32 0, %v1606
    %v1608 = vrot.slane %v1603, %v1607
    %v1610 = vcombine.low %v208, %v216
    %v1611 = vcombine.low %v215, %v217
    %v1613 = vunpack.c.l.s4 1983009808
    %v1614 = vunpack.c.0.s8 %v1613
    %v1615 = vlaneseq
    %v1616 = vshrl.u32 %v1615, 7
    %v1617 = vsub.s32 %v1614, %v1616
    %v1618 = vrot.slane %v1610, %v1617
    %v1620 = vunpack.c.l.s4 1983009808
    %v1621 = vunpack.c.0.s8 %v1620
    %v1622 = vlaneseq
    %v1623 = vshrl.u32 %v1622, 7
    %v1624 = vsub.s32 %v1621, %v1623
    %v1625 = vrot.slane %v1611, %v1624
    %v1626 = vcombine.low %v1618, %v1625
    %v1627 = vcombine.low %v225, %v233
    %v1628 = vcombine.low %v232, %v234
    %v1630 = vunpack.c.l.s4 1983009808
    %v1631 = vunpack.c.0.s8 %v1630
    %v1632 = vlaneseq
    %v1633 = vshrl.u32 %v1632, 7
    %v1634 = vsub.s32 %v1631, %v1633
    %v1635 = vrot.slane %v1627, %v1634
    %v1637 = vunpack.c.l.s4 1983009808
    %v1638 = vunpack.c.0.s8 %v1637
    %v1639 = vlaneseq
    %v1640 = vshrl.u32 %v1639, 7
    %v1641 = vsub.s32 %v1638, %v1640
    %v1642 = vrot.slane %v1628, %v1641
    %v1643 = vcombine.low %v1635, %v1642
    %v1644 = vcombine.low %v242, %v250
    %v1645 = vcombine.low %v249, %v258
    %v1647 = vunpack.c.l.s4 1983009808
    %v1648 = vunpack.c.0.s8 %v1647
    %v1649 = vlaneseq
    %v1650 = vshrl.u32 %v1649, 7
    %v1651 = vsub.s32 %v1648, %v1650
    %v1652 = vrot.slane %v1644, %v1651
    %v1654 = vunpack.c.l.s4 1983009808
    %v1655 = vunpack.c.0.s8 %v1654
    %v1656 = vlaneseq
    %v1657 = vshrl.u32 %v1656, 7
    %v1658 = vsub.s32 %v1655, %v1657
    %v1659 = vrot.slane %v1645, %v1658
    %v1660 = vcombine.low %v1652, %v1659
    %v1661 = vcombine.low %v266, %v265
    %v1662 = vcombine.low %v267, %v275
    %v1664 = vunpack.c.l.s4 1983009808
    %v1665 = vunpack.c.0.s8 %v1664
    %v1666 = vlaneseq
    %v1667 = vshrl.u32 %v1666, 7
    %v1668 = vsub.s32 %v1665, %v1667
    %v1669 = vrot.slane %v1661, %v1668
    %v1671 = vunpack.c.l.s4 1983009808
    %v1672 = vunpack.c.0.s8 %v1671
    %v1673 = vlaneseq
    %v1674 = vshrl.u32 %v1673, 7
    %v1675 = vsub.s32 %v1672, %v1674
    %v1676 = vrot.slane %v1662, %v1675
    %v1677 = vcombine.low %v1669, %v1676
    %v1678 = vcombine.low %v283, %v282
    %v1679 = vcombine.low %v284, %v292
    %v1681 = vunpack.c.l.s4 1983009808
    %v1682 = vunpack.c.0.s8 %v1681
    %v1683 = vlaneseq
    %v1684 = vshrl.u32 %v1683, 7
    %v1685 = vsub.s32 %v1682, %v1684
    %v1686 = vrot.slane %v1678, %v1685
    %v1688 = vunpack.c.l.s4 1983009808
    %v1689 = vunpack.c.0.s8 %v1688
    %v1690 = vlaneseq
    %v1691 = vshrl.u32 %v1690, 7
    %v1692 = vsub.s32 %v1689, %v1691
    %v1693 = vrot.slane %v1679, %v1692
    %v1694 = vcombine.low %v1686, %v1693
    %v1695 = vcombine.low %v300, %v299
    %v1696 = vcombine.low %v308, %v316
    %v1698 = vunpack.c.l.s4 1983009808
    %v1699 = vunpack.c.0.s8 %v1698
    %v1700 = vlaneseq
    %v1701 = vshrl.u32 %v1700, 7
    %v1702 = vsub.s32 %v1699, %v1701
    %v1703 = vrot.slane %v1695, %v1702
    %v1705 = vunpack.c.l.s4 1983009808
    %v1706 = vunpack.c.0.s8 %v1705
    %v1707 = vlaneseq
    %v1708 = vshrl.u32 %v1707, 7
    %v1709 = vsub.s32 %v1706, %v1708
    %v1710 = vrot.slane %v1696, %v1709
    %v1711 = vcombine.low %v1703, %v1710
    %v1712 = vcombine.low %v315, %v317
    %v1713 = vcombine.low %v325, %v333
    %v1715 = vunpack.c.l.s4 1983009808
    %v1716 = vunpack.c.0.s8 %v1715
    %v1717 = vlaneseq
    %v1718 = vshrl.u32 %v1717, 7
    %v1719 = vsub.s32 %v1716, %v1718
    %v1720 = vrot.slane %v1712, %v1719
    %v1722 = vunpack.c.l.s4 1983009808
    %v1723 = vunpack.c.0.s8 %v1722
    %v1724 = vlaneseq
    %v1725 = vshrl.u32 %v1724, 7
    %v1726 = vsub.s32 %v1723, %v1725
    %v1727 = vrot.slane %v1713, %v1726
    %v1728 = vcombine.low %v1720, %v1727
    %v1729 = vcombine.low %v332, %v334
    %v1730 = vcombine.low %v342, %v350
    %v1732 = vunpack.c.l.s4 1983009808
    %v1733 = vunpack.c.0.s8 %v1732
    %v1734 = vlaneseq
    %v1735 = vshrl.u32 %v1734, 7
    %v1736 = vsub.s32 %v1733, %v1735
    %v1737 = vrot.slane %v1729, %v1736
    %v1739 = vunpack.c.l.s4 1983009808
    %v1740 = vunpack.c.0.s8 %v1739
    %v1741 = vlaneseq
    %v1742 = vshrl.u32 %v1741, 7
    %v1743 = vsub.s32 %v1740, %v1742
    %v1744 = vrot.slane %v1730, %v1743
    %v1745 = vcombine.low %v1737, %v1744
    %v1746 = vcombine.low %v349, %v358
    %v1747 = vcombine.low %v366, %v365
    %v1749 = vunpack.c.l.s4 1983009808
    %v1750 = vunpack.c.0.s8 %v1749
    %v1751 = vlaneseq
    %v1752 = vshrl.u32 %v1751, 7
    %v1753 = vsub.s32 %v1750, %v1752
    %v1754 = vrot.slane %v1746, %v1753
    %v1756 = vunpack.c.l.s4 1983009808
    %v1757 = vunpack.c.0.s8 %v1756
    %v1758 = vlaneseq
    %v1759 = vshrl.u32 %v1758, 7
    %v1760 = vsub.s32 %v1757, %v1759
    %v1761 = vrot.slane %v1747, %v1760
    %v1762 = vcombine.low %v1754, %v1761
    %v1763 = vcombine.low %v367, %v375
    %v1764 = vcombine.low %v383, %v382
    %v1766 = vunpack.c.l.s4 1983009808
    %v1767 = vunpack.c.0.s8 %v1766
    %v1768 = vlaneseq
    %v1769 = vshrl.u32 %v1768, 7
    %v1770 = vsub.s32 %v1767, %v1769
    %v1771 = vrot.slane %v1763, %v1770
    %v1773 = vunpack.c.l.s4 1983009808
    %v1774 = vunpack.c.0.s8 %v1773
    %v1775 = vlaneseq
    %v1776 = vshrl.u32 %v1775, 7
    %v1777 = vsub.s32 %v1774, %v1776
    %v1778 = vrot.slane %v1764, %v1777
    %v1779 = vcombine.low %v1771, %v1778
    %v1780 = vcombine.low %v384, %v392
    %v1781 = vcombine.low %v400, %v399
    %v1783 = vunpack.c.l.s4 1983009808
    %v1784 = vunpack.c.0.s8 %v1783
    %v1785 = vlaneseq
    %v1786 = vshrl.u32 %v1785, 7
    %v1787 = vsub.s32 %v1784, %v1786
    %v1788 = vrot.slane %v1780, %v1787
    %v1790 = vunpack.c.l.s4 1983009808
    %v1791 = vunpack.c.0.s8 %v1790
    %v1792 = vlaneseq
    %v1793 = vshrl.u32 %v1792, 7
    %v1794 = vsub.s32 %v1791, %v1793
    %v1795 = vrot.slane %v1781, %v1794
    %v1796 = vcombine.low %v1788, %v1795
    %v1797 = vcombine.low %v408, %v416
    %v1798 = vcombine.low %v415, %v417
    %v1800 = vunpack.c.l.s4 1983009808
    %v1801 = vunpack.c.0.s8 %v1800
    %v1802 = vlaneseq
    %v1803 = vshrl.u32 %v1802, 7
    %v1804 = vsub.s32 %v1801, %v1803
    %v1805 = vrot.slane %v1797, %v1804
    %v1807 = vunpack.c.l.s4 1983009808
    %v1808 = vunpack.c.0.s8 %v1807
    %v1809 = vlaneseq
    %v1810 = vshrl.u32 %v1809, 7
    %v1811 = vsub.s32 %v1808, %v1810
    %v1812 = vrot.slane %v1798, %v1811
    %v1813 = vcombine.low %v1805, %v1812
    %v1814 = vcombine.low %v425, %v433
    %v1815 = vcombine.low %v432, %v434
    %v1817 = vunpack.c.l.s4 1983009808
    %v1818 = vunpack.c.0.s8 %v1817
    %v1819 = vlaneseq
    %v1820 = vshrl.u32 %v1819, 7
    %v1821 = vsub.s32 %v1818, %v1820
    %v1822 = vrot.slane %v1814, %v1821
    %v1824 = vunpack.c.l.s4 1983009808
    %v1825 = vunpack.c.0.s8 %v1824
    %v1826 = vlaneseq
    %v1827 = vshrl.u32 %v1826, 7
    %v1828 = vsub.s32 %v1825, %v1827
    %v1829 = vrot.slane %v1815, %v1828
    %v1830 = vcombine.low %v1822, %v1829
    %v1831 = vcombine.low %v442, %v450
    %v1832 = vcombine.low %v449, %v458
    %v1834 = vunpack.c.l.s4 1983009808
    %v1835 = vunpack.c.0.s8 %v1834
    %v1836 = vlaneseq
    %v1837 = vshrl.u32 %v1836, 7
    %v1838 = vsub.s32 %v1835, %v1837
    %v1839 = vrot.slane %v1831, %v1838
    %v1841 = vunpack.c.l.s4 1983009808
    %v1842 = vunpack.c.0.s8 %v1841
    %v1843 = vlaneseq
    %v1844 = vshrl.u32 %v1843, 7
    %v1845 = vsub.s32 %v1842, %v1844
    %v1846 = vrot.slane %v1832, %v1845
    %v1847 = vcombine.low %v1839, %v1846
    %v1848 = vcombine.low %v466, %v465
    %v1849 = vcombine.low %v467, %v475
    %v1851 = vunpack.c.l.s4 1983009808
    %v1852 = vunpack.c.0.s8 %v1851
    %v1853 = vlaneseq
    %v1854 = vshrl.u32 %v1853, 7
    %v1855 = vsub.s32 %v1852, %v1854
    %v1856 = vrot.slane %v1848, %v1855
    %v1858 = vunpack.c.l.s4 1983009808
    %v1859 = vunpack.c.0.s8 %v1858
    %v1860 = vlaneseq
    %v1861 = vshrl.u32 %v1860, 7
    %v1862 = vsub.s32 %v1859, %v1861
    %v1863 = vrot.slane %v1849, %v1862
    %v1864 = vcombine.low %v1856, %v1863
    %v1865 = vcombine.low %v483, %v482
    %v1866 = vcombine.low %v484, %v492
    %v1868 = vunpack.c.l.s4 1983009808
    %v1869 = vunpack.c.0.s8 %v1868
    %v1870 = vlaneseq
    %v1871 = vshrl.u32 %v1870, 7
    %v1872 = vsub.s32 %v1869, %v1871
    %v1873 = vrot.slane %v1865, %v1872
    %v1875 = vunpack.c.l.s4 1983009808
    %v1876 = vunpack.c.0.s8 %v1875
    %v1877 = vlaneseq
    %v1878 = vshrl.u32 %v1877, 7
    %v1879 = vsub.s32 %v1876, %v1878
    %v1880 = vrot.slane %v1866, %v1879
    %v1881 = vcombine.low %v1873, %v1880
    %v1882 = vcombine.low %v500, %v499
    %v1883 = vcombine.low %v508, %v516
    %v1885 = vunpack.c.l.s4 1983009808
    %v1886 = vunpack.c.0.s8 %v1885
    %v1887 = vlaneseq
    %v1888 = vshrl.u32 %v1887, 7
    %v1889 = vsub.s32 %v1886, %v1888
    %v1890 = vrot.slane %v1882, %v1889
    %v1892 = vunpack.c.l.s4 1983009808
    %v1893 = vunpack.c.0.s8 %v1892
    %v1894 = vlaneseq
    %v1895 = vshrl.u32 %v1894, 7
    %v1896 = vsub.s32 %v1893, %v1895
    %v1897 = vrot.slane %v1883, %v1896
    %v1898 = vcombine.low %v1890, %v1897
    %v1899 = vcombine.low %v515, %v517
    %v1900 = vcombine.low %v525, %v533
    %v1902 = vunpack.c.l.s4 1983009808
    %v1903 = vunpack.c.0.s8 %v1902
    %v1904 = vlaneseq
    %v1905 = vshrl.u32 %v1904, 7
    %v1906 = vsub.s32 %v1903, %v1905
    %v1907 = vrot.slane %v1899, %v1906
    %v1909 = vunpack.c.l.s4 1983009808
    %v1910 = vunpack.c.0.s8 %v1909
    %v1911 = vlaneseq
    %v1912 = vshrl.u32 %v1911, 7
    %v1913 = vsub.s32 %v1910, %v1912
    %v1914 = vrot.slane %v1900, %v1913
    %v1915 = vcombine.low %v1907, %v1914
    %v1916 = vcombine.low %v532, %v534
    %v1917 = vcombine.low %v542, %v550
    %v1919 = vunpack.c.l.s4 1983009808
    %v1920 = vunpack.c.0.s8 %v1919
    %v1921 = vlaneseq
    %v1922 = vshrl.u32 %v1921, 7
    %v1923 = vsub.s32 %v1920, %v1922
    %v1924 = vrot.slane %v1916, %v1923
    %v1926 = vunpack.c.l.s4 1983009808
    %v1927 = vunpack.c.0.s8 %v1926
    %v1928 = vlaneseq
    %v1929 = vshrl.u32 %v1928, 7
    %v1930 = vsub.s32 %v1927, %v1929
    %v1931 = vrot.slane %v1917, %v1930
    %v1932 = vcombine.low %v1924, %v1931
    %v1933 = vcombine.low %v549, %v558
    %v1934 = vcombine.low %v566, %v565
    %v1936 = vunpack.c.l.s4 1983009808
    %v1937 = vunpack.c.0.s8 %v1936
    %v1938 = vlaneseq
    %v1939 = vshrl.u32 %v1938, 7
    %v1940 = vsub.s32 %v1937, %v1939
    %v1941 = vrot.slane %v1933, %v1940
    %v1943 = vunpack.c.l.s4 1983009808
    %v1944 = vunpack.c.0.s8 %v1943
    %v1945 = vlaneseq
    %v1946 = vshrl.u32 %v1945, 7
    %v1947 = vsub.s32 %v1944, %v1946
    %v1948 = vrot.slane %v1934, %v1947
    %v1949 = vcombine.low %v1941, %v1948
    %v1950 = vcombine.low %v567, %v575
    %v1951 = vcombine.low %v583, %v582
    %v1953 = vunpack.c.l.s4 1983009808
    %v1954 = vunpack.c.0.s8 %v1953
    %v1955 = vlaneseq
    %v1956 = vshrl.u32 %v1955, 7
    %v1957 = vsub.s32 %v1954, %v1956
    %v1958 = vrot.slane %v1950, %v1957
    %v1960 = vunpack.c.l.s4 1983009808
    %v1961 = vunpack.c.0.s8 %v1960
    %v1962 = vlaneseq
    %v1963 = vshrl.u32 %v1962, 7
    %v1964 = vsub.s32 %v1961, %v1963
    %v1965 = vrot.slane %v1951, %v1964
    %v1966 = vcombine.low %v1958, %v1965
    %v1967 = vcombine.low %v584, %v592
    %v1968 = vcombine.low %v600, %v599
    %v1970 = vunpack.c.l.s4 1983009808
    %v1971 = vunpack.c.0.s8 %v1970
    %v1972 = vlaneseq
    %v1973 = vshrl.u32 %v1972, 7
    %v1974 = vsub.s32 %v1971, %v1973
    %v1975 = vrot.slane %v1967, %v1974
    %v1977 = vunpack.c.l.s4 1983009808
    %v1978 = vunpack.c.0.s8 %v1977
    %v1979 = vlaneseq
    %v1980 = vshrl.u32 %v1979, 7
    %v1981 = vsub.s32 %v1978, %v1980
    %v1982 = vrot.slane %v1968, %v1981
    %v1983 = vcombine.low %v1975, %v1982
    %v1984 = vcombine.low %v608, %v616
    %v1985 = vcombine.low %v615, %v617
    %v1987 = vunpack.c.l.s4 1983009808
    %v1988 = vunpack.c.0.s8 %v1987
    %v1989 = vlaneseq
    %v1990 = vshrl.u32 %v1989, 7
    %v1991 = vsub.s32 %v1988, %v1990
    %v1992 = vrot.slane %v1984, %v1991
    %v1994 = vunpack.c.l.s4 1983009808
    %v1995 = vunpack.c.0.s8 %v1994
    %v1996 = vlaneseq
    %v1997 = vshrl.u32 %v1996, 7
    %v1998 = vsub.s32 %v1995, %v1997
    %v1999 = vrot.slane %v1985, %v1998
    %v2000 = vcombine.low %v1992, %v1999
    %v2001 = vcombine.low %v625, %v633
    %v2002 = vcombine.low %v632, %v634
    %v2004 = vunpack.c.l.s4 1983009808
    %v2005 = vunpack.c.0.s8 %v2004
    %v2006 = vlaneseq
    %v2007 = vshrl.u32 %v2006, 7
    %v2008 = vsub.s32 %v2005, %v2007
    %v2009 = vrot.slane %v2001, %v2008
    %v2011 = vunpack.c.l.s4 1983009808
    %v2012 = vunpack.c.0.s8 %v2011
    %v2013 = vlaneseq
    %v2014 = vshrl.u32 %v2013, 7
    %v2015 = vsub.s32 %v2012, %v2014
    %v2016 = vrot.slane %v2002, %v2015
    %v2017 = vcombine.low %v2009, %v2016
    %v2018 = vcombine.low %v642, %v650
    %v2019 = vcombine.low %v649, %v658
    %v2021 = vunpack.c.l.s4 1983009808
    %v2022 = vunpack.c.0.s8 %v2021
    %v2023 = vlaneseq
    %v2024 = vshrl.u32 %v2023, 7
    %v2025 = vsub.s32 %v2022, %v2024
    %v2026 = vrot.slane %v2018, %v2025
    %v2028 = vunpack.c.l.s4 1983009808
    %v2029 = vunpack.c.0.s8 %v2028
    %v2030 = vlaneseq
    %v2031 = vshrl.u32 %v2030, 7
    %v2032 = vsub.s32 %v2029, %v2031
    %v2033 = vrot.slane %v2019, %v2032
    %v2034 = vcombine.low %v2026, %v2033
    %v2035 = vcombine.low %v666, %v665
    %v2036 = vcombine.low %v667, %v675
    %v2038 = vunpack.c.l.s4 1983009808
    %v2039 = vunpack.c.0.s8 %v2038
    %v2040 = vlaneseq
    %v2041 = vshrl.u32 %v2040, 7
    %v2042 = vsub.s32 %v2039, %v2041
    %v2043 = vrot.slane %v2035, %v2042
    %v2045 = vunpack.c.l.s4 1983009808
    %v2046 = vunpack.c.0.s8 %v2045
    %v2047 = vlaneseq
    %v2048 = vshrl.u32 %v2047, 7
    %v2049 = vsub.s32 %v2046, %v2048
    %v2050 = vrot.slane %v2036, %v2049
    %v2051 = vcombine.low %v2043, %v2050
    %v2052 = vcombine.low %v683, %v682
    %v2053 = vcombine.low %v684, %v692
    %v2055 = vunpack.c.l.s4 1983009808
    %v2056 = vunpack.c.0.s8 %v2055
    %v2057 = vlaneseq
    %v2058 = vshrl.u32 %v2057, 7
    %v2059 = vsub.s32 %v2056, %v2058
    %v2060 = vrot.slane %v2052, %v2059
    %v2062 = vunpack.c.l.s4 1983009808
    %v2063 = vunpack.c.0.s8 %v2062
    %v2064 = vlaneseq
    %v2065 = vshrl.u32 %v2064, 7
    %v2066 = vsub.s32 %v2063, %v2065
    %v2067 = vrot.slane %v2053, %v2066
    %v2068 = vcombine.low %v2060, %v2067
    %v2069 = vcombine.low %v700, %v699
    %v2070 = vcombine.low %v708, %v716
    %v2072 = vunpack.c.l.s4 1983009808
    %v2073 = vunpack.c.0.s8 %v2072
    %v2074 = vlaneseq
    %v2075 = vshrl.u32 %v2074, 7
    %v2076 = vsub.s32 %v2073, %v2075
    %v2077 = vrot.slane %v2069, %v2076
    %v2079 = vunpack.c.l.s4 1983009808
    %v2080 = vunpack.c.0.s8 %v2079
    %v2081 = vlaneseq
    %v2082 = vshrl.u32 %v2081, 7
    %v2083 = vsub.s32 %v2080, %v2082
    %v2084 = vrot.slane %v2070, %v2083
    %v2085 = vcombine.low %v2077, %v2084
    %v2086 = vcombine.low %v715, %v717
    %v2087 = vcombine.low %v725, %v733
    %v2089 = vunpack.c.l.s4 1983009808
    %v2090 = vunpack.c.0.s8 %v2089
    %v2091 = vlaneseq
    %v2092 = vshrl.u32 %v2091, 7
    %v2093 = vsub.s32 %v2090, %v2092
    %v2094 = vrot.slane %v2086, %v2093
    %v2096 = vunpack.c.l.s4 1983009808
    %v2097 = vunpack.c.0.s8 %v2096
    %v2098 = vlaneseq
    %v2099 = vshrl.u32 %v2098, 7
    %v2100 = vsub.s32 %v2097, %v2099
    %v2101 = vrot.slane %v2087, %v2100
    %v2102 = vcombine.low %v2094, %v2101
    %v2103 = vcombine.low %v732, %v734
    %v2104 = vcombine.low %v742, %v750
    %v2106 = vunpack.c.l.s4 1983009808
    %v2107 = vunpack.c.0.s8 %v2106
    %v2108 = vlaneseq
    %v2109 = vshrl.u32 %v2108, 7
    %v2110 = vsub.s32 %v2107, %v2109
    %v2111 = vrot.slane %v2103, %v2110
    %v2113 = vunpack.c.l.s4 1983009808
    %v2114 = vunpack.c.0.s8 %v2113
    %v2115 = vlaneseq
    %v2116 = vshrl.u32 %v2115, 7
    %v2117 = vsub.s32 %v2114, %v2116
    %v2118 = vrot.slane %v2104, %v2117
    %v2119 = vcombine.low %v2111, %v2118
    %v2120 = vcombine.low %v749, %v758
    %v2121 = vcombine.low %v766, %v765
    %v2123 = vunpack.c.l.s4 1983009808
    %v2124 = vunpack.c.0.s8 %v2123
    %v2125 = vlaneseq
    %v2126 = vshrl.u32 %v2125, 7
    %v2127 = vsub.s32 %v2124, %v2126
    %v2128 = vrot.slane %v2120, %v2127
    %v2130 = vunpack.c.l.s4 1983009808
    %v2131 = vunpack.c.0.s8 %v2130
    %v2132 = vlaneseq
    %v2133 = vshrl.u32 %v2132, 7
    %v2134 = vsub.s32 %v2131, %v2133
    %v2135 = vrot.slane %v2121, %v2134
    %v2136 = vcombine.low %v2128, %v2135
    %v2137 = vcombine.low %v767, %v775
    %v2138 = vcombine.low %v783, %v782
    %v2140 = vunpack.c.l.s4 1983009808
    %v2141 = vunpack.c.0.s8 %v2140
    %v2142 = vlaneseq
    %v2143 = vshrl.u32 %v2142, 7
    %v2144 = vsub.s32 %v2141, %v2143
    %v2145 = vrot.slane %v2137, %v2144
    %v2147 = vunpack.c.l.s4 1983009808
    %v2148 = vunpack.c.0.s8 %v2147
    %v2149 = vlaneseq
    %v2150 = vshrl.u32 %v2149, 7
    %v2151 = vsub.s32 %v2148, %v2150
    %v2152 = vrot.slane %v2138, %v2151
    %v2153 = vcombine.low %v2145, %v2152
    %v2154 = vcombine.low %v784, %v792
    %v2155 = vcombine.low %v800, %v799
    %v2157 = vunpack.c.l.s4 1983009808
    %v2158 = vunpack.c.0.s8 %v2157
    %v2159 = vlaneseq
    %v2160 = vshrl.u32 %v2159, 7
    %v2161 = vsub.s32 %v2158, %v2160
    %v2162 = vrot.slane %v2154, %v2161
    %v2164 = vunpack.c.l.s4 1983009808
    %v2165 = vunpack.c.0.s8 %v2164
    %v2166 = vlaneseq
    %v2167 = vshrl.u32 %v2166, 7
    %v2168 = vsub.s32 %v2165, %v2167
    %v2169 = vrot.slane %v2155, %v2168
    %v2170 = vcombine.low %v2162, %v2169
    %v2171 = vcombine.low %v808, %v816
    %v2172 = vcombine.low %v815, %v817
    %v2174 = vunpack.c.l.s4 1983009808
    %v2175 = vunpack.c.0.s8 %v2174
    %v2176 = vlaneseq
    %v2177 = vshrl.u32 %v2176, 7
    %v2178 = vsub.s32 %v2175, %v2177
    %v2179 = vrot.slane %v2171, %v2178
    %v2181 = vunpack.c.l.s4 1983009808
    %v2182 = vunpack.c.0.s8 %v2181
    %v2183 = vlaneseq
    %v2184 = vshrl.u32 %v2183, 7
    %v2185 = vsub.s32 %v2182, %v2184
    %v2186 = vrot.slane %v2172, %v2185
    %v2187 = vcombine.low %v2179, %v2186
    %v2188 = vcombine.low %v825, %v833
    %v2189 = vcombine.low %v832, %v834
    %v2191 = vunpack.c.l.s4 1983009808
    %v2192 = vunpack.c.0.s8 %v2191
    %v2193 = vlaneseq
    %v2194 = vshrl.u32 %v2193, 7
    %v2195 = vsub.s32 %v2192, %v2194
    %v2196 = vrot.slane %v2188, %v2195
    %v2198 = vunpack.c.l.s4 1983009808
    %v2199 = vunpack.c.0.s8 %v2198
    %v2200 = vlaneseq
    %v2201 = vshrl.u32 %v2200, 7
    %v2202 = vsub.s32 %v2199, %v2201
    %v2203 = vrot.slane %v2189, %v2202
    %v2204 = vcombine.low %v2196, %v2203
    %v2205 = vcombine.low %v842, %v850
    %v2206 = vcombine.low %v849, %v858
    %v2208 = vunpack.c.l.s4 1983009808
    %v2209 = vunpack.c.0.s8 %v2208
    %v2210 = vlaneseq
    %v2211 = vshrl.u32 %v2210, 7
    %v2212 = vsub.s32 %v2209, %v2211
    %v2213 = vrot.slane %v2205, %v2212
    %v2215 = vunpack.c.l.s4 1983009808
    %v2216 = vunpack.c.0.s8 %v2215
    %v2217 = vlaneseq
    %v2218 = vshrl.u32 %v2217, 7
    %v2219 = vsub.s32 %v2216, %v2218
    %v2220 = vrot.slane %v2206, %v2219
    %v2221 = vcombine.low %v2213, %v2220
    %v2222 = vcombine.low %v866, %v865
    %v2223 = vcombine.low %v867, %v875
    %v2225 = vunpack.c.l.s4 1983009808
    %v2226 = vunpack.c.0.s8 %v2225
    %v2227 = vlaneseq
    %v2228 = vshrl.u32 %v2227, 7
    %v2229 = vsub.s32 %v2226, %v2228
    %v2230 = vrot.slane %v2222, %v2229
    %v2232 = vunpack.c.l.s4 1983009808
    %v2233 = vunpack.c.0.s8 %v2232
    %v2234 = vlaneseq
    %v2235 = vshrl.u32 %v2234, 7
    %v2236 = vsub.s32 %v2233, %v2235
    %v2237 = vrot.slane %v2223, %v2236
    %v2238 = vcombine.low %v2230, %v2237
    %v2239 = vcombine.low %v883, %v882
    %v2240 = vcombine.low %v884, %v892
    %v2242 = vunpack.c.l.s4 1983009808
    %v2243 = vunpack.c.0.s8 %v2242
    %v2244 = vlaneseq
    %v2245 = vshrl.u32 %v2244, 7
    %v2246 = vsub.s32 %v2243, %v2245
    %v2247 = vrot.slane %v2239, %v2246
    %v2249 = vunpack.c.l.s4 1983009808
    %v2250 = vunpack.c.0.s8 %v2249
    %v2251 = vlaneseq
    %v2252 = vshrl.u32 %v2251, 7
    %v2253 = vsub.s32 %v2250, %v2252
    %v2254 = vrot.slane %v2240, %v2253
    %v2255 = vcombine.low %v2247, %v2254
    %v2256 = vcombine.low %v900, %v899
    %v2257 = vcombine.low %v908, %v916
    %v2259 = vunpack.c.l.s4 1983009808
    %v2260 = vunpack.c.0.s8 %v2259
    %v2261 = vlaneseq
    %v2262 = vshrl.u32 %v2261, 7
    %v2263 = vsub.s32 %v2260, %v2262
    %v2264 = vrot.slane %v2256, %v2263
    %v2266 = vunpack.c.l.s4 1983009808
    %v2267 = vunpack.c.0.s8 %v2266
    %v2268 = vlaneseq
    %v2269 = vshrl.u32 %v2268, 7
    %v2270 = vsub.s32 %v2267, %v2269
    %v2271 = vrot.slane %v2257, %v2270
    %v2272 = vcombine.low %v2264, %v2271
    %v2273 = vcombine.low %v915, %v917
    %v2274 = vcombine.low %v925, %v933
    %v2276 = vunpack.c.l.s4 1983009808
    %v2277 = vunpack.c.0.s8 %v2276
    %v2278 = vlaneseq
    %v2279 = vshrl.u32 %v2278, 7
    %v2280 = vsub.s32 %v2277, %v2279
    %v2281 = vrot.slane %v2273, %v2280
    %v2283 = vunpack.c.l.s4 1983009808
    %v2284 = vunpack.c.0.s8 %v2283
    %v2285 = vlaneseq
    %v2286 = vshrl.u32 %v2285, 7
    %v2287 = vsub.s32 %v2284, %v2286
    %v2288 = vrot.slane %v2274, %v2287
    %v2289 = vcombine.low %v2281, %v2288
    %v2290 = vcombine.low %v932, %v934
    %v2291 = vcombine.low %v942, %v950
    %v2293 = vunpack.c.l.s4 1983009808
    %v2294 = vunpack.c.0.s8 %v2293
    %v2295 = vlaneseq
    %v2296 = vshrl.u32 %v2295, 7
    %v2297 = vsub.s32 %v2294, %v2296
    %v2298 = vrot.slane %v2290, %v2297
    %v2300 = vunpack.c.l.s4 1983009808
    %v2301 = vunpack.c.0.s8 %v2300
    %v2302 = vlaneseq
    %v2303 = vshrl.u32 %v2302, 7
    %v2304 = vsub.s32 %v2301, %v2303
    %v2305 = vrot.slane %v2291, %v2304
    %v2306 = vcombine.low %v2298, %v2305
    %v2307 = vcombine.low %v949, %v958
    %v2308 = vcombine.low %v966, %v965
    %v2310 = vunpack.c.l.s4 1983009808
    %v2311 = vunpack.c.0.s8 %v2310
    %v2312 = vlaneseq
    %v2313 = vshrl.u32 %v2312, 7
    %v2314 = vsub.s32 %v2311, %v2313
    %v2315 = vrot.slane %v2307, %v2314
    %v2317 = vunpack.c.l.s4 1983009808
    %v2318 = vunpack.c.0.s8 %v2317
    %v2319 = vlaneseq
    %v2320 = vshrl.u32 %v2319, 7
    %v2321 = vsub.s32 %v2318, %v2320
    %v2322 = vrot.slane %v2308, %v2321
    %v2323 = vcombine.low %v2315, %v2322
    %v2324 = vcombine.low %v967, %v975
    %v2325 = vcombine.low %v983, %v982
    %v2327 = vunpack.c.l.s4 1983009808
    %v2328 = vunpack.c.0.s8 %v2327
    %v2329 = vlaneseq
    %v2330 = vshrl.u32 %v2329, 7
    %v2331 = vsub.s32 %v2328, %v2330
    %v2332 = vrot.slane %v2324, %v2331
    %v2334 = vunpack.c.l.s4 1983009808
    %v2335 = vunpack.c.0.s8 %v2334
    %v2336 = vlaneseq
    %v2337 = vshrl.u32 %v2336, 7
    %v2338 = vsub.s32 %v2335, %v2337
    %v2339 = vrot.slane %v2325, %v2338
    %v2340 = vcombine.low %v2332, %v2339
    %v2341 = vcombine.low %v984, %v992
    %v2342 = vcombine.low %v1000, %v999
    %v2344 = vunpack.c.l.s4 1983009808
    %v2345 = vunpack.c.0.s8 %v2344
    %v2346 = vlaneseq
    %v2347 = vshrl.u32 %v2346, 7
    %v2348 = vsub.s32 %v2345, %v2347
    %v2349 = vrot.slane %v2341, %v2348
    %v2351 = vunpack.c.l.s4 1983009808
    %v2352 = vunpack.c.0.s8 %v2351
    %v2353 = vlaneseq
    %v2354 = vshrl.u32 %v2353, 7
    %v2355 = vsub.s32 %v2352, %v2354
    %v2356 = vrot.slane %v2342, %v2355
    %v2357 = vcombine.low %v2349, %v2356
    %v2358 = vcombine.low %v1008, %v1016
    %v2359 = vcombine.low %v1015, %v1017
    %v2361 = vunpack.c.l.s4 1983009808
    %v2362 = vunpack.c.0.s8 %v2361
    %v2363 = vlaneseq
    %v2364 = vshrl.u32 %v2363, 7
    %v2365 = vsub.s32 %v2362, %v2364
    %v2366 = vrot.slane %v2358, %v2365
    %v2368 = vunpack.c.l.s4 1983009808
    %v2369 = vunpack.c.0.s8 %v2368
    %v2370 = vlaneseq
    %v2371 = vshrl.u32 %v2370, 7
    %v2372 = vsub.s32 %v2369, %v2371
    %v2373 = vrot.slane %v2359, %v2372
    %v2374 = vcombine.low %v2366, %v2373
    %v2375 = vcombine.low %v1025, %v1033
    %v2376 = vcombine.low %v1032, %v1034
    %v2378 = vunpack.c.l.s4 1983009808
    %v2379 = vunpack.c.0.s8 %v2378
    %v2380 = vlaneseq
    %v2381 = vshrl.u32 %v2380, 7
    %v2382 = vsub.s32 %v2379, %v2381
    %v2383 = vrot.slane %v2375, %v2382
    %v2385 = vunpack.c.l.s4 1983009808
    %v2386 = vunpack.c.0.s8 %v2385
    %v2387 = vlaneseq
    %v2388 = vshrl.u32 %v2387, 7
    %v2389 = vsub.s32 %v2386, %v2388
    %v2390 = vrot.slane %v2376, %v2389
    %v2391 = vcombine.low %v2383, %v2390
    %v2392 = vcombine.low %v1042, %v1050
    %v2393 = vcombine.low %v1049, %v1058
    %v2395 = vunpack.c.l.s4 1983009808
    %v2396 = vunpack.c.0.s8 %v2395
    %v2397 = vlaneseq
    %v2398 = vshrl.u32 %v2397, 7
    %v2399 = vsub.s32 %v2396, %v2398
    %v2400 = vrot.slane %v2392, %v2399
    %v2402 = vunpack.c.l.s4 1983009808
    %v2403 = vunpack.c.0.s8 %v2402
    %v2404 = vlaneseq
    %v2405 = vshrl.u32 %v2404, 7
    %v2406 = vsub.s32 %v2403, %v2405
    %v2407 = vrot.slane %v2393, %v2406
    %v2408 = vcombine.low %v2400, %v2407
    %v2409 = vcombine.low %v1066, %v1065
    %v2410 = vcombine.low %v1067, %v1075
    %v2412 = vunpack.c.l.s4 1983009808
    %v2413 = vunpack.c.0.s8 %v2412
    %v2414 = vlaneseq
    %v2415 = vshrl.u32 %v2414, 7
    %v2416 = vsub.s32 %v2413, %v2415
    %v2417 = vrot.slane %v2409, %v2416
    %v2419 = vunpack.c.l.s4 1983009808
    %v2420 = vunpack.c.0.s8 %v2419
    %v2421 = vlaneseq
    %v2422 = vshrl.u32 %v2421, 7
    %v2423 = vsub.s32 %v2420, %v2422
    %v2424 = vrot.slane %v2410, %v2423
    %v2425 = vcombine.low %v2417, %v2424
    %v2426 = vcombine.low %v1083, %v1082
    %v2427 = vcombine.low %v1084, %v1092
    %v2429 = vunpack.c.l.s4 1983009808
    %v2430 = vunpack.c.0.s8 %v2429
    %v2431 = vlaneseq
    %v2432 = vshrl.u32 %v2431, 7
    %v2433 = vsub.s32 %v2430, %v2432
    %v2434 = vrot.slane %v2426, %v2433
    %v2436 = vunpack.c.l.s4 1983009808
    %v2437 = vunpack.c.0.s8 %v2436
    %v2438 = vlaneseq
    %v2439 = vshrl.u32 %v2438, 7
    %v2440 = vsub.s32 %v2437, %v2439
    %v2441 = vrot.slane %v2427, %v2440
    %v2442 = vcombine.low %v2434, %v2441
    %v2443 = vcombine.low %v1100, %v1099
    %v2444 = vcombine.low %v1108, %v1116
    %v2446 = vunpack.c.l.s4 1983009808
    %v2447 = vunpack.c.0.s8 %v2446
    %v2448 = vlaneseq
    %v2449 = vshrl.u32 %v2448, 7
    %v2450 = vsub.s32 %v2447, %v2449
    %v2451 = vrot.slane %v2443, %v2450
    %v2453 = vunpack.c.l.s4 1983009808
    %v2454 = vunpack.c.0.s8 %v2453
    %v2455 = vlaneseq
    %v2456 = vshrl.u32 %v2455, 7
    %v2457 = vsub.s32 %v2454, %v2456
    %v2458 = vrot.slane %v2444, %v2457
    %v2459 = vcombine.low %v2451, %v2458
    %v2460 = vcombine.low %v1115, %v1117
    %v2461 = vcombine.low %v1125, %v1133
    %v2463 = vunpack.c.l.s4 1983009808
    %v2464 = vunpack.c.0.s8 %v2463
    %v2465 = vlaneseq
    %v2466 = vshrl.u32 %v2465, 7
    %v2467 = vsub.s32 %v2464, %v2466
    %v2468 = vrot.slane %v2460, %v2467
    %v2470 = vunpack.c.l.s4 1983009808
    %v2471 = vunpack.c.0.s8 %v2470
    %v2472 = vlaneseq
    %v2473 = vshrl.u32 %v2472, 7
    %v2474 = vsub.s32 %v2471, %v2473
    %v2475 = vrot.slane %v2461, %v2474
    %v2476 = vcombine.low %v2468, %v2475
    %v2477 = vcombine.low %v1132, %v1134
    %v2478 = vcombine.low %v1142, %v1150
    %v2480 = vunpack.c.l.s4 1983009808
    %v2481 = vunpack.c.0.s8 %v2480
    %v2482 = vlaneseq
    %v2483 = vshrl.u32 %v2482, 7
    %v2484 = vsub.s32 %v2481, %v2483
    %v2485 = vrot.slane %v2477, %v2484
    %v2487 = vunpack.c.l.s4 1983009808
    %v2488 = vunpack.c.0.s8 %v2487
    %v2489 = vlaneseq
    %v2490 = vshrl.u32 %v2489, 7
    %v2491 = vsub.s32 %v2488, %v2490
    %v2492 = vrot.slane %v2478, %v2491
    %v2493 = vcombine.low %v2485, %v2492
    %v2494 = vcombine.low %v1149, %v1158
    %v2495 = vcombine.low %v1166, %v1165
    %v2497 = vunpack.c.l.s4 1983009808
    %v2498 = vunpack.c.0.s8 %v2497
    %v2499 = vlaneseq
    %v2500 = vshrl.u32 %v2499, 7
    %v2501 = vsub.s32 %v2498, %v2500
    %v2502 = vrot.slane %v2494, %v2501
    %v2504 = vunpack.c.l.s4 1983009808
    %v2505 = vunpack.c.0.s8 %v2504
    %v2506 = vlaneseq
    %v2507 = vshrl.u32 %v2506, 7
    %v2508 = vsub.s32 %v2505, %v2507
    %v2509 = vrot.slane %v2495, %v2508
    %v2510 = vcombine.low %v2502, %v2509
    %v2511 = vcombine.low %v1167, %v1175
    %v2512 = vcombine.low %v1183, %v1182
    %v2514 = vunpack.c.l.s4 1983009808
    %v2515 = vunpack.c.0.s8 %v2514
    %v2516 = vlaneseq
    %v2517 = vshrl.u32 %v2516, 7
    %v2518 = vsub.s32 %v2515, %v2517
    %v2519 = vrot.slane %v2511, %v2518
    %v2521 = vunpack.c.l.s4 1983009808
    %v2522 = vunpack.c.0.s8 %v2521
    %v2523 = vlaneseq
    %v2524 = vshrl.u32 %v2523, 7
    %v2525 = vsub.s32 %v2522, %v2524
    %v2526 = vrot.slane %v2512, %v2525
    %v2527 = vcombine.low %v2519, %v2526
    %v2528 = vcombine.low %v1184, %v1192
    %v2529 = vcombine.low %v1200, %v1199
    %v2531 = vunpack.c.l.s4 1983009808
    %v2532 = vunpack.c.0.s8 %v2531
    %v2533 = vlaneseq
    %v2534 = vshrl.u32 %v2533, 7
    %v2535 = vsub.s32 %v2532, %v2534
    %v2536 = vrot.slane %v2528, %v2535
    %v2538 = vunpack.c.l.s4 1983009808
    %v2539 = vunpack.c.0.s8 %v2538
    %v2540 = vlaneseq
    %v2541 = vshrl.u32 %v2540, 7
    %v2542 = vsub.s32 %v2539, %v2541
    %v2543 = vrot.slane %v2529, %v2542
    %v2544 = vcombine.low %v2536, %v2543
    %v2545 = vcombine.low %v1208, %v1216
    %v2546 = vcombine.low %v1215, %v1217
    %v2548 = vunpack.c.l.s4 1983009808
    %v2549 = vunpack.c.0.s8 %v2548
    %v2550 = vlaneseq
    %v2551 = vshrl.u32 %v2550, 7
    %v2552 = vsub.s32 %v2549, %v2551
    %v2553 = vrot.slane %v2545, %v2552
    %v2555 = vunpack.c.l.s4 1983009808
    %v2556 = vunpack.c.0.s8 %v2555
    %v2557 = vlaneseq
    %v2558 = vshrl.u32 %v2557, 7
    %v2559 = vsub.s32 %v2556, %v2558
    %v2560 = vrot.slane %v2546, %v2559
    %v2561 = vcombine.low %v2553, %v2560
    %v2562 = vcombine.low %v1225, %v1233
    %v2563 = vcombine.low %v1232, %v1234
    %v2565 = vunpack.c.l.s4 1983009808
    %v2566 = vunpack.c.0.s8 %v2565
    %v2567 = vlaneseq
    %v2568 = vshrl.u32 %v2567, 7
    %v2569 = vsub.s32 %v2566, %v2568
    %v2570 = vrot.slane %v2562, %v2569
    %v2572 = vunpack.c.l.s4 1983009808
    %v2573 = vunpack.c.0.s8 %v2572
    %v2574 = vlaneseq
    %v2575 = vshrl.u32 %v2574, 7
    %v2576 = vsub.s32 %v2573, %v2575
    %v2577 = vrot.slane %v2563, %v2576
    %v2578 = vcombine.low %v2570, %v2577
    %v2579 = vcombine.low %v1242, %v1250
    %v2580 = vcombine.low %v1249, %v1258
    %v2582 = vunpack.c.l.s4 1983009808
    %v2583 = vunpack.c.0.s8 %v2582
    %v2584 = vlaneseq
    %v2585 = vshrl.u32 %v2584, 7
    %v2586 = vsub.s32 %v2583, %v2585
    %v2587 = vrot.slane %v2579, %v2586
    %v2589 = vunpack.c.l.s4 1983009808
    %v2590 = vunpack.c.0.s8 %v2589
    %v2591 = vlaneseq
    %v2592 = vshrl.u32 %v2591, 7
    %v2593 = vsub.s32 %v2590, %v2592
    %v2594 = vrot.slane %v2580, %v2593
    %v2595 = vcombine.low %v2587, %v2594
    %v2596 = vcombine.low %v1266, %v1265
    %v2597 = vcombine.low %v1267, %v1275
    %v2599 = vunpack.c.l.s4 1983009808
    %v2600 = vunpack.c.0.s8 %v2599
    %v2601 = vlaneseq
    %v2602 = vshrl.u32 %v2601, 7
    %v2603 = vsub.s32 %v2600, %v2602
    %v2604 = vrot.slane %v2596, %v2603
    %v2606 = vunpack.c.l.s4 1983009808
    %v2607 = vunpack.c.0.s8 %v2606
    %v2608 = vlaneseq
    %v2609 = vshrl.u32 %v2608, 7
    %v2610 = vsub.s32 %v2607, %v2609
    %v2611 = vrot.slane %v2597, %v2610
    %v2612 = vcombine.low %v2604, %v2611
    %v2613 = vcombine.low %v1283, %v1282
    %v2614 = vcombine.low %v1284, %v1292
    %v2616 = vunpack.c.l.s4 1983009808
    %v2617 = vunpack.c.0.s8 %v2616
    %v2618 = vlaneseq
    %v2619 = vshrl.u32 %v2618, 7
    %v2620 = vsub.s32 %v2617, %v2619
    %v2621 = vrot.slane %v2613, %v2620
    %v2623 = vunpack.c.l.s4 1983009808
    %v2624 = vunpack.c.0.s8 %v2623
    %v2625 = vlaneseq
    %v2626 = vshrl.u32 %v2625, 7
    %v2627 = vsub.s32 %v2624, %v2626
    %v2628 = vrot.slane %v2614, %v2627
    %v2629 = vcombine.low %v2621, %v2628
    %v2630 = vcombine.low %v1300, %v1299
    %v2631 = vcombine.low %v1308, %v1316
    %v2633 = vunpack.c.l.s4 1983009808
    %v2634 = vunpack.c.0.s8 %v2633
    %v2635 = vlaneseq
    %v2636 = vshrl.u32 %v2635, 7
    %v2637 = vsub.s32 %v2634, %v2636
    %v2638 = vrot.slane %v2630, %v2637
    %v2640 = vunpack.c.l.s4 1983009808
    %v2641 = vunpack.c.0.s8 %v2640
    %v2642 = vlaneseq
    %v2643 = vshrl.u32 %v2642, 7
    %v2644 = vsub.s32 %v2641, %v2643
    %v2645 = vrot.slane %v2631, %v2644
    %v2646 = vcombine.low %v2638, %v2645
    %v2647 = vcombine.low %v1315, %v1317
    %v2648 = vcombine.low %v1325, %v1333
    %v2650 = vunpack.c.l.s4 1983009808
    %v2651 = vunpack.c.0.s8 %v2650
    %v2652 = vlaneseq
    %v2653 = vshrl.u32 %v2652, 7
    %v2654 = vsub.s32 %v2651, %v2653
    %v2655 = vrot.slane %v2647, %v2654
    %v2657 = vunpack.c.l.s4 1983009808
    %v2658 = vunpack.c.0.s8 %v2657
    %v2659 = vlaneseq
    %v2660 = vshrl.u32 %v2659, 7
    %v2661 = vsub.s32 %v2658, %v2660
    %v2662 = vrot.slane %v2648, %v2661
    %v2663 = vcombine.low %v2655, %v2662
    %v2664 = vcombine.low %v1332, %v1334
    %v2665 = vcombine.low %v1342, %v1350
    %v2667 = vunpack.c.l.s4 1983009808
    %v2668 = vunpack.c.0.s8 %v2667
    %v2669 = vlaneseq
    %v2670 = vshrl.u32 %v2669, 7
    %v2671 = vsub.s32 %v2668, %v2670
    %v2672 = vrot.slane %v2664, %v2671
    %v2674 = vunpack.c.l.s4 1983009808
    %v2675 = vunpack.c.0.s8 %v2674
    %v2676 = vlaneseq
    %v2677 = vshrl.u32 %v2676, 7
    %v2678 = vsub.s32 %v2675, %v2677
    %v2679 = vrot.slane %v2665, %v2678
    %v2680 = vcombine.low %v2672, %v2679
    %v2681 = vcombine.low %v1349, %v1358
    %v2682 = vcombine.low %v1366, %v1365
    %v2684 = vunpack.c.l.s4 1983009808
    %v2685 = vunpack.c.0.s8 %v2684
    %v2686 = vlaneseq
    %v2687 = vshrl.u32 %v2686, 7
    %v2688 = vsub.s32 %v2685, %v2687
    %v2689 = vrot.slane %v2681, %v2688
    %v2691 = vunpack.c.l.s4 1983009808
    %v2692 = vunpack.c.0.s8 %v2691
    %v2693 = vlaneseq
    %v2694 = vshrl.u32 %v2693, 7
    %v2695 = vsub.s32 %v2692, %v2694
    %v2696 = vrot.slane %v2682, %v2695
    %v2697 = vcombine.low %v2689, %v2696
    %v2698 = vcombine.low %v1367, %v1375
    %v2699 = vcombine.low %v1383, %v1382
    %v2701 = vunpack.c.l.s4 1983009808
    %v2702 = vunpack.c.0.s8 %v2701
    %v2703 = vlaneseq
    %v2704 = vshrl.u32 %v2703, 7
    %v2705 = vsub.s32 %v2702, %v2704
    %v2706 = vrot.slane %v2698, %v2705
    %v2708 = vunpack.c.l.s4 1983009808
    %v2709 = vunpack.c.0.s8 %v2708
    %v2710 = vlaneseq
    %v2711 = vshrl.u32 %v2710, 7
    %v2712 = vsub.s32 %v2709, %v2711
    %v2713 = vrot.slane %v2699, %v2712
    %v2714 = vcombine.low %v2706, %v2713
    %v2715 = vcombine.low %v1384, %v1392
    %v2716 = vcombine.low %v1400, %v1399
    %v2718 = vunpack.c.l.s4 1983009808
    %v2719 = vunpack.c.0.s8 %v2718
    %v2720 = vlaneseq
    %v2721 = vshrl.u32 %v2720, 7
    %v2722 = vsub.s32 %v2719, %v2721
    %v2723 = vrot.slane %v2715, %v2722
    %v2725 = vunpack.c.l.s4 1983009808
    %v2726 = vunpack.c.0.s8 %v2725
    %v2727 = vlaneseq
    %v2728 = vshrl.u32 %v2727, 7
    %v2729 = vsub.s32 %v2726, %v2728
    %v2730 = vrot.slane %v2716, %v2729
    %v2731 = vcombine.low %v2723, %v2730
    %v2732 = vcombine.low %v1408, %v1416
    %v2733 = vcombine.low %v1415, %v1417
    %v2735 = vunpack.c.l.s4 1983009808
    %v2736 = vunpack.c.0.s8 %v2735
    %v2737 = vlaneseq
    %v2738 = vshrl.u32 %v2737, 7
    %v2739 = vsub.s32 %v2736, %v2738
    %v2740 = vrot.slane %v2732, %v2739
    %v2742 = vunpack.c.l.s4 1983009808
    %v2743 = vunpack.c.0.s8 %v2742
    %v2744 = vlaneseq
    %v2745 = vshrl.u32 %v2744, 7
    %v2746 = vsub.s32 %v2743, %v2745
    %v2747 = vrot.slane %v2733, %v2746
    %v2748 = vcombine.low %v2740, %v2747
    %v2749 = vcombine.low %v1425, %v1433
    %v2750 = vcombine.low %v1432, %v1434
    %v2752 = vunpack.c.l.s4 1983009808
    %v2753 = vunpack.c.0.s8 %v2752
    %v2754 = vlaneseq
    %v2755 = vshrl.u32 %v2754, 7
    %v2756 = vsub.s32 %v2753, %v2755
    %v2757 = vrot.slane %v2749, %v2756
    %v2759 = vunpack.c.l.s4 1983009808
    %v2760 = vunpack.c.0.s8 %v2759
    %v2761 = vlaneseq
    %v2762 = vshrl.u32 %v2761, 7
    %v2763 = vsub.s32 %v2760, %v2762
    %v2764 = vrot.slane %v2750, %v2763
    %v2765 = vcombine.low %v2757, %v2764
    %v2766 = vcombine.low %v1442, %v1450
    %v2767 = vcombine.low %v1449, %v1458
    %v2769 = vunpack.c.l.s4 1983009808
    %v2770 = vunpack.c.0.s8 %v2769
    %v2771 = vlaneseq
    %v2772 = vshrl.u32 %v2771, 7
    %v2773 = vsub.s32 %v2770, %v2772
    %v2774 = vrot.slane %v2766, %v2773
    %v2776 = vunpack.c.l.s4 1983009808
    %v2777 = vunpack.c.0.s8 %v2776
    %v2778 = vlaneseq
    %v2779 = vshrl.u32 %v2778, 7
    %v2780 = vsub.s32 %v2777, %v2779
    %v2781 = vrot.slane %v2767, %v2780
    %v2782 = vcombine.low %v2774, %v2781
    %v2783 = vcombine.low %v1466, %v1465
    %v2784 = vcombine.low %v1467, %v1475
    %v2786 = vunpack.c.l.s4 1983009808
    %v2787 = vunpack.c.0.s8 %v2786
    %v2788 = vlaneseq
    %v2789 = vshrl.u32 %v2788, 7
    %v2790 = vsub.s32 %v2787, %v2789
    %v2791 = vrot.slane %v2783, %v2790
    %v2793 = vunpack.c.l.s4 1983009808
    %v2794 = vunpack.c.0.s8 %v2793
    %v2795 = vlaneseq
    %v2796 = vshrl.u32 %v2795, 7
    %v2797 = vsub.s32 %v2794, %v2796
    %v2798 = vrot.slane %v2784, %v2797
    %v2799 = vcombine.low %v2791, %v2798
    %v2800 = vcombine.low %v1483, %v1482
    %v2801 = vcombine.low %v1484, %v1492
    %v2803 = vunpack.c.l.s4 1983009808
    %v2804 = vunpack.c.0.s8 %v2803
    %v2805 = vlaneseq
    %v2806 = vshrl.u32 %v2805, 7
    %v2807 = vsub.s32 %v2804, %v2806
    %v2808 = vrot.slane %v2800, %v2807
    %v2810 = vunpack.c.l.s4 1983009808
    %v2811 = vunpack.c.0.s8 %v2810
    %v2812 = vlaneseq
    %v2813 = vshrl.u32 %v2812, 7
    %v2814 = vsub.s32 %v2811, %v2813
    %v2815 = vrot.slane %v2801, %v2814
    %v2816 = vcombine.low %v2808, %v2815
    %v2817 = vcombine.low %v1500, %v1499
    %v2818 = vcombine.low %v1508, %v1516
    %v2820 = vunpack.c.l.s4 1983009808
    %v2821 = vunpack.c.0.s8 %v2820
    %v2822 = vlaneseq
    %v2823 = vshrl.u32 %v2822, 7
    %v2824 = vsub.s32 %v2821, %v2823
    %v2825 = vrot.slane %v2817, %v2824
    %v2827 = vunpack.c.l.s4 1983009808
    %v2828 = vunpack.c.0.s8 %v2827
    %v2829 = vlaneseq
    %v2830 = vshrl.u32 %v2829, 7
    %v2831 = vsub.s32 %v2828, %v2830
    %v2832 = vrot.slane %v2818, %v2831
    %v2833 = vcombine.low %v2825, %v2832
    %v2834 = vcombine.low %v1515, %v1517
    %v2835 = vcombine.low %v1525, %v1533
    %v2837 = vunpack.c.l.s4 1983009808
    %v2838 = vunpack.c.0.s8 %v2837
    %v2839 = vlaneseq
    %v2840 = vshrl.u32 %v2839, 7
    %v2841 = vsub.s32 %v2838, %v2840
    %v2842 = vrot.slane %v2834, %v2841
    %v2844 = vunpack.c.l.s4 1983009808
    %v2845 = vunpack.c.0.s8 %v2844
    %v2846 = vlaneseq
    %v2847 = vshrl.u32 %v2846, 7
    %v2848 = vsub.s32 %v2845, %v2847
    %v2849 = vrot.slane %v2835, %v2848
    %v2850 = vcombine.low %v2842, %v2849
    %v2851 = vcombine.low %v1532, %v1534
    %v2852 = vcombine.low %v1542, %v1550
    %v2854 = vunpack.c.l.s4 1983009808
    %v2855 = vunpack.c.0.s8 %v2854
    %v2856 = vlaneseq
    %v2857 = vshrl.u32 %v2856, 7
    %v2858 = vsub.s32 %v2855, %v2857
    %v2859 = vrot.slane %v2851, %v2858
    %v2861 = vunpack.c.l.s4 1983009808
    %v2862 = vunpack.c.0.s8 %v2861
    %v2863 = vlaneseq
    %v2864 = vshrl.u32 %v2863, 7
    %v2865 = vsub.s32 %v2862, %v2864
    %v2866 = vrot.slane %v2852, %v2865
    %v2867 = vcombine.low %v2859, %v2866
    %v2868 = vcombine.low %v1549, %v1558
    %v2869 = vcombine.low %v1566, %v1565
    %v2871 = vunpack.c.l.s4 1983009808
    %v2872 = vunpack.c.0.s8 %v2871
    %v2873 = vlaneseq
    %v2874 = vshrl.u32 %v2873, 7
    %v2875 = vsub.s32 %v2872, %v2874
    %v2876 = vrot.slane %v2868, %v2875
    %v2878 = vunpack.c.l.s4 1983009808
    %v2879 = vunpack.c.0.s8 %v2878
    %v2880 = vlaneseq
    %v2881 = vshrl.u32 %v2880, 7
    %v2882 = vsub.s32 %v2879, %v2881
    %v2883 = vrot.slane %v2869, %v2882
    %v2884 = vcombine.low %v2876, %v2883
    %v2885 = vcombine.low %v1567, %v1575
    %v2886 = vcombine.low %v1583, %v1582
    %v2888 = vunpack.c.l.s4 1983009808
    %v2889 = vunpack.c.0.s8 %v2888
    %v2890 = vlaneseq
    %v2891 = vshrl.u32 %v2890, 7
    %v2892 = vsub.s32 %v2889, %v2891
    %v2893 = vrot.slane %v2885, %v2892
    %v2895 = vunpack.c.l.s4 1983009808
    %v2896 = vunpack.c.0.s8 %v2895
    %v2897 = vlaneseq
    %v2898 = vshrl.u32 %v2897, 7
    %v2899 = vsub.s32 %v2896, %v2898
    %v2900 = vrot.slane %v2886, %v2899
    %v2901 = vcombine.low %v2893, %v2900
    %v2902 = vcombine.low %v1584, %v1592
    %v2903 = vcombine.low %v1600, %v1599
    %v2905 = vunpack.c.l.s4 1983009808
    %v2906 = vunpack.c.0.s8 %v2905
    %v2907 = vlaneseq
    %v2908 = vshrl.u32 %v2907, 7
    %v2909 = vsub.s32 %v2906, %v2908
    %v2910 = vrot.slane %v2902, %v2909
    %v2912 = vunpack.c.l.s4 1983009808
    %v2913 = vunpack.c.0.s8 %v2912
    %v2914 = vlaneseq
    %v2915 = vshrl.u32 %v2914, 7
    %v2916 = vsub.s32 %v2913, %v2915
    %v2917 = vrot.slane %v2903, %v2916
    %v2918 = vcombine.low %v2910, %v2917
    %vm2919 = vcmask 72704
    %v2920 = vsel %vm2919, %v1626, 0
    %v2922 = vsel %vm2919, %v1643, 0
    %v2924 = vsel %vm2919, %v1660, 0
    %v2926 = vsel %vm2919, %v1677, 0
    %v2928 = vsel %vm2919, %v1694, 0
    %v2930 = vsel %vm2919, %v1711, 0
    %v2932 = vsel %vm2919, %v1728, 0
    %v2934 = vsel %vm2919, %v1745, 0
    %v2936 = vsel %vm2919, %v1762, 0
    %v2938 = vsel %vm2919, %v1779, 0
    %v2940 = vsel %vm2919, %v1796, 0
    %v2942 = vsel %vm2919, %v1813, 0
    %v2944 = vsel %vm2919, %v1830, 0
    %v2946 = vsel %vm2919, %v1847, 0
    %v2948 = vsel %vm2919, %v1864, 0
    %v2950 = vsel %vm2919, %v1881, 0
    %v2952 = vsel %vm2919, %v1898, 0
    %v2954 = vsel %vm2919, %v1915, 0
    %v2956 = vsel %vm2919, %v1932, 0
    %v2958 = vsel %vm2919, %v1949, 0
    %v2960 = vsel %vm2919, %v1966, 0
    %v2962 = vsel %vm2919, %v1983, 0
    %v2964 = vsel %vm2919, %v2000, 0
    %v2966 = vsel %vm2919, %v2017, 0
    %v2968 = vsel %vm2919, %v2034, 0
    %v2970 = vsel %vm2919, %v2051, 0
    %v2972 = vsel %vm2919, %v2068, 0
    %v2974 = vsel %vm2919, %v2085, 0
    %v2976 = vsel %vm2919, %v2102, 0
    %v2978 = vsel %vm2919, %v2119, 0
    %v2980 = vsel %vm2919, %v2136, 0
    %v2982 = vsel %vm2919, %v2153, 0
    %v2984 = vsel %vm2919, %v2170, 0
    %v2986 = vsel %vm2919, %v2187, 0
    %v2988 = vsel %vm2919, %v2204, 0
    %v2990 = vsel %vm2919, %v2221, 0
    %v2992 = vsel %vm2919, %v2238, 0
    %v2994 = vsel %vm2919, %v2255, 0
    %v2996 = vsel %vm2919, %v2272, 0
    %v2998 = vsel %vm2919, %v2289, 0
    %v3000 = vsel %vm2919, %v2306, 0
    %v3002 = vsel %vm2919, %v2323, 0
    %v3004 = vsel %vm2919, %v2340, 0
    %v3006 = vsel %vm2919, %v2357, 0
    %v3008 = vsel %vm2919, %v2374, 0
    %v3010 = vsel %vm2919, %v2391, 0
    %v3012 = vsel %vm2919, %v2408, 0
    %v3014 = vsel %vm2919, %v2425, 0
    %v3016 = vsel %vm2919, %v2442, 0
    %v3018 = vsel %vm2919, %v2459, 0
    %v3020 = vsel %vm2919, %v2476, 0
    %v3022 = vsel %vm2919, %v2493, 0
    %v3024 = vsel %vm2919, %v2510, 0
    %v3026 = vsel %vm2919, %v2527, 0
    %v3028 = vsel %vm2919, %v2544, 0
    %v3030 = vsel %vm2919, %v2561, 0
    %v3032 = vsel %vm2919, %v2578, 0
    %v3034 = vsel %vm2919, %v2595, 0
    %v3036 = vsel %vm2919, %v2612, 0
    %v3038 = vsel %vm2919, %v2629, 0
    %v3040 = vsel %vm2919, %v2646, 0
    %v3042 = vsel %vm2919, %v2663, 0
    %v3044 = vsel %vm2919, %v2680, 0
    %v3046 = vsel %vm2919, %v2697, 0
    %v3048 = vsel %vm2919, %v2714, 0
    %v3050 = vsel %vm2919, %v2731, 0
    %v3052 = vsel %vm2919, %v2748, 0
    %v3054 = vsel %vm2919, %v2765, 0
    %v3056 = vsel %vm2919, %v2782, 0
    %v3058 = vsel %vm2919, %v2799, 0
    %v3060 = vsel %vm2919, %v2816, 0
    %v3062 = vsel %vm2919, %v2833, 0
    %v3064 = vsel %vm2919, %v2850, 0
    %v3066 = vsel %vm2919, %v2867, 0
    %v3068 = vsel %vm2919, %v2884, 0
    %v3070 = vsel %vm2919, %v2901, 0
    %v3072 = vsel %vm2919, %v2918, 0
    %vm3074 = vcmask 1040384
    %v3076 = vsel %vm3074, %v1602, 0
    %3078 = vmatprep.subr.mxu0 0.0
    %3079 = vmatpush1.msra.mxu0 %v1601
    %3080 = vmatprep.subr.mxu0 0.0
    %3081 = vmatpush1.msra.mxu0 %v3076
    %3082 = vmatprep.subr.mxu0 0.0
    %3083 = vmatpush1.msra.mxu0 0.0
    %3084 = vmatprep.subr.mxu0 0.0
    %3085 = vmatpush1.msra.mxu0 0.0
    %3086 = vmatprep.subr.mxu0 0.0
    %3087 = vmatpush1.msra.mxu0 0.0
    %3088 = vmatprep.subr.mxu0 0.0
    %3089 = vmatpush1.msra.mxu0 0.0
    %3090 = vmatprep.subr.mxu0 0.0
    %3091 = vmatpush1.msra.mxu0 0.0
    %3092 = vmatprep.subr.mxu0 0.0
    %3093 = vmatpush1.msra.mxu0 0.0
    %3094 = vmatprep.subr.mxu0 0.0
    %3095 = vmatpush1.msra.mxu0 0.0
    %3096 = vmatprep.subr.mxu0 0.0
    %3097 = vmatpush1.msra.mxu0 0.0
    %3098 = vmatprep.subr.mxu0 0.0
    %3099 = vmatpush1.msra.mxu0 0.0
    %3100 = vmatprep.subr.mxu0 0.0
    %3101 = vmatpush1.msra.mxu0 0.0
    %3102 = vmatprep.subr.mxu0 0.0
    %3103 = vmatpush1.msra.mxu0 0.0
    %3104 = vmatprep.subr.mxu0 0.0
    %3105 = vmatpush1.msra.mxu0 0.0
    %3106 = vmatprep.subr.mxu0 0.0
    %3107 = vmatpush1.msra.mxu0 0.0
    %3108 = vmatprep.subr.mxu0 0.0
    %3109 = vmatpush1.msra.mxu0 0.0
    %3110 = vmatprep.subr.mxu0 0.0
    %3111 = vmatpush1.msra.mxu0 0.0
    %3112 = vmatprep.subr.mxu0 0.0
    %3113 = vmatpush1.msra.mxu0 0.0
    %3114 = vmatprep.subr.mxu0 0.0
    %3115 = vmatpush1.msra.mxu0 0.0
    %3116 = vmatprep.subr.mxu0 0.0
    %3117 = vmatpush1.msra.mxu0 0.0
    %3118 = vmatprep.subr.mxu0 0.0
    %3119 = vmatpush1.msra.mxu0 0.0
    %3120 = vmatprep.subr.mxu0 0.0
    %3121 = vmatpush1.msra.mxu0 0.0
    %3122 = vmatprep.subr.mxu0 0.0
    %3123 = vmatpush1.msra.mxu0 0.0
    %3124 = vmatprep.subr.mxu0 0.0
    %3125 = vmatpush1.msra.mxu0 0.0
    %3126 = vmatprep.subr.mxu0 0.0
    %3127 = vmatpush1.msra.mxu0 0.0
    %3128 = vmatprep.subr.mxu0 0.0
    %3129 = vmatpush1.msra.mxu0 0.0
    %3130 = vmatprep.subr.mxu0 0.0
    %3131 = vmatpush1.msra.mxu0 0.0
    %3132 = vmatprep.subr.mxu0 0.0
    %3133 = vmatpush1.msra.mxu0 0.0
    %3134 = vmatprep.subr.mxu0 0.0
    %3135 = vmatpush1.msra.mxu0 0.0
    %3136 = vmatprep.subr.mxu0 0.0
    %3137 = vmatpush1.msra.mxu0 0.0
    %3138 = vmatprep.subr.mxu0 0.0
    %3139 = vmatpush1.msra.mxu0 0.0
    %3140 = vmatprep.subr.mxu0 0.0
    %3141 = vmatpush1.msra.mxu0 0.0
    %3142 = vmatprep.mubr.f32.mxu0 0.0
    %3143 = vmatmul.mubr.f32.gmra.mrb[0].mxu0 %v2920
    %v3144 = vpop.f32.mrb[0].mxu0
    %v3145 = vadd.f32 %v1608, %v3144
    %v3146 = vpop.f32.mrb[0].mxu0
    %3147 = vmatprep.mubr.f32.mxu0 0.0
    %3148 = vmatmul.mubr.f32.gmra.mrb[0].mxu0 %v2922
    %v3149 = vpop.f32.mrb[0].mxu0
    %v3150 = vadd.f32 %v1608, %v3149
    %v3151 = vpop.f32.mrb[0].mxu0
    %3152 = vmatprep.mubr.f32.mxu0 0.0
    %3153 = vmatmul.mubr.f32.gmra.mrb[0].mxu0 %v2924
    %v3154 = vpop.f32.mrb[0].mxu0
    %v3155 = vadd.f32 %v1608, %v3154
    %v3156 = vpop.f32.mrb[0].mxu0
    %3157 = vmatprep.mubr.f32.mxu0 0.0
    %3158 = vmatmul.mubr.f32.gmra.mrb[0].mxu0 %v2926
    %v3159 = vpop.f32.mrb[0].mxu0
    %v3160 = vadd.f32 %v1608, %v3159
    %v3161 = vpop.f32.mrb[0].mxu0
    %3162 = vmatprep.mubr.f32.mxu0 0.0
    %3163 = vmatmul.mubr.f32.gmra.mrb[0].mxu0 %v2928
    %v3164 = vpop.f32.mrb[0].mxu0
    %v3165 = vadd.f32 %v1608, %v3164
    %v3166 = vpop.f32.mrb[0].mxu0
    %3167 = vmatprep.mubr.f32.mxu0 0.0
    %3168 = vmatmul.mubr.f32.gmra.mrb[0].mxu0 %v2930
    %v3169 = vpop.f32.mrb[0].mxu0
    %v3170 = vadd.f32 %v1608, %v3169
    %v3171 = vpop.f32.mrb[0].mxu0
    %3172 = vmatprep.mubr.f32.mxu0 0.0
    %3173 = vmatmul.mubr.f32.gmra.mrb[0].mxu0 %v2932
    %v3174 = vpop.f32.mrb[0].mxu0
    %v3175 = vadd.f32 %v1608, %v3174
    %v3176 = vpop.f32.mrb[0].mxu0
    %3177 = vmatprep.mubr.f32.mxu0 0.0
    %3178 = vmatmul.mubr.f32.gmra.mrb[0].mxu0 %v2934
    %v3179 = vpop.f32.mrb[0].mxu0
    %v3180 = vadd.f32 %v1608, %v3179
    %v3181 = vpop.f32.mrb[0].mxu0
    %3182 = vmatprep.mubr.f32.mxu0 0.0
    %3183 = vmatmul.mubr.f32.gmra.mrb[0].mxu0 %v2936
    %v3184 = vpop.f32.mrb[0].mxu0
    %v3185 = vadd.f32 %v1608, %v3184
    %v3186 = vpop.f32.mrb[0].mxu0
    %3187 = vmatprep.mubr.f32.mxu0 0.0
    %3188 = vmatmul.mubr.f32.gmra.mrb[0].mxu0 %v2938
    %v3189 = vpop.f32.mrb[0].mxu0
    %v3190 = vadd.f32 %v1608, %v3189
    %v3191 = vpop.f32.mrb[0].mxu0
    %3192 = vmatprep.mubr.f32.mxu0 0.0
    %3193 = vmatmul.mubr.f32.gmra.mrb[0].mxu0 %v2940
    %v3194 = vpop.f32.mrb[0].mxu0
    %v3195 = vadd.f32 %v1608, %v3194
    %v3196 = vpop.f32.mrb[0].mxu0
    %3197 = vmatprep.mubr.f32.mxu0 0.0
    %3198 = vmatmul.mubr.f32.gmra.mrb[0].mxu0 %v2942
    %v3199 = vpop.f32.mrb[0].mxu0
    %v3200 = vadd.f32 %v1608, %v3199
    %v3201 = vpop.f32.mrb[0].mxu0
    %3202 = vmatprep.mubr.f32.mxu0 0.0
    %3203 = vmatmul.mubr.f32.gmra.mrb[0].mxu0 %v2944
    %v3204 = vpop.f32.mrb[0].mxu0
    %v3205 = vadd.f32 %v1608, %v3204
    %v3206 = vpop.f32.mrb[0].mxu0
    %3207 = vmatprep.mubr.f32.mxu0 0.0
    %3208 = vmatmul.mubr.f32.gmra.mrb[0].mxu0 %v2946
    %v3209 = vpop.f32.mrb[0].mxu0
    %v3210 = vadd.f32 %v1608, %v3209
    %v3211 = vpop.f32.mrb[0].mxu0
    %3212 = vmatprep.mubr.f32.mxu0 0.0
    %3213 = vmatmul.mubr.f32.gmra.mrb[0].mxu0 %v2948
    %v3214 = vpop.f32.mrb[0].mxu0
    %v3215 = vadd.f32 %v1608, %v3214
    %v3216 = vpop.f32.mrb[0].mxu0
    %3217 = vmatprep.mubr.f32.mxu0 0.0
    %3218 = vmatmul.mubr.f32.gmra.mrb[0].mxu0 %v2950
    %v3219 = vpop.f32.mrb[0].mxu0
    %v3220 = vadd.f32 %v1608, %v3219
    %v3221 = vpop.f32.mrb[0].mxu0
    %3222 = vmatprep.mubr.f32.mxu0 0.0
    %3223 = vmatmul.mubr.f32.gmra.mrb[0].mxu0 %v2952
    %v3224 = vpop.f32.mrb[0].mxu0
    %v3225 = vadd.f32 %v1608, %v3224
    %v3226 = vpop.f32.mrb[0].mxu0
    %3227 = vmatprep.mubr.f32.mxu0 0.0
    %3228 = vmatmul.mubr.f32.gmra.mrb[0].mxu0 %v2954
    %v3229 = vpop.f32.mrb[0].mxu0
    %v3230 = vadd.f32 %v1608, %v3229
    %v3231 = vpop.f32.mrb[0].mxu0
    %3232 = vmatprep.mubr.f32.mxu0 0.0
    %3233 = vmatmul.mubr.f32.gmra.mrb[0].mxu0 %v2956
    %v3234 = vpop.f32.mrb[0].mxu0
    %v3235 = vadd.f32 %v1608, %v3234
    %v3236 = vpop.f32.mrb[0].mxu0
    %3237 = vmatprep.mubr.f32.mxu0 0.0
    %3238 = vmatmul.mubr.f32.gmra.mrb[0].mxu0 %v2958
    %v3239 = vpop.f32.mrb[0].mxu0
    %v3240 = vadd.f32 %v1608, %v3239
    %v3241 = vpop.f32.mrb[0].mxu0
    %3242 = vmatprep.mubr.f32.mxu0 0.0
    %3243 = vmatmul.mubr.f32.gmra.mrb[0].mxu0 %v2960
    %v3244 = vpop.f32.mrb[0].mxu0
    %v3245 = vadd.f32 %v1608, %v3244
    %v3246 = vpop.f32.mrb[0].mxu0
    %3247 = vmatprep.mubr.f32.mxu0 0.0
    %3248 = vmatmul.mubr.f32.gmra.mrb[0].mxu0 %v2962
    %v3249 = vpop.f32.mrb[0].mxu0
    %v3250 = vadd.f32 %v1608, %v3249
    %v3251 = vpop.f32.mrb[0].mxu0
    %3252 = vmatprep.mubr.f32.mxu0 0.0
    %3253 = vmatmul.mubr.f32.gmra.mrb[0].mxu0 %v2964
    %v3254 = vpop.f32.mrb[0].mxu0
    %v3255 = vadd.f32 %v1608, %v3254
    %v3256 = vpop.f32.mrb[0].mxu0
    %3257 = vmatprep.mubr.f32.mxu0 0.0
    %3258 = vmatmul.mubr.f32.gmra.mrb[0].mxu0 %v2966
    %v3259 = vpop.f32.mrb[0].mxu0
    %v3260 = vadd.f32 %v1608, %v3259
    %v3261 = vpop.f32.mrb[0].mxu0
    %3262 = vmatprep.mubr.f32.mxu0 0.0
    %3263 = vmatmul.mubr.f32.gmra.mrb[0].mxu0 %v2968
    %v3264 = vpop.f32.mrb[0].mxu0
    %v3265 = vadd.f32 %v1608, %v3264
    %v3266 = vpop.f32.mrb[0].mxu0
    %3267 = vmatprep.mubr.f32.mxu0 0.0
    %3268 = vmatmul.mubr.f32.gmra.mrb[0].mxu0 %v2970
    %v3269 = vpop.f32.mrb[0].mxu0
    %v3270 = vadd.f32 %v1608, %v3269
    %v3271 = vpop.f32.mrb[0].mxu0
    %3272 = vmatprep.mubr.f32.mxu0 0.0
    %3273 = vmatmul.mubr.f32.gmra.mrb[0].mxu0 %v2972
    %v3274 = vpop.f32.mrb[0].mxu0
    %v3275 = vadd.f32 %v1608, %v3274
    %v3276 = vpop.f32.mrb[0].mxu0
    %3277 = vmatprep.mubr.f32.mxu0 0.0
    %3278 = vmatmul.mubr.f32.gmra.mrb[0].mxu0 %v2974
    %v3279 = vpop.f32.mrb[0].mxu0
    %v3280 = vadd.f32 %v1608, %v3279
    %v3281 = vpop.f32.mrb[0].mxu0
    %3282 = vmatprep.mubr.f32.mxu0 0.0
    %3283 = vmatmul.mubr.f32.gmra.mrb[0].mxu0 %v2976
    %v3284 = vpop.f32.mrb[0].mxu0
    %v3285 = vadd.f32 %v1608, %v3284
    %v3286 = vpop.f32.mrb[0].mxu0
    %3287 = vmatprep.mubr.f32.mxu0 0.0
    %3288 = vmatmul.mubr.f32.gmra.mrb[0].mxu0 %v2978
    %v3289 = vpop.f32.mrb[0].mxu0
    %v3290 = vadd.f32 %v1608, %v3289
    %v3291 = vpop.f32.mrb[0].mxu0
    %3292 = vmatprep.mubr.f32.mxu0 0.0
    %3293 = vmatmul.mubr.f32.gmra.mrb[0].mxu0 %v2980
    %v3294 = vpop.f32.mrb[0].mxu0
    %v3295 = vadd.f32 %v1608, %v3294
    %v3296 = vpop.f32.mrb[0].mxu0
    %3297 = vmatprep.mubr.f32.mxu0 0.0
    %3298 = vmatmul.mubr.f32.gmra.mrb[0].mxu0 %v2982
    %v3299 = vpop.f32.mrb[0].mxu0
    %v3300 = vadd.f32 %v1608, %v3299
    %v3301 = vpop.f32.mrb[0].mxu0
    %3302 = vmatprep.mubr.f32.mxu0 0.0
    %3303 = vmatmul.mubr.f32.gmra.mrb[0].mxu0 %v2984
    %v3304 = vpop.f32.mrb[0].mxu0
    %v3305 = vadd.f32 %v1608, %v3304
    %v3306 = vpop.f32.mrb[0].mxu0
    %3307 = vmatprep.mubr.f32.mxu0 0.0
    %3308 = vmatmul.mubr.f32.gmra.mrb[0].mxu0 %v2986
    %v3309 = vpop.f32.mrb[0].mxu0
    %v3310 = vadd.f32 %v1608, %v3309
    %v3311 = vpop.f32.mrb[0].mxu0
    %3312 = vmatprep.mubr.f32.mxu0 0.0
    %3313 = vmatmul.mubr.f32.gmra.mrb[0].mxu0 %v2988
    %v3314 = vpop.f32.mrb[0].mxu0
    %v3315 = vadd.f32 %v1608, %v3314
    %v3316 = vpop.f32.mrb[0].mxu0
    %3317 = vmatprep.mubr.f32.mxu0 0.0
    %3318 = vmatmul.mubr.f32.gmra.mrb[0].mxu0 %v2990
    %v3319 = vpop.f32.mrb[0].mxu0
    %v3320 = vadd.f32 %v1608, %v3319
    %v3321 = vpop.f32.mrb[0].mxu0
    %3322 = vmatprep.mubr.f32.mxu0 0.0
    %3323 = vmatmul.mubr.f32.gmra.mrb[0].mxu0 %v2992
    %v3324 = vpop.f32.mrb[0].mxu0
    %v3325 = vadd.f32 %v1608, %v3324
    %v3326 = vpop.f32.mrb[0].mxu0
    %3327 = vmatprep.mubr.f32.mxu0 0.0
    %3328 = vmatmul.mubr.f32.gmra.mrb[0].mxu0 %v2994
    %v3329 = vpop.f32.mrb[0].mxu0
    %v3330 = vadd.f32 %v1608, %v3329
    %v3331 = vpop.f32.mrb[0].mxu0
    %3332 = vmatprep.mubr.f32.mxu0 0.0
    %3333 = vmatmul.mubr.f32.gmra.mrb[0].mxu0 %v2996
    %v3334 = vpop.f32.mrb[0].mxu0
    %v3335 = vadd.f32 %v1608, %v3334
    %v3336 = vpop.f32.mrb[0].mxu0
    %3337 = vmatprep.mubr.f32.mxu0 0.0
    %3338 = vmatmul.mubr.f32.gmra.mrb[0].mxu0 %v2998
    %v3339 = vpop.f32.mrb[0].mxu0
    %v3340 = vadd.f32 %v1608, %v3339
    %v3341 = vpop.f32.mrb[0].mxu0
    %3342 = vmatprep.mubr.f32.mxu0 0.0
    %3343 = vmatmul.mubr.f32.gmra.mrb[0].mxu0 %v3000
    %v3344 = vpop.f32.mrb[0].mxu0
    %v3345 = vadd.f32 %v1608, %v3344
    %v3346 = vpop.f32.mrb[0].mxu0
    %3347 = vmatprep.mubr.f32.mxu0 0.0
    %3348 = vmatmul.mubr.f32.gmra.mrb[0].mxu0 %v3002
    %v3349 = vpop.f32.mrb[0].mxu0
    %v3350 = vadd.f32 %v1608, %v3349
    %v3351 = vpop.f32.mrb[0].mxu0
    %3352 = vmatprep.mubr.f32.mxu0 0.0
    %3353 = vmatmul.mubr.f32.gmra.mrb[0].mxu0 %v3004
    %v3354 = vpop.f32.mrb[0].mxu0
    %v3355 = vadd.f32 %v1608, %v3354
    %v3356 = vpop.f32.mrb[0].mxu0
    %3357 = vmatprep.mubr.f32.mxu0 0.0
    %3358 = vmatmul.mubr.f32.gmra.mrb[0].mxu0 %v3006
    %v3359 = vpop.f32.mrb[0].mxu0
    %v3360 = vadd.f32 %v1608, %v3359
    %v3361 = vpop.f32.mrb[0].mxu0
    %3362 = vmatprep.mubr.f32.mxu0 0.0
    %3363 = vmatmul.mubr.f32.gmra.mrb[0].mxu0 %v3008
    %v3364 = vpop.f32.mrb[0].mxu0
    %v3365 = vadd.f32 %v1608, %v3364
    %v3366 = vpop.f32.mrb[0].mxu0
    %3367 = vmatprep.mubr.f32.mxu0 0.0
    %3368 = vmatmul.mubr.f32.gmra.mrb[0].mxu0 %v3010
    %v3369 = vpop.f32.mrb[0].mxu0
    %v3370 = vadd.f32 %v1608, %v3369
    %v3371 = vpop.f32.mrb[0].mxu0
    %3372 = vmatprep.mubr.f32.mxu0 0.0
    %3373 = vmatmul.mubr.f32.gmra.mrb[0].mxu0 %v3012
    %v3374 = vpop.f32.mrb[0].mxu0
    %v3375 = vadd.f32 %v1608, %v3374
    %v3376 = vpop.f32.mrb[0].mxu0
    %3377 = vmatprep.mubr.f32.mxu0 0.0
    %3378 = vmatmul.mubr.f32.gmra.mrb[0].mxu0 %v3014
    %v3379 = vpop.f32.mrb[0].mxu0
    %v3380 = vadd.f32 %v1608, %v3379
    %v3381 = vpop.f32.mrb[0].mxu0
    %3382 = vmatprep.mubr.f32.mxu0 0.0
    %3383 = vmatmul.mubr.f32.gmra.mrb[0].mxu0 %v3016
    %v3384 = vpop.f32.mrb[0].mxu0
    %v3385 = vadd.f32 %v1608, %v3384
    %v3386 = vpop.f32.mrb[0].mxu0
    %3387 = vmatprep.mubr.f32.mxu0 0.0
    %3388 = vmatmul.mubr.f32.gmra.mrb[0].mxu0 %v3018
    %v3389 = vpop.f32.mrb[0].mxu0
    %v3390 = vadd.f32 %v1608, %v3389
    %v3391 = vpop.f32.mrb[0].mxu0
    %3392 = vmatprep.mubr.f32.mxu0 0.0
    %3393 = vmatmul.mubr.f32.gmra.mrb[0].mxu0 %v3020
    %v3394 = vpop.f32.mrb[0].mxu0
    %v3395 = vadd.f32 %v1608, %v3394
    %v3396 = vpop.f32.mrb[0].mxu0
    %3397 = vmatprep.mubr.f32.mxu0 0.0
    %3398 = vmatmul.mubr.f32.gmra.mrb[0].mxu0 %v3022
    %v3399 = vpop.f32.mrb[0].mxu0
    %v3400 = vadd.f32 %v1608, %v3399
    %v3401 = vpop.f32.mrb[0].mxu0
    %3402 = vmatprep.mubr.f32.mxu0 0.0
    %3403 = vmatmul.mubr.f32.gmra.mrb[0].mxu0 %v3024
    %v3404 = vpop.f32.mrb[0].mxu0
    %v3405 = vadd.f32 %v1608, %v3404
    %v3406 = vpop.f32.mrb[0].mxu0
    %3407 = vmatprep.mubr.f32.mxu0 0.0
    %3408 = vmatmul.mubr.f32.gmra.mrb[0].mxu0 %v3026
    %v3409 = vpop.f32.mrb[0].mxu0
    %v3410 = vadd.f32 %v1608, %v3409
    %v3411 = vpop.f32.mrb[0].mxu0
    %3412 = vmatprep.mubr.f32.mxu0 0.0
    %3413 = vmatmul.mubr.f32.gmra.mrb[0].mxu0 %v3028
    %v3414 = vpop.f32.mrb[0].mxu0
    %v3415 = vadd.f32 %v1608, %v3414
    %v3416 = vpop.f32.mrb[0].mxu0
    %3417 = vmatprep.mubr.f32.mxu0 0.0
    %3418 = vmatmul.mubr.f32.gmra.mrb[0].mxu0 %v3030
    %v3419 = vpop.f32.mrb[0].mxu0
    %v3420 = vadd.f32 %v1608, %v3419
    %v3421 = vpop.f32.mrb[0].mxu0
    %3422 = vmatprep.mubr.f32.mxu0 0.0
    %3423 = vmatmul.mubr.f32.gmra.mrb[0].mxu0 %v3032
    %v3424 = vpop.f32.mrb[0].mxu0
    %v3425 = vadd.f32 %v1608, %v3424
    %v3426 = vpop.f32.mrb[0].mxu0
    %3427 = vmatprep.mubr.f32.mxu0 0.0
    %3428 = vmatmul.mubr.f32.gmra.mrb[0].mxu0 %v3034
    %v3429 = vpop.f32.mrb[0].mxu0
    %v3430 = vadd.f32 %v1608, %v3429
    %v3431 = vpop.f32.mrb[0].mxu0
    %3432 = vmatprep.mubr.f32.mxu0 0.0
    %3433 = vmatmul.mubr.f32.gmra.mrb[0].mxu0 %v3036
    %v3434 = vpop.f32.mrb[0].mxu0
    %v3435 = vadd.f32 %v1608, %v3434
    %v3436 = vpop.f32.mrb[0].mxu0
    %3437 = vmatprep.mubr.f32.mxu0 0.0
    %3438 = vmatmul.mubr.f32.gmra.mrb[0].mxu0 %v3038
    %v3439 = vpop.f32.mrb[0].mxu0
    %v3440 = vadd.f32 %v1608, %v3439
    %v3441 = vpop.f32.mrb[0].mxu0
    %3442 = vmatprep.mubr.f32.mxu0 0.0
    %3443 = vmatmul.mubr.f32.gmra.mrb[0].mxu0 %v3040
    %v3444 = vpop.f32.mrb[0].mxu0
    %v3445 = vadd.f32 %v1608, %v3444
    %v3446 = vpop.f32.mrb[0].mxu0
    %3447 = vmatprep.mubr.f32.mxu0 0.0
    %3448 = vmatmul.mubr.f32.gmra.mrb[0].mxu0 %v3042
    %v3449 = vpop.f32.mrb[0].mxu0
    %v3450 = vadd.f32 %v1608, %v3449
    %v3451 = vpop.f32.mrb[0].mxu0
    %3452 = vmatprep.mubr.f32.mxu0 0.0
    %3453 = vmatmul.mubr.f32.gmra.mrb[0].mxu0 %v3044
    %v3454 = vpop.f32.mrb[0].mxu0
    %v3455 = vadd.f32 %v1608, %v3454
    %v3456 = vpop.f32.mrb[0].mxu0
    %3457 = vmatprep.mubr.f32.mxu0 0.0
    %3458 = vmatmul.mubr.f32.gmra.mrb[0].mxu0 %v3046
    %v3459 = vpop.f32.mrb[0].mxu0
    %v3460 = vadd.f32 %v1608, %v3459
    %v3461 = vpop.f32.mrb[0].mxu0
    %3462 = vmatprep.mubr.f32.mxu0 0.0
    %3463 = vmatmul.mubr.f32.gmra.mrb[0].mxu0 %v3048
    %v3464 = vpop.f32.mrb[0].mxu0
    %v3465 = vadd.f32 %v1608, %v3464
    %v3466 = vpop.f32.mrb[0].mxu0
    %3467 = vmatprep.mubr.f32.mxu0 0.0
    %3468 = vmatmul.mubr.f32.gmra.mrb[0].mxu0 %v3050
    %v3469 = vpop.f32.mrb[0].mxu0
    %v3470 = vadd.f32 %v1608, %v3469
    %v3471 = vpop.f32.mrb[0].mxu0
    %3472 = vmatprep.mubr.f32.mxu0 0.0
    %3473 = vmatmul.mubr.f32.gmra.mrb[0].mxu0 %v3052
    %v3474 = vpop.f32.mrb[0].mxu0
    %v3475 = vadd.f32 %v1608, %v3474
    %v3476 = vpop.f32.mrb[0].mxu0
    %3477 = vmatprep.mubr.f32.mxu0 0.0
    %3478 = vmatmul.mubr.f32.gmra.mrb[0].mxu0 %v3054
    %v3479 = vpop.f32.mrb[0].mxu0
    %v3480 = vadd.f32 %v1608, %v3479
    %v3481 = vpop.f32.mrb[0].mxu0
    %3482 = vmatprep.mubr.f32.mxu0 0.0
    %3483 = vmatmul.mubr.f32.gmra.mrb[0].mxu0 %v3056
    %v3484 = vpop.f32.mrb[0].mxu0
    %v3485 = vadd.f32 %v1608, %v3484
    %v3486 = vpop.f32.mrb[0].mxu0
    %3487 = vmatprep.mubr.f32.mxu0 0.0
    %3488 = vmatmul.mubr.f32.gmra.mrb[0].mxu0 %v3058
    %v3489 = vpop.f32.mrb[0].mxu0
    %v3490 = vadd.f32 %v1608, %v3489
    %v3491 = vpop.f32.mrb[0].mxu0
    %3492 = vmatprep.mubr.f32.mxu0 0.0
    %3493 = vmatmul.mubr.f32.gmra.mrb[0].mxu0 %v3060
    %v3494 = vpop.f32.mrb[0].mxu0
    %v3495 = vadd.f32 %v1608, %v3494
    %v3496 = vpop.f32.mrb[0].mxu0
    %3497 = vmatprep.mubr.f32.mxu0 0.0
    %3498 = vmatmul.mubr.f32.gmra.mrb[0].mxu0 %v3062
    %v3499 = vpop.f32.mrb[0].mxu0
    %v3500 = vadd.f32 %v1608, %v3499
    %v3501 = vpop.f32.mrb[0].mxu0
    %3502 = vmatprep.mubr.f32.mxu0 0.0
    %3503 = vmatmul.mubr.f32.gmra.mrb[0].mxu0 %v3064
    %v3504 = vpop.f32.mrb[0].mxu0
    %v3505 = vadd.f32 %v1608, %v3504
    %v3506 = vpop.f32.mrb[0].mxu0
    %3507 = vmatprep.mubr.f32.mxu0 0.0
    %3508 = vmatmul.mubr.f32.gmra.mrb[0].mxu0 %v3066
    %v3509 = vpop.f32.mrb[0].mxu0
    %v3510 = vadd.f32 %v1608, %v3509
    %v3511 = vpop.f32.mrb[0].mxu0
    %3512 = vmatprep.mubr.f32.mxu0 0.0
    %3513 = vmatmul.mubr.f32.gmra.mrb[0].mxu0 %v3068
    %v3514 = vpop.f32.mrb[0].mxu0
    %v3515 = vadd.f32 %v1608, %v3514
    %v3516 = vpop.f32.mrb[0].mxu0
    %3517 = vmatprep.mubr.f32.mxu0 0.0
    %3518 = vmatmul.mubr.f32.gmra.mrb[0].mxu0 %v3070
    %v3519 = vpop.f32.mrb[0].mxu0
    %v3520 = vadd.f32 %v1608, %v3519
    %v3521 = vpop.f32.mrb[0].mxu0
    %3522 = vmatprep.mubr.f32.mxu0 0.0
    %3523 = vmatmul.mubr.f32.gmra.mrb[0].mxu0 %v3072
    %v3524 = vpop.f32.mrb[0].mxu0
    %v3525 = vadd.f32 %v1608, %v3524
    %v3526 = vpop.f32.mrb[0].mxu0
    %3527 = vdwg.mxu0
    %v3605 = vcombine.high %v3145, %v3145
    %v3607 = vunpack.c.l.s4 1983009808
    %v3608 = vunpack.c.0.s8 %v3607
    %v3609 = vlaneseq
    %v3610 = vshrl.u32 %v3609, 7
    %v3611 = vsub.s32 %v3608, %v3610
    %v3612 = vrot.slane %v3145, %v3611
    %v3614 = vunpack.c.l.s4 1983009808
    %v3615 = vunpack.c.0.s8 %v3614
    %v3616 = vlaneseq
    %v3617 = vshrl.u32 %v3616, 7
    %v3618 = vsub.s32 %v3615, %v3617
    %v3619 = vrot.slane %v3605, %v3618
    %v3620 = vcombine.high %v3612, %v3612
    %v3621 = vcombine.high %v3619, %v3619
    %v3622 = vcombine.high %v3150, %v3150
    %v3624 = vunpack.c.l.s4 1983009808
    %v3625 = vunpack.c.0.s8 %v3624
    %v3626 = vlaneseq
    %v3627 = vshrl.u32 %v3626, 7
    %v3628 = vsub.s32 %v3625, %v3627
    %v3629 = vrot.slane %v3150, %v3628
    %v3631 = vunpack.c.l.s4 1983009808
    %v3632 = vunpack.c.0.s8 %v3631
    %v3633 = vlaneseq
    %v3634 = vshrl.u32 %v3633, 7
    %v3635 = vsub.s32 %v3632, %v3634
    %v3636 = vrot.slane %v3622, %v3635
    %v3637 = vcombine.high %v3629, %v3629
    %v3638 = vcombine.high %v3636, %v3636
    %v3639 = vcombine.high %v3155, %v3155
    %v3641 = vunpack.c.l.s4 1983009808
    %v3642 = vunpack.c.0.s8 %v3641
    %v3643 = vlaneseq
    %v3644 = vshrl.u32 %v3643, 7
    %v3645 = vsub.s32 %v3642, %v3644
    %v3646 = vrot.slane %v3155, %v3645
    %v3648 = vunpack.c.l.s4 1983009808
    %v3649 = vunpack.c.0.s8 %v3648
    %v3650 = vlaneseq
    %v3651 = vshrl.u32 %v3650, 7
    %v3652 = vsub.s32 %v3649, %v3651
    %v3653 = vrot.slane %v3639, %v3652
    %v3654 = vcombine.high %v3646, %v3646
    %v3655 = vcombine.high %v3653, %v3653
    %v3656 = vcombine.high %v3160, %v3160
    %v3658 = vunpack.c.l.s4 1983009808
    %v3659 = vunpack.c.0.s8 %v3658
    %v3660 = vlaneseq
    %v3661 = vshrl.u32 %v3660, 7
    %v3662 = vsub.s32 %v3659, %v3661
    %v3663 = vrot.slane %v3160, %v3662
    %v3665 = vunpack.c.l.s4 1983009808
    %v3666 = vunpack.c.0.s8 %v3665
    %v3667 = vlaneseq
    %v3668 = vshrl.u32 %v3667, 7
    %v3669 = vsub.s32 %v3666, %v3668
    %v3670 = vrot.slane %v3656, %v3669
    %v3671 = vcombine.high %v3663, %v3663
    %v3672 = vcombine.high %v3670, %v3670
    %v3673 = vcombine.high %v3165, %v3165
    %v3675 = vunpack.c.l.s4 1983009808
    %v3676 = vunpack.c.0.s8 %v3675
    %v3677 = vlaneseq
    %v3678 = vshrl.u32 %v3677, 7
    %v3679 = vsub.s32 %v3676, %v3678
    %v3680 = vrot.slane %v3165, %v3679
    %v3682 = vunpack.c.l.s4 1983009808
    %v3683 = vunpack.c.0.s8 %v3682
    %v3684 = vlaneseq
    %v3685 = vshrl.u32 %v3684, 7
    %v3686 = vsub.s32 %v3683, %v3685
    %v3687 = vrot.slane %v3673, %v3686
    %v3688 = vcombine.high %v3680, %v3680
    %v3689 = vcombine.high %v3687, %v3687
    %v3690 = vcombine.high %v3170, %v3170
    %v3692 = vunpack.c.l.s4 1983009808
    %v3693 = vunpack.c.0.s8 %v3692
    %v3694 = vlaneseq
    %v3695 = vshrl.u32 %v3694, 7
    %v3696 = vsub.s32 %v3693, %v3695
    %v3697 = vrot.slane %v3170, %v3696
    %v3699 = vunpack.c.l.s4 1983009808
    %v3700 = vunpack.c.0.s8 %v3699
    %v3701 = vlaneseq
    %v3702 = vshrl.u32 %v3701, 7
    %v3703 = vsub.s32 %v3700, %v3702
    %v3704 = vrot.slane %v3690, %v3703
    %v3705 = vcombine.high %v3697, %v3697
    %v3706 = vcombine.high %v3704, %v3704
    %v3707 = vcombine.high %v3175, %v3175
    %v3709 = vunpack.c.l.s4 1983009808
    %v3710 = vunpack.c.0.s8 %v3709
    %v3711 = vlaneseq
    %v3712 = vshrl.u32 %v3711, 7
    %v3713 = vsub.s32 %v3710, %v3712
    %v3714 = vrot.slane %v3175, %v3713
    %v3716 = vunpack.c.l.s4 1983009808
    %v3717 = vunpack.c.0.s8 %v3716
    %v3718 = vlaneseq
    %v3719 = vshrl.u32 %v3718, 7
    %v3720 = vsub.s32 %v3717, %v3719
    %v3721 = vrot.slane %v3707, %v3720
    %v3722 = vcombine.high %v3714, %v3714
    %v3723 = vcombine.high %v3721, %v3721
    %v3724 = vcombine.high %v3180, %v3180
    %v3726 = vunpack.c.l.s4 1983009808
    %v3727 = vunpack.c.0.s8 %v3726
    %v3728 = vlaneseq
    %v3729 = vshrl.u32 %v3728, 7
    %v3730 = vsub.s32 %v3727, %v3729
    %v3731 = vrot.slane %v3180, %v3730
    %v3733 = vunpack.c.l.s4 1983009808
    %v3734 = vunpack.c.0.s8 %v3733
    %v3735 = vlaneseq
    %v3736 = vshrl.u32 %v3735, 7
    %v3737 = vsub.s32 %v3734, %v3736
    %v3738 = vrot.slane %v3724, %v3737
    %v3739 = vcombine.high %v3731, %v3731
    %v3740 = vcombine.high %v3738, %v3738
    %v3741 = vcombine.high %v3185, %v3185
    %v3743 = vunpack.c.l.s4 1983009808
    %v3744 = vunpack.c.0.s8 %v3743
    %v3745 = vlaneseq
    %v3746 = vshrl.u32 %v3745, 7
    %v3747 = vsub.s32 %v3744, %v3746
    %v3748 = vrot.slane %v3185, %v3747
    %v3750 = vunpack.c.l.s4 1983009808
    %v3751 = vunpack.c.0.s8 %v3750
    %v3752 = vlaneseq
    %v3753 = vshrl.u32 %v3752, 7
    %v3754 = vsub.s32 %v3751, %v3753
    %v3755 = vrot.slane %v3741, %v3754
    %v3756 = vcombine.high %v3748, %v3748
    %v3757 = vcombine.high %v3755, %v3755
    %v3758 = vcombine.high %v3190, %v3190
    %v3760 = vunpack.c.l.s4 1983009808
    %v3761 = vunpack.c.0.s8 %v3760
    %v3762 = vlaneseq
    %v3763 = vshrl.u32 %v3762, 7
    %v3764 = vsub.s32 %v3761, %v3763
    %v3765 = vrot.slane %v3190, %v3764
    %v3767 = vunpack.c.l.s4 1983009808
    %v3768 = vunpack.c.0.s8 %v3767
    %v3769 = vlaneseq
    %v3770 = vshrl.u32 %v3769, 7
    %v3771 = vsub.s32 %v3768, %v3770
    %v3772 = vrot.slane %v3758, %v3771
    %v3773 = vcombine.high %v3765, %v3765
    %v3774 = vcombine.high %v3772, %v3772
    %v3775 = vcombine.high %v3195, %v3195
    %v3777 = vunpack.c.l.s4 1983009808
    %v3778 = vunpack.c.0.s8 %v3777
    %v3779 = vlaneseq
    %v3780 = vshrl.u32 %v3779, 7
    %v3781 = vsub.s32 %v3778, %v3780
    %v3782 = vrot.slane %v3195, %v3781
    %v3784 = vunpack.c.l.s4 1983009808
    %v3785 = vunpack.c.0.s8 %v3784
    %v3786 = vlaneseq
    %v3787 = vshrl.u32 %v3786, 7
    %v3788 = vsub.s32 %v3785, %v3787
    %v3789 = vrot.slane %v3775, %v3788
    %v3790 = vcombine.high %v3782, %v3782
    %v3791 = vcombine.high %v3789, %v3789
    %v3792 = vcombine.high %v3200, %v3200
    %v3794 = vunpack.c.l.s4 1983009808
    %v3795 = vunpack.c.0.s8 %v3794
    %v3796 = vlaneseq
    %v3797 = vshrl.u32 %v3796, 7
    %v3798 = vsub.s32 %v3795, %v3797
    %v3799 = vrot.slane %v3200, %v3798
    %v3801 = vunpack.c.l.s4 1983009808
    %v3802 = vunpack.c.0.s8 %v3801
    %v3803 = vlaneseq
    %v3804 = vshrl.u32 %v3803, 7
    %v3805 = vsub.s32 %v3802, %v3804
    %v3806 = vrot.slane %v3792, %v3805
    %v3807 = vcombine.high %v3799, %v3799
    %v3808 = vcombine.high %v3806, %v3806
    %v3809 = vcombine.high %v3205, %v3205
    %v3811 = vunpack.c.l.s4 1983009808
    %v3812 = vunpack.c.0.s8 %v3811
    %v3813 = vlaneseq
    %v3814 = vshrl.u32 %v3813, 7
    %v3815 = vsub.s32 %v3812, %v3814
    %v3816 = vrot.slane %v3205, %v3815
    %v3818 = vunpack.c.l.s4 1983009808
    %v3819 = vunpack.c.0.s8 %v3818
    %v3820 = vlaneseq
    %v3821 = vshrl.u32 %v3820, 7
    %v3822 = vsub.s32 %v3819, %v3821
    %v3823 = vrot.slane %v3809, %v3822
    %v3824 = vcombine.high %v3816, %v3816
    %v3825 = vcombine.high %v3823, %v3823
    %v3826 = vcombine.high %v3210, %v3210
    %v3828 = vunpack.c.l.s4 1983009808
    %v3829 = vunpack.c.0.s8 %v3828
    %v3830 = vlaneseq
    %v3831 = vshrl.u32 %v3830, 7
    %v3832 = vsub.s32 %v3829, %v3831
    %v3833 = vrot.slane %v3210, %v3832
    %v3835 = vunpack.c.l.s4 1983009808
    %v3836 = vunpack.c.0.s8 %v3835
    %v3837 = vlaneseq
    %v3838 = vshrl.u32 %v3837, 7
    %v3839 = vsub.s32 %v3836, %v3838
    %v3840 = vrot.slane %v3826, %v3839
    %v3841 = vcombine.high %v3833, %v3833
    %v3842 = vcombine.high %v3840, %v3840
    %v3843 = vcombine.high %v3215, %v3215
    %v3845 = vunpack.c.l.s4 1983009808
    %v3846 = vunpack.c.0.s8 %v3845
    %v3847 = vlaneseq
    %v3848 = vshrl.u32 %v3847, 7
    %v3849 = vsub.s32 %v3846, %v3848
    %v3850 = vrot.slane %v3215, %v3849
    %v3852 = vunpack.c.l.s4 1983009808
    %v3853 = vunpack.c.0.s8 %v3852
    %v3854 = vlaneseq
    %v3855 = vshrl.u32 %v3854, 7
    %v3856 = vsub.s32 %v3853, %v3855
    %v3857 = vrot.slane %v3843, %v3856
    %v3858 = vcombine.high %v3850, %v3850
    %v3859 = vcombine.high %v3857, %v3857
    %v3860 = vcombine.high %v3220, %v3220
    %v3862 = vunpack.c.l.s4 1983009808
    %v3863 = vunpack.c.0.s8 %v3862
    %v3864 = vlaneseq
    %v3865 = vshrl.u32 %v3864, 7
    %v3866 = vsub.s32 %v3863, %v3865
    %v3867 = vrot.slane %v3220, %v3866
    %v3869 = vunpack.c.l.s4 1983009808
    %v3870 = vunpack.c.0.s8 %v3869
    %v3871 = vlaneseq
    %v3872 = vshrl.u32 %v3871, 7
    %v3873 = vsub.s32 %v3870, %v3872
    %v3874 = vrot.slane %v3860, %v3873
    %v3875 = vcombine.high %v3867, %v3867
    %v3876 = vcombine.high %v3874, %v3874
    %v3877 = vcombine.high %v3225, %v3225
    %v3879 = vunpack.c.l.s4 1983009808
    %v3880 = vunpack.c.0.s8 %v3879
    %v3881 = vlaneseq
    %v3882 = vshrl.u32 %v3881, 7
    %v3883 = vsub.s32 %v3880, %v3882
    %v3884 = vrot.slane %v3225, %v3883
    %v3886 = vunpack.c.l.s4 1983009808
    %v3887 = vunpack.c.0.s8 %v3886
    %v3888 = vlaneseq
    %v3889 = vshrl.u32 %v3888, 7
    %v3890 = vsub.s32 %v3887, %v3889
    %v3891 = vrot.slane %v3877, %v3890
    %v3892 = vcombine.high %v3884, %v3884
    %v3893 = vcombine.high %v3891, %v3891
    %v3894 = vcombine.high %v3230, %v3230
    %v3896 = vunpack.c.l.s4 1983009808
    %v3897 = vunpack.c.0.s8 %v3896
    %v3898 = vlaneseq
    %v3899 = vshrl.u32 %v3898, 7
    %v3900 = vsub.s32 %v3897, %v3899
    %v3901 = vrot.slane %v3230, %v3900
    %v3903 = vunpack.c.l.s4 1983009808
    %v3904 = vunpack.c.0.s8 %v3903
    %v3905 = vlaneseq
    %v3906 = vshrl.u32 %v3905, 7
    %v3907 = vsub.s32 %v3904, %v3906
    %v3908 = vrot.slane %v3894, %v3907
    %v3909 = vcombine.high %v3901, %v3901
    %v3910 = vcombine.high %v3908, %v3908
    %v3911 = vcombine.high %v3235, %v3235
    %v3913 = vunpack.c.l.s4 1983009808
    %v3914 = vunpack.c.0.s8 %v3913
    %v3915 = vlaneseq
    %v3916 = vshrl.u32 %v3915, 7
    %v3917 = vsub.s32 %v3914, %v3916
    %v3918 = vrot.slane %v3235, %v3917
    %v3920 = vunpack.c.l.s4 1983009808
    %v3921 = vunpack.c.0.s8 %v3920
    %v3922 = vlaneseq
    %v3923 = vshrl.u32 %v3922, 7
    %v3924 = vsub.s32 %v3921, %v3923
    %v3925 = vrot.slane %v3911, %v3924
    %v3926 = vcombine.high %v3918, %v3918
    %v3927 = vcombine.high %v3925, %v3925
    %v3928 = vcombine.high %v3240, %v3240
    %v3930 = vunpack.c.l.s4 1983009808
    %v3931 = vunpack.c.0.s8 %v3930
    %v3932 = vlaneseq
    %v3933 = vshrl.u32 %v3932, 7
    %v3934 = vsub.s32 %v3931, %v3933
    %v3935 = vrot.slane %v3240, %v3934
    %v3937 = vunpack.c.l.s4 1983009808
    %v3938 = vunpack.c.0.s8 %v3937
    %v3939 = vlaneseq
    %v3940 = vshrl.u32 %v3939, 7
    %v3941 = vsub.s32 %v3938, %v3940
    %v3942 = vrot.slane %v3928, %v3941
    %v3943 = vcombine.high %v3935, %v3935
    %v3944 = vcombine.high %v3942, %v3942
    %v3945 = vcombine.high %v3245, %v3245
    %v3947 = vunpack.c.l.s4 1983009808
    %v3948 = vunpack.c.0.s8 %v3947
    %v3949 = vlaneseq
    %v3950 = vshrl.u32 %v3949, 7
    %v3951 = vsub.s32 %v3948, %v3950
    %v3952 = vrot.slane %v3245, %v3951
    %v3954 = vunpack.c.l.s4 1983009808
    %v3955 = vunpack.c.0.s8 %v3954
    %v3956 = vlaneseq
    %v3957 = vshrl.u32 %v3956, 7
    %v3958 = vsub.s32 %v3955, %v3957
    %v3959 = vrot.slane %v3945, %v3958
    %v3960 = vcombine.high %v3952, %v3952
    %v3961 = vcombine.high %v3959, %v3959
    %v3962 = vcombine.high %v3250, %v3250
    %v3964 = vunpack.c.l.s4 1983009808
    %v3965 = vunpack.c.0.s8 %v3964
    %v3966 = vlaneseq
    %v3967 = vshrl.u32 %v3966, 7
    %v3968 = vsub.s32 %v3965, %v3967
    %v3969 = vrot.slane %v3250, %v3968
    %v3971 = vunpack.c.l.s4 1983009808
    %v3972 = vunpack.c.0.s8 %v3971
    %v3973 = vlaneseq
    %v3974 = vshrl.u32 %v3973, 7
    %v3975 = vsub.s32 %v3972, %v3974
    %v3976 = vrot.slane %v3962, %v3975
    %v3977 = vcombine.high %v3969, %v3969
    %v3978 = vcombine.high %v3976, %v3976
    %v3979 = vcombine.high %v3255, %v3255
    %v3981 = vunpack.c.l.s4 1983009808
    %v3982 = vunpack.c.0.s8 %v3981
    %v3983 = vlaneseq
    %v3984 = vshrl.u32 %v3983, 7
    %v3985 = vsub.s32 %v3982, %v3984
    %v3986 = vrot.slane %v3255, %v3985
    %v3988 = vunpack.c.l.s4 1983009808
    %v3989 = vunpack.c.0.s8 %v3988
    %v3990 = vlaneseq
    %v3991 = vshrl.u32 %v3990, 7
    %v3992 = vsub.s32 %v3989, %v3991
    %v3993 = vrot.slane %v3979, %v3992
    %v3994 = vcombine.high %v3986, %v3986
    %v3995 = vcombine.high %v3993, %v3993
    %v3996 = vcombine.high %v3260, %v3260
    %v3998 = vunpack.c.l.s4 1983009808
    %v3999 = vunpack.c.0.s8 %v3998
    %v4000 = vlaneseq
    %v4001 = vshrl.u32 %v4000, 7
    %v4002 = vsub.s32 %v3999, %v4001
    %v4003 = vrot.slane %v3260, %v4002
    %v4005 = vunpack.c.l.s4 1983009808
    %v4006 = vunpack.c.0.s8 %v4005
    %v4007 = vlaneseq
    %v4008 = vshrl.u32 %v4007, 7
    %v4009 = vsub.s32 %v4006, %v4008
    %v4010 = vrot.slane %v3996, %v4009
    %v4011 = vcombine.high %v4003, %v4003
    %v4012 = vcombine.high %v4010, %v4010
    %v4013 = vcombine.high %v3265, %v3265
    %v4015 = vunpack.c.l.s4 1983009808
    %v4016 = vunpack.c.0.s8 %v4015
    %v4017 = vlaneseq
    %v4018 = vshrl.u32 %v4017, 7
    %v4019 = vsub.s32 %v4016, %v4018
    %v4020 = vrot.slane %v3265, %v4019
    %v4022 = vunpack.c.l.s4 1983009808
    %v4023 = vunpack.c.0.s8 %v4022
    %v4024 = vlaneseq
    %v4025 = vshrl.u32 %v4024, 7
    %v4026 = vsub.s32 %v4023, %v4025
    %v4027 = vrot.slane %v4013, %v4026
    %v4028 = vcombine.high %v4020, %v4020
    %v4029 = vcombine.high %v4027, %v4027
    %v4030 = vcombine.high %v3270, %v3270
    %v4032 = vunpack.c.l.s4 1983009808
    %v4033 = vunpack.c.0.s8 %v4032
    %v4034 = vlaneseq
    %v4035 = vshrl.u32 %v4034, 7
    %v4036 = vsub.s32 %v4033, %v4035
    %v4037 = vrot.slane %v3270, %v4036
    %v4039 = vunpack.c.l.s4 1983009808
    %v4040 = vunpack.c.0.s8 %v4039
    %v4041 = vlaneseq
    %v4042 = vshrl.u32 %v4041, 7
    %v4043 = vsub.s32 %v4040, %v4042
    %v4044 = vrot.slane %v4030, %v4043
    %v4045 = vcombine.high %v4037, %v4037
    %v4046 = vcombine.high %v4044, %v4044
    %v4047 = vcombine.high %v3275, %v3275
    %v4049 = vunpack.c.l.s4 1983009808
    %v4050 = vunpack.c.0.s8 %v4049
    %v4051 = vlaneseq
    %v4052 = vshrl.u32 %v4051, 7
    %v4053 = vsub.s32 %v4050, %v4052
    %v4054 = vrot.slane %v3275, %v4053
    %v4056 = vunpack.c.l.s4 1983009808
    %v4057 = vunpack.c.0.s8 %v4056
    %v4058 = vlaneseq
    %v4059 = vshrl.u32 %v4058, 7
    %v4060 = vsub.s32 %v4057, %v4059
    %v4061 = vrot.slane %v4047, %v4060
    %v4062 = vcombine.high %v4054, %v4054
    %v4063 = vcombine.high %v4061, %v4061
    %v4064 = vcombine.high %v3280, %v3280
    %v4066 = vunpack.c.l.s4 1983009808
    %v4067 = vunpack.c.0.s8 %v4066
    %v4068 = vlaneseq
    %v4069 = vshrl.u32 %v4068, 7
    %v4070 = vsub.s32 %v4067, %v4069
    %v4071 = vrot.slane %v3280, %v4070
    %v4073 = vunpack.c.l.s4 1983009808
    %v4074 = vunpack.c.0.s8 %v4073
    %v4075 = vlaneseq
    %v4076 = vshrl.u32 %v4075, 7
    %v4077 = vsub.s32 %v4074, %v4076
    %v4078 = vrot.slane %v4064, %v4077
    %v4079 = vcombine.high %v4071, %v4071
    %v4080 = vcombine.high %v4078, %v4078
    %v4081 = vcombine.high %v3285, %v3285
    %v4083 = vunpack.c.l.s4 1983009808
    %v4084 = vunpack.c.0.s8 %v4083
    %v4085 = vlaneseq
    %v4086 = vshrl.u32 %v4085, 7
    %v4087 = vsub.s32 %v4084, %v4086
    %v4088 = vrot.slane %v3285, %v4087
    %v4090 = vunpack.c.l.s4 1983009808
    %v4091 = vunpack.c.0.s8 %v4090
    %v4092 = vlaneseq
    %v4093 = vshrl.u32 %v4092, 7
    %v4094 = vsub.s32 %v4091, %v4093
    %v4095 = vrot.slane %v4081, %v4094
    %v4096 = vcombine.high %v4088, %v4088
    %v4097 = vcombine.high %v4095, %v4095
    %v4098 = vcombine.high %v3290, %v3290
    %v4100 = vunpack.c.l.s4 1983009808
    %v4101 = vunpack.c.0.s8 %v4100
    %v4102 = vlaneseq
    %v4103 = vshrl.u32 %v4102, 7
    %v4104 = vsub.s32 %v4101, %v4103
    %v4105 = vrot.slane %v3290, %v4104
    %v4107 = vunpack.c.l.s4 1983009808
    %v4108 = vunpack.c.0.s8 %v4107
    %v4109 = vlaneseq
    %v4110 = vshrl.u32 %v4109, 7
    %v4111 = vsub.s32 %v4108, %v4110
    %v4112 = vrot.slane %v4098, %v4111
    %v4113 = vcombine.high %v4105, %v4105
    %v4114 = vcombine.high %v4112, %v4112
    %v4115 = vcombine.high %v3295, %v3295
    %v4117 = vunpack.c.l.s4 1983009808
    %v4118 = vunpack.c.0.s8 %v4117
    %v4119 = vlaneseq
    %v4120 = vshrl.u32 %v4119, 7
    %v4121 = vsub.s32 %v4118, %v4120
    %v4122 = vrot.slane %v3295, %v4121
    %v4124 = vunpack.c.l.s4 1983009808
    %v4125 = vunpack.c.0.s8 %v4124
    %v4126 = vlaneseq
    %v4127 = vshrl.u32 %v4126, 7
    %v4128 = vsub.s32 %v4125, %v4127
    %v4129 = vrot.slane %v4115, %v4128
    %v4130 = vcombine.high %v4122, %v4122
    %v4131 = vcombine.high %v4129, %v4129
    %v4132 = vcombine.high %v3300, %v3300
    %v4134 = vunpack.c.l.s4 1983009808
    %v4135 = vunpack.c.0.s8 %v4134
    %v4136 = vlaneseq
    %v4137 = vshrl.u32 %v4136, 7
    %v4138 = vsub.s32 %v4135, %v4137
    %v4139 = vrot.slane %v3300, %v4138
    %v4141 = vunpack.c.l.s4 1983009808
    %v4142 = vunpack.c.0.s8 %v4141
    %v4143 = vlaneseq
    %v4144 = vshrl.u32 %v4143, 7
    %v4145 = vsub.s32 %v4142, %v4144
    %v4146 = vrot.slane %v4132, %v4145
    %v4147 = vcombine.high %v4139, %v4139
    %v4148 = vcombine.high %v4146, %v4146
    %v4149 = vcombine.high %v3305, %v3305
    %v4151 = vunpack.c.l.s4 1983009808
    %v4152 = vunpack.c.0.s8 %v4151
    %v4153 = vlaneseq
    %v4154 = vshrl.u32 %v4153, 7
    %v4155 = vsub.s32 %v4152, %v4154
    %v4156 = vrot.slane %v3305, %v4155
    %v4158 = vunpack.c.l.s4 1983009808
    %v4159 = vunpack.c.0.s8 %v4158
    %v4160 = vlaneseq
    %v4161 = vshrl.u32 %v4160, 7
    %v4162 = vsub.s32 %v4159, %v4161
    %v4163 = vrot.slane %v4149, %v4162
    %v4164 = vcombine.high %v4156, %v4156
    %v4165 = vcombine.high %v4163, %v4163
    %v4166 = vcombine.high %v3310, %v3310
    %v4168 = vunpack.c.l.s4 1983009808
    %v4169 = vunpack.c.0.s8 %v4168
    %v4170 = vlaneseq
    %v4171 = vshrl.u32 %v4170, 7
    %v4172 = vsub.s32 %v4169, %v4171
    %v4173 = vrot.slane %v3310, %v4172
    %v4175 = vunpack.c.l.s4 1983009808
    %v4176 = vunpack.c.0.s8 %v4175
    %v4177 = vlaneseq
    %v4178 = vshrl.u32 %v4177, 7
    %v4179 = vsub.s32 %v4176, %v4178
    %v4180 = vrot.slane %v4166, %v4179
    %v4181 = vcombine.high %v4173, %v4173
    %v4182 = vcombine.high %v4180, %v4180
    %v4183 = vcombine.high %v3315, %v3315
    %v4185 = vunpack.c.l.s4 1983009808
    %v4186 = vunpack.c.0.s8 %v4185
    %v4187 = vlaneseq
    %v4188 = vshrl.u32 %v4187, 7
    %v4189 = vsub.s32 %v4186, %v4188
    %v4190 = vrot.slane %v3315, %v4189
    %v4192 = vunpack.c.l.s4 1983009808
    %v4193 = vunpack.c.0.s8 %v4192
    %v4194 = vlaneseq
    %v4195 = vshrl.u32 %v4194, 7
    %v4196 = vsub.s32 %v4193, %v4195
    %v4197 = vrot.slane %v4183, %v4196
    %v4198 = vcombine.high %v4190, %v4190
    %v4199 = vcombine.high %v4197, %v4197
    %v4200 = vcombine.high %v3320, %v3320
    %v4202 = vunpack.c.l.s4 1983009808
    %v4203 = vunpack.c.0.s8 %v4202
    %v4204 = vlaneseq
    %v4205 = vshrl.u32 %v4204, 7
    %v4206 = vsub.s32 %v4203, %v4205
    %v4207 = vrot.slane %v3320, %v4206
    %v4209 = vunpack.c.l.s4 1983009808
    %v4210 = vunpack.c.0.s8 %v4209
    %v4211 = vlaneseq
    %v4212 = vshrl.u32 %v4211, 7
    %v4213 = vsub.s32 %v4210, %v4212
    %v4214 = vrot.slane %v4200, %v4213
    %v4215 = vcombine.high %v4207, %v4207
    %v4216 = vcombine.high %v4214, %v4214
    %v4217 = vcombine.high %v3325, %v3325
    %v4219 = vunpack.c.l.s4 1983009808
    %v4220 = vunpack.c.0.s8 %v4219
    %v4221 = vlaneseq
    %v4222 = vshrl.u32 %v4221, 7
    %v4223 = vsub.s32 %v4220, %v4222
    %v4224 = vrot.slane %v3325, %v4223
    %v4226 = vunpack.c.l.s4 1983009808
    %v4227 = vunpack.c.0.s8 %v4226
    %v4228 = vlaneseq
    %v4229 = vshrl.u32 %v4228, 7
    %v4230 = vsub.s32 %v4227, %v4229
    %v4231 = vrot.slane %v4217, %v4230
    %v4232 = vcombine.high %v4224, %v4224
    %v4233 = vcombine.high %v4231, %v4231
    %v4234 = vcombine.high %v3330, %v3330
    %v4236 = vunpack.c.l.s4 1983009808
    %v4237 = vunpack.c.0.s8 %v4236
    %v4238 = vlaneseq
    %v4239 = vshrl.u32 %v4238, 7
    %v4240 = vsub.s32 %v4237, %v4239
    %v4241 = vrot.slane %v3330, %v4240
    %v4243 = vunpack.c.l.s4 1983009808
    %v4244 = vunpack.c.0.s8 %v4243
    %v4245 = vlaneseq
    %v4246 = vshrl.u32 %v4245, 7
    %v4247 = vsub.s32 %v4244, %v4246
    %v4248 = vrot.slane %v4234, %v4247
    %v4249 = vcombine.high %v4241, %v4241
    %v4250 = vcombine.high %v4248, %v4248
    %v4251 = vcombine.high %v3335, %v3335
    %v4253 = vunpack.c.l.s4 1983009808
    %v4254 = vunpack.c.0.s8 %v4253
    %v4255 = vlaneseq
    %v4256 = vshrl.u32 %v4255, 7
    %v4257 = vsub.s32 %v4254, %v4256
    %v4258 = vrot.slane %v3335, %v4257
    %v4260 = vunpack.c.l.s4 1983009808
    %v4261 = vunpack.c.0.s8 %v4260
    %v4262 = vlaneseq
    %v4263 = vshrl.u32 %v4262, 7
    %v4264 = vsub.s32 %v4261, %v4263
    %v4265 = vrot.slane %v4251, %v4264
    %v4266 = vcombine.high %v4258, %v4258
    %v4267 = vcombine.high %v4265, %v4265
    %v4268 = vcombine.high %v3340, %v3340
    %v4270 = vunpack.c.l.s4 1983009808
    %v4271 = vunpack.c.0.s8 %v4270
    %v4272 = vlaneseq
    %v4273 = vshrl.u32 %v4272, 7
    %v4274 = vsub.s32 %v4271, %v4273
    %v4275 = vrot.slane %v3340, %v4274
    %v4277 = vunpack.c.l.s4 1983009808
    %v4278 = vunpack.c.0.s8 %v4277
    %v4279 = vlaneseq
    %v4280 = vshrl.u32 %v4279, 7
    %v4281 = vsub.s32 %v4278, %v4280
    %v4282 = vrot.slane %v4268, %v4281
    %v4283 = vcombine.high %v4275, %v4275
    %v4284 = vcombine.high %v4282, %v4282
    %v4285 = vcombine.high %v3345, %v3345
    %v4287 = vunpack.c.l.s4 1983009808
    %v4288 = vunpack.c.0.s8 %v4287
    %v4289 = vlaneseq
    %v4290 = vshrl.u32 %v4289, 7
    %v4291 = vsub.s32 %v4288, %v4290
    %v4292 = vrot.slane %v3345, %v4291
    %v4294 = vunpack.c.l.s4 1983009808
    %v4295 = vunpack.c.0.s8 %v4294
    %v4296 = vlaneseq
    %v4297 = vshrl.u32 %v4296, 7
    %v4298 = vsub.s32 %v4295, %v4297
    %v4299 = vrot.slane %v4285, %v4298
    %v4300 = vcombine.high %v4292, %v4292
    %v4301 = vcombine.high %v4299, %v4299
    %v4302 = vcombine.high %v3350, %v3350
    %v4304 = vunpack.c.l.s4 1983009808
    %v4305 = vunpack.c.0.s8 %v4304
    %v4306 = vlaneseq
    %v4307 = vshrl.u32 %v4306, 7
    %v4308 = vsub.s32 %v4305, %v4307
    %v4309 = vrot.slane %v3350, %v4308
    %v4311 = vunpack.c.l.s4 1983009808
    %v4312 = vunpack.c.0.s8 %v4311
    %v4313 = vlaneseq
    %v4314 = vshrl.u32 %v4313, 7
    %v4315 = vsub.s32 %v4312, %v4314
    %v4316 = vrot.slane %v4302, %v4315
    %v4317 = vcombine.high %v4309, %v4309
    %v4318 = vcombine.high %v4316, %v4316
    %v4319 = vcombine.high %v3355, %v3355
    %v4321 = vunpack.c.l.s4 1983009808
    %v4322 = vunpack.c.0.s8 %v4321
    %v4323 = vlaneseq
    %v4324 = vshrl.u32 %v4323, 7
    %v4325 = vsub.s32 %v4322, %v4324
    %v4326 = vrot.slane %v3355, %v4325
    %v4328 = vunpack.c.l.s4 1983009808
    %v4329 = vunpack.c.0.s8 %v4328
    %v4330 = vlaneseq
    %v4331 = vshrl.u32 %v4330, 7
    %v4332 = vsub.s32 %v4329, %v4331
    %v4333 = vrot.slane %v4319, %v4332
    %v4334 = vcombine.high %v4326, %v4326
    %v4335 = vcombine.high %v4333, %v4333
    %v4336 = vcombine.high %v3360, %v3360
    %v4338 = vunpack.c.l.s4 1983009808
    %v4339 = vunpack.c.0.s8 %v4338
    %v4340 = vlaneseq
    %v4341 = vshrl.u32 %v4340, 7
    %v4342 = vsub.s32 %v4339, %v4341
    %v4343 = vrot.slane %v3360, %v4342
    %v4345 = vunpack.c.l.s4 1983009808
    %v4346 = vunpack.c.0.s8 %v4345
    %v4347 = vlaneseq
    %v4348 = vshrl.u32 %v4347, 7
    %v4349 = vsub.s32 %v4346, %v4348
    %v4350 = vrot.slane %v4336, %v4349
    %v4351 = vcombine.high %v4343, %v4343
    %v4352 = vcombine.high %v4350, %v4350
    %v4353 = vcombine.high %v3365, %v3365
    %v4355 = vunpack.c.l.s4 1983009808
    %v4356 = vunpack.c.0.s8 %v4355
    %v4357 = vlaneseq
    %v4358 = vshrl.u32 %v4357, 7
    %v4359 = vsub.s32 %v4356, %v4358
    %v4360 = vrot.slane %v3365, %v4359
    %v4362 = vunpack.c.l.s4 1983009808
    %v4363 = vunpack.c.0.s8 %v4362
    %v4364 = vlaneseq
    %v4365 = vshrl.u32 %v4364, 7
    %v4366 = vsub.s32 %v4363, %v4365
    %v4367 = vrot.slane %v4353, %v4366
    %v4368 = vcombine.high %v4360, %v4360
    %v4369 = vcombine.high %v4367, %v4367
    %v4370 = vcombine.high %v3370, %v3370
    %v4372 = vunpack.c.l.s4 1983009808
    %v4373 = vunpack.c.0.s8 %v4372
    %v4374 = vlaneseq
    %v4375 = vshrl.u32 %v4374, 7
    %v4376 = vsub.s32 %v4373, %v4375
    %v4377 = vrot.slane %v3370, %v4376
    %v4379 = vunpack.c.l.s4 1983009808
    %v4380 = vunpack.c.0.s8 %v4379
    %v4381 = vlaneseq
    %v4382 = vshrl.u32 %v4381, 7
    %v4383 = vsub.s32 %v4380, %v4382
    %v4384 = vrot.slane %v4370, %v4383
    %v4385 = vcombine.high %v4377, %v4377
    %v4386 = vcombine.high %v4384, %v4384
    %v4387 = vcombine.high %v3375, %v3375
    %v4389 = vunpack.c.l.s4 1983009808
    %v4390 = vunpack.c.0.s8 %v4389
    %v4391 = vlaneseq
    %v4392 = vshrl.u32 %v4391, 7
    %v4393 = vsub.s32 %v4390, %v4392
    %v4394 = vrot.slane %v3375, %v4393
    %v4396 = vunpack.c.l.s4 1983009808
    %v4397 = vunpack.c.0.s8 %v4396
    %v4398 = vlaneseq
    %v4399 = vshrl.u32 %v4398, 7
    %v4400 = vsub.s32 %v4397, %v4399
    %v4401 = vrot.slane %v4387, %v4400
    %v4402 = vcombine.high %v4394, %v4394
    %v4403 = vcombine.high %v4401, %v4401
    %v4404 = vcombine.high %v3380, %v3380
    %v4406 = vunpack.c.l.s4 1983009808
    %v4407 = vunpack.c.0.s8 %v4406
    %v4408 = vlaneseq
    %v4409 = vshrl.u32 %v4408, 7
    %v4410 = vsub.s32 %v4407, %v4409
    %v4411 = vrot.slane %v3380, %v4410
    %v4413 = vunpack.c.l.s4 1983009808
    %v4414 = vunpack.c.0.s8 %v4413
    %v4415 = vlaneseq
    %v4416 = vshrl.u32 %v4415, 7
    %v4417 = vsub.s32 %v4414, %v4416
    %v4418 = vrot.slane %v4404, %v4417
    %v4419 = vcombine.high %v4411, %v4411
    %v4420 = vcombine.high %v4418, %v4418
    %v4421 = vcombine.high %v3385, %v3385
    %v4423 = vunpack.c.l.s4 1983009808
    %v4424 = vunpack.c.0.s8 %v4423
    %v4425 = vlaneseq
    %v4426 = vshrl.u32 %v4425, 7
    %v4427 = vsub.s32 %v4424, %v4426
    %v4428 = vrot.slane %v3385, %v4427
    %v4430 = vunpack.c.l.s4 1983009808
    %v4431 = vunpack.c.0.s8 %v4430
    %v4432 = vlaneseq
    %v4433 = vshrl.u32 %v4432, 7
    %v4434 = vsub.s32 %v4431, %v4433
    %v4435 = vrot.slane %v4421, %v4434
    %v4436 = vcombine.high %v4428, %v4428
    %v4437 = vcombine.high %v4435, %v4435
    %v4438 = vcombine.high %v3390, %v3390
    %v4440 = vunpack.c.l.s4 1983009808
    %v4441 = vunpack.c.0.s8 %v4440
    %v4442 = vlaneseq
    %v4443 = vshrl.u32 %v4442, 7
    %v4444 = vsub.s32 %v4441, %v4443
    %v4445 = vrot.slane %v3390, %v4444
    %v4447 = vunpack.c.l.s4 1983009808
    %v4448 = vunpack.c.0.s8 %v4447
    %v4449 = vlaneseq
    %v4450 = vshrl.u32 %v4449, 7
    %v4451 = vsub.s32 %v4448, %v4450
    %v4452 = vrot.slane %v4438, %v4451
    %v4453 = vcombine.high %v4445, %v4445
    %v4454 = vcombine.high %v4452, %v4452
    %v4455 = vcombine.high %v3395, %v3395
    %v4457 = vunpack.c.l.s4 1983009808
    %v4458 = vunpack.c.0.s8 %v4457
    %v4459 = vlaneseq
    %v4460 = vshrl.u32 %v4459, 7
    %v4461 = vsub.s32 %v4458, %v4460
    %v4462 = vrot.slane %v3395, %v4461
    %v4464 = vunpack.c.l.s4 1983009808
    %v4465 = vunpack.c.0.s8 %v4464
    %v4466 = vlaneseq
    %v4467 = vshrl.u32 %v4466, 7
    %v4468 = vsub.s32 %v4465, %v4467
    %v4469 = vrot.slane %v4455, %v4468
    %v4470 = vcombine.high %v4462, %v4462
    %v4471 = vcombine.high %v4469, %v4469
    %v4472 = vcombine.high %v3400, %v3400
    %v4474 = vunpack.c.l.s4 1983009808
    %v4475 = vunpack.c.0.s8 %v4474
    %v4476 = vlaneseq
    %v4477 = vshrl.u32 %v4476, 7
    %v4478 = vsub.s32 %v4475, %v4477
    %v4479 = vrot.slane %v3400, %v4478
    %v4481 = vunpack.c.l.s4 1983009808
    %v4482 = vunpack.c.0.s8 %v4481
    %v4483 = vlaneseq
    %v4484 = vshrl.u32 %v4483, 7
    %v4485 = vsub.s32 %v4482, %v4484
    %v4486 = vrot.slane %v4472, %v4485
    %v4487 = vcombine.high %v4479, %v4479
    %v4488 = vcombine.high %v4486, %v4486
    %v4489 = vcombine.high %v3405, %v3405
    %v4491 = vunpack.c.l.s4 1983009808
    %v4492 = vunpack.c.0.s8 %v4491
    %v4493 = vlaneseq
    %v4494 = vshrl.u32 %v4493, 7
    %v4495 = vsub.s32 %v4492, %v4494
    %v4496 = vrot.slane %v3405, %v4495
    %v4498 = vunpack.c.l.s4 1983009808
    %v4499 = vunpack.c.0.s8 %v4498
    %v4500 = vlaneseq
    %v4501 = vshrl.u32 %v4500, 7
    %v4502 = vsub.s32 %v4499, %v4501
    %v4503 = vrot.slane %v4489, %v4502
    %v4504 = vcombine.high %v4496, %v4496
    %v4505 = vcombine.high %v4503, %v4503
    %v4506 = vcombine.high %v3410, %v3410
    %v4508 = vunpack.c.l.s4 1983009808
    %v4509 = vunpack.c.0.s8 %v4508
    %v4510 = vlaneseq
    %v4511 = vshrl.u32 %v4510, 7
    %v4512 = vsub.s32 %v4509, %v4511
    %v4513 = vrot.slane %v3410, %v4512
    %v4515 = vunpack.c.l.s4 1983009808
    %v4516 = vunpack.c.0.s8 %v4515
    %v4517 = vlaneseq
    %v4518 = vshrl.u32 %v4517, 7
    %v4519 = vsub.s32 %v4516, %v4518
    %v4520 = vrot.slane %v4506, %v4519
    %v4521 = vcombine.high %v4513, %v4513
    %v4522 = vcombine.high %v4520, %v4520
    %v4523 = vcombine.high %v3415, %v3415
    %v4525 = vunpack.c.l.s4 1983009808
    %v4526 = vunpack.c.0.s8 %v4525
    %v4527 = vlaneseq
    %v4528 = vshrl.u32 %v4527, 7
    %v4529 = vsub.s32 %v4526, %v4528
    %v4530 = vrot.slane %v3415, %v4529
    %v4532 = vunpack.c.l.s4 1983009808
    %v4533 = vunpack.c.0.s8 %v4532
    %v4534 = vlaneseq
    %v4535 = vshrl.u32 %v4534, 7
    %v4536 = vsub.s32 %v4533, %v4535
    %v4537 = vrot.slane %v4523, %v4536
    %v4538 = vcombine.high %v4530, %v4530
    %v4539 = vcombine.high %v4537, %v4537
    %v4540 = vcombine.high %v3420, %v3420
    %v4542 = vunpack.c.l.s4 1983009808
    %v4543 = vunpack.c.0.s8 %v4542
    %v4544 = vlaneseq
    %v4545 = vshrl.u32 %v4544, 7
    %v4546 = vsub.s32 %v4543, %v4545
    %v4547 = vrot.slane %v3420, %v4546
    %v4549 = vunpack.c.l.s4 1983009808
    %v4550 = vunpack.c.0.s8 %v4549
    %v4551 = vlaneseq
    %v4552 = vshrl.u32 %v4551, 7
    %v4553 = vsub.s32 %v4550, %v4552
    %v4554 = vrot.slane %v4540, %v4553
    %v4555 = vcombine.high %v4547, %v4547
    %v4556 = vcombine.high %v4554, %v4554
    %v4557 = vcombine.high %v3425, %v3425
    %v4559 = vunpack.c.l.s4 1983009808
    %v4560 = vunpack.c.0.s8 %v4559
    %v4561 = vlaneseq
    %v4562 = vshrl.u32 %v4561, 7
    %v4563 = vsub.s32 %v4560, %v4562
    %v4564 = vrot.slane %v3425, %v4563
    %v4566 = vunpack.c.l.s4 1983009808
    %v4567 = vunpack.c.0.s8 %v4566
    %v4568 = vlaneseq
    %v4569 = vshrl.u32 %v4568, 7
    %v4570 = vsub.s32 %v4567, %v4569
    %v4571 = vrot.slane %v4557, %v4570
    %v4572 = vcombine.high %v4564, %v4564
    %v4573 = vcombine.high %v4571, %v4571
    %v4574 = vcombine.high %v3430, %v3430
    %v4576 = vunpack.c.l.s4 1983009808
    %v4577 = vunpack.c.0.s8 %v4576
    %v4578 = vlaneseq
    %v4579 = vshrl.u32 %v4578, 7
    %v4580 = vsub.s32 %v4577, %v4579
    %v4581 = vrot.slane %v3430, %v4580
    %v4583 = vunpack.c.l.s4 1983009808
    %v4584 = vunpack.c.0.s8 %v4583
    %v4585 = vlaneseq
    %v4586 = vshrl.u32 %v4585, 7
    %v4587 = vsub.s32 %v4584, %v4586
    %v4588 = vrot.slane %v4574, %v4587
    %v4589 = vcombine.high %v4581, %v4581
    %v4590 = vcombine.high %v4588, %v4588
    %v4591 = vcombine.high %v3435, %v3435
    %v4593 = vunpack.c.l.s4 1983009808
    %v4594 = vunpack.c.0.s8 %v4593
    %v4595 = vlaneseq
    %v4596 = vshrl.u32 %v4595, 7
    %v4597 = vsub.s32 %v4594, %v4596
    %v4598 = vrot.slane %v3435, %v4597
    %v4600 = vunpack.c.l.s4 1983009808
    %v4601 = vunpack.c.0.s8 %v4600
    %v4602 = vlaneseq
    %v4603 = vshrl.u32 %v4602, 7
    %v4604 = vsub.s32 %v4601, %v4603
    %v4605 = vrot.slane %v4591, %v4604
    %v4606 = vcombine.high %v4598, %v4598
    %v4607 = vcombine.high %v4605, %v4605
    %v4608 = vcombine.high %v3440, %v3440
    %v4610 = vunpack.c.l.s4 1983009808
    %v4611 = vunpack.c.0.s8 %v4610
    %v4612 = vlaneseq
    %v4613 = vshrl.u32 %v4612, 7
    %v4614 = vsub.s32 %v4611, %v4613
    %v4615 = vrot.slane %v3440, %v4614
    %v4617 = vunpack.c.l.s4 1983009808
    %v4618 = vunpack.c.0.s8 %v4617
    %v4619 = vlaneseq
    %v4620 = vshrl.u32 %v4619, 7
    %v4621 = vsub.s32 %v4618, %v4620
    %v4622 = vrot.slane %v4608, %v4621
    %v4623 = vcombine.high %v4615, %v4615
    %v4624 = vcombine.high %v4622, %v4622
    %v4625 = vcombine.high %v3445, %v3445
    %v4627 = vunpack.c.l.s4 1983009808
    %v4628 = vunpack.c.0.s8 %v4627
    %v4629 = vlaneseq
    %v4630 = vshrl.u32 %v4629, 7
    %v4631 = vsub.s32 %v4628, %v4630
    %v4632 = vrot.slane %v3445, %v4631
    %v4634 = vunpack.c.l.s4 1983009808
    %v4635 = vunpack.c.0.s8 %v4634
    %v4636 = vlaneseq
    %v4637 = vshrl.u32 %v4636, 7
    %v4638 = vsub.s32 %v4635, %v4637
    %v4639 = vrot.slane %v4625, %v4638
    %v4640 = vcombine.high %v4632, %v4632
    %v4641 = vcombine.high %v4639, %v4639
    %v4642 = vcombine.high %v3450, %v3450
    %v4644 = vunpack.c.l.s4 1983009808
    %v4645 = vunpack.c.0.s8 %v4644
    %v4646 = vlaneseq
    %v4647 = vshrl.u32 %v4646, 7
    %v4648 = vsub.s32 %v4645, %v4647
    %v4649 = vrot.slane %v3450, %v4648
    %v4651 = vunpack.c.l.s4 1983009808
    %v4652 = vunpack.c.0.s8 %v4651
    %v4653 = vlaneseq
    %v4654 = vshrl.u32 %v4653, 7
    %v4655 = vsub.s32 %v4652, %v4654
    %v4656 = vrot.slane %v4642, %v4655
    %v4657 = vcombine.high %v4649, %v4649
    %v4658 = vcombine.high %v4656, %v4656
    %v4659 = vcombine.high %v3455, %v3455
    %v4661 = vunpack.c.l.s4 1983009808
    %v4662 = vunpack.c.0.s8 %v4661
    %v4663 = vlaneseq
    %v4664 = vshrl.u32 %v4663, 7
    %v4665 = vsub.s32 %v4662, %v4664
    %v4666 = vrot.slane %v3455, %v4665
    %v4668 = vunpack.c.l.s4 1983009808
    %v4669 = vunpack.c.0.s8 %v4668
    %v4670 = vlaneseq
    %v4671 = vshrl.u32 %v4670, 7
    %v4672 = vsub.s32 %v4669, %v4671
    %v4673 = vrot.slane %v4659, %v4672
    %v4674 = vcombine.high %v4666, %v4666
    %v4675 = vcombine.high %v4673, %v4673
    %v4676 = vcombine.high %v3460, %v3460
    %v4678 = vunpack.c.l.s4 1983009808
    %v4679 = vunpack.c.0.s8 %v4678
    %v4680 = vlaneseq
    %v4681 = vshrl.u32 %v4680, 7
    %v4682 = vsub.s32 %v4679, %v4681
    %v4683 = vrot.slane %v3460, %v4682
    %v4685 = vunpack.c.l.s4 1983009808
    %v4686 = vunpack.c.0.s8 %v4685
    %v4687 = vlaneseq
    %v4688 = vshrl.u32 %v4687, 7
    %v4689 = vsub.s32 %v4686, %v4688
    %v4690 = vrot.slane %v4676, %v4689
    %v4691 = vcombine.high %v4683, %v4683
    %v4692 = vcombine.high %v4690, %v4690
    %v4693 = vcombine.high %v3465, %v3465
    %v4695 = vunpack.c.l.s4 1983009808
    %v4696 = vunpack.c.0.s8 %v4695
    %v4697 = vlaneseq
    %v4698 = vshrl.u32 %v4697, 7
    %v4699 = vsub.s32 %v4696, %v4698
    %v4700 = vrot.slane %v3465, %v4699
    %v4702 = vunpack.c.l.s4 1983009808
    %v4703 = vunpack.c.0.s8 %v4702
    %v4704 = vlaneseq
    %v4705 = vshrl.u32 %v4704, 7
    %v4706 = vsub.s32 %v4703, %v4705
    %v4707 = vrot.slane %v4693, %v4706
    %v4708 = vcombine.high %v4700, %v4700
    %v4709 = vcombine.high %v4707, %v4707
    %v4710 = vcombine.high %v3470, %v3470
    %v4712 = vunpack.c.l.s4 1983009808
    %v4713 = vunpack.c.0.s8 %v4712
    %v4714 = vlaneseq
    %v4715 = vshrl.u32 %v4714, 7
    %v4716 = vsub.s32 %v4713, %v4715
    %v4717 = vrot.slane %v3470, %v4716
    %v4719 = vunpack.c.l.s4 1983009808
    %v4720 = vunpack.c.0.s8 %v4719
    %v4721 = vlaneseq
    %v4722 = vshrl.u32 %v4721, 7
    %v4723 = vsub.s32 %v4720, %v4722
    %v4724 = vrot.slane %v4710, %v4723
    %v4725 = vcombine.high %v4717, %v4717
    %v4726 = vcombine.high %v4724, %v4724
    %v4727 = vcombine.high %v3475, %v3475
    %v4729 = vunpack.c.l.s4 1983009808
    %v4730 = vunpack.c.0.s8 %v4729
    %v4731 = vlaneseq
    %v4732 = vshrl.u32 %v4731, 7
    %v4733 = vsub.s32 %v4730, %v4732
    %v4734 = vrot.slane %v3475, %v4733
    %v4736 = vunpack.c.l.s4 1983009808
    %v4737 = vunpack.c.0.s8 %v4736
    %v4738 = vlaneseq
    %v4739 = vshrl.u32 %v4738, 7
    %v4740 = vsub.s32 %v4737, %v4739
    %v4741 = vrot.slane %v4727, %v4740
    %v4742 = vcombine.high %v4734, %v4734
    %v4743 = vcombine.high %v4741, %v4741
    %v4744 = vcombine.high %v3480, %v3480
    %v4746 = vunpack.c.l.s4 1983009808
    %v4747 = vunpack.c.0.s8 %v4746
    %v4748 = vlaneseq
    %v4749 = vshrl.u32 %v4748, 7
    %v4750 = vsub.s32 %v4747, %v4749
    %v4751 = vrot.slane %v3480, %v4750
    %v4753 = vunpack.c.l.s4 1983009808
    %v4754 = vunpack.c.0.s8 %v4753
    %v4755 = vlaneseq
    %v4756 = vshrl.u32 %v4755, 7
    %v4757 = vsub.s32 %v4754, %v4756
    %v4758 = vrot.slane %v4744, %v4757
    %v4759 = vcombine.high %v4751, %v4751
    %v4760 = vcombine.high %v4758, %v4758
    %v4761 = vcombine.high %v3485, %v3485
    %v4763 = vunpack.c.l.s4 1983009808
    %v4764 = vunpack.c.0.s8 %v4763
    %v4765 = vlaneseq
    %v4766 = vshrl.u32 %v4765, 7
    %v4767 = vsub.s32 %v4764, %v4766
    %v4768 = vrot.slane %v3485, %v4767
    %v4770 = vunpack.c.l.s4 1983009808
    %v4771 = vunpack.c.0.s8 %v4770
    %v4772 = vlaneseq
    %v4773 = vshrl.u32 %v4772, 7
    %v4774 = vsub.s32 %v4771, %v4773
    %v4775 = vrot.slane %v4761, %v4774
    %v4776 = vcombine.high %v4768, %v4768
    %v4777 = vcombine.high %v4775, %v4775
    %v4778 = vcombine.high %v3490, %v3490
    %v4780 = vunpack.c.l.s4 1983009808
    %v4781 = vunpack.c.0.s8 %v4780
    %v4782 = vlaneseq
    %v4783 = vshrl.u32 %v4782, 7
    %v4784 = vsub.s32 %v4781, %v4783
    %v4785 = vrot.slane %v3490, %v4784
    %v4787 = vunpack.c.l.s4 1983009808
    %v4788 = vunpack.c.0.s8 %v4787
    %v4789 = vlaneseq
    %v4790 = vshrl.u32 %v4789, 7
    %v4791 = vsub.s32 %v4788, %v4790
    %v4792 = vrot.slane %v4778, %v4791
    %v4793 = vcombine.high %v4785, %v4785
    %v4794 = vcombine.high %v4792, %v4792
    %v4795 = vcombine.high %v3495, %v3495
    %v4797 = vunpack.c.l.s4 1983009808
    %v4798 = vunpack.c.0.s8 %v4797
    %v4799 = vlaneseq
    %v4800 = vshrl.u32 %v4799, 7
    %v4801 = vsub.s32 %v4798, %v4800
    %v4802 = vrot.slane %v3495, %v4801
    %v4804 = vunpack.c.l.s4 1983009808
    %v4805 = vunpack.c.0.s8 %v4804
    %v4806 = vlaneseq
    %v4807 = vshrl.u32 %v4806, 7
    %v4808 = vsub.s32 %v4805, %v4807
    %v4809 = vrot.slane %v4795, %v4808
    %v4810 = vcombine.high %v4802, %v4802
    %v4811 = vcombine.high %v4809, %v4809
    %v4812 = vcombine.high %v3500, %v3500
    %v4814 = vunpack.c.l.s4 1983009808
    %v4815 = vunpack.c.0.s8 %v4814
    %v4816 = vlaneseq
    %v4817 = vshrl.u32 %v4816, 7
    %v4818 = vsub.s32 %v4815, %v4817
    %v4819 = vrot.slane %v3500, %v4818
    %v4821 = vunpack.c.l.s4 1983009808
    %v4822 = vunpack.c.0.s8 %v4821
    %v4823 = vlaneseq
    %v4824 = vshrl.u32 %v4823, 7
    %v4825 = vsub.s32 %v4822, %v4824
    %v4826 = vrot.slane %v4812, %v4825
    %v4827 = vcombine.high %v4819, %v4819
    %v4828 = vcombine.high %v4826, %v4826
    %v4829 = vcombine.high %v3505, %v3505
    %v4831 = vunpack.c.l.s4 1983009808
    %v4832 = vunpack.c.0.s8 %v4831
    %v4833 = vlaneseq
    %v4834 = vshrl.u32 %v4833, 7
    %v4835 = vsub.s32 %v4832, %v4834
    %v4836 = vrot.slane %v3505, %v4835
    %v4838 = vunpack.c.l.s4 1983009808
    %v4839 = vunpack.c.0.s8 %v4838
    %v4840 = vlaneseq
    %v4841 = vshrl.u32 %v4840, 7
    %v4842 = vsub.s32 %v4839, %v4841
    %v4843 = vrot.slane %v4829, %v4842
    %v4844 = vcombine.high %v4836, %v4836
    %v4845 = vcombine.high %v4843, %v4843
    %v4846 = vcombine.high %v3510, %v3510
    %v4848 = vunpack.c.l.s4 1983009808
    %v4849 = vunpack.c.0.s8 %v4848
    %v4850 = vlaneseq
    %v4851 = vshrl.u32 %v4850, 7
    %v4852 = vsub.s32 %v4849, %v4851
    %v4853 = vrot.slane %v3510, %v4852
    %v4855 = vunpack.c.l.s4 1983009808
    %v4856 = vunpack.c.0.s8 %v4855
    %v4857 = vlaneseq
    %v4858 = vshrl.u32 %v4857, 7
    %v4859 = vsub.s32 %v4856, %v4858
    %v4860 = vrot.slane %v4846, %v4859
    %v4861 = vcombine.high %v4853, %v4853
    %v4862 = vcombine.high %v4860, %v4860
    %v4863 = vcombine.high %v3515, %v3515
    %v4865 = vunpack.c.l.s4 1983009808
    %v4866 = vunpack.c.0.s8 %v4865
    %v4867 = vlaneseq
    %v4868 = vshrl.u32 %v4867, 7
    %v4869 = vsub.s32 %v4866, %v4868
    %v4870 = vrot.slane %v3515, %v4869
    %v4872 = vunpack.c.l.s4 1983009808
    %v4873 = vunpack.c.0.s8 %v4872
    %v4874 = vlaneseq
    %v4875 = vshrl.u32 %v4874, 7
    %v4876 = vsub.s32 %v4873, %v4875
    %v4877 = vrot.slane %v4863, %v4876
    %v4878 = vcombine.high %v4870, %v4870
    %v4879 = vcombine.high %v4877, %v4877
    %v4880 = vcombine.high %v3520, %v3520
    %v4882 = vunpack.c.l.s4 1983009808
    %v4883 = vunpack.c.0.s8 %v4882
    %v4884 = vlaneseq
    %v4885 = vshrl.u32 %v4884, 7
    %v4886 = vsub.s32 %v4883, %v4885
    %v4887 = vrot.slane %v3520, %v4886
    %v4889 = vunpack.c.l.s4 1983009808
    %v4890 = vunpack.c.0.s8 %v4889
    %v4891 = vlaneseq
    %v4892 = vshrl.u32 %v4891, 7
    %v4893 = vsub.s32 %v4890, %v4892
    %v4894 = vrot.slane %v4880, %v4893
    %v4895 = vcombine.high %v4887, %v4887
    %v4896 = vcombine.high %v4894, %v4894
    %v4897 = vcombine.high %v3525, %v3525
    %v4899 = vunpack.c.l.s4 1983009808
    %v4900 = vunpack.c.0.s8 %v4899
    %v4901 = vlaneseq
    %v4902 = vshrl.u32 %v4901, 7
    %v4903 = vsub.s32 %v4900, %v4902
    %v4904 = vrot.slane %v3525, %v4903
    %v4906 = vunpack.c.l.s4 1983009808
    %v4907 = vunpack.c.0.s8 %v4906
    %v4908 = vlaneseq
    %v4909 = vshrl.u32 %v4908, 7
    %v4910 = vsub.s32 %v4907, %v4909
    %v4911 = vrot.slane %v4897, %v4910
    %v4912 = vcombine.high %v4904, %v4904
    %v4913 = vcombine.high %v4911, %v4911
    %v5222 = vmax.f32 %v3612, %v3655
    %v5223 = vmax.f32 %v3620, %v3663
    %v5224 = vmax.f32 %v3619, %v3671
    %v5225 = vmax.f32 %v3621, %v3670
    %v5226 = vmax.f32 %v3629, %v3672
    %v5227 = vmax.f32 %v3637, %v3680
    %v5228 = vmax.f32 %v3636, %v3688
    %v5229 = vmax.f32 %v3638, %v3687
    %v5230 = vmax.f32 %v3646, %v3689
    %v5231 = vmax.f32 %v3654, %v3697
    %v5232 = vmax.f32 %v3653, %v3705
    %v5233 = vmax.f32 %v3704, %v3756
    %v5234 = vmax.f32 %v3706, %v3755
    %v5235 = vmax.f32 %v3714, %v3757
    %v5236 = vmax.f32 %v3722, %v3765
    %v5237 = vmax.f32 %v3721, %v3773
    %v5238 = vmax.f32 %v3723, %v3772
    %v5239 = vmax.f32 %v3731, %v3774
    %v5240 = vmax.f32 %v3739, %v3782
    %v5241 = vmax.f32 %v3738, %v3790
    %v5242 = vmax.f32 %v3740, %v3789
    %v5243 = vmax.f32 %v3748, %v3791
    %v5244 = vmax.f32 %v3799, %v3842
    %v5245 = vmax.f32 %v3807, %v3850
    %v5246 = vmax.f32 %v3806, %v3858
    %v5247 = vmax.f32 %v3808, %v3857
    %v5248 = vmax.f32 %v3816, %v3859
    %v5249 = vmax.f32 %v3824, %v3867
    %v5250 = vmax.f32 %v3823, %v3875
    %v5251 = vmax.f32 %v3825, %v3874
    %v5252 = vmax.f32 %v3833, %v3876
    %v5253 = vmax.f32 %v3841, %v3884
    %v5254 = vmax.f32 %v3840, %v3892
    %v5255 = vmax.f32 %v3891, %v3943
    %v5256 = vmax.f32 %v3893, %v3942
    %v5257 = vmax.f32 %v3901, %v3944
    %v5258 = vmax.f32 %v3909, %v3952
    %v5259 = vmax.f32 %v3908, %v3960
    %v5260 = vmax.f32 %v3910, %v3959
    %v5261 = vmax.f32 %v3918, %v3961
    %v5262 = vmax.f32 %v3926, %v3969
    %v5263 = vmax.f32 %v3925, %v3977
    %v5264 = vmax.f32 %v3927, %v3976
    %v5265 = vmax.f32 %v3935, %v3978
    %v5266 = vmax.f32 %v3986, %v4029
    %v5267 = vmax.f32 %v3994, %v4037
    %v5268 = vmax.f32 %v3993, %v4045
    %v5269 = vmax.f32 %v3995, %v4044
    %v5270 = vmax.f32 %v4003, %v4046
    %v5271 = vmax.f32 %v4011, %v4054
    %v5272 = vmax.f32 %v4010, %v4062
    %v5273 = vmax.f32 %v4012, %v4061
    %v5274 = vmax.f32 %v4020, %v4063
    %v5275 = vmax.f32 %v4028, %v4071
    %v5276 = vmax.f32 %v4027, %v4079
    %v5277 = vmax.f32 %v4078, %v4130
    %v5278 = vmax.f32 %v4080, %v4129
    %v5279 = vmax.f32 %v4088, %v4131
    %v5280 = vmax.f32 %v4096, %v4139
    %v5281 = vmax.f32 %v4095, %v4147
    %v5282 = vmax.f32 %v4097, %v4146
    %v5283 = vmax.f32 %v4105, %v4148
    %v5284 = vmax.f32 %v4113, %v4156
    %v5285 = vmax.f32 %v4112, %v4164
    %v5286 = vmax.f32 %v4114, %v4163
    %v5287 = vmax.f32 %v4122, %v4165
    %v5288 = vmax.f32 %v4173, %v4216
    %v5289 = vmax.f32 %v4181, %v4224
    %v5290 = vmax.f32 %v4180, %v4232
    %v5291 = vmax.f32 %v4182, %v4231
    %v5292 = vmax.f32 %v4190, %v4233
    %v5293 = vmax.f32 %v4198, %v4241
    %v5294 = vmax.f32 %v4197, %v4249
    %v5295 = vmax.f32 %v4199, %v4248
    %v5296 = vmax.f32 %v4207, %v4250
    %v5297 = vmax.f32 %v4215, %v4258
    %v5298 = vmax.f32 %v4214, %v4266
    %v5299 = vmax.f32 %v4265, %v4317
    %v5300 = vmax.f32 %v4267, %v4316
    %v5301 = vmax.f32 %v4275, %v4318
    %v5302 = vmax.f32 %v4283, %v4326
    %v5303 = vmax.f32 %v4282, %v4334
    %v5304 = vmax.f32 %v4284, %v4333
    %v5305 = vmax.f32 %v4292, %v4335
    %v5306 = vmax.f32 %v4300, %v4343
    %v5307 = vmax.f32 %v4299, %v4351
    %v5308 = vmax.f32 %v4301, %v4350
    %v5309 = vmax.f32 %v4309, %v4352
    %v5310 = vmax.f32 %v4360, %v4403
    %v5311 = vmax.f32 %v4368, %v4411
    %v5312 = vmax.f32 %v4367, %v4419
    %v5313 = vmax.f32 %v4369, %v4418
    %v5314 = vmax.f32 %v4377, %v4420
    %v5315 = vmax.f32 %v4385, %v4428
    %v5316 = vmax.f32 %v4384, %v4436
    %v5317 = vmax.f32 %v4386, %v4435
    %v5318 = vmax.f32 %v4394, %v4437
    %v5319 = vmax.f32 %v4402, %v4445
    %v5320 = vmax.f32 %v4401, %v4453
    %v5321 = vmax.f32 %v4452, %v4504
    %v5322 = vmax.f32 %v4454, %v4503
    %v5323 = vmax.f32 %v4462, %v4505
    %v5324 = vmax.f32 %v4470, %v4513
    %v5325 = vmax.f32 %v4469, %v4521
    %v5326 = vmax.f32 %v4471, %v4520
    %v5327 = vmax.f32 %v4479, %v4522
    %v5328 = vmax.f32 %v4487, %v4530
    %v5329 = vmax.f32 %v4486, %v4538
    %v5330 = vmax.f32 %v4488, %v4537
    %v5331 = vmax.f32 %v4496, %v4539
    %v5332 = vmax.f32 %v4547, %v4590
    %v5333 = vmax.f32 %v4555, %v4598
    %v5334 = vmax.f32 %v4554, %v4606
    %v5335 = vmax.f32 %v4556, %v4605
    %v5336 = vmax.f32 %v4564, %v4607
    %v5337 = vmax.f32 %v4572, %v4615
    %v5338 = vmax.f32 %v4571, %v4623
    %v5339 = vmax.f32 %v4573, %v4622
    %v5340 = vmax.f32 %v4581, %v4624
    %v5341 = vmax.f32 %v4589, %v4632
    %v5342 = vmax.f32 %v4588, %v4640
    %v5343 = vmax.f32 %v4639, %v4691
    %v5344 = vmax.f32 %v4641, %v4690
    %v5345 = vmax.f32 %v4649, %v4692
    %v5346 = vmax.f32 %v4657, %v4700
    %v5347 = vmax.f32 %v4656, %v4708
    %v5348 = vmax.f32 %v4658, %v4707
    %v5349 = vmax.f32 %v4666, %v4709
    %v5350 = vmax.f32 %v4674, %v4717
    %v5351 = vmax.f32 %v4673, %v4725
    %v5352 = vmax.f32 %v4675, %v4724
    %v5353 = vmax.f32 %v4683, %v4726
    %v5354 = vmax.f32 %v4734, %v4777
    %v5355 = vmax.f32 %v4742, %v4785
    %v5356 = vmax.f32 %v4741, %v4793
    %v5357 = vmax.f32 %v4743, %v4792
    %v5358 = vmax.f32 %v4751, %v4794
    %v5359 = vmax.f32 %v4759, %v4802
    %v5360 = vmax.f32 %v4758, %v4810
    %v5361 = vmax.f32 %v4760, %v4809
    %v5362 = vmax.f32 %v4768, %v4811
    %v5363 = vmax.f32 %v4776, %v4819
    %v5364 = vmax.f32 %v4775, %v4827
    %v5365 = vmax.f32 %v4826, %v4878
    %v5366 = vmax.f32 %v4828, %v4877
    %v5367 = vmax.f32 %v4836, %v4879
    %v5368 = vmax.f32 %v4844, %v4887
    %v5369 = vmax.f32 %v4843, %v4895
    %v5370 = vmax.f32 %v4845, %v4894
    %v5371 = vmax.f32 %v4853, %v4896
    %v5372 = vmax.f32 %v4861, %v4904
    %v5373 = vmax.f32 %v4860, %v4912
    %v5374 = vmax.f32 %v4862, %v4911
    %v5375 = vmax.f32 %v4870, %v4913
    %v5530 = vrot.slane %v5222, 7
    %v5531 = vrot.slane %v5530, 2
    %v5532 = vrot.slane %v5223, 7
    %v5533 = vrot.slane %v5532, 2
    %v5534 = vrot.slane %v5224, 7
    %v5535 = vrot.slane %v5534, 2
    %v5536 = vrot.slane %v5225, 7
    %v5537 = vrot.slane %v5536, 2
    %v5538 = vrot.slane %v5226, 7
    %v5539 = vrot.slane %v5538, 2
    %v5540 = vrot.slane %v5227, 7
    %v5541 = vrot.slane %v5540, 2
    %v5542 = vrot.slane %v5228, 7
    %v5543 = vrot.slane %v5542, 2
    %v5544 = vrot.slane %v5229, 7
    %v5545 = vrot.slane %v5544, 2
    %v5546 = vrot.slane %v5230, 7
    %v5547 = vrot.slane %v5546, 2
    %v5548 = vrot.slane %v5231, 7
    %v5549 = vrot.slane %v5548, 2
    %v5550 = vrot.slane %v5232, 7
    %v5551 = vrot.slane %v5550, 2
    %v5552 = vrot.slane %v5233, 7
    %v5553 = vrot.slane %v5552, 2
    %v5554 = vrot.slane %v5234, 7
    %v5555 = vrot.slane %v5554, 2
    %v5556 = vrot.slane %v5235, 7
    %v5557 = vrot.slane %v5556, 2
    %v5558 = vrot.slane %v5236, 7
    %v5559 = vrot.slane %v5558, 2
    %v5560 = vrot.slane %v5237, 7
    %v5561 = vrot.slane %v5560, 2
    %v5562 = vrot.slane %v5238, 7
    %v5563 = vrot.slane %v5562, 2
    %v5564 = vrot.slane %v5239, 7
    %v5565 = vrot.slane %v5564, 2
    %v5566 = vrot.slane %v5240, 7
    %v5567 = vrot.slane %v5566, 2
    %v5568 = vrot.slane %v5241, 7
    %v5569 = vrot.slane %v5568, 2
    %v5570 = vrot.slane %v5242, 7
    %v5571 = vrot.slane %v5570, 2
    %v5572 = vrot.slane %v5243, 7
    %v5573 = vrot.slane %v5572, 2
    %v5574 = vrot.slane %v5244, 7
    %v5575 = vrot.slane %v5574, 2
    %v5576 = vrot.slane %v5245, 7
    %v5577 = vrot.slane %v5576, 2
    %v5578 = vrot.slane %v5246, 7
    %v5579 = vrot.slane %v5578, 2
    %v5580 = vrot.slane %v5247, 7
    %v5581 = vrot.slane %v5580, 2
    %v5582 = vrot.slane %v5248, 7
    %v5583 = vrot.slane %v5582, 2
    %v5584 = vrot.slane %v5249, 7
    %v5585 = vrot.slane %v5584, 2
    %v5586 = vrot.slane %v5250, 7
    %v5587 = vrot.slane %v5586, 2
    %v5588 = vrot.slane %v5251, 7
    %v5589 = vrot.slane %v5588, 2
    %v5590 = vrot.slane %v5252, 7
    %v5591 = vrot.slane %v5590, 2
    %v5592 = vrot.slane %v5253, 7
    %v5593 = vrot.slane %v5592, 2
    %v5594 = vrot.slane %v5254, 7
    %v5595 = vrot.slane %v5594, 2
    %v5596 = vrot.slane %v5255, 7
    %v5597 = vrot.slane %v5596, 2
    %v5598 = vrot.slane %v5256, 7
    %v5599 = vrot.slane %v5598, 2
    %v5600 = vrot.slane %v5257, 7
    %v5601 = vrot.slane %v5600, 2
    %v5602 = vrot.slane %v5258, 7
    %v5603 = vrot.slane %v5602, 2
    %v5604 = vrot.slane %v5259, 7
    %v5605 = vrot.slane %v5604, 2
    %v5606 = vrot.slane %v5260, 7
    %v5607 = vrot.slane %v5606, 2
    %v5608 = vrot.slane %v5261, 7
    %v5609 = vrot.slane %v5608, 2
    %v5610 = vrot.slane %v5262, 7
    %v5611 = vrot.slane %v5610, 2
    %v5612 = vrot.slane %v5263, 7
    %v5613 = vrot.slane %v5612, 2
    %v5614 = vrot.slane %v5264, 7
    %v5615 = vrot.slane %v5614, 2
    %v5616 = vrot.slane %v5265, 7
    %v5617 = vrot.slane %v5616, 2
    %v5618 = vrot.slane %v5266, 7
    %v5619 = vrot.slane %v5618, 2
    %v5620 = vrot.slane %v5267, 7
    %v5621 = vrot.slane %v5620, 2
    %v5622 = vrot.slane %v5268, 7
    %v5623 = vrot.slane %v5622, 2
    %v5624 = vrot.slane %v5269, 7
    %v5625 = vrot.slane %v5624, 2
    %v5626 = vrot.slane %v5270, 7
    %v5627 = vrot.slane %v5626, 2
    %v5628 = vrot.slane %v5271, 7
    %v5629 = vrot.slane %v5628, 2
    %v5630 = vrot.slane %v5272, 7
    %v5631 = vrot.slane %v5630, 2
    %v5632 = vrot.slane %v5273, 7
    %v5633 = vrot.slane %v5632, 2
    %v5634 = vrot.slane %v5274, 7
    %v5635 = vrot.slane %v5634, 2
    %v5636 = vrot.slane %v5275, 7
    %v5637 = vrot.slane %v5636, 2
    %v5638 = vrot.slane %v5276, 7
    %v5639 = vrot.slane %v5638, 2
    %v5640 = vrot.slane %v5277, 7
    %v5641 = vrot.slane %v5640, 2
    %v5642 = vrot.slane %v5278, 7
    %v5643 = vrot.slane %v5642, 2
    %v5644 = vrot.slane %v5279, 7
    %v5645 = vrot.slane %v5644, 2
    %v5646 = vrot.slane %v5280, 7
    %v5647 = vrot.slane %v5646, 2
    %v5648 = vrot.slane %v5281, 7
    %v5649 = vrot.slane %v5648, 2
    %v5650 = vrot.slane %v5282, 7
    %v5651 = vrot.slane %v5650, 2
    %v5652 = vrot.slane %v5283, 7
    %v5653 = vrot.slane %v5652, 2
    %v5654 = vrot.slane %v5284, 7
    %v5655 = vrot.slane %v5654, 2
    %v5656 = vrot.slane %v5285, 7
    %v5657 = vrot.slane %v5656, 2
    %v5658 = vrot.slane %v5286, 7
    %v5659 = vrot.slane %v5658, 2
    %v5660 = vrot.slane %v5287, 7
    %v5661 = vrot.slane %v5660, 2
    %v5662 = vrot.slane %v5288, 7
    %v5663 = vrot.slane %v5662, 2
    %v5664 = vrot.slane %v5289, 7
    %v5665 = vrot.slane %v5664, 2
    %v5666 = vrot.slane %v5290, 7
    %v5667 = vrot.slane %v5666, 2
    %v5668 = vrot.slane %v5291, 7
    %v5669 = vrot.slane %v5668, 2
    %v5670 = vrot.slane %v5292, 7
    %v5671 = vrot.slane %v5670, 2
    %v5672 = vrot.slane %v5293, 7
    %v5673 = vrot.slane %v5672, 2
    %v5674 = vrot.slane %v5294, 7
    %v5675 = vrot.slane %v5674, 2
    %v5676 = vrot.slane %v5295, 7
    %v5677 = vrot.slane %v5676, 2
    %v5678 = vrot.slane %v5296, 7
    %v5679 = vrot.slane %v5678, 2
    %v5680 = vrot.slane %v5297, 7
    %v5681 = vrot.slane %v5680, 2
    %v5682 = vrot.slane %v5298, 7
    %v5683 = vrot.slane %v5682, 2
    %v5684 = vrot.slane %v5299, 7
    %v5685 = vrot.slane %v5684, 2
    %v5686 = vrot.slane %v5300, 7
    %v5687 = vrot.slane %v5686, 2
    %v5688 = vrot.slane %v5301, 7
    %v5689 = vrot.slane %v5688, 2
    %v5690 = vrot.slane %v5302, 7
    %v5691 = vrot.slane %v5690, 2
    %v5692 = vrot.slane %v5303, 7
    %v5693 = vrot.slane %v5692, 2
    %v5694 = vrot.slane %v5304, 7
    %v5695 = vrot.slane %v5694, 2
    %v5696 = vrot.slane %v5305, 7
    %v5697 = vrot.slane %v5696, 2
    %v5698 = vrot.slane %v5306, 7
    %v5699 = vrot.slane %v5698, 2
    %v5700 = vrot.slane %v5307, 7
    %v5701 = vrot.slane %v5700, 2
    %v5702 = vrot.slane %v5308, 7
    %v5703 = vrot.slane %v5702, 2
    %v5704 = vrot.slane %v5309, 7
    %v5705 = vrot.slane %v5704, 2
    %v5706 = vrot.slane %v5310, 7
    %v5707 = vrot.slane %v5706, 2
    %v5708 = vrot.slane %v5311, 7
    %v5709 = vrot.slane %v5708, 2
    %v5710 = vrot.slane %v5312, 7
    %v5711 = vrot.slane %v5710, 2
    %v5712 = vrot.slane %v5313, 7
    %v5713 = vrot.slane %v5712, 2
    %v5714 = vrot.slane %v5314, 7
    %v5715 = vrot.slane %v5714, 2
    %v5716 = vrot.slane %v5315, 7
    %v5717 = vrot.slane %v5716, 2
    %v5718 = vrot.slane %v5316, 7
    %v5719 = vrot.slane %v5718, 2
    %v5720 = vrot.slane %v5317, 7
    %v5721 = vrot.slane %v5720, 2
    %v5722 = vrot.slane %v5318, 7
    %v5723 = vrot.slane %v5722, 2
    %v5724 = vrot.slane %v5319, 7
    %v5725 = vrot.slane %v5724, 2
    %v5726 = vrot.slane %v5320, 7
    %v5727 = vrot.slane %v5726, 2
    %v5728 = vrot.slane %v5321, 7
    %v5729 = vrot.slane %v5728, 2
    %v5730 = vrot.slane %v5322, 7
    %v5731 = vrot.slane %v5730, 2
    %v5732 = vrot.slane %v5323, 7
    %v5733 = vrot.slane %v5732, 2
    %v5734 = vrot.slane %v5324, 7
    %v5735 = vrot.slane %v5734, 2
    %v5736 = vrot.slane %v5325, 7
    %v5737 = vrot.slane %v5736, 2
    %v5738 = vrot.slane %v5326, 7
    %v5739 = vrot.slane %v5738, 2
    %v5740 = vrot.slane %v5327, 7
    %v5741 = vrot.slane %v5740, 2
    %v5742 = vrot.slane %v5328, 7
    %v5743 = vrot.slane %v5742, 2
    %v5744 = vrot.slane %v5329, 7
    %v5745 = vrot.slane %v5744, 2
    %v5746 = vrot.slane %v5330, 7
    %v5747 = vrot.slane %v5746, 2
    %v5748 = vrot.slane %v5331, 7
    %v5749 = vrot.slane %v5748, 2
    %v5750 = vrot.slane %v5332, 7
    %v5751 = vrot.slane %v5750, 2
    %v5752 = vrot.slane %v5333, 7
    %v5753 = vrot.slane %v5752, 2
    %v5754 = vrot.slane %v5334, 7
    %v5755 = vrot.slane %v5754, 2
    %v5756 = vrot.slane %v5335, 7
    %v5757 = vrot.slane %v5756, 2
    %v5758 = vrot.slane %v5336, 7
    %v5759 = vrot.slane %v5758, 2
    %v5760 = vrot.slane %v5337, 7
    %v5761 = vrot.slane %v5760, 2
    %v5762 = vrot.slane %v5338, 7
    %v5763 = vrot.slane %v5762, 2
    %v5764 = vrot.slane %v5339, 7
    %v5765 = vrot.slane %v5764, 2
    %v5766 = vrot.slane %v5340, 7
    %v5767 = vrot.slane %v5766, 2
    %v5768 = vrot.slane %v5341, 7
    %v5769 = vrot.slane %v5768, 2
    %v5770 = vrot.slane %v5342, 7
    %v5771 = vrot.slane %v5770, 2
    %v5772 = vrot.slane %v5343, 7
    %v5773 = vrot.slane %v5772, 2
    %v5774 = vrot.slane %v5344, 7
    %v5775 = vrot.slane %v5774, 2
    %v5776 = vrot.slane %v5345, 7
    %v5777 = vrot.slane %v5776, 2
    %v5778 = vrot.slane %v5346, 7
    %v5779 = vrot.slane %v5778, 2
    %v5780 = vrot.slane %v5347, 7
    %v5781 = vrot.slane %v5780, 2
    %v5782 = vrot.slane %v5348, 7
    %v5783 = vrot.slane %v5782, 2
    %v5784 = vrot.slane %v5349, 7
    %v5785 = vrot.slane %v5784, 2
    %v5786 = vrot.slane %v5350, 7
    %v5787 = vrot.slane %v5786, 2
    %v5788 = vrot.slane %v5351, 7
    %v5789 = vrot.slane %v5788, 2
    %v5790 = vrot.slane %v5352, 7
    %v5791 = vrot.slane %v5790, 2
    %v5792 = vrot.slane %v5353, 7
    %v5793 = vrot.slane %v5792, 2
    %v5794 = vrot.slane %v5354, 7
    %v5795 = vrot.slane %v5794, 2
    %v5796 = vrot.slane %v5355, 7
    %v5797 = vrot.slane %v5796, 2
    %v5798 = vrot.slane %v5356, 7
    %v5799 = vrot.slane %v5798, 2
    %v5800 = vrot.slane %v5357, 7
    %v5801 = vrot.slane %v5800, 2
    %v5802 = vrot.slane %v5358, 7
    %v5803 = vrot.slane %v5802, 2
    %v5804 = vrot.slane %v5359, 7
    %v5805 = vrot.slane %v5804, 2
    %v5806 = vrot.slane %v5360, 7
    %v5807 = vrot.slane %v5806, 2
    %v5808 = vrot.slane %v5361, 7
    %v5809 = vrot.slane %v5808, 2
    %v5810 = vrot.slane %v5362, 7
    %v5811 = vrot.slane %v5810, 2
    %v5812 = vrot.slane %v5363, 7
    %v5813 = vrot.slane %v5812, 2
    %v5814 = vrot.slane %v5364, 7
    %v5815 = vrot.slane %v5814, 2
    %v5816 = vrot.slane %v5365, 7
    %v5817 = vrot.slane %v5816, 2
    %v5818 = vrot.slane %v5366, 7
    %v5819 = vrot.slane %v5818, 2
    %v5820 = vrot.slane %v5367, 7
    %v5821 = vrot.slane %v5820, 2
    %v5822 = vrot.slane %v5368, 7
    %v5823 = vrot.slane %v5822, 2
    %v5824 = vrot.slane %v5369, 7
    %v5825 = vrot.slane %v5824, 2
    %v5826 = vrot.slane %v5370, 7
    %v5827 = vrot.slane %v5826, 2
    %v5828 = vrot.slane %v5371, 7
    %v5829 = vrot.slane %v5828, 2
    %v5830 = vrot.slane %v5372, 7
    %v5831 = vrot.slane %v5830, 2
    %v5832 = vrot.slane %v5373, 7
    %v5833 = vrot.slane %v5832, 2
    %v5834 = vrot.slane %v5374, 7
    %v5835 = vrot.slane %v5834, 2
    %v5836 = vrot.slane %v5375, 7
    %v5837 = vrot.slane %v5836, 2
    %v5992 = vmax.f32 %v5222, %v5531
    %v5993 = vmax.f32 %v5223, %v5533
    %v5994 = vmax.f32 %v5224, %v5535
    %v5995 = vmax.f32 %v5225, %v5537
    %v5996 = vmax.f32 %v5226, %v5539
    %v5997 = vmax.f32 %v5227, %v5541
    %v5998 = vmax.f32 %v5228, %v5543
    %v5999 = vmax.f32 %v5229, %v5545
    %v6000 = vmax.f32 %v5230, %v5547
    %v6001 = vmax.f32 %v5231, %v5549
    %v6002 = vmax.f32 %v5232, %v5551
    %v6003 = vmax.f32 %v5233, %v5553
    %v6004 = vmax.f32 %v5234, %v5555
    %v6005 = vmax.f32 %v5235, %v5557
    %v6006 = vmax.f32 %v5236, %v5559
    %v6007 = vmax.f32 %v5237, %v5561
    %v6008 = vmax.f32 %v5238, %v5563
    %v6009 = vmax.f32 %v5239, %v5565
    %v6010 = vmax.f32 %v5240, %v5567
    %v6011 = vmax.f32 %v5241, %v5569
    %v6012 = vmax.f32 %v5242, %v5571
    %v6013 = vmax.f32 %v5243, %v5573
    %v6014 = vmax.f32 %v5244, %v5575
    %v6015 = vmax.f32 %v5245, %v5577
    %v6016 = vmax.f32 %v5246, %v5579
    %v6017 = vmax.f32 %v5247, %v5581
    %v6018 = vmax.f32 %v5248, %v5583
    %v6019 = vmax.f32 %v5249, %v5585
    %v6020 = vmax.f32 %v5250, %v5587
    %v6021 = vmax.f32 %v5251, %v5589
    %v6022 = vmax.f32 %v5252, %v5591
    %v6023 = vmax.f32 %v5253, %v5593
    %v6024 = vmax.f32 %v5254, %v5595
    %v6025 = vmax.f32 %v5255, %v5597
    %v6026 = vmax.f32 %v5256, %v5599
    %v6027 = vmax.f32 %v5257, %v5601
    %v6028 = vmax.f32 %v5258, %v5603
    %v6029 = vmax.f32 %v5259, %v5605
    %v6030 = vmax.f32 %v5260, %v5607
    %v6031 = vmax.f32 %v5261, %v5609
    %v6032 = vmax.f32 %v5262, %v5611
    %v6033 = vmax.f32 %v5263, %v5613
    %v6034 = vmax.f32 %v5264, %v5615
    %v6035 = vmax.f32 %v5265, %v5617
    %v6036 = vmax.f32 %v5266, %v5619
    %v6037 = vmax.f32 %v5267, %v5621
    %v6038 = vmax.f32 %v5268, %v5623
    %v6039 = vmax.f32 %v5269, %v5625
    %v6040 = vmax.f32 %v5270, %v5627
    %v6041 = vmax.f32 %v5271, %v5629
    %v6042 = vmax.f32 %v5272, %v5631
    %v6043 = vmax.f32 %v5273, %v5633
    %v6044 = vmax.f32 %v5274, %v5635
    %v6045 = vmax.f32 %v5275, %v5637
    %v6046 = vmax.f32 %v5276, %v5639
    %v6047 = vmax.f32 %v5277, %v5641
    %v6048 = vmax.f32 %v5278, %v5643
    %v6049 = vmax.f32 %v5279, %v5645
    %v6050 = vmax.f32 %v5280, %v5647
    %v6051 = vmax.f32 %v5281, %v5649
    %v6052 = vmax.f32 %v5282, %v5651
    %v6053 = vmax.f32 %v5283, %v5653
    %v6054 = vmax.f32 %v5284, %v5655
    %v6055 = vmax.f32 %v5285, %v5657
    %v6056 = vmax.f32 %v5286, %v5659
    %v6057 = vmax.f32 %v5287, %v5661
    %v6058 = vmax.f32 %v5288, %v5663
    %v6059 = vmax.f32 %v5289, %v5665
    %v6060 = vmax.f32 %v5290, %v5667
    %v6061 = vmax.f32 %v5291, %v5669
    %v6062 = vmax.f32 %v5292, %v5671
    %v6063 = vmax.f32 %v5293, %v5673
    %v6064 = vmax.f32 %v5294, %v5675
    %v6065 = vmax.f32 %v5295, %v5677
    %v6066 = vmax.f32 %v5296, %v5679
    %v6067 = vmax.f32 %v5297, %v5681
    %v6068 = vmax.f32 %v5298, %v5683
    %v6069 = vmax.f32 %v5299, %v5685
    %v6070 = vmax.f32 %v5300, %v5687
    %v6071 = vmax.f32 %v5301, %v5689
    %v6072 = vmax.f32 %v5302, %v5691
    %v6073 = vmax.f32 %v5303, %v5693
    %v6074 = vmax.f32 %v5304, %v5695
    %v6075 = vmax.f32 %v5305, %v5697
    %v6076 = vmax.f32 %v5306, %v5699
    %v6077 = vmax.f32 %v5307, %v5701
    %v6078 = vmax.f32 %v5308, %v5703
    %v6079 = vmax.f32 %v5309, %v5705
    %v6080 = vmax.f32 %v5310, %v5707
    %v6081 = vmax.f32 %v5311, %v5709
    %v6082 = vmax.f32 %v5312, %v5711
    %v6083 = vmax.f32 %v5313, %v5713
    %v6084 = vmax.f32 %v5314, %v5715
    %v6085 = vmax.f32 %v5315, %v5717
    %v6086 = vmax.f32 %v5316, %v5719
    %v6087 = vmax.f32 %v5317, %v5721
    %v6088 = vmax.f32 %v5318, %v5723
    %v6089 = vmax.f32 %v5319, %v5725
    %v6090 = vmax.f32 %v5320, %v5727
    %v6091 = vmax.f32 %v5321, %v5729
    %v6092 = vmax.f32 %v5322, %v5731
    %v6093 = vmax.f32 %v5323, %v5733
    %v6094 = vmax.f32 %v5324, %v5735
    %v6095 = vmax.f32 %v5325, %v5737
    %v6096 = vmax.f32 %v5326, %v5739
    %v6097 = vmax.f32 %v5327, %v5741
    %v6098 = vmax.f32 %v5328, %v5743
    %v6099 = vmax.f32 %v5329, %v5745
    %v6100 = vmax.f32 %v5330, %v5747
    %v6101 = vmax.f32 %v5331, %v5749
    %v6102 = vmax.f32 %v5332, %v5751
    %v6103 = vmax.f32 %v5333, %v5753
    %v6104 = vmax.f32 %v5334, %v5755
    %v6105 = vmax.f32 %v5335, %v5757
    %v6106 = vmax.f32 %v5336, %v5759
    %v6107 = vmax.f32 %v5337, %v5761
    %v6108 = vmax.f32 %v5338, %v5763
    %v6109 = vmax.f32 %v5339, %v5765
    %v6110 = vmax.f32 %v5340, %v5767
    %v6111 = vmax.f32 %v5341, %v5769
    %v6112 = vmax.f32 %v5342, %v5771
    %v6113 = vmax.f32 %v5343, %v5773
    %v6114 = vmax.f32 %v5344, %v5775
    %v6115 = vmax.f32 %v5345, %v5777
    %v6116 = vmax.f32 %v5346, %v5779
    %v6117 = vmax.f32 %v5347, %v5781
    %v6118 = vmax.f32 %v5348, %v5783
    %v6119 = vmax.f32 %v5349, %v5785
    %v6120 = vmax.f32 %v5350, %v5787
    %v6121 = vmax.f32 %v5351, %v5789
    %v6122 = vmax.f32 %v5352, %v5791
    %v6123 = vmax.f32 %v5353, %v5793
    %v6124 = vmax.f32 %v5354, %v5795
    %v6125 = vmax.f32 %v5355, %v5797
    %v6126 = vmax.f32 %v5356, %v5799
    %v6127 = vmax.f32 %v5357, %v5801
    %v6128 = vmax.f32 %v5358, %v5803
    %v6129 = vmax.f32 %v5359, %v5805
    %v6130 = vmax.f32 %v5360, %v5807
    %v6131 = vmax.f32 %v5361, %v5809
    %v6132 = vmax.f32 %v5362, %v5811
    %v6133 = vmax.f32 %v5363, %v5813
    %v6134 = vmax.f32 %v5364, %v5815
    %v6135 = vmax.f32 %v5365, %v5817
    %v6136 = vmax.f32 %v5366, %v5819
    %v6137 = vmax.f32 %v5367, %v5821
    %v6138 = vmax.f32 %v5368, %v5823
    %v6139 = vmax.f32 %v5369, %v5825
    %v6140 = vmax.f32 %v5370, %v5827
    %v6141 = vmax.f32 %v5371, %v5829
    %v6142 = vmax.f32 %v5372, %v5831
    %v6143 = vmax.f32 %v5373, %v5833
    %v6144 = vmax.f32 %v5374, %v5835
    %v6145 = vmax.f32 %v5375, %v5837
    %v6146 = vmax.f32 %v5992, 0.0
    %v6147 = vmax.f32 %v5993, 0.0
    %v6148 = vmax.f32 %v5994, 0.0
    %v6149 = vmax.f32 %v5995, 0.0
    %v6150 = vmax.f32 %v5996, 0.0
    %v6151 = vmax.f32 %v5997, 0.0
    %v6152 = vmax.f32 %v5998, 0.0
    %v6153 = vmax.f32 %v5999, 0.0
    %v6154 = vmax.f32 %v6000, 0.0
    %v6155 = vmax.f32 %v6001, 0.0
    %v6156 = vmax.f32 %v6002, 0.0
    %v6157 = vmax.f32 %v6003, 0.0
    %v6158 = vmax.f32 %v6004, 0.0
    %v6159 = vmax.f32 %v6005, 0.0
    %v6160 = vmax.f32 %v6006, 0.0
    %v6161 = vmax.f32 %v6007, 0.0
    %v6162 = vmax.f32 %v6008, 0.0
    %v6163 = vmax.f32 %v6009, 0.0
    %v6164 = vmax.f32 %v6010, 0.0
    %v6165 = vmax.f32 %v6011, 0.0
    %v6166 = vmax.f32 %v6012, 0.0
    %v6167 = vmax.f32 %v6013, 0.0
    %v6168 = vmax.f32 %v6014, 0.0
    %v6169 = vmax.f32 %v6015, 0.0
    %v6170 = vmax.f32 %v6016, 0.0
    %v6171 = vmax.f32 %v6017, 0.0
    %v6172 = vmax.f32 %v6018, 0.0
    %v6173 = vmax.f32 %v6019, 0.0
    %v6174 = vmax.f32 %v6020, 0.0
    %v6175 = vmax.f32 %v6021, 0.0
    %v6176 = vmax.f32 %v6022, 0.0
    %v6177 = vmax.f32 %v6023, 0.0
    %v6178 = vmax.f32 %v6024, 0.0
    %v6179 = vmax.f32 %v6025, 0.0
    %v6180 = vmax.f32 %v6026, 0.0
    %v6181 = vmax.f32 %v6027, 0.0
    %v6182 = vmax.f32 %v6028, 0.0
    %v6183 = vmax.f32 %v6029, 0.0
    %v6184 = vmax.f32 %v6030, 0.0
    %v6185 = vmax.f32 %v6031, 0.0
    %v6186 = vmax.f32 %v6032, 0.0
    %v6187 = vmax.f32 %v6033, 0.0
    %v6188 = vmax.f32 %v6034, 0.0
    %v6189 = vmax.f32 %v6035, 0.0
    %v6190 = vmax.f32 %v6036, 0.0
    %v6191 = vmax.f32 %v6037, 0.0
    %v6192 = vmax.f32 %v6038, 0.0
    %v6193 = vmax.f32 %v6039, 0.0
    %v6194 = vmax.f32 %v6040, 0.0
    %v6195 = vmax.f32 %v6041, 0.0
    %v6196 = vmax.f32 %v6042, 0.0
    %v6197 = vmax.f32 %v6043, 0.0
    %v6198 = vmax.f32 %v6044, 0.0
    %v6199 = vmax.f32 %v6045, 0.0
    %v6200 = vmax.f32 %v6046, 0.0
    %v6201 = vmax.f32 %v6047, 0.0
    %v6202 = vmax.f32 %v6048, 0.0
    %v6203 = vmax.f32 %v6049, 0.0
    %v6204 = vmax.f32 %v6050, 0.0
    %v6205 = vmax.f32 %v6051, 0.0
    %v6206 = vmax.f32 %v6052, 0.0
    %v6207 = vmax.f32 %v6053, 0.0
    %v6208 = vmax.f32 %v6054, 0.0
    %v6209 = vmax.f32 %v6055, 0.0
    %v6210 = vmax.f32 %v6056, 0.0
    %v6211 = vmax.f32 %v6057, 0.0
    %v6212 = vmax.f32 %v6058, 0.0
    %v6213 = vmax.f32 %v6059, 0.0
    %v6214 = vmax.f32 %v6060, 0.0
    %v6215 = vmax.f32 %v6061, 0.0
    %v6216 = vmax.f32 %v6062, 0.0
    %v6217 = vmax.f32 %v6063, 0.0
    %v6218 = vmax.f32 %v6064, 0.0
    %v6219 = vmax.f32 %v6065, 0.0
    %v6220 = vmax.f32 %v6066, 0.0
    %v6221 = vmax.f32 %v6067, 0.0
    %v6222 = vmax.f32 %v6068, 0.0
    %v6223 = vmax.f32 %v6069, 0.0
    %v6224 = vmax.f32 %v6070, 0.0
    %v6225 = vmax.f32 %v6071, 0.0
    %v6226 = vmax.f32 %v6072, 0.0
    %v6227 = vmax.f32 %v6073, 0.0
    %v6228 = vmax.f32 %v6074, 0.0
    %v6229 = vmax.f32 %v6075, 0.0
    %v6230 = vmax.f32 %v6076, 0.0
    %v6231 = vmax.f32 %v6077, 0.0
    %v6232 = vmax.f32 %v6078, 0.0
    %v6233 = vmax.f32 %v6079, 0.0
    %v6234 = vmax.f32 %v6080, 0.0
    %v6235 = vmax.f32 %v6081, 0.0
    %v6236 = vmax.f32 %v6082, 0.0
    %v6237 = vmax.f32 %v6083, 0.0
    %v6238 = vmax.f32 %v6084, 0.0
    %v6239 = vmax.f32 %v6085, 0.0
    %v6240 = vmax.f32 %v6086, 0.0
    %v6241 = vmax.f32 %v6087, 0.0
    %v6242 = vmax.f32 %v6088, 0.0
    %v6243 = vmax.f32 %v6089, 0.0
    %v6244 = vmax.f32 %v6090, 0.0
    %v6245 = vmax.f32 %v6091, 0.0
    %v6246 = vmax.f32 %v6092, 0.0
    %v6247 = vmax.f32 %v6093, 0.0
    %v6248 = vmax.f32 %v6094, 0.0
    %v6249 = vmax.f32 %v6095, 0.0
    %v6250 = vmax.f32 %v6096, 0.0
    %v6251 = vmax.f32 %v6097, 0.0
    %v6252 = vmax.f32 %v6098, 0.0
    %v6253 = vmax.f32 %v6099, 0.0
    %v6254 = vmax.f32 %v6100, 0.0
    %v6255 = vmax.f32 %v6101, 0.0
    %v6256 = vmax.f32 %v6102, 0.0
    %v6257 = vmax.f32 %v6103, 0.0
    %v6258 = vmax.f32 %v6104, 0.0
    %v6259 = vmax.f32 %v6105, 0.0
    %v6260 = vmax.f32 %v6106, 0.0
    %v6261 = vmax.f32 %v6107, 0.0
    %v6262 = vmax.f32 %v6108, 0.0
    %v6263 = vmax.f32 %v6109, 0.0
    %v6264 = vmax.f32 %v6110, 0.0
    %v6265 = vmax.f32 %v6111, 0.0
    %v6266 = vmax.f32 %v6112, 0.0
    %v6267 = vmax.f32 %v6113, 0.0
    %v6268 = vmax.f32 %v6114, 0.0
    %v6269 = vmax.f32 %v6115, 0.0
    %v6270 = vmax.f32 %v6116, 0.0
    %v6271 = vmax.f32 %v6117, 0.0
    %v6272 = vmax.f32 %v6118, 0.0
    %v6273 = vmax.f32 %v6119, 0.0
    %v6274 = vmax.f32 %v6120, 0.0
    %v6275 = vmax.f32 %v6121, 0.0
    %v6276 = vmax.f32 %v6122, 0.0
    %v6277 = vmax.f32 %v6123, 0.0
    %v6278 = vmax.f32 %v6124, 0.0
    %v6279 = vmax.f32 %v6125, 0.0
    %v6280 = vmax.f32 %v6126, 0.0
    %v6281 = vmax.f32 %v6127, 0.0
    %v6282 = vmax.f32 %v6128, 0.0
    %v6283 = vmax.f32 %v6129, 0.0
    %v6284 = vmax.f32 %v6130, 0.0
    %v6285 = vmax.f32 %v6131, 0.0
    %v6286 = vmax.f32 %v6132, 0.0
    %v6287 = vmax.f32 %v6133, 0.0
    %v6288 = vmax.f32 %v6134, 0.0
    %v6289 = vmax.f32 %v6135, 0.0
    %v6290 = vmax.f32 %v6136, 0.0
    %v6291 = vmax.f32 %v6137, 0.0
    %v6292 = vmax.f32 %v6138, 0.0
    %v6293 = vmax.f32 %v6139, 0.0
    %v6294 = vmax.f32 %v6140, 0.0
    %v6295 = vmax.f32 %v6141, 0.0
    %v6296 = vmax.f32 %v6142, 0.0
    %v6297 = vmax.f32 %v6143, 0.0
    %v6298 = vmax.f32 %v6144, 0.0
    %v6299 = vmax.f32 %v6145, 0.0
    %v6390 = vlaneseq
    %v6391 = vshrl.u32 %v6390, 7
    %v6392 = vsub.s32 0, %v6391
    %v6393 = vrot.slane %v6146, %v6392
    %v6394 = vlaneseq
    %v6395 = vshrl.u32 %v6394, 7
    %v6396 = vsub.s32 0, %v6395
    %v6397 = vrot.slane %v6147, %v6396
    %v6398 = vlaneseq
    %v6399 = vshrl.u32 %v6398, 7
    %v6400 = vsub.s32 0, %v6399
    %v6401 = vrot.slane %v6148, %v6400
    %v6402 = vlaneseq
    %v6403 = vshrl.u32 %v6402, 7
    %v6404 = vsub.s32 0, %v6403
    %v6405 = vrot.slane %v6149, %v6404
    %v6406 = vlaneseq
    %v6407 = vshrl.u32 %v6406, 7
    %v6408 = vsub.s32 0, %v6407
    %v6409 = vrot.slane %v6150, %v6408
    %v6410 = vlaneseq
    %v6411 = vshrl.u32 %v6410, 7
    %v6412 = vsub.s32 0, %v6411
    %v6413 = vrot.slane %v6151, %v6412
    %v6414 = vlaneseq
    %v6415 = vshrl.u32 %v6414, 7
    %v6416 = vsub.s32 0, %v6415
    %v6417 = vrot.slane %v6152, %v6416
    %v6418 = vlaneseq
    %v6419 = vshrl.u32 %v6418, 7
    %v6420 = vsub.s32 0, %v6419
    %v6421 = vrot.slane %v6153, %v6420
    %v6422 = vlaneseq
    %v6423 = vshrl.u32 %v6422, 7
    %v6424 = vsub.s32 0, %v6423
    %v6425 = vrot.slane %v6154, %v6424
    %v6426 = vlaneseq
    %v6427 = vshrl.u32 %v6426, 7
    %v6428 = vsub.s32 0, %v6427
    %v6429 = vrot.slane %v6157, %v6428
    %v6430 = vlaneseq
    %v6431 = vshrl.u32 %v6430, 7
    %v6432 = vsub.s32 0, %v6431
    %v6433 = vrot.slane %v6158, %v6432
    %v6434 = vlaneseq
    %v6435 = vshrl.u32 %v6434, 7
    %v6436 = vsub.s32 0, %v6435
    %v6437 = vrot.slane %v6159, %v6436
    %v6438 = vlaneseq
    %v6439 = vshrl.u32 %v6438, 7
    %v6440 = vsub.s32 0, %v6439
    %v6441 = vrot.slane %v6160, %v6440
    %v6442 = vlaneseq
    %v6443 = vshrl.u32 %v6442, 7
    %v6444 = vsub.s32 0, %v6443
    %v6445 = vrot.slane %v6161, %v6444
    %v6446 = vlaneseq
    %v6447 = vshrl.u32 %v6446, 7
    %v6448 = vsub.s32 0, %v6447
    %v6449 = vrot.slane %v6162, %v6448
    %v6450 = vlaneseq
    %v6451 = vshrl.u32 %v6450, 7
    %v6452 = vsub.s32 0, %v6451
    %v6453 = vrot.slane %v6163, %v6452
    %v6454 = vlaneseq
    %v6455 = vshrl.u32 %v6454, 7
    %v6456 = vsub.s32 0, %v6455
    %v6457 = vrot.slane %v6164, %v6456
    %v6458 = vlaneseq
    %v6459 = vshrl.u32 %v6458, 7
    %v6460 = vsub.s32 0, %v6459
    %v6461 = vrot.slane %v6165, %v6460
    %v6462 = vlaneseq
    %v6463 = vshrl.u32 %v6462, 7
    %v6464 = vsub.s32 0, %v6463
    %v6465 = vrot.slane %v6168, %v6464
    %v6466 = vlaneseq
    %v6467 = vshrl.u32 %v6466, 7
    %v6468 = vsub.s32 0, %v6467
    %v6469 = vrot.slane %v6169, %v6468
    %v6470 = vlaneseq
    %v6471 = vshrl.u32 %v6470, 7
    %v6472 = vsub.s32 0, %v6471
    %v6473 = vrot.slane %v6170, %v6472
    %v6474 = vlaneseq
    %v6475 = vshrl.u32 %v6474, 7
    %v6476 = vsub.s32 0, %v6475
    %v6477 = vrot.slane %v6171, %v6476
    %v6478 = vlaneseq
    %v6479 = vshrl.u32 %v6478, 7
    %v6480 = vsub.s32 0, %v6479
    %v6481 = vrot.slane %v6172, %v6480
    %v6482 = vlaneseq
    %v6483 = vshrl.u32 %v6482, 7
    %v6484 = vsub.s32 0, %v6483
    %v6485 = vrot.slane %v6173, %v6484
    %v6486 = vlaneseq
    %v6487 = vshrl.u32 %v6486, 7
    %v6488 = vsub.s32 0, %v6487
    %v6489 = vrot.slane %v6174, %v6488
    %v6490 = vlaneseq
    %v6491 = vshrl.u32 %v6490, 7
    %v6492 = vsub.s32 0, %v6491
    %v6493 = vrot.slane %v6175, %v6492
    %v6494 = vlaneseq
    %v6495 = vshrl.u32 %v6494, 7
    %v6496 = vsub.s32 0, %v6495
    %v6497 = vrot.slane %v6176, %v6496
    %v6498 = vlaneseq
    %v6499 = vshrl.u32 %v6498, 7
    %v6500 = vsub.s32 0, %v6499
    %v6501 = vrot.slane %v6179, %v6500
    %v6502 = vlaneseq
    %v6503 = vshrl.u32 %v6502, 7
    %v6504 = vsub.s32 0, %v6503
    %v6505 = vrot.slane %v6180, %v6504
    %v6506 = vlaneseq
    %v6507 = vshrl.u32 %v6506, 7
    %v6508 = vsub.s32 0, %v6507
    %v6509 = vrot.slane %v6181, %v6508
    %v6510 = vlaneseq
    %v6511 = vshrl.u32 %v6510, 7
    %v6512 = vsub.s32 0, %v6511
    %v6513 = vrot.slane %v6182, %v6512
    %v6514 = vlaneseq
    %v6515 = vshrl.u32 %v6514, 7
    %v6516 = vsub.s32 0, %v6515
    %v6517 = vrot.slane %v6183, %v6516
    %v6518 = vlaneseq
    %v6519 = vshrl.u32 %v6518, 7
    %v6520 = vsub.s32 0, %v6519
    %v6521 = vrot.slane %v6184, %v6520
    %v6522 = vlaneseq
    %v6523 = vshrl.u32 %v6522, 7
    %v6524 = vsub.s32 0, %v6523
    %v6525 = vrot.slane %v6185, %v6524
    %v6526 = vlaneseq
    %v6527 = vshrl.u32 %v6526, 7
    %v6528 = vsub.s32 0, %v6527
    %v6529 = vrot.slane %v6186, %v6528
    %v6530 = vlaneseq
    %v6531 = vshrl.u32 %v6530, 7
    %v6532 = vsub.s32 0, %v6531
    %v6533 = vrot.slane %v6187, %v6532
    %v6534 = vlaneseq
    %v6535 = vshrl.u32 %v6534, 7
    %v6536 = vsub.s32 0, %v6535
    %v6537 = vrot.slane %v6190, %v6536
    %v6538 = vlaneseq
    %v6539 = vshrl.u32 %v6538, 7
    %v6540 = vsub.s32 0, %v6539
    %v6541 = vrot.slane %v6191, %v6540
    %v6542 = vlaneseq
    %v6543 = vshrl.u32 %v6542, 7
    %v6544 = vsub.s32 0, %v6543
    %v6545 = vrot.slane %v6192, %v6544
    %v6546 = vlaneseq
    %v6547 = vshrl.u32 %v6546, 7
    %v6548 = vsub.s32 0, %v6547
    %v6549 = vrot.slane %v6193, %v6548
    %v6550 = vlaneseq
    %v6551 = vshrl.u32 %v6550, 7
    %v6552 = vsub.s32 0, %v6551
    %v6553 = vrot.slane %v6194, %v6552
    %v6554 = vlaneseq
    %v6555 = vshrl.u32 %v6554, 7
    %v6556 = vsub.s32 0, %v6555
    %v6557 = vrot.slane %v6195, %v6556
    %v6558 = vlaneseq
    %v6559 = vshrl.u32 %v6558, 7
    %v6560 = vsub.s32 0, %v6559
    %v6561 = vrot.slane %v6196, %v6560
    %v6562 = vlaneseq
    %v6563 = vshrl.u32 %v6562, 7
    %v6564 = vsub.s32 0, %v6563
    %v6565 = vrot.slane %v6197, %v6564
    %v6566 = vlaneseq
    %v6567 = vshrl.u32 %v6566, 7
    %v6568 = vsub.s32 0, %v6567
    %v6569 = vrot.slane %v6198, %v6568
    %v6570 = vlaneseq
    %v6571 = vshrl.u32 %v6570, 7
    %v6572 = vsub.s32 0, %v6571
    %v6573 = vrot.slane %v6223, %v6572
    %v6574 = vlaneseq
    %v6575 = vshrl.u32 %v6574, 7
    %v6576 = vsub.s32 0, %v6575
    %v6577 = vrot.slane %v6224, %v6576
    %v6578 = vlaneseq
    %v6579 = vshrl.u32 %v6578, 7
    %v6580 = vsub.s32 0, %v6579
    %v6581 = vrot.slane %v6225, %v6580
    %v6582 = vlaneseq
    %v6583 = vshrl.u32 %v6582, 7
    %v6584 = vsub.s32 0, %v6583
    %v6585 = vrot.slane %v6226, %v6584
    %v6586 = vlaneseq
    %v6587 = vshrl.u32 %v6586, 7
    %v6588 = vsub.s32 0, %v6587
    %v6589 = vrot.slane %v6227, %v6588
    %v6590 = vlaneseq
    %v6591 = vshrl.u32 %v6590, 7
    %v6592 = vsub.s32 0, %v6591
    %v6593 = vrot.slane %v6228, %v6592
    %v6594 = vlaneseq
    %v6595 = vshrl.u32 %v6594, 7
    %v6596 = vsub.s32 0, %v6595
    %v6597 = vrot.slane %v6229, %v6596
    %v6598 = vlaneseq
    %v6599 = vshrl.u32 %v6598, 7
    %v6600 = vsub.s32 0, %v6599
    %v6601 = vrot.slane %v6230, %v6600
    %v6602 = vlaneseq
    %v6603 = vshrl.u32 %v6602, 7
    %v6604 = vsub.s32 0, %v6603
    %v6605 = vrot.slane %v6231, %v6604
    %v6606 = vlaneseq
    %v6607 = vshrl.u32 %v6606, 7
    %v6608 = vsub.s32 0, %v6607
    %v6609 = vrot.slane %v6234, %v6608
    %v6610 = vlaneseq
    %v6611 = vshrl.u32 %v6610, 7
    %v6612 = vsub.s32 0, %v6611
    %v6613 = vrot.slane %v6235, %v6612
    %v6614 = vlaneseq
    %v6615 = vshrl.u32 %v6614, 7
    %v6616 = vsub.s32 0, %v6615
    %v6617 = vrot.slane %v6236, %v6616
    %v6618 = vlaneseq
    %v6619 = vshrl.u32 %v6618, 7
    %v6620 = vsub.s32 0, %v6619
    %v6621 = vrot.slane %v6237, %v6620
    %v6622 = vlaneseq
    %v6623 = vshrl.u32 %v6622, 7
    %v6624 = vsub.s32 0, %v6623
    %v6625 = vrot.slane %v6238, %v6624
    %v6626 = vlaneseq
    %v6627 = vshrl.u32 %v6626, 7
    %v6628 = vsub.s32 0, %v6627
    %v6629 = vrot.slane %v6239, %v6628
    %v6630 = vlaneseq
    %v6631 = vshrl.u32 %v6630, 7
    %v6632 = vsub.s32 0, %v6631
    %v6633 = vrot.slane %v6240, %v6632
    %v6634 = vlaneseq
    %v6635 = vshrl.u32 %v6634, 7
    %v6636 = vsub.s32 0, %v6635
    %v6637 = vrot.slane %v6241, %v6636
    %v6638 = vlaneseq
    %v6639 = vshrl.u32 %v6638, 7
    %v6640 = vsub.s32 0, %v6639
    %v6641 = vrot.slane %v6242, %v6640
    %v6642 = vlaneseq
    %v6643 = vshrl.u32 %v6642, 7
    %v6644 = vsub.s32 0, %v6643
    %v6645 = vrot.slane %v6245, %v6644
    %v6646 = vlaneseq
    %v6647 = vshrl.u32 %v6646, 7
    %v6648 = vsub.s32 0, %v6647
    %v6649 = vrot.slane %v6246, %v6648
    %v6650 = vlaneseq
    %v6651 = vshrl.u32 %v6650, 7
    %v6652 = vsub.s32 0, %v6651
    %v6653 = vrot.slane %v6247, %v6652
    %v6654 = vlaneseq
    %v6655 = vshrl.u32 %v6654, 7
    %v6656 = vsub.s32 0, %v6655
    %v6657 = vrot.slane %v6248, %v6656
    %v6658 = vlaneseq
    %v6659 = vshrl.u32 %v6658, 7
    %v6660 = vsub.s32 0, %v6659
    %v6661 = vrot.slane %v6249, %v6660
    %v6662 = vlaneseq
    %v6663 = vshrl.u32 %v6662, 7
    %v6664 = vsub.s32 0, %v6663
    %v6665 = vrot.slane %v6250, %v6664
    %v6666 = vlaneseq
    %v6667 = vshrl.u32 %v6666, 7
    %v6668 = vsub.s32 0, %v6667
    %v6669 = vrot.slane %v6251, %v6668
    %v6670 = vlaneseq
    %v6671 = vshrl.u32 %v6670, 7
    %v6672 = vsub.s32 0, %v6671
    %v6673 = vrot.slane %v6252, %v6672
    %v6674 = vlaneseq
    %v6675 = vshrl.u32 %v6674, 7
    %v6676 = vsub.s32 0, %v6675
    %v6677 = vrot.slane %v6253, %v6676
    %v6678 = vlaneseq
    %v6679 = vshrl.u32 %v6678, 7
    %v6680 = vsub.s32 0, %v6679
    %v6681 = vrot.slane %v6256, %v6680
    %v6682 = vlaneseq
    %v6683 = vshrl.u32 %v6682, 7
    %v6684 = vsub.s32 0, %v6683
    %v6685 = vrot.slane %v6257, %v6684
    %v6686 = vlaneseq
    %v6687 = vshrl.u32 %v6686, 7
    %v6688 = vsub.s32 0, %v6687
    %v6689 = vrot.slane %v6258, %v6688
    %v6690 = vlaneseq
    %v6691 = vshrl.u32 %v6690, 7
    %v6692 = vsub.s32 0, %v6691
    %v6693 = vrot.slane %v6259, %v6692
    %v6694 = vlaneseq
    %v6695 = vshrl.u32 %v6694, 7
    %v6696 = vsub.s32 0, %v6695
    %v6697 = vrot.slane %v6260, %v6696
    %v6698 = vlaneseq
    %v6699 = vshrl.u32 %v6698, 7
    %v6700 = vsub.s32 0, %v6699
    %v6701 = vrot.slane %v6261, %v6700
    %v6702 = vlaneseq
    %v6703 = vshrl.u32 %v6702, 7
    %v6704 = vsub.s32 0, %v6703
    %v6705 = vrot.slane %v6262, %v6704
    %v6706 = vlaneseq
    %v6707 = vshrl.u32 %v6706, 7
    %v6708 = vsub.s32 0, %v6707
    %v6709 = vrot.slane %v6263, %v6708
    %v6710 = vlaneseq
    %v6711 = vshrl.u32 %v6710, 7
    %v6712 = vsub.s32 0, %v6711
    %v6713 = vrot.slane %v6264, %v6712
    %v6714 = vlaneseq
    %v6715 = vshrl.u32 %v6714, 7
    %v6716 = vsub.s32 0, %v6715
    %v6717 = vrot.slane %v6267, %v6716
    %v6718 = vlaneseq
    %v6719 = vshrl.u32 %v6718, 7
    %v6720 = vsub.s32 0, %v6719
    %v6721 = vrot.slane %v6268, %v6720
    %v6722 = vlaneseq
    %v6723 = vshrl.u32 %v6722, 7
    %v6724 = vsub.s32 0, %v6723
    %v6725 = vrot.slane %v6269, %v6724
    %v6726 = vlaneseq
    %v6727 = vshrl.u32 %v6726, 7
    %v6728 = vsub.s32 0, %v6727
    %v6729 = vrot.slane %v6270, %v6728
    %v6730 = vlaneseq
    %v6731 = vshrl.u32 %v6730, 7
    %v6732 = vsub.s32 0, %v6731
    %v6733 = vrot.slane %v6271, %v6732
    %v6734 = vlaneseq
    %v6735 = vshrl.u32 %v6734, 7
    %v6736 = vsub.s32 0, %v6735
    %v6737 = vrot.slane %v6272, %v6736
    %v6738 = vlaneseq
    %v6739 = vshrl.u32 %v6738, 7
    %v6740 = vsub.s32 0, %v6739
    %v6741 = vrot.slane %v6273, %v6740
    %v6742 = vlaneseq
    %v6743 = vshrl.u32 %v6742, 7
    %v6744 = vsub.s32 0, %v6743
    %v6745 = vrot.slane %v6274, %v6744
    %v6746 = vlaneseq
    %v6747 = vshrl.u32 %v6746, 7
    %v6748 = vsub.s32 0, %v6747
    %v6749 = vrot.slane %v6275, %v6748
    %vm6750 = vcmask 1041409
    %v6751 = vsel %vm6750, %v6397, %v6393
    %vm6752 = vcmask 1042434
    %v6753 = vsel %vm6752, %v6401, %v6751
    %vm6754 = vcmask 1043459
    %v6755 = vsel %vm6754, %v6405, %v6753
    %vm6756 = vcmask 1044484
    %v6757 = vsel %vm6756, %v6409, %v6755
    %vm6758 = vcmask 1045509
    %v6759 = vsel %vm6758, %v6413, %v6757
    %vm6760 = vcmask 1046534
    %v6761 = vsel %vm6760, %v6417, %v6759
    %vm6762 = vcmask 1047559
    %v6763 = vsel %vm6762, %v6421, %v6761
    %v6764 = vsel %vm6750, %v6433, %v6429
    %v6765 = vsel %vm6752, %v6437, %v6764
    %v6766 = vsel %vm6754, %v6441, %v6765
    %v6767 = vsel %vm6756, %v6445, %v6766
    %v6768 = vsel %vm6758, %v6449, %v6767
    %v6769 = vsel %vm6760, %v6453, %v6768
    %v6770 = vsel %vm6762, %v6457, %v6769
    %v6771 = vsel %vm6750, %v6469, %v6465
    %v6772 = vsel %vm6752, %v6473, %v6771
    %v6773 = vsel %vm6754, %v6477, %v6772
    %v6774 = vsel %vm6756, %v6481, %v6773
    %v6775 = vsel %vm6758, %v6485, %v6774
    %v6776 = vsel %vm6760, %v6489, %v6775
    %v6777 = vsel %vm6762, %v6493, %v6776
    %v6778 = vsel %vm6750, %v6505, %v6501
    %v6779 = vsel %vm6752, %v6509, %v6778
    %v6780 = vsel %vm6754, %v6513, %v6779
    %v6781 = vsel %vm6756, %v6517, %v6780
    %v6782 = vsel %vm6758, %v6521, %v6781
    %v6783 = vsel %vm6760, %v6525, %v6782
    %v6784 = vsel %vm6762, %v6529, %v6783
    %v6785 = vsel %vm6750, %v6541, %v6537
    %v6786 = vsel %vm6752, %v6545, %v6785
    %v6787 = vsel %vm6754, %v6549, %v6786
    %v6788 = vsel %vm6756, %v6553, %v6787
    %v6789 = vsel %vm6758, %v6557, %v6788
    %v6790 = vsel %vm6760, %v6561, %v6789
    %v6791 = vsel %vm6762, %v6565, %v6790
    %v6792 = vsel %vm6750, %v6577, %v6573
    %v6793 = vsel %vm6752, %v6581, %v6792
    %v6794 = vsel %vm6754, %v6585, %v6793
    %v6795 = vsel %vm6756, %v6589, %v6794
    %v6796 = vsel %vm6758, %v6593, %v6795
    %v6797 = vsel %vm6760, %v6597, %v6796
    %v6798 = vsel %vm6762, %v6601, %v6797
    %v6799 = vsel %vm6750, %v6613, %v6609
    %v6800 = vsel %vm6752, %v6617, %v6799
    %v6801 = vsel %vm6754, %v6621, %v6800
    %v6802 = vsel %vm6756, %v6625, %v6801
    %v6803 = vsel %vm6758, %v6629, %v6802
    %v6804 = vsel %vm6760, %v6633, %v6803
    %v6805 = vsel %vm6762, %v6637, %v6804
    %v6806 = vsel %vm6750, %v6649, %v6645
    %v6807 = vsel %vm6752, %v6653, %v6806
    %v6808 = vsel %vm6754, %v6657, %v6807
    %v6809 = vsel %vm6756, %v6661, %v6808
    %v6810 = vsel %vm6758, %v6665, %v6809
    %v6811 = vsel %vm6760, %v6669, %v6810
    %v6812 = vsel %vm6762, %v6673, %v6811
    %v6813 = vsel %vm6750, %v6685, %v6681
    %v6814 = vsel %vm6752, %v6689, %v6813
    %v6815 = vsel %vm6754, %v6693, %v6814
    %v6816 = vsel %vm6756, %v6697, %v6815
    %v6817 = vsel %vm6758, %v6701, %v6816
    %v6818 = vsel %vm6760, %v6705, %v6817
    %v6819 = vsel %vm6762, %v6709, %v6818
    %v6820 = vsel %vm6750, %v6721, %v6717
    %v6821 = vsel %vm6752, %v6725, %v6820
    %v6822 = vsel %vm6754, %v6729, %v6821
    %v6823 = vsel %vm6756, %v6733, %v6822
    %v6824 = vsel %vm6758, %v6737, %v6823
    %v6825 = vsel %vm6760, %v6741, %v6824
    %v6826 = vsel %vm6762, %v6745, %v6825
    %v6857 = vlaneseq
    %v6858 = vshrl.u32 %v6857, 7
    %v6859 = vsub.s32 0, %v6858
    %v6860 = vrot.slane %v6155, %v6859
    %v6861 = vlaneseq
    %v6862 = vshrl.u32 %v6861, 7
    %v6863 = vsub.s32 0, %v6862
    %v6864 = vrot.slane %v6166, %v6863
    %v6865 = vlaneseq
    %v6866 = vshrl.u32 %v6865, 7
    %v6867 = vsub.s32 0, %v6866
    %v6868 = vrot.slane %v6177, %v6867
    %v6869 = vlaneseq
    %v6870 = vshrl.u32 %v6869, 7
    %v6871 = vsub.s32 0, %v6870
    %v6872 = vrot.slane %v6188, %v6871
    %v6873 = vlaneseq
    %v6874 = vshrl.u32 %v6873, 7
    %v6875 = vsub.s32 0, %v6874
    %v6876 = vrot.slane %v6199, %v6875
    %v6877 = vlaneseq
    %v6878 = vshrl.u32 %v6877, 7
    %v6879 = vsub.s32 0, %v6878
    %v6880 = vrot.slane %v6232, %v6879
    %v6881 = vlaneseq
    %v6882 = vshrl.u32 %v6881, 7
    %v6883 = vsub.s32 0, %v6882
    %v6884 = vrot.slane %v6243, %v6883
    %v6885 = vlaneseq
    %v6886 = vshrl.u32 %v6885, 7
    %v6887 = vsub.s32 0, %v6886
    %v6888 = vrot.slane %v6254, %v6887
    %v6889 = vlaneseq
    %v6890 = vshrl.u32 %v6889, 7
    %v6891 = vsub.s32 0, %v6890
    %v6892 = vrot.slane %v6265, %v6891
    %v6893 = vlaneseq
    %v6894 = vshrl.u32 %v6893, 7
    %v6895 = vsub.s32 0, %v6894
    %v6896 = vrot.slane %v6276, %v6895
    %v6897 = vsel %vm6750, %v6401, %v6397
    %v6898 = vsel %vm6752, %v6405, %v6897
    %v6899 = vsel %vm6754, %v6409, %v6898
    %v6900 = vsel %vm6756, %v6413, %v6899
    %v6901 = vsel %vm6758, %v6417, %v6900
    %v6902 = vsel %vm6760, %v6421, %v6901
    %v6903 = vsel %vm6762, %v6425, %v6902
    %v6904 = vsel %vm6750, %v6437, %v6433
    %v6905 = vsel %vm6752, %v6441, %v6904
    %v6906 = vsel %vm6754, %v6445, %v6905
    %v6907 = vsel %vm6756, %v6449, %v6906
    %v6908 = vsel %vm6758, %v6453, %v6907
    %v6909 = vsel %vm6760, %v6457, %v6908
    %v6910 = vsel %vm6762, %v6461, %v6909
    %v6911 = vsel %vm6750, %v6473, %v6469
    %v6912 = vsel %vm6752, %v6477, %v6911
    %v6913 = vsel %vm6754, %v6481, %v6912
    %v6914 = vsel %vm6756, %v6485, %v6913
    %v6915 = vsel %vm6758, %v6489, %v6914
    %v6916 = vsel %vm6760, %v6493, %v6915
    %v6917 = vsel %vm6762, %v6497, %v6916
    %v6918 = vsel %vm6750, %v6509, %v6505
    %v6919 = vsel %vm6752, %v6513, %v6918
    %v6920 = vsel %vm6754, %v6517, %v6919
    %v6921 = vsel %vm6756, %v6521, %v6920
    %v6922 = vsel %vm6758, %v6525, %v6921
    %v6923 = vsel %vm6760, %v6529, %v6922
    %v6924 = vsel %vm6762, %v6533, %v6923
    %v6925 = vsel %vm6750, %v6545, %v6541
    %v6926 = vsel %vm6752, %v6549, %v6925
    %v6927 = vsel %vm6754, %v6553, %v6926
    %v6928 = vsel %vm6756, %v6557, %v6927
    %v6929 = vsel %vm6758, %v6561, %v6928
    %v6930 = vsel %vm6760, %v6565, %v6929
    %v6931 = vsel %vm6762, %v6569, %v6930
    %v6932 = vsel %vm6750, %v6581, %v6577
    %v6933 = vsel %vm6752, %v6585, %v6932
    %v6934 = vsel %vm6754, %v6589, %v6933
    %v6935 = vsel %vm6756, %v6593, %v6934
    %v6936 = vsel %vm6758, %v6597, %v6935
    %v6937 = vsel %vm6760, %v6601, %v6936
    %v6938 = vsel %vm6762, %v6605, %v6937
    %v6939 = vsel %vm6750, %v6617, %v6613
    %v6940 = vsel %vm6752, %v6621, %v6939
    %v6941 = vsel %vm6754, %v6625, %v6940
    %v6942 = vsel %vm6756, %v6629, %v6941
    %v6943 = vsel %vm6758, %v6633, %v6942
    %v6944 = vsel %vm6760, %v6637, %v6943
    %v6945 = vsel %vm6762, %v6641, %v6944
    %v6946 = vsel %vm6750, %v6653, %v6649
    %v6947 = vsel %vm6752, %v6657, %v6946
    %v6948 = vsel %vm6754, %v6661, %v6947
    %v6949 = vsel %vm6756, %v6665, %v6948
    %v6950 = vsel %vm6758, %v6669, %v6949
    %v6951 = vsel %vm6760, %v6673, %v6950
    %v6952 = vsel %vm6762, %v6677, %v6951
    %v6953 = vsel %vm6750, %v6689, %v6685
    %v6954 = vsel %vm6752, %v6693, %v6953
    %v6955 = vsel %vm6754, %v6697, %v6954
    %v6956 = vsel %vm6756, %v6701, %v6955
    %v6957 = vsel %vm6758, %v6705, %v6956
    %v6958 = vsel %vm6760, %v6709, %v6957
    %v6959 = vsel %vm6762, %v6713, %v6958
    %v6960 = vsel %vm6750, %v6725, %v6721
    %v6961 = vsel %vm6752, %v6729, %v6960
    %v6962 = vsel %vm6754, %v6733, %v6961
    %v6963 = vsel %vm6756, %v6737, %v6962
    %v6964 = vsel %vm6758, %v6741, %v6963
    %v6965 = vsel %vm6760, %v6745, %v6964
    %v6966 = vsel %vm6762, %v6749, %v6965
    %6967 = vrot.lane.b32.xlu0 %v6903, 64
    %v6968 = vpop.permute.xlu0 %6967
    %6969 = vrot.lane.b32.xlu0 %v6860, 64
    %v6970 = vpop.permute.xlu0 %6969
    %6971 = vrot.lane.b32.xlu0 %v6910, 64
    %v6972 = vpop.permute.xlu0 %6971
    %6973 = vrot.lane.b32.xlu0 %v6864, 64
    %v6974 = vpop.permute.xlu0 %6973
    %6975 = vrot.lane.b32.xlu0 %v6917, 64
    %v6976 = vpop.permute.xlu0 %6975
    %6977 = vrot.lane.b32.xlu0 %v6868, 64
    %v6978 = vpop.permute.xlu0 %6977
    %6979 = vrot.lane.b32.xlu0 %v6924, 64
    %v6980 = vpop.permute.xlu0 %6979
    %6981 = vrot.lane.b32.xlu0 %v6872, 64
    %v6982 = vpop.permute.xlu0 %6981
    %6983 = vrot.lane.b32.xlu0 %v6931, 64
    %v6984 = vpop.permute.xlu0 %6983
    %6985 = vrot.lane.b32.xlu0 %v6876, 64
    %v6986 = vpop.permute.xlu0 %6985
    %6987 = vrot.lane.b32.xlu0 %v6938, 64
    %v6988 = vpop.permute.xlu0 %6987
    %6989 = vrot.lane.b32.xlu0 %v6880, 64
    %v6990 = vpop.permute.xlu0 %6989
    %6991 = vrot.lane.b32.xlu0 %v6945, 64
    %v6992 = vpop.permute.xlu0 %6991
    %6993 = vrot.lane.b32.xlu0 %v6884, 64
    %v6994 = vpop.permute.xlu0 %6993
    %6995 = vrot.lane.b32.xlu0 %v6952, 64
    %v6996 = vpop.permute.xlu0 %6995
    %6997 = vrot.lane.b32.xlu0 %v6888, 64
    %v6998 = vpop.permute.xlu0 %6997
    %6999 = vrot.lane.b32.xlu0 %v6959, 64
    %v7000 = vpop.permute.xlu0 %6999
    %7001 = vrot.lane.b32.xlu0 %v6892, 64
    %v7002 = vpop.permute.xlu0 %7001
    %7003 = vrot.lane.b32.xlu0 %v6966, 64
    %v7004 = vpop.permute.xlu0 %7003
    %7005 = vrot.lane.b32.xlu0 %v6896, 64
    %v7006 = vpop.permute.xlu0 %7005
    %v7037 = vlaneseq
    %v7038 = vshrl.u32 %v7037, 7
    %v7039 = vsub.s32 0, %v7038
    %v7040 = vrot.slane %v6156, %v7039
    %v7041 = vlaneseq
    %v7042 = vshrl.u32 %v7041, 7
    %v7043 = vsub.s32 0, %v7042
    %v7044 = vrot.slane %v6167, %v7043
    %v7045 = vlaneseq
    %v7046 = vshrl.u32 %v7045, 7
    %v7047 = vsub.s32 0, %v7046
    %v7048 = vrot.slane %v6178, %v7047
    %v7049 = vlaneseq
    %v7050 = vshrl.u32 %v7049, 7
    %v7051 = vsub.s32 0, %v7050
    %v7052 = vrot.slane %v6189, %v7051
    %v7053 = vlaneseq
    %v7054 = vshrl.u32 %v7053, 7
    %v7055 = vsub.s32 0, %v7054
    %v7056 = vrot.slane %v6200, %v7055
    %v7057 = vlaneseq
    %v7058 = vshrl.u32 %v7057, 7
    %v7059 = vsub.s32 0, %v7058
    %v7060 = vrot.slane %v6233, %v7059
    %v7061 = vlaneseq
    %v7062 = vshrl.u32 %v7061, 7
    %v7063 = vsub.s32 0, %v7062
    %v7064 = vrot.slane %v6244, %v7063
    %v7065 = vlaneseq
    %v7066 = vshrl.u32 %v7065, 7
    %v7067 = vsub.s32 0, %v7066
    %v7068 = vrot.slane %v6255, %v7067
    %v7069 = vlaneseq
    %v7070 = vshrl.u32 %v7069, 7
    %v7071 = vsub.s32 0, %v7070
    %v7072 = vrot.slane %v6266, %v7071
    %v7073 = vlaneseq
    %v7074 = vshrl.u32 %v7073, 7
    %v7075 = vsub.s32 0, %v7074
    %v7076 = vrot.slane %v6277, %v7075
    %v7077 = vsel %vm6750, %v6405, %v6401
    %v7078 = vsel %vm6752, %v6409, %v7077
    %v7079 = vsel %vm6754, %v6413, %v7078
    %v7080 = vsel %vm6756, %v6417, %v7079
    %v7081 = vsel %vm6758, %v6421, %v7080
    %v7082 = vsel %vm6760, %v6425, %v7081
    %v7083 = vsel %vm6762, %v6860, %v7082
    %v7084 = vsel %vm6750, %v6441, %v6437
    %v7085 = vsel %vm6752, %v6445, %v7084
    %v7086 = vsel %vm6754, %v6449, %v7085
    %v7087 = vsel %vm6756, %v6453, %v7086
    %v7088 = vsel %vm6758, %v6457, %v7087
    %v7089 = vsel %vm6760, %v6461, %v7088
    %v7090 = vsel %vm6762, %v6864, %v7089
    %v7091 = vsel %vm6750, %v6477, %v6473
    %v7092 = vsel %vm6752, %v6481, %v7091
    %v7093 = vsel %vm6754, %v6485, %v7092
    %v7094 = vsel %vm6756, %v6489, %v7093
    %v7095 = vsel %vm6758, %v6493, %v7094
    %v7096 = vsel %vm6760, %v6497, %v7095
    %v7097 = vsel %vm6762, %v6868, %v7096
    %v7098 = vsel %vm6750, %v6513, %v6509
    %v7099 = vsel %vm6752, %v6517, %v7098
    %v7100 = vsel %vm6754, %v6521, %v7099
    %v7101 = vsel %vm6756, %v6525, %v7100
    %v7102 = vsel %vm6758, %v6529, %v7101
    %v7103 = vsel %vm6760, %v6533, %v7102
    %v7104 = vsel %vm6762, %v6872, %v7103
    %v7105 = vsel %vm6750, %v6549, %v6545
    %v7106 = vsel %vm6752, %v6553, %v7105
    %v7107 = vsel %vm6754, %v6557, %v7106
    %v7108 = vsel %vm6756, %v6561, %v7107
    %v7109 = vsel %vm6758, %v6565, %v7108
    %v7110 = vsel %vm6760, %v6569, %v7109
    %v7111 = vsel %vm6762, %v6876, %v7110
    %v7112 = vsel %vm6750, %v6585, %v6581
    %v7113 = vsel %vm6752, %v6589, %v7112
    %v7114 = vsel %vm6754, %v6593, %v7113
    %v7115 = vsel %vm6756, %v6597, %v7114
    %v7116 = vsel %vm6758, %v6601, %v7115
    %v7117 = vsel %vm6760, %v6605, %v7116
    %v7118 = vsel %vm6762, %v6880, %v7117
    %v7119 = vsel %vm6750, %v6621, %v6617
    %v7120 = vsel %vm6752, %v6625, %v7119
    %v7121 = vsel %vm6754, %v6629, %v7120
    %v7122 = vsel %vm6756, %v6633, %v7121
    %v7123 = vsel %vm6758, %v6637, %v7122
    %v7124 = vsel %vm6760, %v6641, %v7123
    %v7125 = vsel %vm6762, %v6884, %v7124
    %v7126 = vsel %vm6750, %v6657, %v6653
    %v7127 = vsel %vm6752, %v6661, %v7126
    %v7128 = vsel %vm6754, %v6665, %v7127
    %v7129 = vsel %vm6756, %v6669, %v7128
    %v7130 = vsel %vm6758, %v6673, %v7129
    %v7131 = vsel %vm6760, %v6677, %v7130
    %v7132 = vsel %vm6762, %v6888, %v7131
    %v7133 = vsel %vm6750, %v6693, %v6689
    %v7134 = vsel %vm6752, %v6697, %v7133
    %v7135 = vsel %vm6754, %v6701, %v7134
    %v7136 = vsel %vm6756, %v6705, %v7135
    %v7137 = vsel %vm6758, %v6709, %v7136
    %v7138 = vsel %vm6760, %v6713, %v7137
    %v7139 = vsel %vm6762, %v6892, %v7138
    %v7140 = vsel %vm6750, %v6729, %v6725
    %v7141 = vsel %vm6752, %v6733, %v7140
    %v7142 = vsel %vm6754, %v6737, %v7141
    %v7143 = vsel %vm6756, %v6741, %v7142
    %v7144 = vsel %vm6758, %v6745, %v7143
    %v7145 = vsel %vm6760, %v6749, %v7144
    %v7146 = vsel %vm6762, %v6896, %v7145
    %v7185 = vlaneseq
    %v7186 = vshrl.u32 %v7185, 7
    %v7187 = vsub.s32 0, %v7186
    %v7188 = vrot.slane %v6201, %v7187
    %v7189 = vlaneseq
    %v7190 = vshrl.u32 %v7189, 7
    %v7191 = vsub.s32 0, %v7190
    %v7192 = vrot.slane %v6202, %v7191
    %v7193 = vlaneseq
    %v7194 = vshrl.u32 %v7193, 7
    %v7195 = vsub.s32 0, %v7194
    %v7196 = vrot.slane %v6203, %v7195
    %v7197 = vlaneseq
    %v7198 = vshrl.u32 %v7197, 7
    %v7199 = vsub.s32 0, %v7198
    %v7200 = vrot.slane %v6204, %v7199
    %v7201 = vlaneseq
    %v7202 = vshrl.u32 %v7201, 7
    %v7203 = vsub.s32 0, %v7202
    %v7204 = vrot.slane %v6205, %v7203
    %v7205 = vlaneseq
    %v7206 = vshrl.u32 %v7205, 7
    %v7207 = vsub.s32 0, %v7206
    %v7208 = vrot.slane %v6206, %v7207
    %v7209 = vlaneseq
    %v7210 = vshrl.u32 %v7209, 7
    %v7211 = vsub.s32 0, %v7210
    %v7212 = vrot.slane %v6207, %v7211
    %v7213 = vlaneseq
    %v7214 = vshrl.u32 %v7213, 7
    %v7215 = vsub.s32 0, %v7214
    %v7216 = vrot.slane %v6208, %v7215
    %v7217 = vlaneseq
    %v7218 = vshrl.u32 %v7217, 7
    %v7219 = vsub.s32 0, %v7218
    %v7220 = vrot.slane %v6209, %v7219
    %v7221 = vlaneseq
    %v7222 = vshrl.u32 %v7221, 7
    %v7223 = vsub.s32 0, %v7222
    %v7224 = vrot.slane %v6278, %v7223
    %v7225 = vlaneseq
    %v7226 = vshrl.u32 %v7225, 7
    %v7227 = vsub.s32 0, %v7226
    %v7228 = vrot.slane %v6279, %v7227
    %v7229 = vlaneseq
    %v7230 = vshrl.u32 %v7229, 7
    %v7231 = vsub.s32 0, %v7230
    %v7232 = vrot.slane %v6280, %v7231
    %v7233 = vlaneseq
    %v7234 = vshrl.u32 %v7233, 7
    %v7235 = vsub.s32 0, %v7234
    %v7236 = vrot.slane %v6281, %v7235
    %v7237 = vlaneseq
    %v7238 = vshrl.u32 %v7237, 7
    %v7239 = vsub.s32 0, %v7238
    %v7240 = vrot.slane %v6282, %v7239
    %v7241 = vlaneseq
    %v7242 = vshrl.u32 %v7241, 7
    %v7243 = vsub.s32 0, %v7242
    %v7244 = vrot.slane %v6283, %v7243
    %v7245 = vlaneseq
    %v7246 = vshrl.u32 %v7245, 7
    %v7247 = vsub.s32 0, %v7246
    %v7248 = vrot.slane %v6284, %v7247
    %v7249 = vlaneseq
    %v7250 = vshrl.u32 %v7249, 7
    %v7251 = vsub.s32 0, %v7250
    %v7252 = vrot.slane %v6285, %v7251
    %v7253 = vlaneseq
    %v7254 = vshrl.u32 %v7253, 7
    %v7255 = vsub.s32 0, %v7254
    %v7256 = vrot.slane %v6286, %v7255
    %v7257 = vsel %vm6750, %v7192, %v7188
    %v7258 = vsel %vm6752, %v7196, %v7257
    %v7259 = vsel %vm6754, %v7200, %v7258
    %v7260 = vsel %vm6756, %v7204, %v7259
    %v7261 = vsel %vm6758, %v7208, %v7260
    %v7262 = vsel %vm6760, %v7212, %v7261
    %v7263 = vsel %vm6762, %v7216, %v7262
    %v7264 = vsel %vm6750, %v7228, %v7224
    %v7265 = vsel %vm6752, %v7232, %v7264
    %v7266 = vsel %vm6754, %v7236, %v7265
    %v7267 = vsel %vm6756, %v7240, %v7266
    %v7268 = vsel %vm6758, %v7244, %v7267
    %v7269 = vsel %vm6760, %v7248, %v7268
    %v7270 = vsel %vm6762, %v7252, %v7269
    %7271 = vrot.lane.b32.xlu0 %v6770, 64
    %v7272 = vpop.permute.xlu0 %7271
    %7273 = vrot.lane.b32.xlu0 %v6461, 64
    %v7274 = vpop.permute.xlu0 %7273
    %7275 = vrot.lane.b32.xlu0 %v6777, 64
    %v7276 = vpop.permute.xlu0 %7275
    %7277 = vrot.lane.b32.xlu0 %v6497, 64
    %v7278 = vpop.permute.xlu0 %7277
    %7279 = vrot.lane.b32.xlu0 %v6784, 64
    %v7280 = vpop.permute.xlu0 %7279
    %7281 = vrot.lane.b32.xlu0 %v6533, 64
    %v7282 = vpop.permute.xlu0 %7281
    %7283 = vrot.lane.b32.xlu0 %v6791, 64
    %v7284 = vpop.permute.xlu0 %7283
    %7285 = vrot.lane.b32.xlu0 %v6569, 64
    %v7286 = vpop.permute.xlu0 %7285
    %7287 = vrot.lane.b32.xlu0 %v7263, 64
    %v7288 = vpop.permute.xlu0 %7287
    %7289 = vrot.lane.b32.xlu0 %v7220, 64
    %v7290 = vpop.permute.xlu0 %7289
    %7291 = vrot.lane.b32.xlu0 %v6805, 64
    %v7292 = vpop.permute.xlu0 %7291
    %7293 = vrot.lane.b32.xlu0 %v6641, 64
    %v7294 = vpop.permute.xlu0 %7293
    %7295 = vrot.lane.b32.xlu0 %v6812, 64
    %v7296 = vpop.permute.xlu0 %7295
    %7297 = vrot.lane.b32.xlu0 %v6677, 64
    %v7298 = vpop.permute.xlu0 %7297
    %7299 = vrot.lane.b32.xlu0 %v6819, 64
    %v7300 = vpop.permute.xlu0 %7299
    %7301 = vrot.lane.b32.xlu0 %v6713, 64
    %v7302 = vpop.permute.xlu0 %7301
    %7303 = vrot.lane.b32.xlu0 %v6826, 64
    %v7304 = vpop.permute.xlu0 %7303
    %7305 = vrot.lane.b32.xlu0 %v6749, 64
    %v7306 = vpop.permute.xlu0 %7305
    %7307 = vrot.lane.b32.xlu0 %v7270, 64
    %v7308 = vpop.permute.xlu0 %7307
    %7309 = vrot.lane.b32.xlu0 %v7256, 64
    %v7310 = vpop.permute.xlu0 %7309
    %v7333 = vlaneseq
    %v7334 = vshrl.u32 %v7333, 7
    %v7335 = vsub.s32 0, %v7334
    %v7336 = vrot.slane %v6210, %v7335
    %v7337 = vlaneseq
    %v7338 = vshrl.u32 %v7337, 7
    %v7339 = vsub.s32 0, %v7338
    %v7340 = vrot.slane %v6287, %v7339
    %v7341 = vsel %vm6750, %v7196, %v7192
    %v7342 = vsel %vm6752, %v7200, %v7341
    %v7343 = vsel %vm6754, %v7204, %v7342
    %v7344 = vsel %vm6756, %v7208, %v7343
    %v7345 = vsel %vm6758, %v7212, %v7344
    %v7346 = vsel %vm6760, %v7216, %v7345
    %v7347 = vsel %vm6762, %v7220, %v7346
    %v7348 = vsel %vm6750, %v7232, %v7228
    %v7349 = vsel %vm6752, %v7236, %v7348
    %v7350 = vsel %vm6754, %v7240, %v7349
    %v7351 = vsel %vm6756, %v7244, %v7350
    %v7352 = vsel %vm6758, %v7248, %v7351
    %v7353 = vsel %vm6760, %v7252, %v7352
    %v7354 = vsel %vm6762, %v7256, %v7353
    %v7377 = vlaneseq
    %v7378 = vshrl.u32 %v7377, 7
    %v7379 = vsub.s32 0, %v7378
    %v7380 = vrot.slane %v6211, %v7379
    %v7381 = vlaneseq
    %v7382 = vshrl.u32 %v7381, 7
    %v7383 = vsub.s32 0, %v7382
    %v7384 = vrot.slane %v6288, %v7383
    %v7385 = vsel %vm6750, %v7200, %v7196
    %v7386 = vsel %vm6752, %v7204, %v7385
    %v7387 = vsel %vm6754, %v7208, %v7386
    %v7388 = vsel %vm6756, %v7212, %v7387
    %v7389 = vsel %vm6758, %v7216, %v7388
    %v7390 = vsel %vm6760, %v7220, %v7389
    %v7391 = vsel %vm6762, %v7336, %v7390
    %v7392 = vsel %vm6750, %v7236, %v7232
    %v7393 = vsel %vm6752, %v7240, %v7392
    %v7394 = vsel %vm6754, %v7244, %v7393
    %v7395 = vsel %vm6756, %v7248, %v7394
    %v7396 = vsel %vm6758, %v7252, %v7395
    %v7397 = vsel %vm6760, %v7256, %v7396
    %v7398 = vsel %vm6762, %v7340, %v7397
    %7399 = vrot.lane.b32.xlu0 %v7090, 64
    %v7400 = vpop.permute.xlu0 %7399
    %7401 = vrot.lane.b32.xlu0 %v7044, 64
    %v7402 = vpop.permute.xlu0 %7401
    %7403 = vrot.lane.b32.xlu0 %v7097, 64
    %v7404 = vpop.permute.xlu0 %7403
    %7405 = vrot.lane.b32.xlu0 %v7048, 64
    %v7406 = vpop.permute.xlu0 %7405
    %7407 = vrot.lane.b32.xlu0 %v7104, 64
    %v7408 = vpop.permute.xlu0 %7407
    %7409 = vrot.lane.b32.xlu0 %v7052, 64
    %v7410 = vpop.permute.xlu0 %7409
    %7411 = vrot.lane.b32.xlu0 %v7111, 64
    %v7412 = vpop.permute.xlu0 %7411
    %7413 = vrot.lane.b32.xlu0 %v7056, 64
    %v7414 = vpop.permute.xlu0 %7413
    %7415 = vrot.lane.b32.xlu0 %v7391, 64
    %v7416 = vpop.permute.xlu0 %7415
    %7417 = vrot.lane.b32.xlu0 %v7380, 64
    %v7418 = vpop.permute.xlu0 %7417
    %7419 = vrot.lane.b32.xlu0 %v7125, 64
    %v7420 = vpop.permute.xlu0 %7419
    %7421 = vrot.lane.b32.xlu0 %v7064, 64
    %v7422 = vpop.permute.xlu0 %7421
    %7423 = vrot.lane.b32.xlu0 %v7132, 64
    %v7424 = vpop.permute.xlu0 %7423
    %7425 = vrot.lane.b32.xlu0 %v7068, 64
    %v7426 = vpop.permute.xlu0 %7425
    %7427 = vrot.lane.b32.xlu0 %v7139, 64
    %v7428 = vpop.permute.xlu0 %7427
    %7429 = vrot.lane.b32.xlu0 %v7072, 64
    %v7430 = vpop.permute.xlu0 %7429
    %7431 = vrot.lane.b32.xlu0 %v7146, 64
    %v7432 = vpop.permute.xlu0 %7431
    %7433 = vrot.lane.b32.xlu0 %v7076, 64
    %v7434 = vpop.permute.xlu0 %7433
    %7435 = vrot.lane.b32.xlu0 %v7398, 64
    %v7436 = vpop.permute.xlu0 %7435
    %7437 = vrot.lane.b32.xlu0 %v7384, 64
    %v7438 = vpop.permute.xlu0 %7437
    %v7477 = vlaneseq
    %v7478 = vshrl.u32 %v7477, 7
    %v7479 = vsub.s32 0, %v7478
    %v7480 = vrot.slane %v6212, %v7479
    %v7481 = vlaneseq
    %v7482 = vshrl.u32 %v7481, 7
    %v7483 = vsub.s32 0, %v7482
    %v7484 = vrot.slane %v6213, %v7483
    %v7485 = vlaneseq
    %v7486 = vshrl.u32 %v7485, 7
    %v7487 = vsub.s32 0, %v7486
    %v7488 = vrot.slane %v6214, %v7487
    %v7489 = vlaneseq
    %v7490 = vshrl.u32 %v7489, 7
    %v7491 = vsub.s32 0, %v7490
    %v7492 = vrot.slane %v6215, %v7491
    %v7493 = vlaneseq
    %v7494 = vshrl.u32 %v7493, 7
    %v7495 = vsub.s32 0, %v7494
    %v7496 = vrot.slane %v6216, %v7495
    %v7497 = vlaneseq
    %v7498 = vshrl.u32 %v7497, 7
    %v7499 = vsub.s32 0, %v7498
    %v7500 = vrot.slane %v6217, %v7499
    %v7501 = vlaneseq
    %v7502 = vshrl.u32 %v7501, 7
    %v7503 = vsub.s32 0, %v7502
    %v7504 = vrot.slane %v6218, %v7503
    %v7505 = vlaneseq
    %v7506 = vshrl.u32 %v7505, 7
    %v7507 = vsub.s32 0, %v7506
    %v7508 = vrot.slane %v6219, %v7507
    %v7509 = vlaneseq
    %v7510 = vshrl.u32 %v7509, 7
    %v7511 = vsub.s32 0, %v7510
    %v7512 = vrot.slane %v6220, %v7511
    %v7513 = vlaneseq
    %v7514 = vshrl.u32 %v7513, 7
    %v7515 = vsub.s32 0, %v7514
    %v7516 = vrot.slane %v6289, %v7515
    %v7517 = vlaneseq
    %v7518 = vshrl.u32 %v7517, 7
    %v7519 = vsub.s32 0, %v7518
    %v7520 = vrot.slane %v6290, %v7519
    %v7521 = vlaneseq
    %v7522 = vshrl.u32 %v7521, 7
    %v7523 = vsub.s32 0, %v7522
    %v7524 = vrot.slane %v6291, %v7523
    %v7525 = vlaneseq
    %v7526 = vshrl.u32 %v7525, 7
    %v7527 = vsub.s32 0, %v7526
    %v7528 = vrot.slane %v6292, %v7527
    %v7529 = vlaneseq
    %v7530 = vshrl.u32 %v7529, 7
    %v7531 = vsub.s32 0, %v7530
    %v7532 = vrot.slane %v6293, %v7531
    %v7533 = vlaneseq
    %v7534 = vshrl.u32 %v7533, 7
    %v7535 = vsub.s32 0, %v7534
    %v7536 = vrot.slane %v6294, %v7535
    %v7537 = vlaneseq
    %v7538 = vshrl.u32 %v7537, 7
    %v7539 = vsub.s32 0, %v7538
    %v7540 = vrot.slane %v6295, %v7539
    %v7541 = vlaneseq
    %v7542 = vshrl.u32 %v7541, 7
    %v7543 = vsub.s32 0, %v7542
    %v7544 = vrot.slane %v6296, %v7543
    %v7545 = vlaneseq
    %v7546 = vshrl.u32 %v7545, 7
    %v7547 = vsub.s32 0, %v7546
    %v7548 = vrot.slane %v6297, %v7547
    %v7549 = vsel %vm6750, %v7484, %v7480
    %v7550 = vsel %vm6752, %v7488, %v7549
    %v7551 = vsel %vm6754, %v7492, %v7550
    %v7552 = vsel %vm6756, %v7496, %v7551
    %v7553 = vsel %vm6758, %v7500, %v7552
    %v7554 = vsel %vm6760, %v7504, %v7553
    %v7555 = vsel %vm6762, %v7508, %v7554
    %v7556 = vsel %vm6750, %v7520, %v7516
    %v7557 = vsel %vm6752, %v7524, %v7556
    %v7558 = vsel %vm6754, %v7528, %v7557
    %v7559 = vsel %vm6756, %v7532, %v7558
    %v7560 = vsel %vm6758, %v7536, %v7559
    %v7561 = vsel %vm6760, %v7540, %v7560
    %v7562 = vsel %vm6762, %v7544, %v7561
    %v7573 = vlaneseq
    %v7574 = vshrl.u32 %v7573, 7
    %v7575 = vsub.s32 0, %v7574
    %v7576 = vrot.slane %v6221, %v7575
    %v7577 = vlaneseq
    %v7578 = vshrl.u32 %v7577, 7
    %v7579 = vsub.s32 0, %v7578
    %v7580 = vrot.slane %v6298, %v7579
    %v7581 = vsel %vm6750, %v7488, %v7484
    %v7582 = vsel %vm6752, %v7492, %v7581
    %v7583 = vsel %vm6754, %v7496, %v7582
    %v7584 = vsel %vm6756, %v7500, %v7583
    %v7585 = vsel %vm6758, %v7504, %v7584
    %v7586 = vsel %vm6760, %v7508, %v7585
    %v7587 = vsel %vm6762, %v7512, %v7586
    %v7588 = vsel %vm6750, %v7524, %v7520
    %v7589 = vsel %vm6752, %v7528, %v7588
    %v7590 = vsel %vm6754, %v7532, %v7589
    %v7591 = vsel %vm6756, %v7536, %v7590
    %v7592 = vsel %vm6758, %v7540, %v7591
    %v7593 = vsel %vm6760, %v7544, %v7592
    %v7594 = vsel %vm6762, %v7548, %v7593
    %7595 = vrot.lane.b32.xlu0 %v7347, 64
    %v7596 = vpop.permute.xlu0 %7595
    %7597 = vrot.lane.b32.xlu0 %v7336, 64
    %v7598 = vpop.permute.xlu0 %7597
    %7599 = vrot.lane.b32.xlu0 %v7587, 64
    %v7600 = vpop.permute.xlu0 %7599
    %7601 = vrot.lane.b32.xlu0 %v7576, 64
    %v7602 = vpop.permute.xlu0 %7601
    %7603 = vrot.lane.b32.xlu0 %v7354, 64
    %v7604 = vpop.permute.xlu0 %7603
    %7605 = vrot.lane.b32.xlu0 %v7340, 64
    %v7606 = vpop.permute.xlu0 %7605
    %7607 = vrot.lane.b32.xlu0 %v7594, 64
    %v7608 = vpop.permute.xlu0 %7607
    %7609 = vrot.lane.b32.xlu0 %v7580, 64
    %v7610 = vpop.permute.xlu0 %7609
    %v7621 = vlaneseq
    %v7622 = vshrl.u32 %v7621, 7
    %v7623 = vsub.s32 0, %v7622
    %v7624 = vrot.slane %v6222, %v7623
    %v7625 = vlaneseq
    %v7626 = vshrl.u32 %v7625, 7
    %v7627 = vsub.s32 0, %v7626
    %v7628 = vrot.slane %v6299, %v7627
    %v7629 = vsel %vm6750, %v7492, %v7488
    %v7630 = vsel %vm6752, %v7496, %v7629
    %v7631 = vsel %vm6754, %v7500, %v7630
    %v7632 = vsel %vm6756, %v7504, %v7631
    %v7633 = vsel %vm6758, %v7508, %v7632
    %v7634 = vsel %vm6760, %v7512, %v7633
    %v7635 = vsel %vm6762, %v7576, %v7634
    %v7636 = vsel %vm6750, %v7528, %v7524
    %v7637 = vsel %vm6752, %v7532, %v7636
    %v7638 = vsel %vm6754, %v7536, %v7637
    %v7639 = vsel %vm6756, %v7540, %v7638
    %v7640 = vsel %vm6758, %v7544, %v7639
    %v7641 = vsel %vm6760, %v7548, %v7640
    %v7642 = vsel %vm6762, %v7580, %v7641
    %vm7643 = vcmask 523264
    %v7644 = vsel %vm7643, %v6763, %v6968
    %v7645 = vsel %vm7643, %v6425, %v6970
    %v7646 = vsel %vm7643, %v6770, %v6972
    %v7647 = vsel %vm7643, %v6461, %v6974
    %v7648 = vsel %vm7643, %v6777, %v6976
    %v7649 = vsel %vm7643, %v6497, %v6978
    %v7650 = vsel %vm7643, %v6784, %v6980
    %v7651 = vsel %vm7643, %v6533, %v6982
    %v7652 = vsel %vm7643, %v6791, %v6984
    %v7653 = vsel %vm7643, %v6569, %v6986
    %v7654 = vsel %vm7643, %v6798, %v6988
    %v7655 = vsel %vm7643, %v6605, %v6990
    %v7656 = vsel %vm7643, %v6805, %v6992
    %v7657 = vsel %vm7643, %v6641, %v6994
    %v7658 = vsel %vm7643, %v6812, %v6996
    %v7659 = vsel %vm7643, %v6677, %v6998
    %v7660 = vsel %vm7643, %v6819, %v7000
    %v7661 = vsel %vm7643, %v6713, %v7002
    %v7662 = vsel %vm7643, %v6826, %v7004
    %v7663 = vsel %vm7643, %v6749, %v7006
    %v7664 = vsel %vm7643, %v7083, %v7272
    %v7665 = vsel %vm7643, %v7040, %v7274
    %v7666 = vsel %vm7643, %v7090, %v7276
    %v7667 = vsel %vm7643, %v7044, %v7278
    %v7668 = vsel %vm7643, %v7097, %v7280
    %v7669 = vsel %vm7643, %v7048, %v7282
    %v7670 = vsel %vm7643, %v7104, %v7284
    %v7671 = vsel %vm7643, %v7052, %v7286
    %v7672 = vsel %vm7643, %v7111, %v7288
    %v7673 = vsel %vm7643, %v7056, %v7290
    %v7674 = vsel %vm7643, %v7118, %v7292
    %v7675 = vsel %vm7643, %v7060, %v7294
    %v7676 = vsel %vm7643, %v7125, %v7296
    %v7677 = vsel %vm7643, %v7064, %v7298
    %v7678 = vsel %vm7643, %v7132, %v7300
    %v7679 = vsel %vm7643, %v7068, %v7302
    %v7680 = vsel %vm7643, %v7139, %v7304
    %v7681 = vsel %vm7643, %v7072, %v7306
    %v7682 = vsel %vm7643, %v7146, %v7308
    %v7683 = vsel %vm7643, %v7076, %v7310
    %v7684 = vsel %vm7643, %v6910, %v7400
    %v7685 = vsel %vm7643, %v6864, %v7402
    %v7686 = vsel %vm7643, %v6917, %v7404
    %v7687 = vsel %vm7643, %v6868, %v7406
    %v7688 = vsel %vm7643, %v6924, %v7408
    %v7689 = vsel %vm7643, %v6872, %v7410
    %v7690 = vsel %vm7643, %v6931, %v7412
    %v7691 = vsel %vm7643, %v6876, %v7414
    %v7692 = vsel %vm7643, %v7347, %v7416
    %v7693 = vsel %vm7643, %v7336, %v7418
    %v7694 = vsel %vm7643, %v6945, %v7420
    %v7695 = vsel %vm7643, %v6884, %v7422
    %v7696 = vsel %vm7643, %v6952, %v7424
    %v7697 = vsel %vm7643, %v6888, %v7426
    %v7698 = vsel %vm7643, %v6959, %v7428
    %v7699 = vsel %vm7643, %v6892, %v7430
    %v7700 = vsel %vm7643, %v6966, %v7432
    %v7701 = vsel %vm7643, %v6896, %v7434
    %v7702 = vsel %vm7643, %v7354, %v7436
    %v7703 = vsel %vm7643, %v7340, %v7438
    %v7704 = vsel %vm7643, %v7263, %v7596
    %v7705 = vsel %vm7643, %v7220, %v7598
    %v7706 = vsel %vm7643, %v7555, %v7600
    %v7707 = vsel %vm7643, %v7512, %v7602
    %v7708 = vsel %vm7643, %v7270, %v7604
    %v7709 = vsel %vm7643, %v7256, %v7606
    %v7710 = vsel %vm7643, %v7562, %v7608
    %v7711 = vsel %vm7643, %v7548, %v7610
    %v7780 = vcombine.low %v7644, %v7664
    %v7781 = vcombine.high %v7644, %v7664
    %v7782 = vcombine.low %v7684, %v7648
    %v7783 = vcombine.high %v7684, %v7648
    %v7784 = vcombine.high %v7097, %v7097
    %v7786 = vunpack.c.l.s4 1966171168
    %v7787 = vunpack.c.0.s8 %v7786
    %v7788 = vlaneseq
    %v7789 = vshrl.u32 %v7788, 7
    %v7790 = vsub.s32 %v7787, %v7789
    %v7791 = vrot.slane %v7780, %v7790
    %v7793 = vunpack.c.l.s4 1966171168
    %v7794 = vunpack.c.0.s8 %v7793
    %v7795 = vlaneseq
    %v7796 = vshrl.u32 %v7795, 7
    %v7797 = vsub.s32 %v7794, %v7796
    %v7798 = vrot.slane %v7781, %v7797
    %v7800 = vunpack.c.l.s4 1966171168
    %v7801 = vunpack.c.0.s8 %v7800
    %v7802 = vlaneseq
    %v7803 = vshrl.u32 %v7802, 7
    %v7804 = vsub.s32 %v7801, %v7803
    %v7805 = vrot.slane %v7782, %v7804
    %v7807 = vunpack.c.l.s4 1966171168
    %v7808 = vunpack.c.0.s8 %v7807
    %v7809 = vlaneseq
    %v7810 = vshrl.u32 %v7809, 7
    %v7811 = vsub.s32 %v7808, %v7810
    %v7812 = vrot.slane %v7783, %v7811
    %v7814 = vunpack.c.l.s4 1966171168
    %v7815 = vunpack.c.0.s8 %v7814
    %v7816 = vlaneseq
    %v7817 = vshrl.u32 %v7816, 7
    %v7818 = vsub.s32 %v7815, %v7817
    %v7819 = vrot.slane %v7097, %v7818
    %v7821 = vunpack.c.l.s4 1966171168
    %v7822 = vunpack.c.0.s8 %v7821
    %v7823 = vlaneseq
    %v7824 = vshrl.u32 %v7823, 7
    %v7825 = vsub.s32 %v7822, %v7824
    %v7826 = vrot.slane %v7784, %v7825
    %v7827 = vcombine.low %v7791, %v7805
    %v7828 = vcombine.high %v7791, %v7805
    %v7829 = vcombine.low %v7798, %v7812
    %v7830 = vcombine.high %v7798, %v7812
    %v7831 = vcombine.high %v7819, %v7819
    %v7832 = vcombine.high %v7826, %v7826
    %v7834 = vunpack.c.l.s4 1966171168
    %v7835 = vunpack.c.0.s8 %v7834
    %v7836 = vlaneseq
    %v7837 = vshrl.u32 %v7836, 7
    %v7838 = vsub.s32 %v7835, %v7837
    %v7839 = vrot.slane %v7827, %v7838
    %v7841 = vunpack.c.l.s4 1966171168
    %v7842 = vunpack.c.0.s8 %v7841
    %v7843 = vlaneseq
    %v7844 = vshrl.u32 %v7843, 7
    %v7845 = vsub.s32 %v7842, %v7844
    %v7846 = vrot.slane %v7829, %v7845
    %v7848 = vunpack.c.l.s4 1966171168
    %v7849 = vunpack.c.0.s8 %v7848
    %v7850 = vlaneseq
    %v7851 = vshrl.u32 %v7850, 7
    %v7852 = vsub.s32 %v7849, %v7851
    %v7853 = vrot.slane %v7828, %v7852
    %v7855 = vunpack.c.l.s4 1966171168
    %v7856 = vunpack.c.0.s8 %v7855
    %v7857 = vlaneseq
    %v7858 = vshrl.u32 %v7857, 7
    %v7859 = vsub.s32 %v7856, %v7858
    %v7860 = vrot.slane %v7830, %v7859
    %v7862 = vunpack.c.l.s4 1966171168
    %v7863 = vunpack.c.0.s8 %v7862
    %v7864 = vlaneseq
    %v7865 = vshrl.u32 %v7864, 7
    %v7866 = vsub.s32 %v7863, %v7865
    %v7867 = vrot.slane %v7819, %v7866
    %v7869 = vunpack.c.l.s4 1966171168
    %v7870 = vunpack.c.0.s8 %v7869
    %v7871 = vlaneseq
    %v7872 = vshrl.u32 %v7871, 7
    %v7873 = vsub.s32 %v7870, %v7872
    %v7874 = vrot.slane %v7826, %v7873
    %v7876 = vunpack.c.l.s4 1966171168
    %v7877 = vunpack.c.0.s8 %v7876
    %v7878 = vlaneseq
    %v7879 = vshrl.u32 %v7878, 7
    %v7880 = vsub.s32 %v7877, %v7879
    %v7881 = vrot.slane %v7831, %v7880
    %v7883 = vunpack.c.l.s4 1966171168
    %v7884 = vunpack.c.0.s8 %v7883
    %v7885 = vlaneseq
    %v7886 = vshrl.u32 %v7885, 7
    %v7887 = vsub.s32 %v7884, %v7886
    %v7888 = vrot.slane %v7832, %v7887
    %v7889 = vcombine.low %v7839, %v7867
    %v7890 = vcombine.high %v7839, %v7867
    %v7891 = vcombine.low %v7846, %v7874
    %v7892 = vcombine.high %v7846, %v7874
    %v7893 = vcombine.low %v7853, %v7881
    %v7894 = vcombine.high %v7853, %v7881
    %v7895 = vcombine.low %v7860, %v7888
    %v7896 = vcombine.high %v7860, %v7888
    %v7897 = vcombine.low %v7645, %v7665
    %v7898 = vcombine.low %v7685, %v7649
    %v7900 = vunpack.c.l.s4 1966171168
    %v7901 = vunpack.c.0.s8 %v7900
    %v7902 = vlaneseq
    %v7903 = vshrl.u32 %v7902, 7
    %v7904 = vsub.s32 %v7901, %v7903
    %v7905 = vrot.slane %v7897, %v7904
    %v7907 = vunpack.c.l.s4 1966171168
    %v7908 = vunpack.c.0.s8 %v7907
    %v7909 = vlaneseq
    %v7910 = vshrl.u32 %v7909, 7
    %v7911 = vsub.s32 %v7908, %v7910
    %v7912 = vrot.slane %v7898, %v7911
    %v7914 = vunpack.c.l.s4 1966171168
    %v7915 = vunpack.c.0.s8 %v7914
    %v7916 = vlaneseq
    %v7917 = vshrl.u32 %v7916, 7
    %v7918 = vsub.s32 %v7915, %v7917
    %v7919 = vrot.slane %v7048, %v7918
    %v7920 = vcombine.low %v7905, %v7912
    %v7922 = vunpack.c.l.s4 1966171168
    %v7923 = vunpack.c.0.s8 %v7922
    %v7924 = vlaneseq
    %v7925 = vshrl.u32 %v7924, 7
    %v7926 = vsub.s32 %v7923, %v7925
    %v7927 = vrot.slane %v7920, %v7926
    %v7929 = vunpack.c.l.s4 1966171168
    %v7930 = vunpack.c.0.s8 %v7929
    %v7931 = vlaneseq
    %v7932 = vshrl.u32 %v7931, 7
    %v7933 = vsub.s32 %v7930, %v7932
    %v7934 = vrot.slane %v7919, %v7933
    %v7935 = vcombine.low %v7927, %v7934
    %v7936 = vcombine.low %v7646, %v7666
    %v7937 = vcombine.high %v7646, %v7666
    %v7938 = vcombine.low %v7686, %v7650
    %v7939 = vcombine.high %v7686, %v7650
    %v7940 = vcombine.high %v7104, %v7104
    %v7942 = vunpack.c.l.s4 1966171168
    %v7943 = vunpack.c.0.s8 %v7942
    %v7944 = vlaneseq
    %v7945 = vshrl.u32 %v7944, 7
    %v7946 = vsub.s32 %v7943, %v7945
    %v7947 = vrot.slane %v7936, %v7946
    %v7949 = vunpack.c.l.s4 1966171168
    %v7950 = vunpack.c.0.s8 %v7949
    %v7951 = vlaneseq
    %v7952 = vshrl.u32 %v7951, 7
    %v7953 = vsub.s32 %v7950, %v7952
    %v7954 = vrot.slane %v7937, %v7953
    %v7956 = vunpack.c.l.s4 1966171168
    %v7957 = vunpack.c.0.s8 %v7956
    %v7958 = vlaneseq
    %v7959 = vshrl.u32 %v7958, 7
    %v7960 = vsub.s32 %v7957, %v7959
    %v7961 = vrot.slane %v7938, %v7960
    %v7963 = vunpack.c.l.s4 1966171168
    %v7964 = vunpack.c.0.s8 %v7963
    %v7965 = vlaneseq
    %v7966 = vshrl.u32 %v7965, 7
    %v7967 = vsub.s32 %v7964, %v7966
    %v7968 = vrot.slane %v7939, %v7967
    %v7970 = vunpack.c.l.s4 1966171168
    %v7971 = vunpack.c.0.s8 %v7970
    %v7972 = vlaneseq
    %v7973 = vshrl.u32 %v7972, 7
    %v7974 = vsub.s32 %v7971, %v7973
    %v7975 = vrot.slane %v7104, %v7974
    %v7977 = vunpack.c.l.s4 1966171168
    %v7978 = vunpack.c.0.s8 %v7977
    %v7979 = vlaneseq
    %v7980 = vshrl.u32 %v7979, 7
    %v7981 = vsub.s32 %v7978, %v7980
    %v7982 = vrot.slane %v7940, %v7981
    %v7983 = vcombine.low %v7947, %v7961
    %v7984 = vcombine.high %v7947, %v7961
    %v7985 = vcombine.low %v7954, %v7968
    %v7986 = vcombine.high %v7954, %v7968
    %v7987 = vcombine.high %v7975, %v7975
    %v7988 = vcombine.high %v7982, %v7982
    %v7990 = vunpack.c.l.s4 1966171168
    %v7991 = vunpack.c.0.s8 %v7990
    %v7992 = vlaneseq
    %v7993 = vshrl.u32 %v7992, 7
    %v7994 = vsub.s32 %v7991, %v7993
    %v7995 = vrot.slane %v7983, %v7994
    %v7997 = vunpack.c.l.s4 1966171168
    %v7998 = vunpack.c.0.s8 %v7997
    %v7999 = vlaneseq
    %v8000 = vshrl.u32 %v7999, 7
    %v8001 = vsub.s32 %v7998, %v8000
    %v8002 = vrot.slane %v7985, %v8001
    %v8004 = vunpack.c.l.s4 1966171168
    %v8005 = vunpack.c.0.s8 %v8004
    %v8006 = vlaneseq
    %v8007 = vshrl.u32 %v8006, 7
    %v8008 = vsub.s32 %v8005, %v8007
    %v8009 = vrot.slane %v7984, %v8008
    %v8011 = vunpack.c.l.s4 1966171168
    %v8012 = vunpack.c.0.s8 %v8011
    %v8013 = vlaneseq
    %v8014 = vshrl.u32 %v8013, 7
    %v8015 = vsub.s32 %v8012, %v8014
    %v8016 = vrot.slane %v7986, %v8015
    %v8018 = vunpack.c.l.s4 1966171168
    %v8019 = vunpack.c.0.s8 %v8018
    %v8020 = vlaneseq
    %v8021 = vshrl.u32 %v8020, 7
    %v8022 = vsub.s32 %v8019, %v8021
    %v8023 = vrot.slane %v7975, %v8022
    %v8025 = vunpack.c.l.s4 1966171168
    %v8026 = vunpack.c.0.s8 %v8025
    %v8027 = vlaneseq
    %v8028 = vshrl.u32 %v8027, 7
    %v8029 = vsub.s32 %v8026, %v8028
    %v8030 = vrot.slane %v7982, %v8029
    %v8032 = vunpack.c.l.s4 1966171168
    %v8033 = vunpack.c.0.s8 %v8032
    %v8034 = vlaneseq
    %v8035 = vshrl.u32 %v8034, 7
    %v8036 = vsub.s32 %v8033, %v8035
    %v8037 = vrot.slane %v7987, %v8036
    %v8039 = vunpack.c.l.s4 1966171168
    %v8040 = vunpack.c.0.s8 %v8039
    %v8041 = vlaneseq
    %v8042 = vshrl.u32 %v8041, 7
    %v8043 = vsub.s32 %v8040, %v8042
    %v8044 = vrot.slane %v7988, %v8043
    %v8045 = vcombine.low %v7995, %v8023
    %v8046 = vcombine.high %v7995, %v8023
    %v8047 = vcombine.low %v8002, %v8030
    %v8048 = vcombine.high %v8002, %v8030
    %v8049 = vcombine.low %v8009, %v8037
    %v8050 = vcombine.high %v8009, %v8037
    %v8051 = vcombine.low %v8016, %v8044
    %v8052 = vcombine.high %v8016, %v8044
    %v8053 = vcombine.low %v7647, %v7667
    %v8054 = vcombine.low %v7687, %v7651
    %v8056 = vunpack.c.l.s4 1966171168
    %v8057 = vunpack.c.0.s8 %v8056
    %v8058 = vlaneseq
    %v8059 = vshrl.u32 %v8058, 7
    %v8060 = vsub.s32 %v8057, %v8059
    %v8061 = vrot.slane %v8053, %v8060
    %v8063 = vunpack.c.l.s4 1966171168
    %v8064 = vunpack.c.0.s8 %v8063
    %v8065 = vlaneseq
    %v8066 = vshrl.u32 %v8065, 7
    %v8067 = vsub.s32 %v8064, %v8066
    %v8068 = vrot.slane %v8054, %v8067
    %v8070 = vunpack.c.l.s4 1966171168
    %v8071 = vunpack.c.0.s8 %v8070
    %v8072 = vlaneseq
    %v8073 = vshrl.u32 %v8072, 7
    %v8074 = vsub.s32 %v8071, %v8073
    %v8075 = vrot.slane %v7052, %v8074
    %v8076 = vcombine.low %v8061, %v8068
    %v8078 = vunpack.c.l.s4 1966171168
    %v8079 = vunpack.c.0.s8 %v8078
    %v8080 = vlaneseq
    %v8081 = vshrl.u32 %v8080, 7
    %v8082 = vsub.s32 %v8079, %v8081
    %v8083 = vrot.slane %v8076, %v8082
    %v8085 = vunpack.c.l.s4 1966171168
    %v8086 = vunpack.c.0.s8 %v8085
    %v8087 = vlaneseq
    %v8088 = vshrl.u32 %v8087, 7
    %v8089 = vsub.s32 %v8086, %v8088
    %v8090 = vrot.slane %v8075, %v8089
    %v8091 = vcombine.low %v8083, %v8090
    %v8092 = vcombine.low %v7648, %v7668
    %v8093 = vcombine.high %v7648, %v7668
    %v8094 = vcombine.low %v7688, %v7652
    %v8095 = vcombine.high %v7688, %v7652
    %v8096 = vcombine.high %v7111, %v7111
    %v8098 = vunpack.c.l.s4 1966171168
    %v8099 = vunpack.c.0.s8 %v8098
    %v8100 = vlaneseq
    %v8101 = vshrl.u32 %v8100, 7
    %v8102 = vsub.s32 %v8099, %v8101
    %v8103 = vrot.slane %v8092, %v8102
    %v8105 = vunpack.c.l.s4 1966171168
    %v8106 = vunpack.c.0.s8 %v8105
    %v8107 = vlaneseq
    %v8108 = vshrl.u32 %v8107, 7
    %v8109 = vsub.s32 %v8106, %v8108
    %v8110 = vrot.slane %v8093, %v8109
    %v8112 = vunpack.c.l.s4 1966171168
    %v8113 = vunpack.c.0.s8 %v8112
    %v8114 = vlaneseq
    %v8115 = vshrl.u32 %v8114, 7
    %v8116 = vsub.s32 %v8113, %v8115
    %v8117 = vrot.slane %v8094, %v8116
    %v8119 = vunpack.c.l.s4 1966171168
    %v8120 = vunpack.c.0.s8 %v8119
    %v8121 = vlaneseq
    %v8122 = vshrl.u32 %v8121, 7
    %v8123 = vsub.s32 %v8120, %v8122
    %v8124 = vrot.slane %v8095, %v8123
    %v8126 = vunpack.c.l.s4 1966171168
    %v8127 = vunpack.c.0.s8 %v8126
    %v8128 = vlaneseq
    %v8129 = vshrl.u32 %v8128, 7
    %v8130 = vsub.s32 %v8127, %v8129
    %v8131 = vrot.slane %v7111, %v8130
    %v8133 = vunpack.c.l.s4 1966171168
    %v8134 = vunpack.c.0.s8 %v8133
    %v8135 = vlaneseq
    %v8136 = vshrl.u32 %v8135, 7
    %v8137 = vsub.s32 %v8134, %v8136
    %v8138 = vrot.slane %v8096, %v8137
    %v8139 = vcombine.low %v8103, %v8117
    %v8140 = vcombine.high %v8103, %v8117
    %v8141 = vcombine.low %v8110, %v8124
    %v8142 = vcombine.high %v8110, %v8124
    %v8143 = vcombine.high %v8131, %v8131
    %v8144 = vcombine.high %v8138, %v8138
    %v8146 = vunpack.c.l.s4 1966171168
    %v8147 = vunpack.c.0.s8 %v8146
    %v8148 = vlaneseq
    %v8149 = vshrl.u32 %v8148, 7
    %v8150 = vsub.s32 %v8147, %v8149
    %v8151 = vrot.slane %v8139, %v8150
    %v8153 = vunpack.c.l.s4 1966171168
    %v8154 = vunpack.c.0.s8 %v8153
    %v8155 = vlaneseq
    %v8156 = vshrl.u32 %v8155, 7
    %v8157 = vsub.s32 %v8154, %v8156
    %v8158 = vrot.slane %v8141, %v8157
    %v8160 = vunpack.c.l.s4 1966171168
    %v8161 = vunpack.c.0.s8 %v8160
    %v8162 = vlaneseq
    %v8163 = vshrl.u32 %v8162, 7
    %v8164 = vsub.s32 %v8161, %v8163
    %v8165 = vrot.slane %v8140, %v8164
    %v8167 = vunpack.c.l.s4 1966171168
    %v8168 = vunpack.c.0.s8 %v8167
    %v8169 = vlaneseq
    %v8170 = vshrl.u32 %v8169, 7
    %v8171 = vsub.s32 %v8168, %v8170
    %v8172 = vrot.slane %v8142, %v8171
    %v8174 = vunpack.c.l.s4 1966171168
    %v8175 = vunpack.c.0.s8 %v8174
    %v8176 = vlaneseq
    %v8177 = vshrl.u32 %v8176, 7
    %v8178 = vsub.s32 %v8175, %v8177
    %v8179 = vrot.slane %v8131, %v8178
    %v8181 = vunpack.c.l.s4 1966171168
    %v8182 = vunpack.c.0.s8 %v8181
    %v8183 = vlaneseq
    %v8184 = vshrl.u32 %v8183, 7
    %v8185 = vsub.s32 %v8182, %v8184
    %v8186 = vrot.slane %v8138, %v8185
    %v8188 = vunpack.c.l.s4 1966171168
    %v8189 = vunpack.c.0.s8 %v8188
    %v8190 = vlaneseq
    %v8191 = vshrl.u32 %v8190, 7
    %v8192 = vsub.s32 %v8189, %v8191
    %v8193 = vrot.slane %v8143, %v8192
    %v8195 = vunpack.c.l.s4 1966171168
    %v8196 = vunpack.c.0.s8 %v8195
    %v8197 = vlaneseq
    %v8198 = vshrl.u32 %v8197, 7
    %v8199 = vsub.s32 %v8196, %v8198
    %v8200 = vrot.slane %v8144, %v8199
    %v8201 = vcombine.low %v8151, %v8179
    %v8202 = vcombine.high %v8151, %v8179
    %v8203 = vcombine.low %v8158, %v8186
    %v8204 = vcombine.high %v8158, %v8186
    %v8205 = vcombine.low %v8165, %v8193
    %v8206 = vcombine.high %v8165, %v8193
    %v8207 = vcombine.low %v8172, %v8200
    %v8208 = vcombine.high %v8172, %v8200
    %v8209 = vcombine.low %v7649, %v7669
    %v8210 = vcombine.low %v7689, %v7653
    %v8212 = vunpack.c.l.s4 1966171168
    %v8213 = vunpack.c.0.s8 %v8212
    %v8214 = vlaneseq
    %v8215 = vshrl.u32 %v8214, 7
    %v8216 = vsub.s32 %v8213, %v8215
    %v8217 = vrot.slane %v8209, %v8216
    %v8219 = vunpack.c.l.s4 1966171168
    %v8220 = vunpack.c.0.s8 %v8219
    %v8221 = vlaneseq
    %v8222 = vshrl.u32 %v8221, 7
    %v8223 = vsub.s32 %v8220, %v8222
    %v8224 = vrot.slane %v8210, %v8223
    %v8226 = vunpack.c.l.s4 1966171168
    %v8227 = vunpack.c.0.s8 %v8226
    %v8228 = vlaneseq
    %v8229 = vshrl.u32 %v8228, 7
    %v8230 = vsub.s32 %v8227, %v8229
    %v8231 = vrot.slane %v7056, %v8230
    %v8232 = vcombine.low %v8217, %v8224
    %v8234 = vunpack.c.l.s4 1966171168
    %v8235 = vunpack.c.0.s8 %v8234
    %v8236 = vlaneseq
    %v8237 = vshrl.u32 %v8236, 7
    %v8238 = vsub.s32 %v8235, %v8237
    %v8239 = vrot.slane %v8232, %v8238
    %v8241 = vunpack.c.l.s4 1966171168
    %v8242 = vunpack.c.0.s8 %v8241
    %v8243 = vlaneseq
    %v8244 = vshrl.u32 %v8243, 7
    %v8245 = vsub.s32 %v8242, %v8244
    %v8246 = vrot.slane %v8231, %v8245
    %v8247 = vcombine.low %v8239, %v8246
    %v8248 = vcombine.low %v7650, %v7670
    %v8249 = vcombine.high %v7650, %v7670
    %v8250 = vcombine.low %v7690, %v7704
    %v8251 = vcombine.high %v7690, %v7704
    %v8252 = vcombine.high %v7391, %v7391
    %v8254 = vunpack.c.l.s4 1966171168
    %v8255 = vunpack.c.0.s8 %v8254
    %v8256 = vlaneseq
    %v8257 = vshrl.u32 %v8256, 7
    %v8258 = vsub.s32 %v8255, %v8257
    %v8259 = vrot.slane %v8248, %v8258
    %v8261 = vunpack.c.l.s4 1966171168
    %v8262 = vunpack.c.0.s8 %v8261
    %v8263 = vlaneseq
    %v8264 = vshrl.u32 %v8263, 7
    %v8265 = vsub.s32 %v8262, %v8264
    %v8266 = vrot.slane %v8249, %v8265
    %v8268 = vunpack.c.l.s4 1966171168
    %v8269 = vunpack.c.0.s8 %v8268
    %v8270 = vlaneseq
    %v8271 = vshrl.u32 %v8270, 7
    %v8272 = vsub.s32 %v8269, %v8271
    %v8273 = vrot.slane %v8250, %v8272
    %v8275 = vunpack.c.l.s4 1966171168
    %v8276 = vunpack.c.0.s8 %v8275
    %v8277 = vlaneseq
    %v8278 = vshrl.u32 %v8277, 7
    %v8279 = vsub.s32 %v8276, %v8278
    %v8280 = vrot.slane %v8251, %v8279
    %v8282 = vunpack.c.l.s4 1966171168
    %v8283 = vunpack.c.0.s8 %v8282
    %v8284 = vlaneseq
    %v8285 = vshrl.u32 %v8284, 7
    %v8286 = vsub.s32 %v8283, %v8285
    %v8287 = vrot.slane %v7391, %v8286
    %v8289 = vunpack.c.l.s4 1966171168
    %v8290 = vunpack.c.0.s8 %v8289
    %v8291 = vlaneseq
    %v8292 = vshrl.u32 %v8291, 7
    %v8293 = vsub.s32 %v8290, %v8292
    %v8294 = vrot.slane %v8252, %v8293
    %v8295 = vcombine.low %v8259, %v8273
    %v8296 = vcombine.high %v8259, %v8273
    %v8297 = vcombine.low %v8266, %v8280
    %v8298 = vcombine.high %v8266, %v8280
    %v8299 = vcombine.high %v8287, %v8287
    %v8300 = vcombine.high %v8294, %v8294
    %v8302 = vunpack.c.l.s4 1966171168
    %v8303 = vunpack.c.0.s8 %v8302
    %v8304 = vlaneseq
    %v8305 = vshrl.u32 %v8304, 7
    %v8306 = vsub.s32 %v8303, %v8305
    %v8307 = vrot.slane %v8295, %v8306
    %v8309 = vunpack.c.l.s4 1966171168
    %v8310 = vunpack.c.0.s8 %v8309
    %v8311 = vlaneseq
    %v8312 = vshrl.u32 %v8311, 7
    %v8313 = vsub.s32 %v8310, %v8312
    %v8314 = vrot.slane %v8297, %v8313
    %v8316 = vunpack.c.l.s4 1966171168
    %v8317 = vunpack.c.0.s8 %v8316
    %v8318 = vlaneseq
    %v8319 = vshrl.u32 %v8318, 7
    %v8320 = vsub.s32 %v8317, %v8319
    %v8321 = vrot.slane %v8296, %v8320
    %v8323 = vunpack.c.l.s4 1966171168
    %v8324 = vunpack.c.0.s8 %v8323
    %v8325 = vlaneseq
    %v8326 = vshrl.u32 %v8325, 7
    %v8327 = vsub.s32 %v8324, %v8326
    %v8328 = vrot.slane %v8298, %v8327
    %v8330 = vunpack.c.l.s4 1966171168
    %v8331 = vunpack.c.0.s8 %v8330
    %v8332 = vlaneseq
    %v8333 = vshrl.u32 %v8332, 7
    %v8334 = vsub.s32 %v8331, %v8333
    %v8335 = vrot.slane %v8287, %v8334
    %v8337 = vunpack.c.l.s4 1966171168
    %v8338 = vunpack.c.0.s8 %v8337
    %v8339 = vlaneseq
    %v8340 = vshrl.u32 %v8339, 7
    %v8341 = vsub.s32 %v8338, %v8340
    %v8342 = vrot.slane %v8294, %v8341
    %v8344 = vunpack.c.l.s4 1966171168
    %v8345 = vunpack.c.0.s8 %v8344
    %v8346 = vlaneseq
    %v8347 = vshrl.u32 %v8346, 7
    %v8348 = vsub.s32 %v8345, %v8347
    %v8349 = vrot.slane %v8299, %v8348
    %v8351 = vunpack.c.l.s4 1966171168
    %v8352 = vunpack.c.0.s8 %v8351
    %v8353 = vlaneseq
    %v8354 = vshrl.u32 %v8353, 7
    %v8355 = vsub.s32 %v8352, %v8354
    %v8356 = vrot.slane %v8300, %v8355
    %v8357 = vcombine.low %v8307, %v8335
    %v8358 = vcombine.high %v8307, %v8335
    %v8359 = vcombine.low %v8314, %v8342
    %v8360 = vcombine.high %v8314, %v8342
    %v8361 = vcombine.low %v8321, %v8349
    %v8362 = vcombine.high %v8321, %v8349
    %v8363 = vcombine.low %v8328, %v8356
    %v8364 = vcombine.high %v8328, %v8356
    %v8365 = vcombine.low %v7651, %v7671
    %v8366 = vcombine.low %v7691, %v7705
    %v8368 = vunpack.c.l.s4 1966171168
    %v8369 = vunpack.c.0.s8 %v8368
    %v8370 = vlaneseq
    %v8371 = vshrl.u32 %v8370, 7
    %v8372 = vsub.s32 %v8369, %v8371
    %v8373 = vrot.slane %v8365, %v8372
    %v8375 = vunpack.c.l.s4 1966171168
    %v8376 = vunpack.c.0.s8 %v8375
    %v8377 = vlaneseq
    %v8378 = vshrl.u32 %v8377, 7
    %v8379 = vsub.s32 %v8376, %v8378
    %v8380 = vrot.slane %v8366, %v8379
    %v8382 = vunpack.c.l.s4 1966171168
    %v8383 = vunpack.c.0.s8 %v8382
    %v8384 = vlaneseq
    %v8385 = vshrl.u32 %v8384, 7
    %v8386 = vsub.s32 %v8383, %v8385
    %v8387 = vrot.slane %v7380, %v8386
    %v8388 = vcombine.low %v8373, %v8380
    %v8390 = vunpack.c.l.s4 1966171168
    %v8391 = vunpack.c.0.s8 %v8390
    %v8392 = vlaneseq
    %v8393 = vshrl.u32 %v8392, 7
    %v8394 = vsub.s32 %v8391, %v8393
    %v8395 = vrot.slane %v8388, %v8394
    %v8397 = vunpack.c.l.s4 1966171168
    %v8398 = vunpack.c.0.s8 %v8397
    %v8399 = vlaneseq
    %v8400 = vshrl.u32 %v8399, 7
    %v8401 = vsub.s32 %v8398, %v8400
    %v8402 = vrot.slane %v8387, %v8401
    %v8403 = vcombine.low %v8395, %v8402
    %v8404 = vcombine.low %v7652, %v7672
    %v8405 = vcombine.high %v7652, %v7672
    %v8406 = vcombine.low %v7692, %v7706
    %v8407 = vcombine.high %v7692, %v7706
    %v8408 = vcombine.high %v7635, %v7635
    %v8410 = vunpack.c.l.s4 1966171168
    %v8411 = vunpack.c.0.s8 %v8410
    %v8412 = vlaneseq
    %v8413 = vshrl.u32 %v8412, 7
    %v8414 = vsub.s32 %v8411, %v8413
    %v8415 = vrot.slane %v8404, %v8414
    %v8417 = vunpack.c.l.s4 1966171168
    %v8418 = vunpack.c.0.s8 %v8417
    %v8419 = vlaneseq
    %v8420 = vshrl.u32 %v8419, 7
    %v8421 = vsub.s32 %v8418, %v8420
    %v8422 = vrot.slane %v8405, %v8421
    %v8424 = vunpack.c.l.s4 1966171168
    %v8425 = vunpack.c.0.s8 %v8424
    %v8426 = vlaneseq
    %v8427 = vshrl.u32 %v8426, 7
    %v8428 = vsub.s32 %v8425, %v8427
    %v8429 = vrot.slane %v8406, %v8428
    %v8431 = vunpack.c.l.s4 1966171168
    %v8432 = vunpack.c.0.s8 %v8431
    %v8433 = vlaneseq
    %v8434 = vshrl.u32 %v8433, 7
    %v8435 = vsub.s32 %v8432, %v8434
    %v8436 = vrot.slane %v8407, %v8435
    %v8438 = vunpack.c.l.s4 1966171168
    %v8439 = vunpack.c.0.s8 %v8438
    %v8440 = vlaneseq
    %v8441 = vshrl.u32 %v8440, 7
    %v8442 = vsub.s32 %v8439, %v8441
    %v8443 = vrot.slane %v7635, %v8442
    %v8445 = vunpack.c.l.s4 1966171168
    %v8446 = vunpack.c.0.s8 %v8445
    %v8447 = vlaneseq
    %v8448 = vshrl.u32 %v8447, 7
    %v8449 = vsub.s32 %v8446, %v8448
    %v8450 = vrot.slane %v8408, %v8449
    %v8451 = vcombine.low %v8415, %v8429
    %v8452 = vcombine.high %v8415, %v8429
    %v8453 = vcombine.low %v8422, %v8436
    %v8454 = vcombine.high %v8422, %v8436
    %v8455 = vcombine.high %v8443, %v8443
    %v8456 = vcombine.high %v8450, %v8450
    %v8458 = vunpack.c.l.s4 1966171168
    %v8459 = vunpack.c.0.s8 %v8458
    %v8460 = vlaneseq
    %v8461 = vshrl.u32 %v8460, 7
    %v8462 = vsub.s32 %v8459, %v8461
    %v8463 = vrot.slane %v8451, %v8462
    %v8465 = vunpack.c.l.s4 1966171168
    %v8466 = vunpack.c.0.s8 %v8465
    %v8467 = vlaneseq
    %v8468 = vshrl.u32 %v8467, 7
    %v8469 = vsub.s32 %v8466, %v8468
    %v8470 = vrot.slane %v8453, %v8469
    %v8472 = vunpack.c.l.s4 1966171168
    %v8473 = vunpack.c.0.s8 %v8472
    %v8474 = vlaneseq
    %v8475 = vshrl.u32 %v8474, 7
    %v8476 = vsub.s32 %v8473, %v8475
    %v8477 = vrot.slane %v8452, %v8476
    %v8479 = vunpack.c.l.s4 1966171168
    %v8480 = vunpack.c.0.s8 %v8479
    %v8481 = vlaneseq
    %v8482 = vshrl.u32 %v8481, 7
    %v8483 = vsub.s32 %v8480, %v8482
    %v8484 = vrot.slane %v8454, %v8483
    %v8486 = vunpack.c.l.s4 1966171168
    %v8487 = vunpack.c.0.s8 %v8486
    %v8488 = vlaneseq
    %v8489 = vshrl.u32 %v8488, 7
    %v8490 = vsub.s32 %v8487, %v8489
    %v8491 = vrot.slane %v8443, %v8490
    %v8493 = vunpack.c.l.s4 1966171168
    %v8494 = vunpack.c.0.s8 %v8493
    %v8495 = vlaneseq
    %v8496 = vshrl.u32 %v8495, 7
    %v8497 = vsub.s32 %v8494, %v8496
    %v8498 = vrot.slane %v8450, %v8497
    %v8500 = vunpack.c.l.s4 1966171168
    %v8501 = vunpack.c.0.s8 %v8500
    %v8502 = vlaneseq
    %v8503 = vshrl.u32 %v8502, 7
    %v8504 = vsub.s32 %v8501, %v8503
    %v8505 = vrot.slane %v8455, %v8504
    %v8507 = vunpack.c.l.s4 1966171168
    %v8508 = vunpack.c.0.s8 %v8507
    %v8509 = vlaneseq
    %v8510 = vshrl.u32 %v8509, 7
    %v8511 = vsub.s32 %v8508, %v8510
    %v8512 = vrot.slane %v8456, %v8511
    %v8513 = vcombine.low %v8463, %v8491
    %v8514 = vcombine.high %v8463, %v8491
    %v8515 = vcombine.low %v8470, %v8498
    %v8516 = vcombine.high %v8470, %v8498
    %v8517 = vcombine.low %v8477, %v8505
    %v8518 = vcombine.high %v8477, %v8505
    %v8519 = vcombine.low %v8484, %v8512
    %v8520 = vcombine.high %v8484, %v8512
    %v8521 = vcombine.low %v7653, %v7673
    %v8522 = vcombine.low %v7693, %v7707
    %v8524 = vunpack.c.l.s4 1966171168
    %v8525 = vunpack.c.0.s8 %v8524
    %v8526 = vlaneseq
    %v8527 = vshrl.u32 %v8526, 7
    %v8528 = vsub.s32 %v8525, %v8527
    %v8529 = vrot.slane %v8521, %v8528
    %v8531 = vunpack.c.l.s4 1966171168
    %v8532 = vunpack.c.0.s8 %v8531
    %v8533 = vlaneseq
    %v8534 = vshrl.u32 %v8533, 7
    %v8535 = vsub.s32 %v8532, %v8534
    %v8536 = vrot.slane %v8522, %v8535
    %v8538 = vunpack.c.l.s4 1966171168
    %v8539 = vunpack.c.0.s8 %v8538
    %v8540 = vlaneseq
    %v8541 = vshrl.u32 %v8540, 7
    %v8542 = vsub.s32 %v8539, %v8541
    %v8543 = vrot.slane %v7624, %v8542
    %v8544 = vcombine.low %v8529, %v8536
    %v8546 = vunpack.c.l.s4 1966171168
    %v8547 = vunpack.c.0.s8 %v8546
    %v8548 = vlaneseq
    %v8549 = vshrl.u32 %v8548, 7
    %v8550 = vsub.s32 %v8547, %v8549
    %v8551 = vrot.slane %v8544, %v8550
    %v8553 = vunpack.c.l.s4 1966171168
    %v8554 = vunpack.c.0.s8 %v8553
    %v8555 = vlaneseq
    %v8556 = vshrl.u32 %v8555, 7
    %v8557 = vsub.s32 %v8554, %v8556
    %v8558 = vrot.slane %v8543, %v8557
    %v8559 = vcombine.low %v8551, %v8558
    %v8560 = vcombine.low %v7654, %v7674
    %v8561 = vcombine.high %v7654, %v7674
    %v8562 = vcombine.low %v7694, %v7658
    %v8563 = vcombine.high %v7694, %v7658
    %v8564 = vcombine.high %v7132, %v7132
    %v8566 = vunpack.c.l.s4 1966171168
    %v8567 = vunpack.c.0.s8 %v8566
    %v8568 = vlaneseq
    %v8569 = vshrl.u32 %v8568, 7
    %v8570 = vsub.s32 %v8567, %v8569
    %v8571 = vrot.slane %v8560, %v8570
    %v8573 = vunpack.c.l.s4 1966171168
    %v8574 = vunpack.c.0.s8 %v8573
    %v8575 = vlaneseq
    %v8576 = vshrl.u32 %v8575, 7
    %v8577 = vsub.s32 %v8574, %v8576
    %v8578 = vrot.slane %v8561, %v8577
    %v8580 = vunpack.c.l.s4 1966171168
    %v8581 = vunpack.c.0.s8 %v8580
    %v8582 = vlaneseq
    %v8583 = vshrl.u32 %v8582, 7
    %v8584 = vsub.s32 %v8581, %v8583
    %v8585 = vrot.slane %v8562, %v8584
    %v8587 = vunpack.c.l.s4 1966171168
    %v8588 = vunpack.c.0.s8 %v8587
    %v8589 = vlaneseq
    %v8590 = vshrl.u32 %v8589, 7
    %v8591 = vsub.s32 %v8588, %v8590
    %v8592 = vrot.slane %v8563, %v8591
    %v8594 = vunpack.c.l.s4 1966171168
    %v8595 = vunpack.c.0.s8 %v8594
    %v8596 = vlaneseq
    %v8597 = vshrl.u32 %v8596, 7
    %v8598 = vsub.s32 %v8595, %v8597
    %v8599 = vrot.slane %v7132, %v8598
    %v8601 = vunpack.c.l.s4 1966171168
    %v8602 = vunpack.c.0.s8 %v8601
    %v8603 = vlaneseq
    %v8604 = vshrl.u32 %v8603, 7
    %v8605 = vsub.s32 %v8602, %v8604
    %v8606 = vrot.slane %v8564, %v8605
    %v8607 = vcombine.low %v8571, %v8585
    %v8608 = vcombine.high %v8571, %v8585
    %v8609 = vcombine.low %v8578, %v8592
    %v8610 = vcombine.high %v8578, %v8592
    %v8611 = vcombine.high %v8599, %v8599
    %v8612 = vcombine.high %v8606, %v8606
    %v8614 = vunpack.c.l.s4 1966171168
    %v8615 = vunpack.c.0.s8 %v8614
    %v8616 = vlaneseq
    %v8617 = vshrl.u32 %v8616, 7
    %v8618 = vsub.s32 %v8615, %v8617
    %v8619 = vrot.slane %v8607, %v8618
    %v8621 = vunpack.c.l.s4 1966171168
    %v8622 = vunpack.c.0.s8 %v8621
    %v8623 = vlaneseq
    %v8624 = vshrl.u32 %v8623, 7
    %v8625 = vsub.s32 %v8622, %v8624
    %v8626 = vrot.slane %v8609, %v8625
    %v8628 = vunpack.c.l.s4 1966171168
    %v8629 = vunpack.c.0.s8 %v8628
    %v8630 = vlaneseq
    %v8631 = vshrl.u32 %v8630, 7
    %v8632 = vsub.s32 %v8629, %v8631
    %v8633 = vrot.slane %v8608, %v8632
    %v8635 = vunpack.c.l.s4 1966171168
    %v8636 = vunpack.c.0.s8 %v8635
    %v8637 = vlaneseq
    %v8638 = vshrl.u32 %v8637, 7
    %v8639 = vsub.s32 %v8636, %v8638
    %v8640 = vrot.slane %v8610, %v8639
    %v8642 = vunpack.c.l.s4 1966171168
    %v8643 = vunpack.c.0.s8 %v8642
    %v8644 = vlaneseq
    %v8645 = vshrl.u32 %v8644, 7
    %v8646 = vsub.s32 %v8643, %v8645
    %v8647 = vrot.slane %v8599, %v8646
    %v8649 = vunpack.c.l.s4 1966171168
    %v8650 = vunpack.c.0.s8 %v8649
    %v8651 = vlaneseq
    %v8652 = vshrl.u32 %v8651, 7
    %v8653 = vsub.s32 %v8650, %v8652
    %v8654 = vrot.slane %v8606, %v8653
    %v8656 = vunpack.c.l.s4 1966171168
    %v8657 = vunpack.c.0.s8 %v8656
    %v8658 = vlaneseq
    %v8659 = vshrl.u32 %v8658, 7
    %v8660 = vsub.s32 %v8657, %v8659
    %v8661 = vrot.slane %v8611, %v8660
    %v8663 = vunpack.c.l.s4 1966171168
    %v8664 = vunpack.c.0.s8 %v8663
    %v8665 = vlaneseq
    %v8666 = vshrl.u32 %v8665, 7
    %v8667 = vsub.s32 %v8664, %v8666
    %v8668 = vrot.slane %v8612, %v8667
    %v8669 = vcombine.low %v8619, %v8647
    %v8670 = vcombine.high %v8619, %v8647
    %v8671 = vcombine.low %v8626, %v8654
    %v8672 = vcombine.high %v8626, %v8654
    %v8673 = vcombine.low %v8633, %v8661
    %v8674 = vcombine.high %v8633, %v8661
    %v8675 = vcombine.low %v8640, %v8668
    %v8676 = vcombine.high %v8640, %v8668
    %v8677 = vcombine.low %v7655, %v7675
    %v8678 = vcombine.low %v7695, %v7659
    %v8680 = vunpack.c.l.s4 1966171168
    %v8681 = vunpack.c.0.s8 %v8680
    %v8682 = vlaneseq
    %v8683 = vshrl.u32 %v8682, 7
    %v8684 = vsub.s32 %v8681, %v8683
    %v8685 = vrot.slane %v8677, %v8684
    %v8687 = vunpack.c.l.s4 1966171168
    %v8688 = vunpack.c.0.s8 %v8687
    %v8689 = vlaneseq
    %v8690 = vshrl.u32 %v8689, 7
    %v8691 = vsub.s32 %v8688, %v8690
    %v8692 = vrot.slane %v8678, %v8691
    %v8694 = vunpack.c.l.s4 1966171168
    %v8695 = vunpack.c.0.s8 %v8694
    %v8696 = vlaneseq
    %v8697 = vshrl.u32 %v8696, 7
    %v8698 = vsub.s32 %v8695, %v8697
    %v8699 = vrot.slane %v7068, %v8698
    %v8700 = vcombine.low %v8685, %v8692
    %v8702 = vunpack.c.l.s4 1966171168
    %v8703 = vunpack.c.0.s8 %v8702
    %v8704 = vlaneseq
    %v8705 = vshrl.u32 %v8704, 7
    %v8706 = vsub.s32 %v8703, %v8705
    %v8707 = vrot.slane %v8700, %v8706
    %v8709 = vunpack.c.l.s4 1966171168
    %v8710 = vunpack.c.0.s8 %v8709
    %v8711 = vlaneseq
    %v8712 = vshrl.u32 %v8711, 7
    %v8713 = vsub.s32 %v8710, %v8712
    %v8714 = vrot.slane %v8699, %v8713
    %v8715 = vcombine.low %v8707, %v8714
    %v8716 = vcombine.low %v7656, %v7676
    %v8717 = vcombine.high %v7656, %v7676
    %v8718 = vcombine.low %v7696, %v7660
    %v8719 = vcombine.high %v7696, %v7660
    %v8720 = vcombine.high %v7139, %v7139
    %v8722 = vunpack.c.l.s4 1966171168
    %v8723 = vunpack.c.0.s8 %v8722
    %v8724 = vlaneseq
    %v8725 = vshrl.u32 %v8724, 7
    %v8726 = vsub.s32 %v8723, %v8725
    %v8727 = vrot.slane %v8716, %v8726
    %v8729 = vunpack.c.l.s4 1966171168
    %v8730 = vunpack.c.0.s8 %v8729
    %v8731 = vlaneseq
    %v8732 = vshrl.u32 %v8731, 7
    %v8733 = vsub.s32 %v8730, %v8732
    %v8734 = vrot.slane %v8717, %v8733
    %v8736 = vunpack.c.l.s4 1966171168
    %v8737 = vunpack.c.0.s8 %v8736
    %v8738 = vlaneseq
    %v8739 = vshrl.u32 %v8738, 7
    %v8740 = vsub.s32 %v8737, %v8739
    %v8741 = vrot.slane %v8718, %v8740
    %v8743 = vunpack.c.l.s4 1966171168
    %v8744 = vunpack.c.0.s8 %v8743
    %v8745 = vlaneseq
    %v8746 = vshrl.u32 %v8745, 7
    %v8747 = vsub.s32 %v8744, %v8746
    %v8748 = vrot.slane %v8719, %v8747
    %v8750 = vunpack.c.l.s4 1966171168
    %v8751 = vunpack.c.0.s8 %v8750
    %v8752 = vlaneseq
    %v8753 = vshrl.u32 %v8752, 7
    %v8754 = vsub.s32 %v8751, %v8753
    %v8755 = vrot.slane %v7139, %v8754
    %v8757 = vunpack.c.l.s4 1966171168
    %v8758 = vunpack.c.0.s8 %v8757
    %v8759 = vlaneseq
    %v8760 = vshrl.u32 %v8759, 7
    %v8761 = vsub.s32 %v8758, %v8760
    %v8762 = vrot.slane %v8720, %v8761
    %v8763 = vcombine.low %v8727, %v8741
    %v8764 = vcombine.high %v8727, %v8741
    %v8765 = vcombine.low %v8734, %v8748
    %v8766 = vcombine.high %v8734, %v8748
    %v8767 = vcombine.high %v8755, %v8755
    %v8768 = vcombine.high %v8762, %v8762
    %v8770 = vunpack.c.l.s4 1966171168
    %v8771 = vunpack.c.0.s8 %v8770
    %v8772 = vlaneseq
    %v8773 = vshrl.u32 %v8772, 7
    %v8774 = vsub.s32 %v8771, %v8773
    %v8775 = vrot.slane %v8763, %v8774
    %v8777 = vunpack.c.l.s4 1966171168
    %v8778 = vunpack.c.0.s8 %v8777
    %v8779 = vlaneseq
    %v8780 = vshrl.u32 %v8779, 7
    %v8781 = vsub.s32 %v8778, %v8780
    %v8782 = vrot.slane %v8765, %v8781
    %v8784 = vunpack.c.l.s4 1966171168
    %v8785 = vunpack.c.0.s8 %v8784
    %v8786 = vlaneseq
    %v8787 = vshrl.u32 %v8786, 7
    %v8788 = vsub.s32 %v8785, %v8787
    %v8789 = vrot.slane %v8764, %v8788
    %v8791 = vunpack.c.l.s4 1966171168
    %v8792 = vunpack.c.0.s8 %v8791
    %v8793 = vlaneseq
    %v8794 = vshrl.u32 %v8793, 7
    %v8795 = vsub.s32 %v8792, %v8794
    %v8796 = vrot.slane %v8766, %v8795
    %v8798 = vunpack.c.l.s4 1966171168
    %v8799 = vunpack.c.0.s8 %v8798
    %v8800 = vlaneseq
    %v8801 = vshrl.u32 %v8800, 7
    %v8802 = vsub.s32 %v8799, %v8801
    %v8803 = vrot.slane %v8755, %v8802
    %v8805 = vunpack.c.l.s4 1966171168
    %v8806 = vunpack.c.0.s8 %v8805
    %v8807 = vlaneseq
    %v8808 = vshrl.u32 %v8807, 7
    %v8809 = vsub.s32 %v8806, %v8808
    %v8810 = vrot.slane %v8762, %v8809
    %v8812 = vunpack.c.l.s4 1966171168
    %v8813 = vunpack.c.0.s8 %v8812
    %v8814 = vlaneseq
    %v8815 = vshrl.u32 %v8814, 7
    %v8816 = vsub.s32 %v8813, %v8815
    %v8817 = vrot.slane %v8767, %v8816
    %v8819 = vunpack.c.l.s4 1966171168
    %v8820 = vunpack.c.0.s8 %v8819
    %v8821 = vlaneseq
    %v8822 = vshrl.u32 %v8821, 7
    %v8823 = vsub.s32 %v8820, %v8822
    %v8824 = vrot.slane %v8768, %v8823
    %v8825 = vcombine.low %v8775, %v8803
    %v8826 = vcombine.high %v8775, %v8803
    %v8827 = vcombine.low %v8782, %v8810
    %v8828 = vcombine.high %v8782, %v8810
    %v8829 = vcombine.low %v8789, %v8817
    %v8830 = vcombine.high %v8789, %v8817
    %v8831 = vcombine.low %v8796, %v8824
    %v8832 = vcombine.high %v8796, %v8824
    %v8833 = vcombine.low %v7657, %v7677
    %v8834 = vcombine.low %v7697, %v7661
    %v8836 = vunpack.c.l.s4 1966171168
    %v8837 = vunpack.c.0.s8 %v8836
    %v8838 = vlaneseq
    %v8839 = vshrl.u32 %v8838, 7
    %v8840 = vsub.s32 %v8837, %v8839
    %v8841 = vrot.slane %v8833, %v8840
    %v8843 = vunpack.c.l.s4 1966171168
    %v8844 = vunpack.c.0.s8 %v8843
    %v8845 = vlaneseq
    %v8846 = vshrl.u32 %v8845, 7
    %v8847 = vsub.s32 %v8844, %v8846
    %v8848 = vrot.slane %v8834, %v8847
    %v8850 = vunpack.c.l.s4 1966171168
    %v8851 = vunpack.c.0.s8 %v8850
    %v8852 = vlaneseq
    %v8853 = vshrl.u32 %v8852, 7
    %v8854 = vsub.s32 %v8851, %v8853
    %v8855 = vrot.slane %v7072, %v8854
    %v8856 = vcombine.low %v8841, %v8848
    %v8858 = vunpack.c.l.s4 1966171168
    %v8859 = vunpack.c.0.s8 %v8858
    %v8860 = vlaneseq
    %v8861 = vshrl.u32 %v8860, 7
    %v8862 = vsub.s32 %v8859, %v8861
    %v8863 = vrot.slane %v8856, %v8862
    %v8865 = vunpack.c.l.s4 1966171168
    %v8866 = vunpack.c.0.s8 %v8865
    %v8867 = vlaneseq
    %v8868 = vshrl.u32 %v8867, 7
    %v8869 = vsub.s32 %v8866, %v8868
    %v8870 = vrot.slane %v8855, %v8869
    %v8871 = vcombine.low %v8863, %v8870
    %v8872 = vcombine.low %v7658, %v7678
    %v8873 = vcombine.high %v7658, %v7678
    %v8874 = vcombine.low %v7698, %v7662
    %v8875 = vcombine.high %v7698, %v7662
    %v8876 = vcombine.high %v7146, %v7146
    %v8878 = vunpack.c.l.s4 1966171168
    %v8879 = vunpack.c.0.s8 %v8878
    %v8880 = vlaneseq
    %v8881 = vshrl.u32 %v8880, 7
    %v8882 = vsub.s32 %v8879, %v8881
    %v8883 = vrot.slane %v8872, %v8882
    %v8885 = vunpack.c.l.s4 1966171168
    %v8886 = vunpack.c.0.s8 %v8885
    %v8887 = vlaneseq
    %v8888 = vshrl.u32 %v8887, 7
    %v8889 = vsub.s32 %v8886, %v8888
    %v8890 = vrot.slane %v8873, %v8889
    %v8892 = vunpack.c.l.s4 1966171168
    %v8893 = vunpack.c.0.s8 %v8892
    %v8894 = vlaneseq
    %v8895 = vshrl.u32 %v8894, 7
    %v8896 = vsub.s32 %v8893, %v8895
    %v8897 = vrot.slane %v8874, %v8896
    %v8899 = vunpack.c.l.s4 1966171168
    %v8900 = vunpack.c.0.s8 %v8899
    %v8901 = vlaneseq
    %v8902 = vshrl.u32 %v8901, 7
    %v8903 = vsub.s32 %v8900, %v8902
    %v8904 = vrot.slane %v8875, %v8903
    %v8906 = vunpack.c.l.s4 1966171168
    %v8907 = vunpack.c.0.s8 %v8906
    %v8908 = vlaneseq
    %v8909 = vshrl.u32 %v8908, 7
    %v8910 = vsub.s32 %v8907, %v8909
    %v8911 = vrot.slane %v7146, %v8910
    %v8913 = vunpack.c.l.s4 1966171168
    %v8914 = vunpack.c.0.s8 %v8913
    %v8915 = vlaneseq
    %v8916 = vshrl.u32 %v8915, 7
    %v8917 = vsub.s32 %v8914, %v8916
    %v8918 = vrot.slane %v8876, %v8917
    %v8919 = vcombine.low %v8883, %v8897
    %v8920 = vcombine.high %v8883, %v8897
    %v8921 = vcombine.low %v8890, %v8904
    %v8922 = vcombine.high %v8890, %v8904
    %v8923 = vcombine.high %v8911, %v8911
    %v8924 = vcombine.high %v8918, %v8918
    %v8926 = vunpack.c.l.s4 1966171168
    %v8927 = vunpack.c.0.s8 %v8926
    %v8928 = vlaneseq
    %v8929 = vshrl.u32 %v8928, 7
    %v8930 = vsub.s32 %v8927, %v8929
    %v8931 = vrot.slane %v8919, %v8930
    %v8933 = vunpack.c.l.s4 1966171168
    %v8934 = vunpack.c.0.s8 %v8933
    %v8935 = vlaneseq
    %v8936 = vshrl.u32 %v8935, 7
    %v8937 = vsub.s32 %v8934, %v8936
    %v8938 = vrot.slane %v8921, %v8937
    %v8940 = vunpack.c.l.s4 1966171168
    %v8941 = vunpack.c.0.s8 %v8940
    %v8942 = vlaneseq
    %v8943 = vshrl.u32 %v8942, 7
    %v8944 = vsub.s32 %v8941, %v8943
    %v8945 = vrot.slane %v8920, %v8944
    %v8947 = vunpack.c.l.s4 1966171168
    %v8948 = vunpack.c.0.s8 %v8947
    %v8949 = vlaneseq
    %v8950 = vshrl.u32 %v8949, 7
    %v8951 = vsub.s32 %v8948, %v8950
    %v8952 = vrot.slane %v8922, %v8951
    %v8954 = vunpack.c.l.s4 1966171168
    %v8955 = vunpack.c.0.s8 %v8954
    %v8956 = vlaneseq
    %v8957 = vshrl.u32 %v8956, 7
    %v8958 = vsub.s32 %v8955, %v8957
    %v8959 = vrot.slane %v8911, %v8958
    %v8961 = vunpack.c.l.s4 1966171168
    %v8962 = vunpack.c.0.s8 %v8961
    %v8963 = vlaneseq
    %v8964 = vshrl.u32 %v8963, 7
    %v8965 = vsub.s32 %v8962, %v8964
    %v8966 = vrot.slane %v8918, %v8965
    %v8968 = vunpack.c.l.s4 1966171168
    %v8969 = vunpack.c.0.s8 %v8968
    %v8970 = vlaneseq
    %v8971 = vshrl.u32 %v8970, 7
    %v8972 = vsub.s32 %v8969, %v8971
    %v8973 = vrot.slane %v8923, %v8972
    %v8975 = vunpack.c.l.s4 1966171168
    %v8976 = vunpack.c.0.s8 %v8975
    %v8977 = vlaneseq
    %v8978 = vshrl.u32 %v8977, 7
    %v8979 = vsub.s32 %v8976, %v8978
    %v8980 = vrot.slane %v8924, %v8979
    %v8981 = vcombine.low %v8931, %v8959
    %v8982 = vcombine.high %v8931, %v8959
    %v8983 = vcombine.low %v8938, %v8966
    %v8984 = vcombine.high %v8938, %v8966
    %v8985 = vcombine.low %v8945, %v8973
    %v8986 = vcombine.high %v8945, %v8973
    %v8987 = vcombine.low %v8952, %v8980
    %v8988 = vcombine.high %v8952, %v8980
    %v8989 = vcombine.low %v7659, %v7679
    %v8990 = vcombine.low %v7699, %v7663
    %v8992 = vunpack.c.l.s4 1966171168
    %v8993 = vunpack.c.0.s8 %v8992
    %v8994 = vlaneseq
    %v8995 = vshrl.u32 %v8994, 7
    %v8996 = vsub.s32 %v8993, %v8995
    %v8997 = vrot.slane %v8989, %v8996
    %v8999 = vunpack.c.l.s4 1966171168
    %v9000 = vunpack.c.0.s8 %v8999
    %v9001 = vlaneseq
    %v9002 = vshrl.u32 %v9001, 7
    %v9003 = vsub.s32 %v9000, %v9002
    %v9004 = vrot.slane %v8990, %v9003
    %v9006 = vunpack.c.l.s4 1966171168
    %v9007 = vunpack.c.0.s8 %v9006
    %v9008 = vlaneseq
    %v9009 = vshrl.u32 %v9008, 7
    %v9010 = vsub.s32 %v9007, %v9009
    %v9011 = vrot.slane %v7076, %v9010
    %v9012 = vcombine.low %v8997, %v9004
    %v9014 = vunpack.c.l.s4 1966171168
    %v9015 = vunpack.c.0.s8 %v9014
    %v9016 = vlaneseq
    %v9017 = vshrl.u32 %v9016, 7
    %v9018 = vsub.s32 %v9015, %v9017
    %v9019 = vrot.slane %v9012, %v9018
    %v9021 = vunpack.c.l.s4 1966171168
    %v9022 = vunpack.c.0.s8 %v9021
    %v9023 = vlaneseq
    %v9024 = vshrl.u32 %v9023, 7
    %v9025 = vsub.s32 %v9022, %v9024
    %v9026 = vrot.slane %v9011, %v9025
    %v9027 = vcombine.low %v9019, %v9026
    %v9028 = vcombine.low %v7660, %v7680
    %v9029 = vcombine.high %v7660, %v7680
    %v9030 = vcombine.low %v7700, %v7708
    %v9031 = vcombine.high %v7700, %v7708
    %v9032 = vcombine.high %v7398, %v7398
    %v9034 = vunpack.c.l.s4 1966171168
    %v9035 = vunpack.c.0.s8 %v9034
    %v9036 = vlaneseq
    %v9037 = vshrl.u32 %v9036, 7
    %v9038 = vsub.s32 %v9035, %v9037
    %v9039 = vrot.slane %v9028, %v9038
    %v9041 = vunpack.c.l.s4 1966171168
    %v9042 = vunpack.c.0.s8 %v9041
    %v9043 = vlaneseq
    %v9044 = vshrl.u32 %v9043, 7
    %v9045 = vsub.s32 %v9042, %v9044
    %v9046 = vrot.slane %v9029, %v9045
    %v9048 = vunpack.c.l.s4 1966171168
    %v9049 = vunpack.c.0.s8 %v9048
    %v9050 = vlaneseq
    %v9051 = vshrl.u32 %v9050, 7
    %v9052 = vsub.s32 %v9049, %v9051
    %v9053 = vrot.slane %v9030, %v9052
    %v9055 = vunpack.c.l.s4 1966171168
    %v9056 = vunpack.c.0.s8 %v9055
    %v9057 = vlaneseq
    %v9058 = vshrl.u32 %v9057, 7
    %v9059 = vsub.s32 %v9056, %v9058
    %v9060 = vrot.slane %v9031, %v9059
    %v9062 = vunpack.c.l.s4 1966171168
    %v9063 = vunpack.c.0.s8 %v9062
    %v9064 = vlaneseq
    %v9065 = vshrl.u32 %v9064, 7
    %v9066 = vsub.s32 %v9063, %v9065
    %v9067 = vrot.slane %v7398, %v9066
    %v9069 = vunpack.c.l.s4 1966171168
    %v9070 = vunpack.c.0.s8 %v9069
    %v9071 = vlaneseq
    %v9072 = vshrl.u32 %v9071, 7
    %v9073 = vsub.s32 %v9070, %v9072
    %v9074 = vrot.slane %v9032, %v9073
    %v9075 = vcombine.low %v9039, %v9053
    %v9076 = vcombine.high %v9039, %v9053
    %v9077 = vcombine.low %v9046, %v9060
    %v9078 = vcombine.high %v9046, %v9060
    %v9079 = vcombine.high %v9067, %v9067
    %v9080 = vcombine.high %v9074, %v9074
    %v9082 = vunpack.c.l.s4 1966171168
    %v9083 = vunpack.c.0.s8 %v9082
    %v9084 = vlaneseq
    %v9085 = vshrl.u32 %v9084, 7
    %v9086 = vsub.s32 %v9083, %v9085
    %v9087 = vrot.slane %v9075, %v9086
    %v9089 = vunpack.c.l.s4 1966171168
    %v9090 = vunpack.c.0.s8 %v9089
    %v9091 = vlaneseq
    %v9092 = vshrl.u32 %v9091, 7
    %v9093 = vsub.s32 %v9090, %v9092
    %v9094 = vrot.slane %v9077, %v9093
    %v9096 = vunpack.c.l.s4 1966171168
    %v9097 = vunpack.c.0.s8 %v9096
    %v9098 = vlaneseq
    %v9099 = vshrl.u32 %v9098, 7
    %v9100 = vsub.s32 %v9097, %v9099
    %v9101 = vrot.slane %v9076, %v9100
    %v9103 = vunpack.c.l.s4 1966171168
    %v9104 = vunpack.c.0.s8 %v9103
    %v9105 = vlaneseq
    %v9106 = vshrl.u32 %v9105, 7
    %v9107 = vsub.s32 %v9104, %v9106
    %v9108 = vrot.slane %v9078, %v9107
    %v9110 = vunpack.c.l.s4 1966171168
    %v9111 = vunpack.c.0.s8 %v9110
    %v9112 = vlaneseq
    %v9113 = vshrl.u32 %v9112, 7
    %v9114 = vsub.s32 %v9111, %v9113
    %v9115 = vrot.slane %v9067, %v9114
    %v9117 = vunpack.c.l.s4 1966171168
    %v9118 = vunpack.c.0.s8 %v9117
    %v9119 = vlaneseq
    %v9120 = vshrl.u32 %v9119, 7
    %v9121 = vsub.s32 %v9118, %v9120
    %v9122 = vrot.slane %v9074, %v9121
    %v9124 = vunpack.c.l.s4 1966171168
    %v9125 = vunpack.c.0.s8 %v9124
    %v9126 = vlaneseq
    %v9127 = vshrl.u32 %v9126, 7
    %v9128 = vsub.s32 %v9125, %v9127
    %v9129 = vrot.slane %v9079, %v9128
    %v9131 = vunpack.c.l.s4 1966171168
    %v9132 = vunpack.c.0.s8 %v9131
    %v9133 = vlaneseq
    %v9134 = vshrl.u32 %v9133, 7
    %v9135 = vsub.s32 %v9132, %v9134
    %v9136 = vrot.slane %v9080, %v9135
    %v9137 = vcombine.low %v9087, %v9115
    %v9138 = vcombine.high %v9087, %v9115
    %v9139 = vcombine.low %v9094, %v9122
    %v9140 = vcombine.high %v9094, %v9122
    %v9141 = vcombine.low %v9101, %v9129
    %v9142 = vcombine.high %v9101, %v9129
    %v9143 = vcombine.low %v9108, %v9136
    %v9144 = vcombine.high %v9108, %v9136
    %v9145 = vcombine.low %v7661, %v7681
    %v9146 = vcombine.low %v7701, %v7709
    %v9148 = vunpack.c.l.s4 1966171168
    %v9149 = vunpack.c.0.s8 %v9148
    %v9150 = vlaneseq
    %v9151 = vshrl.u32 %v9150, 7
    %v9152 = vsub.s32 %v9149, %v9151
    %v9153 = vrot.slane %v9145, %v9152
    %v9155 = vunpack.c.l.s4 1966171168
    %v9156 = vunpack.c.0.s8 %v9155
    %v9157 = vlaneseq
    %v9158 = vshrl.u32 %v9157, 7
    %v9159 = vsub.s32 %v9156, %v9158
    %v9160 = vrot.slane %v9146, %v9159
    %v9162 = vunpack.c.l.s4 1966171168
    %v9163 = vunpack.c.0.s8 %v9162
    %v9164 = vlaneseq
    %v9165 = vshrl.u32 %v9164, 7
    %v9166 = vsub.s32 %v9163, %v9165
    %v9167 = vrot.slane %v7384, %v9166
    %v9168 = vcombine.low %v9153, %v9160
    %v9170 = vunpack.c.l.s4 1966171168
    %v9171 = vunpack.c.0.s8 %v9170
    %v9172 = vlaneseq
    %v9173 = vshrl.u32 %v9172, 7
    %v9174 = vsub.s32 %v9171, %v9173
    %v9175 = vrot.slane %v9168, %v9174
    %v9177 = vunpack.c.l.s4 1966171168
    %v9178 = vunpack.c.0.s8 %v9177
    %v9179 = vlaneseq
    %v9180 = vshrl.u32 %v9179, 7
    %v9181 = vsub.s32 %v9178, %v9180
    %v9182 = vrot.slane %v9167, %v9181
    %v9183 = vcombine.low %v9175, %v9182
    %v9184 = vcombine.low %v7662, %v7682
    %v9185 = vcombine.high %v7662, %v7682
    %v9186 = vcombine.low %v7702, %v7710
    %v9187 = vcombine.high %v7702, %v7710
    %v9188 = vcombine.high %v7642, %v7642
    %v9190 = vunpack.c.l.s4 1966171168
    %v9191 = vunpack.c.0.s8 %v9190
    %v9192 = vlaneseq
    %v9193 = vshrl.u32 %v9192, 7
    %v9194 = vsub.s32 %v9191, %v9193
    %v9195 = vrot.slane %v9184, %v9194
    %v9197 = vunpack.c.l.s4 1966171168
    %v9198 = vunpack.c.0.s8 %v9197
    %v9199 = vlaneseq
    %v9200 = vshrl.u32 %v9199, 7
    %v9201 = vsub.s32 %v9198, %v9200
    %v9202 = vrot.slane %v9185, %v9201
    %v9204 = vunpack.c.l.s4 1966171168
    %v9205 = vunpack.c.0.s8 %v9204
    %v9206 = vlaneseq
    %v9207 = vshrl.u32 %v9206, 7
    %v9208 = vsub.s32 %v9205, %v9207
    %v9209 = vrot.slane %v9186, %v9208
    %v9211 = vunpack.c.l.s4 1966171168
    %v9212 = vunpack.c.0.s8 %v9211
    %v9213 = vlaneseq
    %v9214 = vshrl.u32 %v9213, 7
    %v9215 = vsub.s32 %v9212, %v9214
    %v9216 = vrot.slane %v9187, %v9215
    %v9218 = vunpack.c.l.s4 1966171168
    %v9219 = vunpack.c.0.s8 %v9218
    %v9220 = vlaneseq
    %v9221 = vshrl.u32 %v9220, 7
    %v9222 = vsub.s32 %v9219, %v9221
    %v9223 = vrot.slane %v7642, %v9222
    %v9225 = vunpack.c.l.s4 1966171168
    %v9226 = vunpack.c.0.s8 %v9225
    %v9227 = vlaneseq
    %v9228 = vshrl.u32 %v9227, 7
    %v9229 = vsub.s32 %v9226, %v9228
    %v9230 = vrot.slane %v9188, %v9229
    %v9231 = vcombine.low %v9195, %v9209
    %v9232 = vcombine.high %v9195, %v9209
    %v9233 = vcombine.low %v9202, %v9216
    %v9234 = vcombine.high %v9202, %v9216
    %v9235 = vcombine.high %v9223, %v9223
    %v9236 = vcombine.high %v9230, %v9230
    %v9238 = vunpack.c.l.s4 1966171168
    %v9239 = vunpack.c.0.s8 %v9238
    %v9240 = vlaneseq
    %v9241 = vshrl.u32 %v9240, 7
    %v9242 = vsub.s32 %v9239, %v9241
    %v9243 = vrot.slane %v9231, %v9242
    %v9245 = vunpack.c.l.s4 1966171168
    %v9246 = vunpack.c.0.s8 %v9245
    %v9247 = vlaneseq
    %v9248 = vshrl.u32 %v9247, 7
    %v9249 = vsub.s32 %v9246, %v9248
    %v9250 = vrot.slane %v9233, %v9249
    %v9252 = vunpack.c.l.s4 1966171168
    %v9253 = vunpack.c.0.s8 %v9252
    %v9254 = vlaneseq
    %v9255 = vshrl.u32 %v9254, 7
    %v9256 = vsub.s32 %v9253, %v9255
    %v9257 = vrot.slane %v9232, %v9256
    %v9259 = vunpack.c.l.s4 1966171168
    %v9260 = vunpack.c.0.s8 %v9259
    %v9261 = vlaneseq
    %v9262 = vshrl.u32 %v9261, 7
    %v9263 = vsub.s32 %v9260, %v9262
    %v9264 = vrot.slane %v9234, %v9263
    %v9266 = vunpack.c.l.s4 1966171168
    %v9267 = vunpack.c.0.s8 %v9266
    %v9268 = vlaneseq
    %v9269 = vshrl.u32 %v9268, 7
    %v9270 = vsub.s32 %v9267, %v9269
    %v9271 = vrot.slane %v9223, %v9270
    %v9273 = vunpack.c.l.s4 1966171168
    %v9274 = vunpack.c.0.s8 %v9273
    %v9275 = vlaneseq
    %v9276 = vshrl.u32 %v9275, 7
    %v9277 = vsub.s32 %v9274, %v9276
    %v9278 = vrot.slane %v9230, %v9277
    %v9280 = vunpack.c.l.s4 1966171168
    %v9281 = vunpack.c.0.s8 %v9280
    %v9282 = vlaneseq
    %v9283 = vshrl.u32 %v9282, 7
    %v9284 = vsub.s32 %v9281, %v9283
    %v9285 = vrot.slane %v9235, %v9284
    %v9287 = vunpack.c.l.s4 1966171168
    %v9288 = vunpack.c.0.s8 %v9287
    %v9289 = vlaneseq
    %v9290 = vshrl.u32 %v9289, 7
    %v9291 = vsub.s32 %v9288, %v9290
    %v9292 = vrot.slane %v9236, %v9291
    %v9293 = vcombine.low %v9243, %v9271
    %v9294 = vcombine.high %v9243, %v9271
    %v9295 = vcombine.low %v9250, %v9278
    %v9296 = vcombine.high %v9250, %v9278
    %v9297 = vcombine.low %v9257, %v9285
    %v9298 = vcombine.high %v9257, %v9285
    %v9299 = vcombine.low %v9264, %v9292
    %v9300 = vcombine.high %v9264, %v9292
    %v9301 = vcombine.low %v7663, %v7683
    %v9302 = vcombine.low %v7703, %v7711
    %v9304 = vunpack.c.l.s4 1966171168
    %v9305 = vunpack.c.0.s8 %v9304
    %v9306 = vlaneseq
    %v9307 = vshrl.u32 %v9306, 7
    %v9308 = vsub.s32 %v9305, %v9307
    %v9309 = vrot.slane %v9301, %v9308
    %v9311 = vunpack.c.l.s4 1966171168
    %v9312 = vunpack.c.0.s8 %v9311
    %v9313 = vlaneseq
    %v9314 = vshrl.u32 %v9313, 7
    %v9315 = vsub.s32 %v9312, %v9314
    %v9316 = vrot.slane %v9302, %v9315
    %v9318 = vunpack.c.l.s4 1966171168
    %v9319 = vunpack.c.0.s8 %v9318
    %v9320 = vlaneseq
    %v9321 = vshrl.u32 %v9320, 7
    %v9322 = vsub.s32 %v9319, %v9321
    %v9323 = vrot.slane %v7628, %v9322
    %v9324 = vcombine.low %v9309, %v9316
    %v9326 = vunpack.c.l.s4 1966171168
    %v9327 = vunpack.c.0.s8 %v9326
    %v9328 = vlaneseq
    %v9329 = vshrl.u32 %v9328, 7
    %v9330 = vsub.s32 %v9327, %v9329
    %v9331 = vrot.slane %v9324, %v9330
    %v9333 = vunpack.c.l.s4 1966171168
    %v9334 = vunpack.c.0.s8 %v9333
    %v9335 = vlaneseq
    %v9336 = vshrl.u32 %v9335, 7
    %v9337 = vsub.s32 %v9334, %v9336
    %v9338 = vrot.slane %v9323, %v9337
    %v9339 = vcombine.low %v9331, %v9338
    %v9340 = vld [vmem:[%s3] sm:$0xff]
    %v9341 = vld [vmem:[%s3 + $0x8] sm:$0xff]
    %v9342 = vld [vmem:[%s3 + $0x10] sm:$0xff]
    %v9343 = vld [vmem:[%s3 + $0x18] sm:$0xff]
    %v9344 = vld [vmem:[%s3 + $0x20] sm:$0xff]
    %v9345 = vld [vmem:[%s3 + $0x28] sm:$0xff]
    %v9346 = vld [vmem:[%s3 + $0x30] sm:$0xff]
    %v9347 = vld [vmem:[%s3 + $0x38] sm:$0xff]
    %v9348 = vld [vmem:[%s3 + $0x40] sm:$0xff]
    %v9349 = vld [vmem:[%s3 + $0x48] sm:$0xff]
    %v9350 = vld [vmem:[%s3 + $0x50] sm:$0xff]
    %v9351 = vld [vmem:[%s3 + $0x58] sm:$0xff]
    %v9352 = vld [vmem:[%s3 + $0x60] sm:$0xff]
    %v9353 = vld [vmem:[%s3 + $0x68] sm:$0xff]
    %v9354 = vld [vmem:[%s3 + $0x70] sm:$0xff]
    %v9355 = vld [vmem:[%s3 + $0x78] sm:$0xff]
    %v9356 = vld [vmem:[%s3 + $0x80] sm:$0xff]
    %v9357 = vld [vmem:[%s3 + $0x88] sm:$0xff]
    %v9358 = vld [vmem:[%s3 + $0x90] sm:$0xff]
    %v9359 = vld [vmem:[%s3 + $0x98] sm:$0xff]
    %v9360 = vld [vmem:[%s3 + $0xa0] sm:$0xff]
    %v9361 = vld [vmem:[%s3 + $0xa8] sm:$0xff]
    %v9362 = vld [vmem:[%s3 + $0xb0] sm:$0xff]
    %v9363 = vld [vmem:[%s3 + $0xb8] sm:$0xff]
    %v9364 = vld [vmem:[%s3 + $0xc0] sm:$0xff]
    %v9365 = vld [vmem:[%s3 + $0xc8] sm:$0xff]
    %v9366 = vld [vmem:[%s3 + $0xd0] sm:$0xff]
    %v9367 = vld [vmem:[%s3 + $0xd8] sm:$0xff]
    %v9368 = vld [vmem:[%s3 + $0xe0] sm:$0xff]
    %v9369 = vld [vmem:[%s3 + $0xe8] sm:$0xff]
    %v9370 = vld [vmem:[%s3 + $0xf0] sm:$0xff]
    %v9371 = vld [vmem:[%s3 + $0xf8] sm:$0xff]
    %v9372 = vld [vmem:[%s3 + $0x100] sm:$0xff]
    %v9373 = vld [vmem:[%s3 + $0x108] sm:$0xff]
    %v9374 = vld [vmem:[%s3 + $0x110] sm:$0xff]
    %v9375 = vld [vmem:[%s3 + $0x118] sm:$0xff]
    %v9376 = vld [vmem:[%s3 + $0x120] sm:$0xff]
    %v9377 = vld [vmem:[%s3 + $0x128] sm:$0xff]
    %v9378 = vld [vmem:[%s3 + $0x130] sm:$0xff]
    %v9379 = vld [vmem:[%s3 + $0x138] sm:$0xff]
    %v9380 = vld [vmem:[%s3 + $0x140] sm:$0xff]
    %v9381 = vld [vmem:[%s3 + $0x148] sm:$0xff]
    %v9382 = vld [vmem:[%s3 + $0x150] sm:$0xff]
    %v9383 = vld [vmem:[%s3 + $0x158] sm:$0xff]
    %v9384 = vld [vmem:[%s3 + $0x160] sm:$0xff]
    %v9385 = vld [vmem:[%s3 + $0x168] sm:$0xff]
    %v9386 = vld [vmem:[%s3 + $0x170] sm:$0xff]
    %v9387 = vld [vmem:[%s3 + $0x178] sm:$0xff]
    %v9388 = vld [vmem:[%s3 + $0x180] sm:$0xff]
    %v9389 = vld [vmem:[%s3 + $0x188] sm:$0xff]
    %v9390 = vld [vmem:[%s3 + $0x190] sm:$0xff]
    %v9391 = vld [vmem:[%s3 + $0x198] sm:$0xff]
    %v9392 = vld [vmem:[%s3 + $0x1a0] sm:$0xff]
    %v9393 = vld [vmem:[%s3 + $0x1a8] sm:$0xff]
    %v9394 = vld [vmem:[%s3 + $0x1b0] sm:$0xff]
    %v9395 = vld [vmem:[%s3 + $0x1b8] sm:$0xff]
    %v9396 = vld [vmem:[%s3 + $0x1c0] sm:$0xff]
    %v9397 = vld [vmem:[%s3 + $0x1c8] sm:$0xff]
    %v9398 = vld [vmem:[%s3 + $0x1d0] sm:$0xff]
    %v9399 = vld [vmem:[%s3 + $0x1d8] sm:$0xff]
    %v9400 = vld [vmem:[%s3 + $0x1e0] sm:$0xff]
    %v9401 = vld [vmem:[%s3 + $0x1e8] sm:$0xff]
    %v9402 = vld [vmem:[%s3 + $0x1f0] sm:$0xff]
    %v9403 = vld [vmem:[%s3 + $0x1f8] sm:$0xff]
    %v9404 = vld [vmem:[%s3 + $0x200] sm:$0xff]
    %v9405 = vld [vmem:[%s3 + $0x208] sm:$0xff]
    %v9406 = vld [vmem:[%s3 + $0x210] sm:$0xff]
    %v9407 = vld [vmem:[%s3 + $0x218] sm:$0xff]
    %v9408 = vld [vmem:[%s3 + $0x220] sm:$0xff]
    %v9409 = vld [vmem:[%s3 + $0x228] sm:$0xff]
    %v9410 = vld [vmem:[%s3 + $0x230] sm:$0xff]
    %v9411 = vld [vmem:[%s3 + $0x238] sm:$0xff]
    %v9412 = vld [vmem:[%s4] sm:$0x1]
    %v9414 = vlaneseq
    %v9415 = vshrl.u32 %v9414, 7
    %v9416 = vsub.s32 0, %v9415
    %v9417 = vrot.slane %v9412, %v9416
    %v9419 = vcombine.low %v7889, %v7893
    %v9420 = vcombine.high %v7889, %v7893
    %v9421 = vcombine.low %v7890, %v7894
    %v9422 = vcombine.high %v7890, %v7894
    %v9423 = vcombine.low %v7891, %v7895
    %v9424 = vcombine.high %v7891, %v7895
    %v9425 = vcombine.low %v7892, %v7896
    %v9426 = vcombine.high %v7892, %v7896
    %v9428 = vunpack.c.l.s4 1966171168
    %v9429 = vunpack.c.0.s8 %v9428
    %v9430 = vlaneseq
    %v9431 = vshrl.u32 %v9430, 7
    %v9432 = vsub.s32 %v9429, %v9431
    %v9433 = vrot.slane %v9419, %v9432
    %v9435 = vunpack.c.l.s4 1966171168
    %v9436 = vunpack.c.0.s8 %v9435
    %v9437 = vlaneseq
    %v9438 = vshrl.u32 %v9437, 7
    %v9439 = vsub.s32 %v9436, %v9438
    %v9440 = vrot.slane %v9420, %v9439
    %v9442 = vunpack.c.l.s4 1966171168
    %v9443 = vunpack.c.0.s8 %v9442
    %v9444 = vlaneseq
    %v9445 = vshrl.u32 %v9444, 7
    %v9446 = vsub.s32 %v9443, %v9445
    %v9447 = vrot.slane %v9421, %v9446
    %v9449 = vunpack.c.l.s4 1966171168
    %v9450 = vunpack.c.0.s8 %v9449
    %v9451 = vlaneseq
    %v9452 = vshrl.u32 %v9451, 7
    %v9453 = vsub.s32 %v9450, %v9452
    %v9454 = vrot.slane %v9422, %v9453
    %v9456 = vunpack.c.l.s4 1966171168
    %v9457 = vunpack.c.0.s8 %v9456
    %v9458 = vlaneseq
    %v9459 = vshrl.u32 %v9458, 7
    %v9460 = vsub.s32 %v9457, %v9459
    %v9461 = vrot.slane %v9423, %v9460
    %v9463 = vunpack.c.l.s4 1966171168
    %v9464 = vunpack.c.0.s8 %v9463
    %v9465 = vlaneseq
    %v9466 = vshrl.u32 %v9465, 7
    %v9467 = vsub.s32 %v9464, %v9466
    %v9468 = vrot.slane %v9424, %v9467
    %v9470 = vunpack.c.l.s4 1966171168
    %v9471 = vunpack.c.0.s8 %v9470
    %v9472 = vlaneseq
    %v9473 = vshrl.u32 %v9472, 7
    %v9474 = vsub.s32 %v9471, %v9473
    %v9475 = vrot.slane %v9425, %v9474
    %v9477 = vunpack.c.l.s4 1966171168
    %v9478 = vunpack.c.0.s8 %v9477
    %v9479 = vlaneseq
    %v9480 = vshrl.u32 %v9479, 7
    %v9481 = vsub.s32 %v9478, %v9480
    %v9482 = vrot.slane %v9426, %v9481
    %v9483 = vcombine.low %v9433, %v9447
    %v9484 = vcombine.high %v9433, %v9447
    %v9485 = vcombine.low %v9440, %v9454
    %v9486 = vcombine.low %v9461, %v9475
    %v9487 = vcombine.high %v9461, %v9475
    %v9488 = vcombine.low %v9468, %v9482
    %v9490 = vunpack.c.l.s4 1966171168
    %v9491 = vunpack.c.0.s8 %v9490
    %v9492 = vlaneseq
    %v9493 = vshrl.u32 %v9492, 7
    %v9494 = vsub.s32 %v9491, %v9493
    %v9495 = vrot.slane %v9483, %v9494
    %v9497 = vunpack.c.l.s4 1966171168
    %v9498 = vunpack.c.0.s8 %v9497
    %v9499 = vlaneseq
    %v9500 = vshrl.u32 %v9499, 7
    %v9501 = vsub.s32 %v9498, %v9500
    %v9502 = vrot.slane %v9485, %v9501
    %v9504 = vunpack.c.l.s4 1966171168
    %v9505 = vunpack.c.0.s8 %v9504
    %v9506 = vlaneseq
    %v9507 = vshrl.u32 %v9506, 7
    %v9508 = vsub.s32 %v9505, %v9507
    %v9509 = vrot.slane %v9484, %v9508
    %v9511 = vunpack.c.l.s4 1966171168
    %v9512 = vunpack.c.0.s8 %v9511
    %v9513 = vlaneseq
    %v9514 = vshrl.u32 %v9513, 7
    %v9515 = vsub.s32 %v9512, %v9514
    %v9516 = vrot.slane %v9486, %v9515
    %v9518 = vunpack.c.l.s4 1966171168
    %v9519 = vunpack.c.0.s8 %v9518
    %v9520 = vlaneseq
    %v9521 = vshrl.u32 %v9520, 7
    %v9522 = vsub.s32 %v9519, %v9521
    %v9523 = vrot.slane %v9488, %v9522
    %v9525 = vunpack.c.l.s4 1966171168
    %v9526 = vunpack.c.0.s8 %v9525
    %v9527 = vlaneseq
    %v9528 = vshrl.u32 %v9527, 7
    %v9529 = vsub.s32 %v9526, %v9528
    %v9530 = vrot.slane %v9487, %v9529
    %v9531 = vcombine.low %v9495, %v9516
    %v9532 = vcombine.high %v9495, %v9516
    %v9533 = vcombine.low %v9502, %v9523
    %v9534 = vcombine.low %v9509, %v9530
    %v9535 = vcombine.high %v9509, %v9530
    %v9536 = vcombine.low %v7935, %v8045
    %v9537 = vcombine.high %v7935, %v8045
    %v9538 = vcombine.low %v8049, %v8046
    %v9539 = vcombine.high %v8049, %v8046
    %v9540 = vcombine.low %v8050, %v8047
    %v9541 = vcombine.high %v8050, %v8047
    %v9542 = vcombine.low %v8051, %v8048
    %v9543 = vcombine.high %v8051, %v8048
    %v9545 = vunpack.c.l.s4 1966171168
    %v9546 = vunpack.c.0.s8 %v9545
    %v9547 = vlaneseq
    %v9548 = vshrl.u32 %v9547, 7
    %v9549 = vsub.s32 %v9546, %v9548
    %v9550 = vrot.slane %v9536, %v9549
    %v9552 = vunpack.c.l.s4 1966171168
    %v9553 = vunpack.c.0.s8 %v9552
    %v9554 = vlaneseq
    %v9555 = vshrl.u32 %v9554, 7
    %v9556 = vsub.s32 %v9553, %v9555
    %v9557 = vrot.slane %v9537, %v9556
    %v9559 = vunpack.c.l.s4 1966171168
    %v9560 = vunpack.c.0.s8 %v9559
    %v9561 = vlaneseq
    %v9562 = vshrl.u32 %v9561, 7
    %v9563 = vsub.s32 %v9560, %v9562
    %v9564 = vrot.slane %v9538, %v9563
    %v9566 = vunpack.c.l.s4 1966171168
    %v9567 = vunpack.c.0.s8 %v9566
    %v9568 = vlaneseq
    %v9569 = vshrl.u32 %v9568, 7
    %v9570 = vsub.s32 %v9567, %v9569
    %v9571 = vrot.slane %v9539, %v9570
    %v9573 = vunpack.c.l.s4 1966171168
    %v9574 = vunpack.c.0.s8 %v9573
    %v9575 = vlaneseq
    %v9576 = vshrl.u32 %v9575, 7
    %v9577 = vsub.s32 %v9574, %v9576
    %v9578 = vrot.slane %v9540, %v9577
    %v9580 = vunpack.c.l.s4 1966171168
    %v9581 = vunpack.c.0.s8 %v9580
    %v9582 = vlaneseq
    %v9583 = vshrl.u32 %v9582, 7
    %v9584 = vsub.s32 %v9581, %v9583
    %v9585 = vrot.slane %v9541, %v9584
    %v9587 = vunpack.c.l.s4 1966171168
    %v9588 = vunpack.c.0.s8 %v9587
    %v9589 = vlaneseq
    %v9590 = vshrl.u32 %v9589, 7
    %v9591 = vsub.s32 %v9588, %v9590
    %v9592 = vrot.slane %v9542, %v9591
    %v9594 = vunpack.c.l.s4 1966171168
    %v9595 = vunpack.c.0.s8 %v9594
    %v9596 = vlaneseq
    %v9597 = vshrl.u32 %v9596, 7
    %v9598 = vsub.s32 %v9595, %v9597
    %v9599 = vrot.slane %v9543, %v9598
    %v9600 = vcombine.low %v9550, %v9564
    %v9601 = vcombine.high %v9550, %v9564
    %v9602 = vcombine.low %v9557, %v9571
    %v9603 = vcombine.low %v9578, %v9592
    %v9604 = vcombine.high %v9578, %v9592
    %v9605 = vcombine.low %v9585, %v9599
    %v9607 = vunpack.c.l.s4 1966171168
    %v9608 = vunpack.c.0.s8 %v9607
    %v9609 = vlaneseq
    %v9610 = vshrl.u32 %v9609, 7
    %v9611 = vsub.s32 %v9608, %v9610
    %v9612 = vrot.slane %v9600, %v9611
    %v9614 = vunpack.c.l.s4 1966171168
    %v9615 = vunpack.c.0.s8 %v9614
    %v9616 = vlaneseq
    %v9617 = vshrl.u32 %v9616, 7
    %v9618 = vsub.s32 %v9615, %v9617
    %v9619 = vrot.slane %v9602, %v9618
    %v9621 = vunpack.c.l.s4 1966171168
    %v9622 = vunpack.c.0.s8 %v9621
    %v9623 = vlaneseq
    %v9624 = vshrl.u32 %v9623, 7
    %v9625 = vsub.s32 %v9622, %v9624
    %v9626 = vrot.slane %v9601, %v9625
    %v9628 = vunpack.c.l.s4 1966171168
    %v9629 = vunpack.c.0.s8 %v9628
    %v9630 = vlaneseq
    %v9631 = vshrl.u32 %v9630, 7
    %v9632 = vsub.s32 %v9629, %v9631
    %v9633 = vrot.slane %v9603, %v9632
    %v9635 = vunpack.c.l.s4 1966171168
    %v9636 = vunpack.c.0.s8 %v9635
    %v9637 = vlaneseq
    %v9638 = vshrl.u32 %v9637, 7
    %v9639 = vsub.s32 %v9636, %v9638
    %v9640 = vrot.slane %v9605, %v9639
    %v9642 = vunpack.c.l.s4 1966171168
    %v9643 = vunpack.c.0.s8 %v9642
    %v9644 = vlaneseq
    %v9645 = vshrl.u32 %v9644, 7
    %v9646 = vsub.s32 %v9643, %v9645
    %v9647 = vrot.slane %v9604, %v9646
    %v9648 = vcombine.low %v9612, %v9633
    %v9649 = vcombine.high %v9612, %v9633
    %v9650 = vcombine.low %v9619, %v9640
    %v9651 = vcombine.low %v9626, %v9647
    %v9652 = vcombine.high %v9626, %v9647
    %v9653 = vcombine.low %v8052, %v8091
    %v9654 = vcombine.high %v8052, %v8091
    %v9655 = vcombine.low %v8201, %v8205
    %v9656 = vcombine.high %v8201, %v8205
    %v9657 = vcombine.low %v8202, %v8206
    %v9658 = vcombine.high %v8202, %v8206
    %v9659 = vcombine.low %v8203, %v8207
    %v9660 = vcombine.high %v8203, %v8207
    %v9662 = vunpack.c.l.s4 1966171168
    %v9663 = vunpack.c.0.s8 %v9662
    %v9664 = vlaneseq
    %v9665 = vshrl.u32 %v9664, 7
    %v9666 = vsub.s32 %v9663, %v9665
    %v9667 = vrot.slane %v9653, %v9666
    %v9669 = vunpack.c.l.s4 1966171168
    %v9670 = vunpack.c.0.s8 %v9669
    %v9671 = vlaneseq
    %v9672 = vshrl.u32 %v9671, 7
    %v9673 = vsub.s32 %v9670, %v9672
    %v9674 = vrot.slane %v9654, %v9673
    %v9676 = vunpack.c.l.s4 1966171168
    %v9677 = vunpack.c.0.s8 %v9676
    %v9678 = vlaneseq
    %v9679 = vshrl.u32 %v9678, 7
    %v9680 = vsub.s32 %v9677, %v9679
    %v9681 = vrot.slane %v9655, %v9680
    %v9683 = vunpack.c.l.s4 1966171168
    %v9684 = vunpack.c.0.s8 %v9683
    %v9685 = vlaneseq
    %v9686 = vshrl.u32 %v9685, 7
    %v9687 = vsub.s32 %v9684, %v9686
    %v9688 = vrot.slane %v9656, %v9687
    %v9690 = vunpack.c.l.s4 1966171168
    %v9691 = vunpack.c.0.s8 %v9690
    %v9692 = vlaneseq
    %v9693 = vshrl.u32 %v9692, 7
    %v9694 = vsub.s32 %v9691, %v9693
    %v9695 = vrot.slane %v9657, %v9694
    %v9697 = vunpack.c.l.s4 1966171168
    %v9698 = vunpack.c.0.s8 %v9697
    %v9699 = vlaneseq
    %v9700 = vshrl.u32 %v9699, 7
    %v9701 = vsub.s32 %v9698, %v9700
    %v9702 = vrot.slane %v9658, %v9701
    %v9704 = vunpack.c.l.s4 1966171168
    %v9705 = vunpack.c.0.s8 %v9704
    %v9706 = vlaneseq
    %v9707 = vshrl.u32 %v9706, 7
    %v9708 = vsub.s32 %v9705, %v9707
    %v9709 = vrot.slane %v9659, %v9708
    %v9711 = vunpack.c.l.s4 1966171168
    %v9712 = vunpack.c.0.s8 %v9711
    %v9713 = vlaneseq
    %v9714 = vshrl.u32 %v9713, 7
    %v9715 = vsub.s32 %v9712, %v9714
    %v9716 = vrot.slane %v9660, %v9715
    %v9717 = vcombine.low %v9667, %v9681
    %v9718 = vcombine.high %v9667, %v9681
    %v9719 = vcombine.low %v9674, %v9688
    %v9720 = vcombine.low %v9695, %v9709
    %v9721 = vcombine.high %v9695, %v9709
    %v9722 = vcombine.low %v9702, %v9716
    %v9724 = vunpack.c.l.s4 1966171168
    %v9725 = vunpack.c.0.s8 %v9724
    %v9726 = vlaneseq
    %v9727 = vshrl.u32 %v9726, 7
    %v9728 = vsub.s32 %v9725, %v9727
    %v9729 = vrot.slane %v9717, %v9728
    %v9731 = vunpack.c.l.s4 1966171168
    %v9732 = vunpack.c.0.s8 %v9731
    %v9733 = vlaneseq
    %v9734 = vshrl.u32 %v9733, 7
    %v9735 = vsub.s32 %v9732, %v9734
    %v9736 = vrot.slane %v9719, %v9735
    %v9738 = vunpack.c.l.s4 1966171168
    %v9739 = vunpack.c.0.s8 %v9738
    %v9740 = vlaneseq
    %v9741 = vshrl.u32 %v9740, 7
    %v9742 = vsub.s32 %v9739, %v9741
    %v9743 = vrot.slane %v9718, %v9742
    %v9745 = vunpack.c.l.s4 1966171168
    %v9746 = vunpack.c.0.s8 %v9745
    %v9747 = vlaneseq
    %v9748 = vshrl.u32 %v9747, 7
    %v9749 = vsub.s32 %v9746, %v9748
    %v9750 = vrot.slane %v9720, %v9749
    %v9752 = vunpack.c.l.s4 1966171168
    %v9753 = vunpack.c.0.s8 %v9752
    %v9754 = vlaneseq
    %v9755 = vshrl.u32 %v9754, 7
    %v9756 = vsub.s32 %v9753, %v9755
    %v9757 = vrot.slane %v9722, %v9756
    %v9759 = vunpack.c.l.s4 1966171168
    %v9760 = vunpack.c.0.s8 %v9759
    %v9761 = vlaneseq
    %v9762 = vshrl.u32 %v9761, 7
    %v9763 = vsub.s32 %v9760, %v9762
    %v9764 = vrot.slane %v9721, %v9763
    %v9765 = vcombine.low %v9729, %v9750
    %v9766 = vcombine.high %v9729, %v9750
    %v9767 = vcombine.low %v9736, %v9757
    %v9768 = vcombine.low %v9743, %v9764
    %v9769 = vcombine.high %v9743, %v9764
    %v9770 = vcombine.low %v8204, %v8208
    %v9771 = vcombine.high %v8204, %v8208
    %v9772 = vcombine.low %v8247, %v8357
    %v9773 = vcombine.high %v8247, %v8357
    %v9774 = vcombine.low %v8361, %v8358
    %v9775 = vcombine.high %v8361, %v8358
    %v9776 = vcombine.low %v8362, %v8359
    %v9777 = vcombine.high %v8362, %v8359
    %v9779 = vunpack.c.l.s4 1966171168
    %v9780 = vunpack.c.0.s8 %v9779
    %v9781 = vlaneseq
    %v9782 = vshrl.u32 %v9781, 7
    %v9783 = vsub.s32 %v9780, %v9782
    %v9784 = vrot.slane %v9770, %v9783
    %v9786 = vunpack.c.l.s4 1966171168
    %v9787 = vunpack.c.0.s8 %v9786
    %v9788 = vlaneseq
    %v9789 = vshrl.u32 %v9788, 7
    %v9790 = vsub.s32 %v9787, %v9789
    %v9791 = vrot.slane %v9771, %v9790
    %v9793 = vunpack.c.l.s4 1966171168
    %v9794 = vunpack.c.0.s8 %v9793
    %v9795 = vlaneseq
    %v9796 = vshrl.u32 %v9795, 7
    %v9797 = vsub.s32 %v9794, %v9796
    %v9798 = vrot.slane %v9772, %v9797
    %v9800 = vunpack.c.l.s4 1966171168
    %v9801 = vunpack.c.0.s8 %v9800
    %v9802 = vlaneseq
    %v9803 = vshrl.u32 %v9802, 7
    %v9804 = vsub.s32 %v9801, %v9803
    %v9805 = vrot.slane %v9773, %v9804
    %v9807 = vunpack.c.l.s4 1966171168
    %v9808 = vunpack.c.0.s8 %v9807
    %v9809 = vlaneseq
    %v9810 = vshrl.u32 %v9809, 7
    %v9811 = vsub.s32 %v9808, %v9810
    %v9812 = vrot.slane %v9774, %v9811
    %v9814 = vunpack.c.l.s4 1966171168
    %v9815 = vunpack.c.0.s8 %v9814
    %v9816 = vlaneseq
    %v9817 = vshrl.u32 %v9816, 7
    %v9818 = vsub.s32 %v9815, %v9817
    %v9819 = vrot.slane %v9775, %v9818
    %v9821 = vunpack.c.l.s4 1966171168
    %v9822 = vunpack.c.0.s8 %v9821
    %v9823 = vlaneseq
    %v9824 = vshrl.u32 %v9823, 7
    %v9825 = vsub.s32 %v9822, %v9824
    %v9826 = vrot.slane %v9776, %v9825
    %v9828 = vunpack.c.l.s4 1966171168
    %v9829 = vunpack.c.0.s8 %v9828
    %v9830 = vlaneseq
    %v9831 = vshrl.u32 %v9830, 7
    %v9832 = vsub.s32 %v9829, %v9831
    %v9833 = vrot.slane %v9777, %v9832
    %v9834 = vcombine.low %v9784, %v9798
    %v9835 = vcombine.high %v9784, %v9798
    %v9836 = vcombine.low %v9791, %v9805
    %v9837 = vcombine.low %v9812, %v9826
    %v9838 = vcombine.high %v9812, %v9826
    %v9839 = vcombine.low %v9819, %v9833
    %v9841 = vunpack.c.l.s4 1966171168
    %v9842 = vunpack.c.0.s8 %v9841
    %v9843 = vlaneseq
    %v9844 = vshrl.u32 %v9843, 7
    %v9845 = vsub.s32 %v9842, %v9844
    %v9846 = vrot.slane %v9834, %v9845
    %v9848 = vunpack.c.l.s4 1966171168
    %v9849 = vunpack.c.0.s8 %v9848
    %v9850 = vlaneseq
    %v9851 = vshrl.u32 %v9850, 7
    %v9852 = vsub.s32 %v9849, %v9851
    %v9853 = vrot.slane %v9836, %v9852
    %v9855 = vunpack.c.l.s4 1966171168
    %v9856 = vunpack.c.0.s8 %v9855
    %v9857 = vlaneseq
    %v9858 = vshrl.u32 %v9857, 7
    %v9859 = vsub.s32 %v9856, %v9858
    %v9860 = vrot.slane %v9835, %v9859
    %v9862 = vunpack.c.l.s4 1966171168
    %v9863 = vunpack.c.0.s8 %v9862
    %v9864 = vlaneseq
    %v9865 = vshrl.u32 %v9864, 7
    %v9866 = vsub.s32 %v9863, %v9865
    %v9867 = vrot.slane %v9837, %v9866
    %v9869 = vunpack.c.l.s4 1966171168
    %v9870 = vunpack.c.0.s8 %v9869
    %v9871 = vlaneseq
    %v9872 = vshrl.u32 %v9871, 7
    %v9873 = vsub.s32 %v9870, %v9872
    %v9874 = vrot.slane %v9839, %v9873
    %v9876 = vunpack.c.l.s4 1966171168
    %v9877 = vunpack.c.0.s8 %v9876
    %v9878 = vlaneseq
    %v9879 = vshrl.u32 %v9878, 7
    %v9880 = vsub.s32 %v9877, %v9879
    %v9881 = vrot.slane %v9838, %v9880
    %v9882 = vcombine.low %v9846, %v9867
    %v9883 = vcombine.high %v9846, %v9867
    %v9884 = vcombine.low %v9853, %v9874
    %v9885 = vcombine.low %v9860, %v9881
    %v9886 = vcombine.high %v9860, %v9881
    %v9887 = vcombine.low %v8363, %v8360
    %v9888 = vcombine.high %v8363, %v8360
    %v9889 = vcombine.low %v8364, %v8403
    %v9890 = vcombine.high %v8364, %v8403
    %v9891 = vcombine.low %v8513, %v8517
    %v9892 = vcombine.high %v8513, %v8517
    %v9893 = vcombine.low %v8514, %v8518
    %v9894 = vcombine.high %v8514, %v8518
    %v9896 = vunpack.c.l.s4 1966171168
    %v9897 = vunpack.c.0.s8 %v9896
    %v9898 = vlaneseq
    %v9899 = vshrl.u32 %v9898, 7
    %v9900 = vsub.s32 %v9897, %v9899
    %v9901 = vrot.slane %v9887, %v9900
    %v9903 = vunpack.c.l.s4 1966171168
    %v9904 = vunpack.c.0.s8 %v9903
    %v9905 = vlaneseq
    %v9906 = vshrl.u32 %v9905, 7
    %v9907 = vsub.s32 %v9904, %v9906
    %v9908 = vrot.slane %v9888, %v9907
    %v9910 = vunpack.c.l.s4 1966171168
    %v9911 = vunpack.c.0.s8 %v9910
    %v9912 = vlaneseq
    %v9913 = vshrl.u32 %v9912, 7
    %v9914 = vsub.s32 %v9911, %v9913
    %v9915 = vrot.slane %v9889, %v9914
    %v9917 = vunpack.c.l.s4 1966171168
    %v9918 = vunpack.c.0.s8 %v9917
    %v9919 = vlaneseq
    %v9920 = vshrl.u32 %v9919, 7
    %v9921 = vsub.s32 %v9918, %v9920
    %v9922 = vrot.slane %v9890, %v9921
    %v9924 = vunpack.c.l.s4 1966171168
    %v9925 = vunpack.c.0.s8 %v9924
    %v9926 = vlaneseq
    %v9927 = vshrl.u32 %v9926, 7
    %v9928 = vsub.s32 %v9925, %v9927
    %v9929 = vrot.slane %v9891, %v9928
    %v9931 = vunpack.c.l.s4 1966171168
    %v9932 = vunpack.c.0.s8 %v9931
    %v9933 = vlaneseq
    %v9934 = vshrl.u32 %v9933, 7
    %v9935 = vsub.s32 %v9932, %v9934
    %v9936 = vrot.slane %v9892, %v9935
    %v9938 = vunpack.c.l.s4 1966171168
    %v9939 = vunpack.c.0.s8 %v9938
    %v9940 = vlaneseq
    %v9941 = vshrl.u32 %v9940, 7
    %v9942 = vsub.s32 %v9939, %v9941
    %v9943 = vrot.slane %v9893, %v9942
    %v9945 = vunpack.c.l.s4 1966171168
    %v9946 = vunpack.c.0.s8 %v9945
    %v9947 = vlaneseq
    %v9948 = vshrl.u32 %v9947, 7
    %v9949 = vsub.s32 %v9946, %v9948
    %v9950 = vrot.slane %v9894, %v9949
    %v9951 = vcombine.low %v9901, %v9915
    %v9952 = vcombine.high %v9901, %v9915
    %v9953 = vcombine.low %v9908, %v9922
    %v9954 = vcombine.low %v9929, %v9943
    %v9955 = vcombine.high %v9929, %v9943
    %v9956 = vcombine.low %v9936, %v9950
    %v9958 = vunpack.c.l.s4 1966171168
    %v9959 = vunpack.c.0.s8 %v9958
    %v9960 = vlaneseq
    %v9961 = vshrl.u32 %v9960, 7
    %v9962 = vsub.s32 %v9959, %v9961
    %v9963 = vrot.slane %v9951, %v9962
    %v9965 = vunpack.c.l.s4 1966171168
    %v9966 = vunpack.c.0.s8 %v9965
    %v9967 = vlaneseq
    %v9968 = vshrl.u32 %v9967, 7
    %v9969 = vsub.s32 %v9966, %v9968
    %v9970 = vrot.slane %v9953, %v9969
    %v9972 = vunpack.c.l.s4 1966171168
    %v9973 = vunpack.c.0.s8 %v9972
    %v9974 = vlaneseq
    %v9975 = vshrl.u32 %v9974, 7
    %v9976 = vsub.s32 %v9973, %v9975
    %v9977 = vrot.slane %v9952, %v9976
    %v9979 = vunpack.c.l.s4 1966171168
    %v9980 = vunpack.c.0.s8 %v9979
    %v9981 = vlaneseq
    %v9982 = vshrl.u32 %v9981, 7
    %v9983 = vsub.s32 %v9980, %v9982
    %v9984 = vrot.slane %v9954, %v9983
    %v9986 = vunpack.c.l.s4 1966171168
    %v9987 = vunpack.c.0.s8 %v9986
    %v9988 = vlaneseq
    %v9989 = vshrl.u32 %v9988, 7
    %v9990 = vsub.s32 %v9987, %v9989
    %v9991 = vrot.slane %v9956, %v9990
    %v9993 = vunpack.c.l.s4 1966171168
    %v9994 = vunpack.c.0.s8 %v9993
    %v9995 = vlaneseq
    %v9996 = vshrl.u32 %v9995, 7
    %v9997 = vsub.s32 %v9994, %v9996
    %v9998 = vrot.slane %v9955, %v9997
    %v9999 = vcombine.low %v9963, %v9984
    %v10000 = vcombine.high %v9963, %v9984
    %v10001 = vcombine.low %v9970, %v9991
    %v10002 = vcombine.low %v9977, %v9998
    %v10003 = vcombine.high %v9977, %v9998
    %v10004 = vcombine.low %v8515, %v8519
    %v10005 = vcombine.high %v8515, %v8519
    %v10006 = vcombine.low %v8516, %v8520
    %v10007 = vcombine.high %v8516, %v8520
    %v10008 = vcombine.low %v8559, %v8669
    %v10009 = vcombine.high %v8559, %v8669
    %v10010 = vcombine.low %v8673, %v8670
    %v10011 = vcombine.high %v8673, %v8670
    %v10013 = vunpack.c.l.s4 1966171168
    %v10014 = vunpack.c.0.s8 %v10013
    %v10015 = vlaneseq
    %v10016 = vshrl.u32 %v10015, 7
    %v10017 = vsub.s32 %v10014, %v10016
    %v10018 = vrot.slane %v10004, %v10017
    %v10020 = vunpack.c.l.s4 1966171168
    %v10021 = vunpack.c.0.s8 %v10020
    %v10022 = vlaneseq
    %v10023 = vshrl.u32 %v10022, 7
    %v10024 = vsub.s32 %v10021, %v10023
    %v10025 = vrot.slane %v10005, %v10024
    %v10027 = vunpack.c.l.s4 1966171168
    %v10028 = vunpack.c.0.s8 %v10027
    %v10029 = vlaneseq
    %v10030 = vshrl.u32 %v10029, 7
    %v10031 = vsub.s32 %v10028, %v10030
    %v10032 = vrot.slane %v10006, %v10031
    %v10034 = vunpack.c.l.s4 1966171168
    %v10035 = vunpack.c.0.s8 %v10034
    %v10036 = vlaneseq
    %v10037 = vshrl.u32 %v10036, 7
    %v10038 = vsub.s32 %v10035, %v10037
    %v10039 = vrot.slane %v10007, %v10038
    %v10041 = vunpack.c.l.s4 1966171168
    %v10042 = vunpack.c.0.s8 %v10041
    %v10043 = vlaneseq
    %v10044 = vshrl.u32 %v10043, 7
    %v10045 = vsub.s32 %v10042, %v10044
    %v10046 = vrot.slane %v10008, %v10045
    %v10048 = vunpack.c.l.s4 1966171168
    %v10049 = vunpack.c.0.s8 %v10048
    %v10050 = vlaneseq
    %v10051 = vshrl.u32 %v10050, 7
    %v10052 = vsub.s32 %v10049, %v10051
    %v10053 = vrot.slane %v10009, %v10052
    %v10055 = vunpack.c.l.s4 1966171168
    %v10056 = vunpack.c.0.s8 %v10055
    %v10057 = vlaneseq
    %v10058 = vshrl.u32 %v10057, 7
    %v10059 = vsub.s32 %v10056, %v10058
    %v10060 = vrot.slane %v10010, %v10059
    %v10062 = vunpack.c.l.s4 1966171168
    %v10063 = vunpack.c.0.s8 %v10062
    %v10064 = vlaneseq
    %v10065 = vshrl.u32 %v10064, 7
    %v10066 = vsub.s32 %v10063, %v10065
    %v10067 = vrot.slane %v10011, %v10066
    %v10068 = vcombine.low %v10018, %v10032
    %v10069 = vcombine.high %v10018, %v10032
    %v10070 = vcombine.low %v10025, %v10039
    %v10071 = vcombine.low %v10046, %v10060
    %v10072 = vcombine.high %v10046, %v10060
    %v10073 = vcombine.low %v10053, %v10067
    %v10075 = vunpack.c.l.s4 1966171168
    %v10076 = vunpack.c.0.s8 %v10075
    %v10077 = vlaneseq
    %v10078 = vshrl.u32 %v10077, 7
    %v10079 = vsub.s32 %v10076, %v10078
    %v10080 = vrot.slane %v10068, %v10079
    %v10082 = vunpack.c.l.s4 1966171168
    %v10083 = vunpack.c.0.s8 %v10082
    %v10084 = vlaneseq
    %v10085 = vshrl.u32 %v10084, 7
    %v10086 = vsub.s32 %v10083, %v10085
    %v10087 = vrot.slane %v10070, %v10086
    %v10089 = vunpack.c.l.s4 1966171168
    %v10090 = vunpack.c.0.s8 %v10089
    %v10091 = vlaneseq
    %v10092 = vshrl.u32 %v10091, 7
    %v10093 = vsub.s32 %v10090, %v10092
    %v10094 = vrot.slane %v10069, %v10093
    %v10096 = vunpack.c.l.s4 1966171168
    %v10097 = vunpack.c.0.s8 %v10096
    %v10098 = vlaneseq
    %v10099 = vshrl.u32 %v10098, 7
    %v10100 = vsub.s32 %v10097, %v10099
    %v10101 = vrot.slane %v10071, %v10100
    %v10103 = vunpack.c.l.s4 1966171168
    %v10104 = vunpack.c.0.s8 %v10103
    %v10105 = vlaneseq
    %v10106 = vshrl.u32 %v10105, 7
    %v10107 = vsub.s32 %v10104, %v10106
    %v10108 = vrot.slane %v10073, %v10107
    %v10110 = vunpack.c.l.s4 1966171168
    %v10111 = vunpack.c.0.s8 %v10110
    %v10112 = vlaneseq
    %v10113 = vshrl.u32 %v10112, 7
    %v10114 = vsub.s32 %v10111, %v10113
    %v10115 = vrot.slane %v10072, %v10114
    %v10116 = vcombine.low %v10080, %v10101
    %v10117 = vcombine.high %v10080, %v10101
    %v10118 = vcombine.low %v10087, %v10108
    %v10119 = vcombine.low %v10094, %v10115
    %v10120 = vcombine.high %v10094, %v10115
    %v10121 = vcombine.low %v8674, %v8671
    %v10122 = vcombine.high %v8674, %v8671
    %v10123 = vcombine.low %v8675, %v8672
    %v10124 = vcombine.high %v8675, %v8672
    %v10125 = vcombine.low %v8676, %v8715
    %v10126 = vcombine.high %v8676, %v8715
    %v10127 = vcombine.low %v8825, %v8829
    %v10128 = vcombine.high %v8825, %v8829
    %v10130 = vunpack.c.l.s4 1966171168
    %v10131 = vunpack.c.0.s8 %v10130
    %v10132 = vlaneseq
    %v10133 = vshrl.u32 %v10132, 7
    %v10134 = vsub.s32 %v10131, %v10133
    %v10135 = vrot.slane %v10121, %v10134
    %v10137 = vunpack.c.l.s4 1966171168
    %v10138 = vunpack.c.0.s8 %v10137
    %v10139 = vlaneseq
    %v10140 = vshrl.u32 %v10139, 7
    %v10141 = vsub.s32 %v10138, %v10140
    %v10142 = vrot.slane %v10122, %v10141
    %v10144 = vunpack.c.l.s4 1966171168
    %v10145 = vunpack.c.0.s8 %v10144
    %v10146 = vlaneseq
    %v10147 = vshrl.u32 %v10146, 7
    %v10148 = vsub.s32 %v10145, %v10147
    %v10149 = vrot.slane %v10123, %v10148
    %v10151 = vunpack.c.l.s4 1966171168
    %v10152 = vunpack.c.0.s8 %v10151
    %v10153 = vlaneseq
    %v10154 = vshrl.u32 %v10153, 7
    %v10155 = vsub.s32 %v10152, %v10154
    %v10156 = vrot.slane %v10124, %v10155
    %v10158 = vunpack.c.l.s4 1966171168
    %v10159 = vunpack.c.0.s8 %v10158
    %v10160 = vlaneseq
    %v10161 = vshrl.u32 %v10160, 7
    %v10162 = vsub.s32 %v10159, %v10161
    %v10163 = vrot.slane %v10125, %v10162
    %v10165 = vunpack.c.l.s4 1966171168
    %v10166 = vunpack.c.0.s8 %v10165
    %v10167 = vlaneseq
    %v10168 = vshrl.u32 %v10167, 7
    %v10169 = vsub.s32 %v10166, %v10168
    %v10170 = vrot.slane %v10126, %v10169
    %v10172 = vunpack.c.l.s4 1966171168
    %v10173 = vunpack.c.0.s8 %v10172
    %v10174 = vlaneseq
    %v10175 = vshrl.u32 %v10174, 7
    %v10176 = vsub.s32 %v10173, %v10175
    %v10177 = vrot.slane %v10127, %v10176
    %v10179 = vunpack.c.l.s4 1966171168
    %v10180 = vunpack.c.0.s8 %v10179
    %v10181 = vlaneseq
    %v10182 = vshrl.u32 %v10181, 7
    %v10183 = vsub.s32 %v10180, %v10182
    %v10184 = vrot.slane %v10128, %v10183
    %v10185 = vcombine.low %v10135, %v10149
    %v10186 = vcombine.high %v10135, %v10149
    %v10187 = vcombine.low %v10142, %v10156
    %v10188 = vcombine.low %v10163, %v10177
    %v10189 = vcombine.high %v10163, %v10177
    %v10190 = vcombine.low %v10170, %v10184
    %v10192 = vunpack.c.l.s4 1966171168
    %v10193 = vunpack.c.0.s8 %v10192
    %v10194 = vlaneseq
    %v10195 = vshrl.u32 %v10194, 7
    %v10196 = vsub.s32 %v10193, %v10195
    %v10197 = vrot.slane %v10185, %v10196
    %v10199 = vunpack.c.l.s4 1966171168
    %v10200 = vunpack.c.0.s8 %v10199
    %v10201 = vlaneseq
    %v10202 = vshrl.u32 %v10201, 7
    %v10203 = vsub.s32 %v10200, %v10202
    %v10204 = vrot.slane %v10187, %v10203
    %v10206 = vunpack.c.l.s4 1966171168
    %v10207 = vunpack.c.0.s8 %v10206
    %v10208 = vlaneseq
    %v10209 = vshrl.u32 %v10208, 7
    %v10210 = vsub.s32 %v10207, %v10209
    %v10211 = vrot.slane %v10186, %v10210
    %v10213 = vunpack.c.l.s4 1966171168
    %v10214 = vunpack.c.0.s8 %v10213
    %v10215 = vlaneseq
    %v10216 = vshrl.u32 %v10215, 7
    %v10217 = vsub.s32 %v10214, %v10216
    %v10218 = vrot.slane %v10188, %v10217
    %v10220 = vunpack.c.l.s4 1966171168
    %v10221 = vunpack.c.0.s8 %v10220
    %v10222 = vlaneseq
    %v10223 = vshrl.u32 %v10222, 7
    %v10224 = vsub.s32 %v10221, %v10223
    %v10225 = vrot.slane %v10190, %v10224
    %v10227 = vunpack.c.l.s4 1966171168
    %v10228 = vunpack.c.0.s8 %v10227
    %v10229 = vlaneseq
    %v10230 = vshrl.u32 %v10229, 7
    %v10231 = vsub.s32 %v10228, %v10230
    %v10232 = vrot.slane %v10189, %v10231
    %v10233 = vcombine.low %v10197, %v10218
    %v10234 = vcombine.high %v10197, %v10218
    %v10235 = vcombine.low %v10204, %v10225
    %v10236 = vcombine.low %v10211, %v10232
    %v10237 = vcombine.high %v10211, %v10232
    %v10238 = vcombine.low %v8826, %v8830
    %v10239 = vcombine.high %v8826, %v8830
    %v10240 = vcombine.low %v8827, %v8831
    %v10241 = vcombine.high %v8827, %v8831
    %v10242 = vcombine.low %v8828, %v8832
    %v10243 = vcombine.high %v8828, %v8832
    %v10244 = vcombine.low %v8871, %v8981
    %v10245 = vcombine.high %v8871, %v8981
    %v10247 = vunpack.c.l.s4 1966171168
    %v10248 = vunpack.c.0.s8 %v10247
    %v10249 = vlaneseq
    %v10250 = vshrl.u32 %v10249, 7
    %v10251 = vsub.s32 %v10248, %v10250
    %v10252 = vrot.slane %v10238, %v10251
    %v10254 = vunpack.c.l.s4 1966171168
    %v10255 = vunpack.c.0.s8 %v10254
    %v10256 = vlaneseq
    %v10257 = vshrl.u32 %v10256, 7
    %v10258 = vsub.s32 %v10255, %v10257
    %v10259 = vrot.slane %v10239, %v10258
    %v10261 = vunpack.c.l.s4 1966171168
    %v10262 = vunpack.c.0.s8 %v10261
    %v10263 = vlaneseq
    %v10264 = vshrl.u32 %v10263, 7
    %v10265 = vsub.s32 %v10262, %v10264
    %v10266 = vrot.slane %v10240, %v10265
    %v10268 = vunpack.c.l.s4 1966171168
    %v10269 = vunpack.c.0.s8 %v10268
    %v10270 = vlaneseq
    %v10271 = vshrl.u32 %v10270, 7
    %v10272 = vsub.s32 %v10269, %v10271
    %v10273 = vrot.slane %v10241, %v10272
    %v10275 = vunpack.c.l.s4 1966171168
    %v10276 = vunpack.c.0.s8 %v10275
    %v10277 = vlaneseq
    %v10278 = vshrl.u32 %v10277, 7
    %v10279 = vsub.s32 %v10276, %v10278
    %v10280 = vrot.slane %v10242, %v10279
    %v10282 = vunpack.c.l.s4 1966171168
    %v10283 = vunpack.c.0.s8 %v10282
    %v10284 = vlaneseq
    %v10285 = vshrl.u32 %v10284, 7
    %v10286 = vsub.s32 %v10283, %v10285
    %v10287 = vrot.slane %v10243, %v10286
    %v10289 = vunpack.c.l.s4 1966171168
    %v10290 = vunpack.c.0.s8 %v10289
    %v10291 = vlaneseq
    %v10292 = vshrl.u32 %v10291, 7
    %v10293 = vsub.s32 %v10290, %v10292
    %v10294 = vrot.slane %v10244, %v10293
    %v10296 = vunpack.c.l.s4 1966171168
    %v10297 = vunpack.c.0.s8 %v10296
    %v10298 = vlaneseq
    %v10299 = vshrl.u32 %v10298, 7
    %v10300 = vsub.s32 %v10297, %v10299
    %v10301 = vrot.slane %v10245, %v10300
    %v10302 = vcombine.low %v10252, %v10266
    %v10303 = vcombine.high %v10252, %v10266
    %v10304 = vcombine.low %v10259, %v10273
    %v10305 = vcombine.low %v10280, %v10294
    %v10306 = vcombine.high %v10280, %v10294
    %v10307 = vcombine.low %v10287, %v10301
    %v10309 = vunpack.c.l.s4 1966171168
    %v10310 = vunpack.c.0.s8 %v10309
    %v10311 = vlaneseq
    %v10312 = vshrl.u32 %v10311, 7
    %v10313 = vsub.s32 %v10310, %v10312
    %v10314 = vrot.slane %v10302, %v10313
    %v10316 = vunpack.c.l.s4 1966171168
    %v10317 = vunpack.c.0.s8 %v10316
    %v10318 = vlaneseq
    %v10319 = vshrl.u32 %v10318, 7
    %v10320 = vsub.s32 %v10317, %v10319
    %v10321 = vrot.slane %v10304, %v10320
    %v10323 = vunpack.c.l.s4 1966171168
    %v10324 = vunpack.c.0.s8 %v10323
    %v10325 = vlaneseq
    %v10326 = vshrl.u32 %v10325, 7
    %v10327 = vsub.s32 %v10324, %v10326
    %v10328 = vrot.slane %v10303, %v10327
    %v10330 = vunpack.c.l.s4 1966171168
    %v10331 = vunpack.c.0.s8 %v10330
    %v10332 = vlaneseq
    %v10333 = vshrl.u32 %v10332, 7
    %v10334 = vsub.s32 %v10331, %v10333
    %v10335 = vrot.slane %v10305, %v10334
    %v10337 = vunpack.c.l.s4 1966171168
    %v10338 = vunpack.c.0.s8 %v10337
    %v10339 = vlaneseq
    %v10340 = vshrl.u32 %v10339, 7
    %v10341 = vsub.s32 %v10338, %v10340
    %v10342 = vrot.slane %v10307, %v10341
    %v10344 = vunpack.c.l.s4 1966171168
    %v10345 = vunpack.c.0.s8 %v10344
    %v10346 = vlaneseq
    %v10347 = vshrl.u32 %v10346, 7
    %v10348 = vsub.s32 %v10345, %v10347
    %v10349 = vrot.slane %v10306, %v10348
    %v10350 = vcombine.low %v10314, %v10335
    %v10351 = vcombine.high %v10314, %v10335
    %v10352 = vcombine.low %v10321, %v10342
    %v10353 = vcombine.low %v10328, %v10349
    %v10354 = vcombine.high %v10328, %v10349
    %v10355 = vcombine.low %v8985, %v8982
    %v10356 = vcombine.high %v8985, %v8982
    %v10357 = vcombine.low %v8986, %v8983
    %v10358 = vcombine.high %v8986, %v8983
    %v10359 = vcombine.low %v8987, %v8984
    %v10360 = vcombine.high %v8987, %v8984
    %v10361 = vcombine.low %v8988, %v9027
    %v10362 = vcombine.high %v8988, %v9027
    %v10364 = vunpack.c.l.s4 1966171168
    %v10365 = vunpack.c.0.s8 %v10364
    %v10366 = vlaneseq
    %v10367 = vshrl.u32 %v10366, 7
    %v10368 = vsub.s32 %v10365, %v10367
    %v10369 = vrot.slane %v10355, %v10368
    %v10371 = vunpack.c.l.s4 1966171168
    %v10372 = vunpack.c.0.s8 %v10371
    %v10373 = vlaneseq
    %v10374 = vshrl.u32 %v10373, 7
    %v10375 = vsub.s32 %v10372, %v10374
    %v10376 = vrot.slane %v10356, %v10375
    %v10378 = vunpack.c.l.s4 1966171168
    %v10379 = vunpack.c.0.s8 %v10378
    %v10380 = vlaneseq
    %v10381 = vshrl.u32 %v10380, 7
    %v10382 = vsub.s32 %v10379, %v10381
    %v10383 = vrot.slane %v10357, %v10382
    %v10385 = vunpack.c.l.s4 1966171168
    %v10386 = vunpack.c.0.s8 %v10385
    %v10387 = vlaneseq
    %v10388 = vshrl.u32 %v10387, 7
    %v10389 = vsub.s32 %v10386, %v10388
    %v10390 = vrot.slane %v10358, %v10389
    %v10392 = vunpack.c.l.s4 1966171168
    %v10393 = vunpack.c.0.s8 %v10392
    %v10394 = vlaneseq
    %v10395 = vshrl.u32 %v10394, 7
    %v10396 = vsub.s32 %v10393, %v10395
    %v10397 = vrot.slane %v10359, %v10396
    %v10399 = vunpack.c.l.s4 1966171168
    %v10400 = vunpack.c.0.s8 %v10399
    %v10401 = vlaneseq
    %v10402 = vshrl.u32 %v10401, 7
    %v10403 = vsub.s32 %v10400, %v10402
    %v10404 = vrot.slane %v10360, %v10403
    %v10406 = vunpack.c.l.s4 1966171168
    %v10407 = vunpack.c.0.s8 %v10406
    %v10408 = vlaneseq
    %v10409 = vshrl.u32 %v10408, 7
    %v10410 = vsub.s32 %v10407, %v10409
    %v10411 = vrot.slane %v10361, %v10410
    %v10413 = vunpack.c.l.s4 1966171168
    %v10414 = vunpack.c.0.s8 %v10413
    %v10415 = vlaneseq
    %v10416 = vshrl.u32 %v10415, 7
    %v10417 = vsub.s32 %v10414, %v10416
    %v10418 = vrot.slane %v10362, %v10417
    %v10419 = vcombine.low %v10369, %v10383
    %v10420 = vcombine.high %v10369, %v10383
    %v10421 = vcombine.low %v10376, %v10390
    %v10422 = vcombine.low %v10397, %v10411
    %v10423 = vcombine.high %v10397, %v10411
    %v10424 = vcombine.low %v10404, %v10418
    %v10426 = vunpack.c.l.s4 1966171168
    %v10427 = vunpack.c.0.s8 %v10426
    %v10428 = vlaneseq
    %v10429 = vshrl.u32 %v10428, 7
    %v10430 = vsub.s32 %v10427, %v10429
    %v10431 = vrot.slane %v10419, %v10430
    %v10433 = vunpack.c.l.s4 1966171168
    %v10434 = vunpack.c.0.s8 %v10433
    %v10435 = vlaneseq
    %v10436 = vshrl.u32 %v10435, 7
    %v10437 = vsub.s32 %v10434, %v10436
    %v10438 = vrot.slane %v10421, %v10437
    %v10440 = vunpack.c.l.s4 1966171168
    %v10441 = vunpack.c.0.s8 %v10440
    %v10442 = vlaneseq
    %v10443 = vshrl.u32 %v10442, 7
    %v10444 = vsub.s32 %v10441, %v10443
    %v10445 = vrot.slane %v10420, %v10444
    %v10447 = vunpack.c.l.s4 1966171168
    %v10448 = vunpack.c.0.s8 %v10447
    %v10449 = vlaneseq
    %v10450 = vshrl.u32 %v10449, 7
    %v10451 = vsub.s32 %v10448, %v10450
    %v10452 = vrot.slane %v10422, %v10451
    %v10454 = vunpack.c.l.s4 1966171168
    %v10455 = vunpack.c.0.s8 %v10454
    %v10456 = vlaneseq
    %v10457 = vshrl.u32 %v10456, 7
    %v10458 = vsub.s32 %v10455, %v10457
    %v10459 = vrot.slane %v10424, %v10458
    %v10461 = vunpack.c.l.s4 1966171168
    %v10462 = vunpack.c.0.s8 %v10461
    %v10463 = vlaneseq
    %v10464 = vshrl.u32 %v10463, 7
    %v10465 = vsub.s32 %v10462, %v10464
    %v10466 = vrot.slane %v10423, %v10465
    %v10467 = vcombine.low %v10431, %v10452
    %v10468 = vcombine.high %v10431, %v10452
    %v10469 = vcombine.low %v10438, %v10459
    %v10470 = vcombine.low %v10445, %v10466
    %v10471 = vcombine.high %v10445, %v10466
    %v10472 = vcombine.low %v9137, %v9141
    %v10473 = vcombine.high %v9137, %v9141
    %v10474 = vcombine.low %v9138, %v9142
    %v10475 = vcombine.high %v9138, %v9142
    %v10476 = vcombine.low %v9139, %v9143
    %v10477 = vcombine.high %v9139, %v9143
    %v10478 = vcombine.low %v9140, %v9144
    %v10479 = vcombine.high %v9140, %v9144
    %v10481 = vunpack.c.l.s4 1966171168
    %v10482 = vunpack.c.0.s8 %v10481
    %v10483 = vlaneseq
    %v10484 = vshrl.u32 %v10483, 7
    %v10485 = vsub.s32 %v10482, %v10484
    %v10486 = vrot.slane %v10472, %v10485
    %v10488 = vunpack.c.l.s4 1966171168
    %v10489 = vunpack.c.0.s8 %v10488
    %v10490 = vlaneseq
    %v10491 = vshrl.u32 %v10490, 7
    %v10492 = vsub.s32 %v10489, %v10491
    %v10493 = vrot.slane %v10473, %v10492
    %v10495 = vunpack.c.l.s4 1966171168
    %v10496 = vunpack.c.0.s8 %v10495
    %v10497 = vlaneseq
    %v10498 = vshrl.u32 %v10497, 7
    %v10499 = vsub.s32 %v10496, %v10498
    %v10500 = vrot.slane %v10474, %v10499
    %v10502 = vunpack.c.l.s4 1966171168
    %v10503 = vunpack.c.0.s8 %v10502
    %v10504 = vlaneseq
    %v10505 = vshrl.u32 %v10504, 7
    %v10506 = vsub.s32 %v10503, %v10505
    %v10507 = vrot.slane %v10475, %v10506
    %v10509 = vunpack.c.l.s4 1966171168
    %v10510 = vunpack.c.0.s8 %v10509
    %v10511 = vlaneseq
    %v10512 = vshrl.u32 %v10511, 7
    %v10513 = vsub.s32 %v10510, %v10512
    %v10514 = vrot.slane %v10476, %v10513
    %v10516 = vunpack.c.l.s4 1966171168
    %v10517 = vunpack.c.0.s8 %v10516
    %v10518 = vlaneseq
    %v10519 = vshrl.u32 %v10518, 7
    %v10520 = vsub.s32 %v10517, %v10519
    %v10521 = vrot.slane %v10477, %v10520
    %v10523 = vunpack.c.l.s4 1966171168
    %v10524 = vunpack.c.0.s8 %v10523
    %v10525 = vlaneseq
    %v10526 = vshrl.u32 %v10525, 7
    %v10527 = vsub.s32 %v10524, %v10526
    %v10528 = vrot.slane %v10478, %v10527
    %v10530 = vunpack.c.l.s4 1966171168
    %v10531 = vunpack.c.0.s8 %v10530
    %v10532 = vlaneseq
    %v10533 = vshrl.u32 %v10532, 7
    %v10534 = vsub.s32 %v10531, %v10533
    %v10535 = vrot.slane %v10479, %v10534
    %v10536 = vcombine.low %v10486, %v10500
    %v10537 = vcombine.high %v10486, %v10500
    %v10538 = vcombine.low %v10493, %v10507
    %v10539 = vcombine.low %v10514, %v10528
    %v10540 = vcombine.high %v10514, %v10528
    %v10541 = vcombine.low %v10521, %v10535
    %v10543 = vunpack.c.l.s4 1966171168
    %v10544 = vunpack.c.0.s8 %v10543
    %v10545 = vlaneseq
    %v10546 = vshrl.u32 %v10545, 7
    %v10547 = vsub.s32 %v10544, %v10546
    %v10548 = vrot.slane %v10536, %v10547
    %v10550 = vunpack.c.l.s4 1966171168
    %v10551 = vunpack.c.0.s8 %v10550
    %v10552 = vlaneseq
    %v10553 = vshrl.u32 %v10552, 7
    %v10554 = vsub.s32 %v10551, %v10553
    %v10555 = vrot.slane %v10538, %v10554
    %v10557 = vunpack.c.l.s4 1966171168
    %v10558 = vunpack.c.0.s8 %v10557
    %v10559 = vlaneseq
    %v10560 = vshrl.u32 %v10559, 7
    %v10561 = vsub.s32 %v10558, %v10560
    %v10562 = vrot.slane %v10537, %v10561
    %v10564 = vunpack.c.l.s4 1966171168
    %v10565 = vunpack.c.0.s8 %v10564
    %v10566 = vlaneseq
    %v10567 = vshrl.u32 %v10566, 7
    %v10568 = vsub.s32 %v10565, %v10567
    %v10569 = vrot.slane %v10539, %v10568
    %v10571 = vunpack.c.l.s4 1966171168
    %v10572 = vunpack.c.0.s8 %v10571
    %v10573 = vlaneseq
    %v10574 = vshrl.u32 %v10573, 7
    %v10575 = vsub.s32 %v10572, %v10574
    %v10576 = vrot.slane %v10541, %v10575
    %v10578 = vunpack.c.l.s4 1966171168
    %v10579 = vunpack.c.0.s8 %v10578
    %v10580 = vlaneseq
    %v10581 = vshrl.u32 %v10580, 7
    %v10582 = vsub.s32 %v10579, %v10581
    %v10583 = vrot.slane %v10540, %v10582
    %v10584 = vcombine.low %v10548, %v10569
    %v10585 = vcombine.high %v10548, %v10569
    %v10586 = vcombine.low %v10555, %v10576
    %v10587 = vcombine.low %v10562, %v10583
    %v10588 = vcombine.high %v10562, %v10583
    %v10589 = vcombine.low %v9183, %v9293
    %v10590 = vcombine.high %v9183, %v9293
    %v10591 = vcombine.low %v9297, %v9294
    %v10592 = vcombine.high %v9297, %v9294
    %v10593 = vcombine.low %v9298, %v9295
    %v10594 = vcombine.high %v9298, %v9295
    %v10595 = vcombine.low %v9299, %v9296
    %v10596 = vcombine.high %v9299, %v9296
    %v10598 = vunpack.c.l.s4 1966171168
    %v10599 = vunpack.c.0.s8 %v10598
    %v10600 = vlaneseq
    %v10601 = vshrl.u32 %v10600, 7
    %v10602 = vsub.s32 %v10599, %v10601
    %v10603 = vrot.slane %v10589, %v10602
    %v10605 = vunpack.c.l.s4 1966171168
    %v10606 = vunpack.c.0.s8 %v10605
    %v10607 = vlaneseq
    %v10608 = vshrl.u32 %v10607, 7
    %v10609 = vsub.s32 %v10606, %v10608
    %v10610 = vrot.slane %v10590, %v10609
    %v10612 = vunpack.c.l.s4 1966171168
    %v10613 = vunpack.c.0.s8 %v10612
    %v10614 = vlaneseq
    %v10615 = vshrl.u32 %v10614, 7
    %v10616 = vsub.s32 %v10613, %v10615
    %v10617 = vrot.slane %v10591, %v10616
    %v10619 = vunpack.c.l.s4 1966171168
    %v10620 = vunpack.c.0.s8 %v10619
    %v10621 = vlaneseq
    %v10622 = vshrl.u32 %v10621, 7
    %v10623 = vsub.s32 %v10620, %v10622
    %v10624 = vrot.slane %v10592, %v10623
    %v10626 = vunpack.c.l.s4 1966171168
    %v10627 = vunpack.c.0.s8 %v10626
    %v10628 = vlaneseq
    %v10629 = vshrl.u32 %v10628, 7
    %v10630 = vsub.s32 %v10627, %v10629
    %v10631 = vrot.slane %v10593, %v10630
    %v10633 = vunpack.c.l.s4 1966171168
    %v10634 = vunpack.c.0.s8 %v10633
    %v10635 = vlaneseq
    %v10636 = vshrl.u32 %v10635, 7
    %v10637 = vsub.s32 %v10634, %v10636
    %v10638 = vrot.slane %v10594, %v10637
    %v10640 = vunpack.c.l.s4 1966171168
    %v10641 = vunpack.c.0.s8 %v10640
    %v10642 = vlaneseq
    %v10643 = vshrl.u32 %v10642, 7
    %v10644 = vsub.s32 %v10641, %v10643
    %v10645 = vrot.slane %v10595, %v10644
    %v10647 = vunpack.c.l.s4 1966171168
    %v10648 = vunpack.c.0.s8 %v10647
    %v10649 = vlaneseq
    %v10650 = vshrl.u32 %v10649, 7
    %v10651 = vsub.s32 %v10648, %v10650
    %v10652 = vrot.slane %v10596, %v10651
    %v10653 = vcombine.low %v10603, %v10617
    %v10654 = vcombine.high %v10603, %v10617
    %v10655 = vcombine.low %v10610, %v10624
    %v10656 = vcombine.low %v10631, %v10645
    %v10657 = vcombine.high %v10631, %v10645
    %v10658 = vcombine.low %v10638, %v10652
    %v10660 = vunpack.c.l.s4 1966171168
    %v10661 = vunpack.c.0.s8 %v10660
    %v10662 = vlaneseq
    %v10663 = vshrl.u32 %v10662, 7
    %v10664 = vsub.s32 %v10661, %v10663
    %v10665 = vrot.slane %v10653, %v10664
    %v10667 = vunpack.c.l.s4 1966171168
    %v10668 = vunpack.c.0.s8 %v10667
    %v10669 = vlaneseq
    %v10670 = vshrl.u32 %v10669, 7
    %v10671 = vsub.s32 %v10668, %v10670
    %v10672 = vrot.slane %v10655, %v10671
    %v10674 = vunpack.c.l.s4 1966171168
    %v10675 = vunpack.c.0.s8 %v10674
    %v10676 = vlaneseq
    %v10677 = vshrl.u32 %v10676, 7
    %v10678 = vsub.s32 %v10675, %v10677
    %v10679 = vrot.slane %v10654, %v10678
    %v10681 = vunpack.c.l.s4 1966171168
    %v10682 = vunpack.c.0.s8 %v10681
    %v10683 = vlaneseq
    %v10684 = vshrl.u32 %v10683, 7
    %v10685 = vsub.s32 %v10682, %v10684
    %v10686 = vrot.slane %v10656, %v10685
    %v10688 = vunpack.c.l.s4 1966171168
    %v10689 = vunpack.c.0.s8 %v10688
    %v10690 = vlaneseq
    %v10691 = vshrl.u32 %v10690, 7
    %v10692 = vsub.s32 %v10689, %v10691
    %v10693 = vrot.slane %v10658, %v10692
    %v10695 = vunpack.c.l.s4 1966171168
    %v10696 = vunpack.c.0.s8 %v10695
    %v10697 = vlaneseq
    %v10698 = vshrl.u32 %v10697, 7
    %v10699 = vsub.s32 %v10696, %v10698
    %v10700 = vrot.slane %v10657, %v10699
    %v10701 = vcombine.low %v10665, %v10686
    %v10702 = vcombine.high %v10665, %v10686
    %v10703 = vcombine.low %v10672, %v10693
    %v10704 = vcombine.low %v10679, %v10700
    %v10705 = vcombine.high %v10679, %v10700
    %v10706 = vcombine.low %v9300, %v9339
    %v10707 = vcombine.high %v9300, %v9339
    %v10709 = vunpack.c.l.s4 1966171168
    %v10710 = vunpack.c.0.s8 %v10709
    %v10711 = vlaneseq
    %v10712 = vshrl.u32 %v10711, 7
    %v10713 = vsub.s32 %v10710, %v10712
    %v10714 = vrot.slane %v10706, %v10713
    %v10716 = vunpack.c.l.s4 1966171168
    %v10717 = vunpack.c.0.s8 %v10716
    %v10718 = vlaneseq
    %v10719 = vshrl.u32 %v10718, 7
    %v10720 = vsub.s32 %v10717, %v10719
    %v10721 = vrot.slane %v10707, %v10720
    %v10722 = vcombine.high %v10714, %v10714
    %v10724 = vunpack.c.l.s4 1966171168
    %v10725 = vunpack.c.0.s8 %v10724
    %v10726 = vlaneseq
    %v10727 = vshrl.u32 %v10726, 7
    %v10728 = vsub.s32 %v10725, %v10727
    %v10729 = vrot.slane %v10714, %v10728
    %v10731 = vunpack.c.l.s4 1966171168
    %v10732 = vunpack.c.0.s8 %v10731
    %v10733 = vlaneseq
    %v10734 = vshrl.u32 %v10733, 7
    %v10735 = vsub.s32 %v10732, %v10734
    %v10736 = vrot.slane %v10721, %v10735
    %v10738 = vunpack.c.l.s4 1966171168
    %v10739 = vunpack.c.0.s8 %v10738
    %v10740 = vlaneseq
    %v10741 = vshrl.u32 %v10740, 7
    %v10742 = vsub.s32 %v10739, %v10741
    %v10743 = vrot.slane %v10722, %v10742
    %v10744 = vcombine.high %v10729, %v10729
    %v10745 = vcombine.high %v10743, %v10743
    %v10794 = vsel %vm7643, %v9533, 0
    %v10796 = vsel %vm7643, %v9650, 0
    %v10798 = vsel %vm7643, %v9767, 0
    %v10800 = vsel %vm7643, %v9884, 0
    %v10802 = vsel %vm7643, %v10001, 0
    %v10804 = vsel %vm7643, %v10118, 0
    %v10806 = vsel %vm7643, %v10235, 0
    %v10808 = vsel %vm7643, %v10352, 0
    %v10810 = vsel %vm7643, %v10469, 0
    %v10812 = vsel %vm7643, %v10586, 0
    %v10814 = vsel %vm7643, %v10703, 0
    %v10816 = vsel %vm7643, %v10736, 0
    %10818 = vmatprep.subr.mxu0 0.0
    %10819 = vmatpush1.msra.mxu0 %v9340
    %10820 = vmatprep.subr.mxu0 0.0
    %10821 = vmatpush1.msra.mxu0 %v9341
    %10822 = vmatprep.subr.mxu0 0.0
    %10823 = vmatpush1.msra.mxu0 %v9342
    %10824 = vmatprep.subr.mxu0 0.0
    %10825 = vmatpush1.msra.mxu0 %v9343
    %10826 = vmatprep.subr.mxu0 0.0
    %10827 = vmatpush1.msra.mxu0 %v9344
    %10828 = vmatprep.subr.mxu0 0.0
    %10829 = vmatpush1.msra.mxu0 %v9345
    %10830 = vmatprep.subr.mxu0 0.0
    %10831 = vmatpush1.msra.mxu0 %v9346
    %10832 = vmatprep.subr.mxu0 0.0
    %10833 = vmatpush1.msra.mxu0 %v9347
    %10834 = vmatprep.subr.mxu0 0.0
    %10835 = vmatpush1.msra.mxu0 %v9348
    %10836 = vmatprep.subr.mxu0 0.0
    %10837 = vmatpush1.msra.mxu0 %v9349
    %10838 = vmatprep.subr.mxu0 0.0
    %10839 = vmatpush1.msra.mxu0 %v9350
    %10840 = vmatprep.subr.mxu0 0.0
    %10841 = vmatpush1.msra.mxu0 %v9351
    %10842 = vmatprep.subr.mxu0 0.0
    %10843 = vmatpush1.msra.mxu0 %v9352
    %10844 = vmatprep.subr.mxu0 0.0
    %10845 = vmatpush1.msra.mxu0 %v9353
    %10846 = vmatprep.subr.mxu0 0.0
    %10847 = vmatpush1.msra.mxu0 %v9354
    %10848 = vmatprep.subr.mxu0 0.0
    %10849 = vmatpush1.msra.mxu0 %v9355
    %10850 = vmatprep.subr.mxu0 0.0
    %10851 = vmatpush1.msra.mxu0 %v9356
    %10852 = vmatprep.subr.mxu0 0.0
    %10853 = vmatpush1.msra.mxu0 %v9357
    %10854 = vmatprep.subr.mxu0 0.0
    %10855 = vmatpush1.msra.mxu0 %v9358
    %10856 = vmatprep.subr.mxu0 0.0
    %10857 = vmatpush1.msra.mxu0 %v9359
    %10858 = vmatprep.subr.mxu0 0.0
    %10859 = vmatpush1.msra.mxu0 %v9360
    %10860 = vmatprep.subr.mxu0 0.0
    %10861 = vmatpush1.msra.mxu0 %v9361
    %10862 = vmatprep.subr.mxu0 0.0
    %10863 = vmatpush1.msra.mxu0 %v9362
    %10864 = vmatprep.subr.mxu0 0.0
    %10865 = vmatpush1.msra.mxu0 %v9363
    %10866 = vmatprep.subr.mxu0 0.0
    %10867 = vmatpush1.msra.mxu0 %v9364
    %10868 = vmatprep.subr.mxu0 0.0
    %10869 = vmatpush1.msra.mxu0 %v9365
    %10870 = vmatprep.subr.mxu0 0.0
    %10871 = vmatpush1.msra.mxu0 %v9366
    %10872 = vmatprep.subr.mxu0 0.0
    %10873 = vmatpush1.msra.mxu0 %v9367
    %10874 = vmatprep.subr.mxu0 0.0
    %10875 = vmatpush1.msra.mxu0 %v9368
    %10876 = vmatprep.subr.mxu0 0.0
    %10877 = vmatpush1.msra.mxu0 %v9369
    %10878 = vmatprep.subr.mxu0 0.0
    %10879 = vmatpush1.msra.mxu0 %v9370
    %10880 = vmatprep.subr.mxu0 0.0
    %10881 = vmatpush1.msra.mxu0 %v9371
    %10882 = vmatprep.mubr.f32.mxu0 %v9534
    %10883 = vmatmul.mubr.f32.gmra.mrb[0].mxu0 %v9531
    %v10884 = vpop.f32.mrb[0].mxu0
    %v10885 = vadd.f32 %v9417, %v10884
    %v10886 = vpop.f32.mrb[0].mxu0
    %10887 = vmatprep.mubr.f32.mxu0 %v9651
    %10888 = vmatmul.mubr.f32.gmra.mrb[0].mxu0 %v9648
    %v10889 = vpop.f32.mrb[0].mxu0
    %v10890 = vadd.f32 %v9417, %v10889
    %v10891 = vpop.f32.mrb[0].mxu0
    %10892 = vmatprep.mubr.f32.mxu0 %v9768
    %10893 = vmatmul.mubr.f32.gmra.mrb[0].mxu0 %v9765
    %v10894 = vpop.f32.mrb[0].mxu0
    %v10895 = vadd.f32 %v9417, %v10894
    %v10896 = vpop.f32.mrb[0].mxu0
    %10897 = vmatprep.mubr.f32.mxu0 %v9885
    %10898 = vmatmul.mubr.f32.gmra.mrb[0].mxu0 %v9882
    %v10899 = vpop.f32.mrb[0].mxu0
    %v10900 = vadd.f32 %v9417, %v10899
    %v10901 = vpop.f32.mrb[0].mxu0
    %10902 = vmatprep.mubr.f32.mxu0 %v10002
    %10903 = vmatmul.mubr.f32.gmra.mrb[0].mxu0 %v9999
    %v10904 = vpop.f32.mrb[0].mxu0
    %v10905 = vadd.f32 %v9417, %v10904
    %v10906 = vpop.f32.mrb[0].mxu0
    %10907 = vmatprep.mubr.f32.mxu0 %v10119
    %10908 = vmatmul.mubr.f32.gmra.mrb[0].mxu0 %v10116
    %v10909 = vpop.f32.mrb[0].mxu0
    %v10910 = vadd.f32 %v9417, %v10909
    %v10911 = vpop.f32.mrb[0].mxu0
    %10912 = vmatprep.mubr.f32.mxu0 %v10236
    %10913 = vmatmul.mubr.f32.gmra.mrb[0].mxu0 %v10233
    %v10914 = vpop.f32.mrb[0].mxu0
    %v10915 = vadd.f32 %v9417, %v10914
    %v10916 = vpop.f32.mrb[0].mxu0
    %10917 = vmatprep.mubr.f32.mxu0 %v10353
    %10918 = vmatmul.mubr.f32.gmra.mrb[0].mxu0 %v10350
    %v10919 = vpop.f32.mrb[0].mxu0
    %v10920 = vadd.f32 %v9417, %v10919
    %v10921 = vpop.f32.mrb[0].mxu0
    %10922 = vmatprep.mubr.f32.mxu0 %v10470
    %10923 = vmatmul.mubr.f32.gmra.mrb[0].mxu0 %v10467
    %v10924 = vpop.f32.mrb[0].mxu0
    %v10925 = vadd.f32 %v9417, %v10924
    %v10926 = vpop.f32.mrb[0].mxu0
    %10927 = vmatprep.mubr.f32.mxu0 %v10587
    %10928 = vmatmul.mubr.f32.gmra.mrb[0].mxu0 %v10584
    %v10929 = vpop.f32.mrb[0].mxu0
    %v10930 = vadd.f32 %v9417, %v10929
    %v10931 = vpop.f32.mrb[0].mxu0
    %10932 = vmatprep.mubr.f32.mxu0 %v10704
    %10933 = vmatmul.mubr.f32.gmra.mrb[0].mxu0 %v10701
    %v10934 = vpop.f32.mrb[0].mxu0
    %v10935 = vpop.f32.mrb[0].mxu0
    %10936 = vmatprep.mubr.f32.mxu0 %v10743
    %10937 = vmatmul.mubr.f32.gmra.mrb[0].mxu0 %v10729
    %v10938 = vpop.f32.mrb[0].mxu0
    %v10939 = vpop.f32.mrb[0].mxu0
    %10940 = vdwg.mxu0
    %10941 = vmatprep.subr.mxu0 0.0
    %10942 = vmatpush1.msra.mxu0 %v9372
    %10943 = vmatprep.subr.mxu0 0.0
    %10944 = vmatpush1.msra.mxu0 %v9373
    %10945 = vmatprep.subr.mxu0 0.0
    %10946 = vmatpush1.msra.mxu0 %v9374
    %10947 = vmatprep.subr.mxu0 0.0
    %10948 = vmatpush1.msra.mxu0 %v9375
    %10949 = vmatprep.subr.mxu0 0.0
    %10950 = vmatpush1.msra.mxu0 %v9376
    %10951 = vmatprep.subr.mxu0 0.0
    %10952 = vmatpush1.msra.mxu0 %v9377
    %10953 = vmatprep.subr.mxu0 0.0
    %10954 = vmatpush1.msra.mxu0 %v9378
    %10955 = vmatprep.subr.mxu0 0.0
    %10956 = vmatpush1.msra.mxu0 %v9379
    %10957 = vmatprep.subr.mxu0 0.0
    %10958 = vmatpush1.msra.mxu0 %v9380
    %10959 = vmatprep.subr.mxu0 0.0
    %10960 = vmatpush1.msra.mxu0 %v9381
    %10961 = vmatprep.subr.mxu0 0.0
    %10962 = vmatpush1.msra.mxu0 %v9382
    %10963 = vmatprep.subr.mxu0 0.0
    %10964 = vmatpush1.msra.mxu0 %v9383
    %10965 = vmatprep.subr.mxu0 0.0
    %10966 = vmatpush1.msra.mxu0 %v9384
    %10967 = vmatprep.subr.mxu0 0.0
    %10968 = vmatpush1.msra.mxu0 %v9385
    %10969 = vmatprep.subr.mxu0 0.0
    %10970 = vmatpush1.msra.mxu0 %v9386
    %10971 = vmatprep.subr.mxu0 0.0
    %10972 = vmatpush1.msra.mxu0 %v9387
    %10973 = vmatprep.subr.mxu0 0.0
    %10974 = vmatpush1.msra.mxu0 %v9388
    %10975 = vmatprep.subr.mxu0 0.0
    %10976 = vmatpush1.msra.mxu0 %v9389
    %10977 = vmatprep.subr.mxu0 0.0
    %10978 = vmatpush1.msra.mxu0 %v9390
    %10979 = vmatprep.subr.mxu0 0.0
    %10980 = vmatpush1.msra.mxu0 %v9391
    %10981 = vmatprep.subr.mxu0 0.0
    %10982 = vmatpush1.msra.mxu0 %v9392
    %10983 = vmatprep.subr.mxu0 0.0
    %10984 = vmatpush1.msra.mxu0 %v9393
    %10985 = vmatprep.subr.mxu0 0.0
    %10986 = vmatpush1.msra.mxu0 %v9394
    %10987 = vmatprep.subr.mxu0 0.0
    %10988 = vmatpush1.msra.mxu0 %v9395
    %10989 = vmatprep.subr.mxu0 0.0
    %10990 = vmatpush1.msra.mxu0 %v9396
    %10991 = vmatprep.subr.mxu0 0.0
    %10992 = vmatpush1.msra.mxu0 %v9397
    %10993 = vmatprep.subr.mxu0 0.0
    %10994 = vmatpush1.msra.mxu0 %v9398
    %10995 = vmatprep.subr.mxu0 0.0
    %10996 = vmatpush1.msra.mxu0 %v9399
    %10997 = vmatprep.subr.mxu0 0.0
    %10998 = vmatpush1.msra.mxu0 %v9400
    %10999 = vmatprep.subr.mxu0 0.0
    %11000 = vmatpush1.msra.mxu0 %v9401
    %11001 = vmatprep.subr.mxu0 0.0
    %11002 = vmatpush1.msra.mxu0 %v9402
    %11003 = vmatprep.subr.mxu0 0.0
    %11004 = vmatpush1.msra.mxu0 %v9403
    %11005 = vmatprep.mubr.f32.mxu0 %v9535
    %11006 = vmatmul.mubr.f32.gmra.mrb[0].mxu0 %v9532
    %v11007 = vpop.f32.mrb[0].mxu0
    %v11008 = vadd.f32 %v10885, %v11007
    %v11009 = vpop.f32.mrb[0].mxu0
    %11010 = vmatprep.mubr.f32.mxu0 %v9652
    %11011 = vmatmul.mubr.f32.gmra.mrb[0].mxu0 %v9649
    %v11012 = vpop.f32.mrb[0].mxu0
    %v11013 = vadd.f32 %v10890, %v11012
    %v11014 = vpop.f32.mrb[0].mxu0
    %11015 = vmatprep.mubr.f32.mxu0 %v9769
    %11016 = vmatmul.mubr.f32.gmra.mrb[0].mxu0 %v9766
    %v11017 = vpop.f32.mrb[0].mxu0
    %v11018 = vadd.f32 %v10895, %v11017
    %v11019 = vpop.f32.mrb[0].mxu0
    %11020 = vmatprep.mubr.f32.mxu0 %v9886
    %11021 = vmatmul.mubr.f32.gmra.mrb[0].mxu0 %v9883
    %v11022 = vpop.f32.mrb[0].mxu0
    %v11023 = vadd.f32 %v10900, %v11022
    %v11024 = vpop.f32.mrb[0].mxu0
    %11025 = vmatprep.mubr.f32.mxu0 %v10003
    %11026 = vmatmul.mubr.f32.gmra.mrb[0].mxu0 %v10000
    %v11027 = vpop.f32.mrb[0].mxu0
    %v11028 = vadd.f32 %v10905, %v11027
    %v11029 = vpop.f32.mrb[0].mxu0
    %11030 = vmatprep.mubr.f32.mxu0 %v10120
    %11031 = vmatmul.mubr.f32.gmra.mrb[0].mxu0 %v10117
    %v11032 = vpop.f32.mrb[0].mxu0
    %v11033 = vadd.f32 %v10910, %v11032
    %v11034 = vpop.f32.mrb[0].mxu0
    %11035 = vmatprep.mubr.f32.mxu0 %v10237
    %11036 = vmatmul.mubr.f32.gmra.mrb[0].mxu0 %v10234
    %v11037 = vpop.f32.mrb[0].mxu0
    %v11038 = vadd.f32 %v10915, %v11037
    %v11039 = vpop.f32.mrb[0].mxu0
    %11040 = vmatprep.mubr.f32.mxu0 %v10354
    %11041 = vmatmul.mubr.f32.gmra.mrb[0].mxu0 %v10351
    %v11042 = vpop.f32.mrb[0].mxu0
    %v11043 = vadd.f32 %v10920, %v11042
    %v11044 = vpop.f32.mrb[0].mxu0
    %11045 = vmatprep.mubr.f32.mxu0 %v10471
    %11046 = vmatmul.mubr.f32.gmra.mrb[0].mxu0 %v10468
    %v11047 = vpop.f32.mrb[0].mxu0
    %v11048 = vadd.f32 %v10925, %v11047
    %v11049 = vpop.f32.mrb[0].mxu0
    %11050 = vmatprep.mubr.f32.mxu0 %v10588
    %11051 = vmatmul.mubr.f32.gmra.mrb[0].mxu0 %v10585
    %v11052 = vpop.f32.mrb[0].mxu0
    %v11053 = vadd.f32 %v10930, %v11052
    %v11054 = vpop.f32.mrb[0].mxu0
    %11055 = vmatprep.mubr.f32.mxu0 %v10705
    %11056 = vmatmul.mubr.f32.gmra.mrb[0].mxu0 %v10702
    %v11057 = vpop.f32.mrb[0].mxu0
    %v11058 = vpop.f32.mrb[0].mxu0
    %11059 = vmatprep.mubr.f32.mxu0 %v10745
    %11060 = vmatmul.mubr.f32.gmra.mrb[0].mxu0 %v10744
    %v11061 = vpop.f32.mrb[0].mxu0
    %v11062 = vpop.f32.mrb[0].mxu0
    %11063 = vdwg.mxu0
    %11064 = vmatprep.subr.mxu0 0.0
    %11065 = vmatpush1.msra.mxu0 %v9404
    %11066 = vmatprep.subr.mxu0 0.0
    %11067 = vmatpush1.msra.mxu0 %v9405
    %11068 = vmatprep.subr.mxu0 0.0
    %11069 = vmatpush1.msra.mxu0 %v9406
    %11070 = vmatprep.subr.mxu0 0.0
    %11071 = vmatpush1.msra.mxu0 %v9407
    %11072 = vmatprep.subr.mxu0 0.0
    %11073 = vmatpush1.msra.mxu0 %v9408
    %11074 = vmatprep.subr.mxu0 0.0
    %11075 = vmatpush1.msra.mxu0 %v9409
    %11076 = vmatprep.subr.mxu0 0.0
    %11077 = vmatpush1.msra.mxu0 %v9410
    %11078 = vmatprep.subr.mxu0 0.0
    %11079 = vmatpush1.msra.mxu0 %v9411
    %11080 = vmatprep.subr.mxu0 0.0
    %11081 = vmatpush1.msra.mxu0 0.0
    %11082 = vmatprep.subr.mxu0 0.0
    %11083 = vmatpush1.msra.mxu0 0.0
    %11084 = vmatprep.subr.mxu0 0.0
    %11085 = vmatpush1.msra.mxu0 0.0
    %11086 = vmatprep.subr.mxu0 0.0
    %11087 = vmatpush1.msra.mxu0 0.0
    %11088 = vmatprep.subr.mxu0 0.0
    %11089 = vmatpush1.msra.mxu0 0.0
    %11090 = vmatprep.subr.mxu0 0.0
    %11091 = vmatpush1.msra.mxu0 0.0
    %11092 = vmatprep.subr.mxu0 0.0
    %11093 = vmatpush1.msra.mxu0 0.0
    %11094 = vmatprep.subr.mxu0 0.0
    %11095 = vmatpush1.msra.mxu0 0.0
    %11096 = vmatprep.subr.mxu0 0.0
    %11097 = vmatpush1.msra.mxu0 0.0
    %11098 = vmatprep.subr.mxu0 0.0
    %11099 = vmatpush1.msra.mxu0 0.0
    %11100 = vmatprep.subr.mxu0 0.0
    %11101 = vmatpush1.msra.mxu0 0.0
    %11102 = vmatprep.subr.mxu0 0.0
    %11103 = vmatpush1.msra.mxu0 0.0
    %11104 = vmatprep.subr.mxu0 0.0
    %11105 = vmatpush1.msra.mxu0 0.0
    %11106 = vmatprep.subr.mxu0 0.0
    %11107 = vmatpush1.msra.mxu0 0.0
    %11108 = vmatprep.subr.mxu0 0.0
    %11109 = vmatpush1.msra.mxu0 0.0
    %11110 = vmatprep.subr.mxu0 0.0
    %11111 = vmatpush1.msra.mxu0 0.0
    %11112 = vmatprep.subr.mxu0 0.0
    %11113 = vmatpush1.msra.mxu0 0.0
    %11114 = vmatprep.subr.mxu0 0.0
    %11115 = vmatpush1.msra.mxu0 0.0
    %11116 = vmatprep.subr.mxu0 0.0
    %11117 = vmatpush1.msra.mxu0 0.0
    %11118 = vmatprep.subr.mxu0 0.0
    %11119 = vmatpush1.msra.mxu0 0.0
    %11120 = vmatprep.subr.mxu0 0.0
    %11121 = vmatpush1.msra.mxu0 0.0
    %11122 = vmatprep.subr.mxu0 0.0
    %11123 = vmatpush1.msra.mxu0 0.0
    %11124 = vmatprep.subr.mxu0 0.0
    %11125 = vmatpush1.msra.mxu0 0.0
    %11126 = vmatprep.subr.mxu0 0.0
    %11127 = vmatpush1.msra.mxu0 0.0
    %11128 = vmatprep.mubr.f32.mxu0 0.0
    %11129 = vmatmul.mubr.f32.gmra.mrb[0].mxu0 %v10794
    %v11130 = vpop.f32.mrb[0].mxu0
    %v11131 = vadd.f32 %v11008, %v11130
    %v11132 = vpop.f32.mrb[0].mxu0
    %11133 = vmatprep.mubr.f32.mxu0 0.0
    %11134 = vmatmul.mubr.f32.gmra.mrb[0].mxu0 %v10796
    %v11135 = vpop.f32.mrb[0].mxu0
    %v11136 = vadd.f32 %v11013, %v11135
    %v11137 = vpop.f32.mrb[0].mxu0
    %11138 = vmatprep.mubr.f32.mxu0 0.0
    %11139 = vmatmul.mubr.f32.gmra.mrb[0].mxu0 %v10798
    %v11140 = vpop.f32.mrb[0].mxu0
    %v11141 = vadd.f32 %v11018, %v11140
    %v11142 = vpop.f32.mrb[0].mxu0
    %11143 = vmatprep.mubr.f32.mxu0 0.0
    %11144 = vmatmul.mubr.f32.gmra.mrb[0].mxu0 %v10800
    %v11145 = vpop.f32.mrb[0].mxu0
    %v11146 = vadd.f32 %v11023, %v11145
    %v11147 = vpop.f32.mrb[0].mxu0
    %11148 = vmatprep.mubr.f32.mxu0 0.0
    %11149 = vmatmul.mubr.f32.gmra.mrb[0].mxu0 %v10802
    %v11150 = vpop.f32.mrb[0].mxu0
    %v11151 = vadd.f32 %v11028, %v11150
    %v11152 = vpop.f32.mrb[0].mxu0
    %11153 = vmatprep.mubr.f32.mxu0 0.0
    %11154 = vmatmul.mubr.f32.gmra.mrb[0].mxu0 %v10804
    %v11155 = vpop.f32.mrb[0].mxu0
    %v11156 = vadd.f32 %v11033, %v11155
    %v11157 = vpop.f32.mrb[0].mxu0
    %11158 = vmatprep.mubr.f32.mxu0 0.0
    %11159 = vmatmul.mubr.f32.gmra.mrb[0].mxu0 %v10806
    %v11160 = vpop.f32.mrb[0].mxu0
    %v11161 = vadd.f32 %v11038, %v11160
    %v11162 = vpop.f32.mrb[0].mxu0
    %11163 = vmatprep.mubr.f32.mxu0 0.0
    %11164 = vmatmul.mubr.f32.gmra.mrb[0].mxu0 %v10808
    %v11165 = vpop.f32.mrb[0].mxu0
    %v11166 = vadd.f32 %v11043, %v11165
    %v11167 = vpop.f32.mrb[0].mxu0
    %11168 = vmatprep.mubr.f32.mxu0 0.0
    %11169 = vmatmul.mubr.f32.gmra.mrb[0].mxu0 %v10810
    %v11170 = vpop.f32.mrb[0].mxu0
    %v11171 = vadd.f32 %v11048, %v11170
    %v11172 = vpop.f32.mrb[0].mxu0
    %11173 = vmatprep.mubr.f32.mxu0 0.0
    %11174 = vmatmul.mubr.f32.gmra.mrb[0].mxu0 %v10812
    %v11175 = vpop.f32.mrb[0].mxu0
    %v11176 = vadd.f32 %v11053, %v11175
    %v11177 = vpop.f32.mrb[0].mxu0
    %11178 = vmatprep.mubr.f32.mxu0 0.0
    %11179 = vmatmul.mubr.f32.gmra.mrb[0].mxu0 %v10814
    %v11180 = vpop.f32.mrb[0].mxu0
    %v11181 = vpop.f32.mrb[0].mxu0
    %11182 = vmatprep.mubr.f32.mxu0 0.0
    %11183 = vmatmul.mubr.f32.gmra.mrb[0].mxu0 %v10816
    %v11184 = vpop.f32.mrb[0].mxu0
    %v11185 = vpop.f32.mrb[0].mxu0
    %11186 = vdwg.mxu0
    %v11197 = vcombine.high %v11131, %v11131
    %v11199 = vunpack.c.l.s4 1966171168
    %v11200 = vunpack.c.0.s8 %v11199
    %v11201 = vlaneseq
    %v11202 = vshrl.u32 %v11201, 7
    %v11203 = vsub.s32 %v11200, %v11202
    %v11204 = vrot.slane %v11131, %v11203
    %v11206 = vunpack.c.l.s4 1966171168
    %v11207 = vunpack.c.0.s8 %v11206
    %v11208 = vlaneseq
    %v11209 = vshrl.u32 %v11208, 7
    %v11210 = vsub.s32 %v11207, %v11209
    %v11211 = vrot.slane %v11197, %v11210
    %v11212 = vcombine.high %v11204, %v11204
    %v11213 = vcombine.high %v11211, %v11211
    %v11215 = vunpack.c.l.s4 1966171168
    %v11216 = vunpack.c.0.s8 %v11215
    %v11217 = vlaneseq
    %v11218 = vshrl.u32 %v11217, 7
    %v11219 = vsub.s32 %v11216, %v11218
    %v11220 = vrot.slane %v11204, %v11219
    %v11222 = vunpack.c.l.s4 1966171168
    %v11223 = vunpack.c.0.s8 %v11222
    %v11224 = vlaneseq
    %v11225 = vshrl.u32 %v11224, 7
    %v11226 = vsub.s32 %v11223, %v11225
    %v11227 = vrot.slane %v11211, %v11226
    %v11229 = vunpack.c.l.s4 1966171168
    %v11230 = vunpack.c.0.s8 %v11229
    %v11231 = vlaneseq
    %v11232 = vshrl.u32 %v11231, 7
    %v11233 = vsub.s32 %v11230, %v11232
    %v11234 = vrot.slane %v11212, %v11233
    %v11236 = vunpack.c.l.s4 1966171168
    %v11237 = vunpack.c.0.s8 %v11236
    %v11238 = vlaneseq
    %v11239 = vshrl.u32 %v11238, 7
    %v11240 = vsub.s32 %v11237, %v11239
    %v11241 = vrot.slane %v11213, %v11240
    %v11242 = vcombine.high %v11220, %v11220
    %v11243 = vcombine.high %v11227, %v11227
    %v11244 = vcombine.high %v11234, %v11234
    %v11245 = vcombine.high %v11241, %v11241
    %v11246 = vcombine.high %v11136, %v11136
    %v11248 = vunpack.c.l.s4 1966171168
    %v11249 = vunpack.c.0.s8 %v11248
    %v11250 = vlaneseq
    %v11251 = vshrl.u32 %v11250, 7
    %v11252 = vsub.s32 %v11249, %v11251
    %v11253 = vrot.slane %v11136, %v11252
    %v11255 = vunpack.c.l.s4 1966171168
    %v11256 = vunpack.c.0.s8 %v11255
    %v11257 = vlaneseq
    %v11258 = vshrl.u32 %v11257, 7
    %v11259 = vsub.s32 %v11256, %v11258
    %v11260 = vrot.slane %v11246, %v11259
    %v11261 = vcombine.high %v11253, %v11253
    %v11262 = vcombine.high %v11260, %v11260
    %v11264 = vunpack.c.l.s4 1966171168
    %v11265 = vunpack.c.0.s8 %v11264
    %v11266 = vlaneseq
    %v11267 = vshrl.u32 %v11266, 7
    %v11268 = vsub.s32 %v11265, %v11267
    %v11269 = vrot.slane %v11253, %v11268
    %v11271 = vunpack.c.l.s4 1966171168
    %v11272 = vunpack.c.0.s8 %v11271
    %v11273 = vlaneseq
    %v11274 = vshrl.u32 %v11273, 7
    %v11275 = vsub.s32 %v11272, %v11274
    %v11276 = vrot.slane %v11260, %v11275
    %v11278 = vunpack.c.l.s4 1966171168
    %v11279 = vunpack.c.0.s8 %v11278
    %v11280 = vlaneseq
    %v11281 = vshrl.u32 %v11280, 7
    %v11282 = vsub.s32 %v11279, %v11281
    %v11283 = vrot.slane %v11261, %v11282
    %v11285 = vunpack.c.l.s4 1966171168
    %v11286 = vunpack.c.0.s8 %v11285
    %v11287 = vlaneseq
    %v11288 = vshrl.u32 %v11287, 7
    %v11289 = vsub.s32 %v11286, %v11288
    %v11290 = vrot.slane %v11262, %v11289
    %v11291 = vcombine.high %v11269, %v11269
    %v11292 = vcombine.high %v11276, %v11276
    %v11293 = vcombine.high %v11283, %v11283
    %v11294 = vcombine.high %v11290, %v11290
    %v11295 = vcombine.high %v11141, %v11141
    %v11297 = vunpack.c.l.s4 1966171168
    %v11298 = vunpack.c.0.s8 %v11297
    %v11299 = vlaneseq
    %v11300 = vshrl.u32 %v11299, 7
    %v11301 = vsub.s32 %v11298, %v11300
    %v11302 = vrot.slane %v11141, %v11301
    %v11304 = vunpack.c.l.s4 1966171168
    %v11305 = vunpack.c.0.s8 %v11304
    %v11306 = vlaneseq
    %v11307 = vshrl.u32 %v11306, 7
    %v11308 = vsub.s32 %v11305, %v11307
    %v11309 = vrot.slane %v11295, %v11308
    %v11310 = vcombine.high %v11302, %v11302
    %v11311 = vcombine.high %v11309, %v11309
    %v11313 = vunpack.c.l.s4 1966171168
    %v11314 = vunpack.c.0.s8 %v11313
    %v11315 = vlaneseq
    %v11316 = vshrl.u32 %v11315, 7
    %v11317 = vsub.s32 %v11314, %v11316
    %v11318 = vrot.slane %v11302, %v11317
    %v11320 = vunpack.c.l.s4 1966171168
    %v11321 = vunpack.c.0.s8 %v11320
    %v11322 = vlaneseq
    %v11323 = vshrl.u32 %v11322, 7
    %v11324 = vsub.s32 %v11321, %v11323
    %v11325 = vrot.slane %v11309, %v11324
    %v11327 = vunpack.c.l.s4 1966171168
    %v11328 = vunpack.c.0.s8 %v11327
    %v11329 = vlaneseq
    %v11330 = vshrl.u32 %v11329, 7
    %v11331 = vsub.s32 %v11328, %v11330
    %v11332 = vrot.slane %v11310, %v11331
    %v11334 = vunpack.c.l.s4 1966171168
    %v11335 = vunpack.c.0.s8 %v11334
    %v11336 = vlaneseq
    %v11337 = vshrl.u32 %v11336, 7
    %v11338 = vsub.s32 %v11335, %v11337
    %v11339 = vrot.slane %v11311, %v11338
    %v11340 = vcombine.high %v11318, %v11318
    %v11341 = vcombine.high %v11325, %v11325
    %v11342 = vcombine.high %v11332, %v11332
    %v11343 = vcombine.high %v11339, %v11339
    %v11344 = vcombine.high %v11146, %v11146
    %v11346 = vunpack.c.l.s4 1966171168
    %v11347 = vunpack.c.0.s8 %v11346
    %v11348 = vlaneseq
    %v11349 = vshrl.u32 %v11348, 7
    %v11350 = vsub.s32 %v11347, %v11349
    %v11351 = vrot.slane %v11146, %v11350
    %v11353 = vunpack.c.l.s4 1966171168
    %v11354 = vunpack.c.0.s8 %v11353
    %v11355 = vlaneseq
    %v11356 = vshrl.u32 %v11355, 7
    %v11357 = vsub.s32 %v11354, %v11356
    %v11358 = vrot.slane %v11344, %v11357
    %v11359 = vcombine.high %v11351, %v11351
    %v11360 = vcombine.high %v11358, %v11358
    %v11362 = vunpack.c.l.s4 1966171168
    %v11363 = vunpack.c.0.s8 %v11362
    %v11364 = vlaneseq
    %v11365 = vshrl.u32 %v11364, 7
    %v11366 = vsub.s32 %v11363, %v11365
    %v11367 = vrot.slane %v11351, %v11366
    %v11369 = vunpack.c.l.s4 1966171168
    %v11370 = vunpack.c.0.s8 %v11369
    %v11371 = vlaneseq
    %v11372 = vshrl.u32 %v11371, 7
    %v11373 = vsub.s32 %v11370, %v11372
    %v11374 = vrot.slane %v11358, %v11373
    %v11376 = vunpack.c.l.s4 1966171168
    %v11377 = vunpack.c.0.s8 %v11376
    %v11378 = vlaneseq
    %v11379 = vshrl.u32 %v11378, 7
    %v11380 = vsub.s32 %v11377, %v11379
    %v11381 = vrot.slane %v11359, %v11380
    %v11383 = vunpack.c.l.s4 1966171168
    %v11384 = vunpack.c.0.s8 %v11383
    %v11385 = vlaneseq
    %v11386 = vshrl.u32 %v11385, 7
    %v11387 = vsub.s32 %v11384, %v11386
    %v11388 = vrot.slane %v11360, %v11387
    %v11389 = vcombine.high %v11374, %v11374
    %v11390 = vcombine.high %v11381, %v11381
    %v11391 = vcombine.high %v11388, %v11388
    %v11393 = vunpack.c.l.s4 1966171168
    %v11394 = vunpack.c.0.s8 %v11393
    %v11395 = vlaneseq
    %v11396 = vshrl.u32 %v11395, 7
    %v11397 = vsub.s32 %v11394, %v11396
    %v11398 = vrot.slane %v11151, %v11397
    %v11399 = vcombine.high %v11398, %v11398
    %v11401 = vunpack.c.l.s4 1966171168
    %v11402 = vunpack.c.0.s8 %v11401
    %v11403 = vlaneseq
    %v11404 = vshrl.u32 %v11403, 7
    %v11405 = vsub.s32 %v11402, %v11404
    %v11406 = vrot.slane %v11398, %v11405
    %v11408 = vunpack.c.l.s4 1966171168
    %v11409 = vunpack.c.0.s8 %v11408
    %v11410 = vlaneseq
    %v11411 = vshrl.u32 %v11410, 7
    %v11412 = vsub.s32 %v11409, %v11411
    %v11413 = vrot.slane %v11399, %v11412
    %v11414 = vcombine.high %v11406, %v11406
    %v11415 = vcombine.high %v11156, %v11156
    %v11417 = vunpack.c.l.s4 1966171168
    %v11418 = vunpack.c.0.s8 %v11417
    %v11419 = vlaneseq
    %v11420 = vshrl.u32 %v11419, 7
    %v11421 = vsub.s32 %v11418, %v11420
    %v11422 = vrot.slane %v11415, %v11421
    %v11423 = vcombine.high %v11422, %v11422
    %v11425 = vunpack.c.l.s4 1966171168
    %v11426 = vunpack.c.0.s8 %v11425
    %v11427 = vlaneseq
    %v11428 = vshrl.u32 %v11427, 7
    %v11429 = vsub.s32 %v11426, %v11428
    %v11430 = vrot.slane %v11422, %v11429
    %v11432 = vunpack.c.l.s4 1966171168
    %v11433 = vunpack.c.0.s8 %v11432
    %v11434 = vlaneseq
    %v11435 = vshrl.u32 %v11434, 7
    %v11436 = vsub.s32 %v11433, %v11435
    %v11437 = vrot.slane %v11423, %v11436
    %v11438 = vcombine.high %v11430, %v11430
    %v11439 = vcombine.high %v11437, %v11437
    %v11440 = vcombine.high %v11161, %v11161
    %v11442 = vunpack.c.l.s4 1966171168
    %v11443 = vunpack.c.0.s8 %v11442
    %v11444 = vlaneseq
    %v11445 = vshrl.u32 %v11444, 7
    %v11446 = vsub.s32 %v11443, %v11445
    %v11447 = vrot.slane %v11161, %v11446
    %v11449 = vunpack.c.l.s4 1966171168
    %v11450 = vunpack.c.0.s8 %v11449
    %v11451 = vlaneseq
    %v11452 = vshrl.u32 %v11451, 7
    %v11453 = vsub.s32 %v11450, %v11452
    %v11454 = vrot.slane %v11440, %v11453
    %v11455 = vcombine.high %v11447, %v11447
    %v11456 = vcombine.high %v11454, %v11454
    %v11458 = vunpack.c.l.s4 1966171168
    %v11459 = vunpack.c.0.s8 %v11458
    %v11460 = vlaneseq
    %v11461 = vshrl.u32 %v11460, 7
    %v11462 = vsub.s32 %v11459, %v11461
    %v11463 = vrot.slane %v11447, %v11462
    %v11465 = vunpack.c.l.s4 1966171168
    %v11466 = vunpack.c.0.s8 %v11465
    %v11467 = vlaneseq
    %v11468 = vshrl.u32 %v11467, 7
    %v11469 = vsub.s32 %v11466, %v11468
    %v11470 = vrot.slane %v11454, %v11469
    %v11472 = vunpack.c.l.s4 1966171168
    %v11473 = vunpack.c.0.s8 %v11472
    %v11474 = vlaneseq
    %v11475 = vshrl.u32 %v11474, 7
    %v11476 = vsub.s32 %v11473, %v11475
    %v11477 = vrot.slane %v11455, %v11476
    %v11479 = vunpack.c.l.s4 1966171168
    %v11480 = vunpack.c.0.s8 %v11479
    %v11481 = vlaneseq
    %v11482 = vshrl.u32 %v11481, 7
    %v11483 = vsub.s32 %v11480, %v11482
    %v11484 = vrot.slane %v11456, %v11483
    %v11485 = vcombine.high %v11463, %v11463
    %v11486 = vcombine.high %v11470, %v11470
    %v11487 = vcombine.high %v11477, %v11477
    %v11488 = vcombine.high %v11484, %v11484
    %v11489 = vcombine.high %v11166, %v11166
    %v11491 = vunpack.c.l.s4 1966171168
    %v11492 = vunpack.c.0.s8 %v11491
    %v11493 = vlaneseq
    %v11494 = vshrl.u32 %v11493, 7
    %v11495 = vsub.s32 %v11492, %v11494
    %v11496 = vrot.slane %v11166, %v11495
    %v11498 = vunpack.c.l.s4 1966171168
    %v11499 = vunpack.c.0.s8 %v11498
    %v11500 = vlaneseq
    %v11501 = vshrl.u32 %v11500, 7
    %v11502 = vsub.s32 %v11499, %v11501
    %v11503 = vrot.slane %v11489, %v11502
    %v11504 = vcombine.high %v11496, %v11496
    %v11505 = vcombine.high %v11503, %v11503
    %v11507 = vunpack.c.l.s4 1966171168
    %v11508 = vunpack.c.0.s8 %v11507
    %v11509 = vlaneseq
    %v11510 = vshrl.u32 %v11509, 7
    %v11511 = vsub.s32 %v11508, %v11510
    %v11512 = vrot.slane %v11496, %v11511
    %v11514 = vunpack.c.l.s4 1966171168
    %v11515 = vunpack.c.0.s8 %v11514
    %v11516 = vlaneseq
    %v11517 = vshrl.u32 %v11516, 7
    %v11518 = vsub.s32 %v11515, %v11517
    %v11519 = vrot.slane %v11503, %v11518
    %v11521 = vunpack.c.l.s4 1966171168
    %v11522 = vunpack.c.0.s8 %v11521
    %v11523 = vlaneseq
    %v11524 = vshrl.u32 %v11523, 7
    %v11525 = vsub.s32 %v11522, %v11524
    %v11526 = vrot.slane %v11504, %v11525
    %v11528 = vunpack.c.l.s4 1966171168
    %v11529 = vunpack.c.0.s8 %v11528
    %v11530 = vlaneseq
    %v11531 = vshrl.u32 %v11530, 7
    %v11532 = vsub.s32 %v11529, %v11531
    %v11533 = vrot.slane %v11505, %v11532
    %v11534 = vcombine.high %v11512, %v11512
    %v11535 = vcombine.high %v11526, %v11526
    %v11536 = vcombine.high %v11533, %v11533
    %v11537 = vcombine.high %v11171, %v11171
    %v11539 = vunpack.c.l.s4 1966171168
    %v11540 = vunpack.c.0.s8 %v11539
    %v11541 = vlaneseq
    %v11542 = vshrl.u32 %v11541, 7
    %v11543 = vsub.s32 %v11540, %v11542
    %v11544 = vrot.slane %v11171, %v11543
    %v11546 = vunpack.c.l.s4 1966171168
    %v11547 = vunpack.c.0.s8 %v11546
    %v11548 = vlaneseq
    %v11549 = vshrl.u32 %v11548, 7
    %v11550 = vsub.s32 %v11547, %v11549
    %v11551 = vrot.slane %v11537, %v11550
    %v11552 = vcombine.high %v11544, %v11544
    %v11553 = vcombine.high %v11551, %v11551
    %v11555 = vunpack.c.l.s4 1966171168
    %v11556 = vunpack.c.0.s8 %v11555
    %v11557 = vlaneseq
    %v11558 = vshrl.u32 %v11557, 7
    %v11559 = vsub.s32 %v11556, %v11558
    %v11560 = vrot.slane %v11544, %v11559
    %v11562 = vunpack.c.l.s4 1966171168
    %v11563 = vunpack.c.0.s8 %v11562
    %v11564 = vlaneseq
    %v11565 = vshrl.u32 %v11564, 7
    %v11566 = vsub.s32 %v11563, %v11565
    %v11567 = vrot.slane %v11551, %v11566
    %v11569 = vunpack.c.l.s4 1966171168
    %v11570 = vunpack.c.0.s8 %v11569
    %v11571 = vlaneseq
    %v11572 = vshrl.u32 %v11571, 7
    %v11573 = vsub.s32 %v11570, %v11572
    %v11574 = vrot.slane %v11552, %v11573
    %v11576 = vunpack.c.l.s4 1966171168
    %v11577 = vunpack.c.0.s8 %v11576
    %v11578 = vlaneseq
    %v11579 = vshrl.u32 %v11578, 7
    %v11580 = vsub.s32 %v11577, %v11579
    %v11581 = vrot.slane %v11553, %v11580
    %v11582 = vcombine.high %v11560, %v11560
    %v11583 = vcombine.high %v11567, %v11567
    %v11584 = vcombine.high %v11574, %v11574
    %v11585 = vcombine.high %v11176, %v11176
    %v11587 = vunpack.c.l.s4 1966171168
    %v11588 = vunpack.c.0.s8 %v11587
    %v11589 = vlaneseq
    %v11590 = vshrl.u32 %v11589, 7
    %v11591 = vsub.s32 %v11588, %v11590
    %v11592 = vrot.slane %v11176, %v11591
    %v11594 = vunpack.c.l.s4 1966171168
    %v11595 = vunpack.c.0.s8 %v11594
    %v11596 = vlaneseq
    %v11597 = vshrl.u32 %v11596, 7
    %v11598 = vsub.s32 %v11595, %v11597
    %v11599 = vrot.slane %v11585, %v11598
    %v11600 = vcombine.high %v11592, %v11592
    %v11601 = vcombine.high %v11599, %v11599
    %v11603 = vunpack.c.l.s4 1966171168
    %v11604 = vunpack.c.0.s8 %v11603
    %v11605 = vlaneseq
    %v11606 = vshrl.u32 %v11605, 7
    %v11607 = vsub.s32 %v11604, %v11606
    %v11608 = vrot.slane %v11592, %v11607
    %v11610 = vunpack.c.l.s4 1966171168
    %v11611 = vunpack.c.0.s8 %v11610
    %v11612 = vlaneseq
    %v11613 = vshrl.u32 %v11612, 7
    %v11614 = vsub.s32 %v11611, %v11613
    %v11615 = vrot.slane %v11599, %v11614
    %v11617 = vunpack.c.l.s4 1966171168
    %v11618 = vunpack.c.0.s8 %v11617
    %v11619 = vlaneseq
    %v11620 = vshrl.u32 %v11619, 7
    %v11621 = vsub.s32 %v11618, %v11620
    %v11622 = vrot.slane %v11600, %v11621
    %v11624 = vunpack.c.l.s4 1966171168
    %v11625 = vunpack.c.0.s8 %v11624
    %v11626 = vlaneseq
    %v11627 = vshrl.u32 %v11626, 7
    %v11628 = vsub.s32 %v11625, %v11627
    %v11629 = vrot.slane %v11601, %v11628
    %v11630 = vcombine.high %v11608, %v11608
    %v11631 = vcombine.high %v11615, %v11615
    %v11632 = vcombine.high %v11622, %v11622
    %v11633 = vcombine.high %v11629, %v11629
    %v11698 = vmax.f32 %v11220, %v11283
    %v11699 = vmax.f32 %v11234, %v11291
    %v11700 = vmax.f32 %v11242, %v11293
    %v11701 = vmax.f32 %v11244, %v11276
    %v11702 = vmax.f32 %v11227, %v11290
    %v11703 = vmax.f32 %v11241, %v11292
    %v11704 = vmax.f32 %v11243, %v11294
    %v11705 = vmax.f32 %v11245, %v11318
    %v11706 = vmax.f32 %v11340, %v11390
    %v11707 = vmax.f32 %v11342, %v11374
    %v11708 = vmax.f32 %v11325, %v11388
    %v11709 = vmax.f32 %v11339, %v11389
    %v11710 = vmax.f32 %v11341, %v11391
    %v11711 = vmax.f32 %v11343, %v11406
    %v11712 = vmax.f32 %v11367, %v11413
    %v11713 = vmax.f32 %v11381, %v11414
    %v11714 = vmax.f32 %v11437, %v11486
    %v11715 = vmax.f32 %v11438, %v11488
    %v11716 = vmax.f32 %v11439, %v11512
    %v11717 = vmax.f32 %v11463, %v11526
    %v11718 = vmax.f32 %v11477, %v11534
    %v11719 = vmax.f32 %v11485, %v11535
    %v11720 = vmax.f32 %v11487, %v11519
    %v11721 = vmax.f32 %v11470, %v11533
    %v11722 = vmax.f32 %v11536, %v11608
    %v11723 = vmax.f32 %v11560, %v11622
    %v11724 = vmax.f32 %v11574, %v11630
    %v11725 = vmax.f32 %v11582, %v11632
    %v11726 = vmax.f32 %v11584, %v11615
    %v11727 = vmax.f32 %v11567, %v11629
    %v11728 = vmax.f32 %v11581, %v11631
    %v11729 = vmax.f32 %v11583, %v11633
    %v11730 = vmax.f32 %v11698, %v11699
    %v11731 = vmax.f32 %v11700, %v11701
    %v11732 = vmax.f32 %v11702, %v11703
    %v11733 = vmax.f32 %v11704, %v11705
    %v11734 = vmax.f32 %v11706, %v11707
    %v11735 = vmax.f32 %v11708, %v11709
    %v11736 = vmax.f32 %v11710, %v11711
    %v11737 = vmax.f32 %v11712, %v11713
    %v11738 = vmax.f32 %v11714, %v11715
    %v11739 = vmax.f32 %v11716, %v11717
    %v11740 = vmax.f32 %v11718, %v11719
    %v11741 = vmax.f32 %v11720, %v11721
    %v11742 = vmax.f32 %v11722, %v11723
    %v11743 = vmax.f32 %v11724, %v11725
    %v11744 = vmax.f32 %v11726, %v11727
    %v11745 = vmax.f32 %v11728, %v11729
    %v11746 = vmax.f32 %v11730, 0.0
    %v11747 = vmax.f32 %v11731, 0.0
    %v11748 = vmax.f32 %v11732, 0.0
    %v11749 = vmax.f32 %v11733, 0.0
    %v11750 = vmax.f32 %v11734, 0.0
    %v11751 = vmax.f32 %v11735, 0.0
    %v11752 = vmax.f32 %v11736, 0.0
    %v11753 = vmax.f32 %v11737, 0.0
    %v11754 = vmax.f32 %v11738, 0.0
    %v11755 = vmax.f32 %v11739, 0.0
    %v11756 = vmax.f32 %v11740, 0.0
    %v11757 = vmax.f32 %v11741, 0.0
    %v11758 = vmax.f32 %v11742, 0.0
    %v11759 = vmax.f32 %v11743, 0.0
    %v11760 = vmax.f32 %v11744, 0.0
    %v11761 = vmax.f32 %v11745, 0.0
    %v11762 = vld [vmem:[%s5] sm:$0xff]
    %v11763 = vld [vmem:[%s5 + $0x8] sm:$0xff]
    %v11764 = vld [vmem:[%s5 + $0x10] sm:$0xff]
    %v11765 = vld [vmem:[%s5 + $0x18] sm:$0xff]
    %v11766 = vld [vmem:[%s5 + $0x20] sm:$0xff]
    %v11767 = vld [vmem:[%s5 + $0x28] sm:$0xff]
    %v11768 = vld [vmem:[%s5 + $0x30] sm:$0xff]
    %v11769 = vld [vmem:[%s5 + $0x38] sm:$0xff]
    %v11770 = vld [vmem:[%s5 + $0x40] sm:$0xff]
    %v11771 = vld [vmem:[%s5 + $0x48] sm:$0xff]
    %v11772 = vld [vmem:[%s5 + $0x50] sm:$0xff]
    %v11773 = vld [vmem:[%s5 + $0x58] sm:$0xff]
    %v11774 = vld [vmem:[%s5 + $0x60] sm:$0xff]
    %v11775 = vld [vmem:[%s5 + $0x68] sm:$0xff]
    %v11776 = vld [vmem:[%s5 + $0x70] sm:$0xff]
    %v11777 = vld [vmem:[%s5 + $0x78] sm:$0xff]
    %s11778 = scalar_lea.vmem %s5, 128
    %v11779 = vld [vmem:[%s11778] sm:$0xff]
    %v11780 = vld [vmem:[%s11778 + $0x8] sm:$0xff]
    %v11781 = vld [vmem:[%s11778 + $0x10] sm:$0xff]
    %v11782 = vld [vmem:[%s11778 + $0x18] sm:$0xff]
    %v11783 = vld [vmem:[%s11778 + $0x20] sm:$0xff]
    %v11784 = vld [vmem:[%s11778 + $0x28] sm:$0xff]
    %v11785 = vld [vmem:[%s11778 + $0x30] sm:$0xff]
    %v11786 = vld [vmem:[%s11778 + $0x38] sm:$0xff]
    %v11787 = vld [vmem:[%s11778 + $0x40] sm:$0xff]
    %v11788 = vld [vmem:[%s11778 + $0x48] sm:$0xff]
    %v11789 = vld [vmem:[%s11778 + $0x50] sm:$0xff]
    %v11790 = vld [vmem:[%s11778 + $0x58] sm:$0xff]
    %v11791 = vld [vmem:[%s11778 + $0x60] sm:$0xff]
    %v11792 = vld [vmem:[%s11778 + $0x68] sm:$0xff]
    %v11793 = vld [vmem:[%s11778 + $0x70] sm:$0xff]
    %v11794 = vld [vmem:[%s11778 + $0x78] sm:$0xff]
    %v11797 = vcombine.low %v11747, %v11755
    %v11799 = vunpack.c.l.s4 1966171168
    %v11800 = vunpack.c.0.s8 %v11799
    %v11801 = vlaneseq
    %v11802 = vshrl.u32 %v11801, 7
    %v11803 = vsub.s32 %v11800, %v11802
    %v11804 = vrot.slane %v11797, %v11803
    %v11806 = vunpack.c.l.s4 1966171168
    %v11807 = vunpack.c.0.s8 %v11806
    %v11808 = vlaneseq
    %v11809 = vshrl.u32 %v11808, 7
    %v11810 = vsub.s32 %v11807, %v11809
    %v11811 = vrot.slane %v11804, %v11810
    %11813 = vmatprep.subr.mxu0 0.0
    %11814 = vmatpush1.msra.mxu0 %v11779
    %11815 = vmatprep.subr.mxu0 0.0
    %11816 = vmatpush1.msra.mxu0 %v11780
    %11817 = vmatprep.subr.mxu0 0.0
    %11818 = vmatpush1.msra.mxu0 %v11781
    %11819 = vmatprep.subr.mxu0 0.0
    %11820 = vmatpush1.msra.mxu0 %v11782
    %11821 = vmatprep.subr.mxu0 0.0
    %11822 = vmatpush1.msra.mxu0 %v11783
    %11823 = vmatprep.subr.mxu0 0.0
    %11824 = vmatpush1.msra.mxu0 %v11784
    %11825 = vmatprep.subr.mxu0 0.0
    %11826 = vmatpush1.msra.mxu0 %v11785
    %11827 = vmatprep.subr.mxu0 0.0
    %11828 = vmatpush1.msra.mxu0 %v11786
    %11829 = vmatprep.subr.mxu0 0.0
    %11830 = vmatpush1.msra.mxu0 %v11787
    %11831 = vmatprep.subr.mxu0 0.0
    %11832 = vmatpush1.msra.mxu0 %v11788
    %11833 = vmatprep.subr.mxu0 0.0
    %11834 = vmatpush1.msra.mxu0 %v11789
    %11835 = vmatprep.subr.mxu0 0.0
    %11836 = vmatpush1.msra.mxu0 %v11790
    %11837 = vmatprep.subr.mxu0 0.0
    %11838 = vmatpush1.msra.mxu0 %v11791
    %11839 = vmatprep.subr.mxu0 0.0
    %11840 = vmatpush1.msra.mxu0 %v11792
    %11841 = vmatprep.subr.mxu0 0.0
    %11842 = vmatpush1.msra.mxu0 %v11793
    %11843 = vmatprep.subr.mxu0 0.0
    %11844 = vmatpush1.msra.mxu0 %v11794
    %11845 = vmatprep.subr.mxu0 0.0
    %11846 = vmatpush1.msra.mxu0 0.0
    %11847 = vmatprep.subr.mxu0 0.0
    %11848 = vmatpush1.msra.mxu0 0.0
    %11849 = vmatprep.subr.mxu0 0.0
    %11850 = vmatpush1.msra.mxu0 0.0
    %11851 = vmatprep.subr.mxu0 0.0
    %11852 = vmatpush1.msra.mxu0 0.0
    %11853 = vmatprep.subr.mxu0 0.0
    %11854 = vmatpush1.msra.mxu0 0.0
    %11855 = vmatprep.subr.mxu0 0.0
    %11856 = vmatpush1.msra.mxu0 0.0
    %11857 = vmatprep.subr.mxu0 0.0
    %11858 = vmatpush1.msra.mxu0 0.0
    %11859 = vmatprep.subr.mxu0 0.0
    %11860 = vmatpush1.msra.mxu0 0.0
    %11861 = vmatprep.subr.mxu0 0.0
    %11862 = vmatpush1.msra.mxu0 0.0
    %11863 = vmatprep.subr.mxu0 0.0
    %11864 = vmatpush1.msra.mxu0 0.0
    %11865 = vmatprep.subr.mxu0 0.0
    %11866 = vmatpush1.msra.mxu0 0.0
    %11867 = vmatprep.subr.mxu0 0.0
    %11868 = vmatpush1.msra.mxu0 0.0
    %11869 = vmatprep.subr.mxu0 0.0
    %11870 = vmatpush1.msra.mxu0 0.0
    %11871 = vmatprep.subr.mxu0 0.0
    %11872 = vmatpush1.msra.mxu0 0.0
    %11873 = vmatprep.subr.mxu0 0.0
    %11874 = vmatpush1.msra.mxu0 0.0
    %11875 = vmatprep.subr.mxu0 0.0
    %11876 = vmatpush1.msra.mxu0 0.0
    %11877 = vmatprep.mubr.f32.mxu0 0.0
    %11878 = vmatmul.mubr.f32.gmra.mrb[0].mxu0 %v11811
    %v11879 = vpop.f32.mrb[0].mxu0
    %v11880 = vadd.f32 0.0, %v11879
    %v11881 = vpop.f32.mrb[0].mxu0
    %11882 = vdwg.mxu0
    %v11885 = vcombine.low %v11746, %v11754
    %v11887 = vunpack.c.l.s4 1966171168
    %v11888 = vunpack.c.0.s8 %v11887
    %v11889 = vlaneseq
    %v11890 = vshrl.u32 %v11889, 7
    %v11891 = vsub.s32 %v11888, %v11890
    %v11892 = vrot.slane %v11885, %v11891
    %v11894 = vunpack.c.l.s4 1966171168
    %v11895 = vunpack.c.0.s8 %v11894
    %v11896 = vlaneseq
    %v11897 = vshrl.u32 %v11896, 7
    %v11898 = vsub.s32 %v11895, %v11897
    %v11899 = vrot.slane %v11892, %v11898
    %11901 = vmatprep.subr.mxu0 0.0
    %11902 = vmatpush1.msra.mxu0 %v11762
    %11903 = vmatprep.subr.mxu0 0.0
    %11904 = vmatpush1.msra.mxu0 %v11763
    %11905 = vmatprep.subr.mxu0 0.0
    %11906 = vmatpush1.msra.mxu0 %v11764
    %11907 = vmatprep.subr.mxu0 0.0
    %11908 = vmatpush1.msra.mxu0 %v11765
    %11909 = vmatprep.subr.mxu0 0.0
    %11910 = vmatpush1.msra.mxu0 %v11766
    %11911 = vmatprep.subr.mxu0 0.0
    %11912 = vmatpush1.msra.mxu0 %v11767
    %11913 = vmatprep.subr.mxu0 0.0
    %11914 = vmatpush1.msra.mxu0 %v11768
    %11915 = vmatprep.subr.mxu0 0.0
    %11916 = vmatpush1.msra.mxu0 %v11769
    %11917 = vmatprep.subr.mxu0 0.0
    %11918 = vmatpush1.msra.mxu0 %v11770
    %11919 = vmatprep.subr.mxu0 0.0
    %11920 = vmatpush1.msra.mxu0 %v11771
    %11921 = vmatprep.subr.mxu0 0.0
    %11922 = vmatpush1.msra.mxu0 %v11772
    %11923 = vmatprep.subr.mxu0 0.0
    %11924 = vmatpush1.msra.mxu0 %v11773
    %11925 = vmatprep.subr.mxu0 0.0
    %11926 = vmatpush1.msra.mxu0 %v11774
    %11927 = vmatprep.subr.mxu0 0.0
    %11928 = vmatpush1.msra.mxu0 %v11775
    %11929 = vmatprep.subr.mxu0 0.0
    %11930 = vmatpush1.msra.mxu0 %v11776
    %11931 = vmatprep.subr.mxu0 0.0
    %11932 = vmatpush1.msra.mxu0 %v11777
    %11933 = vmatprep.subr.mxu0 0.0
    %11934 = vmatpush1.msra.mxu0 0.0
    %11935 = vmatprep.subr.mxu0 0.0
    %11936 = vmatpush1.msra.mxu0 0.0
    %11937 = vmatprep.subr.mxu0 0.0
    %11938 = vmatpush1.msra.mxu0 0.0
    %11939 = vmatprep.subr.mxu0 0.0
    %11940 = vmatpush1.msra.mxu0 0.0
    %11941 = vmatprep.subr.mxu0 0.0
    %11942 = vmatpush1.msra.mxu0 0.0
    %11943 = vmatprep.subr.mxu0 0.0
    %11944 = vmatpush1.msra.mxu0 0.0
    %11945 = vmatprep.subr.mxu0 0.0
    %11946 = vmatpush1.msra.mxu0 0.0
    %11947 = vmatprep.subr.mxu0 0.0
    %11948 = vmatpush1.msra.mxu0 0.0
    %11949 = vmatprep.subr.mxu0 0.0
    %11950 = vmatpush1.msra.mxu0 0.0
    %11951 = vmatprep.subr.mxu0 0.0
    %11952 = vmatpush1.msra.mxu0 0.0
    %11953 = vmatprep.subr.mxu0 0.0
    %11954 = vmatpush1.msra.mxu0 0.0
    %11955 = vmatprep.subr.mxu0 0.0
    %11956 = vmatpush1.msra.mxu0 0.0
    %11957 = vmatprep.subr.mxu0 0.0
    %11958 = vmatpush1.msra.mxu0 0.0
    %11959 = vmatprep.subr.mxu0 0.0
    %11960 = vmatpush1.msra.mxu0 0.0
    %11961 = vmatprep.subr.mxu0 0.0
    %11962 = vmatpush1.msra.mxu0 0.0
    %11963 = vmatprep.subr.mxu0 0.0
    %11964 = vmatpush1.msra.mxu0 0.0
    %11965 = vmatprep.mubr.f32.mxu0 0.0
    %11966 = vmatmul.mubr.f32.gmra.mrb[0].mxu0 %v11899
    %v11967 = vpop.f32.mrb[0].mxu0
    %v11968 = vadd.f32 %v11880, %v11967
    %v11969 = vpop.f32.mrb[0].mxu0
    %11970 = vdwg.mxu0
    %s11971 = scalar_lea.vmem %s5, 256
    %v11972 = vld [vmem:[%s11971] sm:$0xff]
    %v11973 = vld [vmem:[%s11971 + $0x8] sm:$0xff]
    %v11974 = vld [vmem:[%s11971 + $0x10] sm:$0xff]
    %v11975 = vld [vmem:[%s11971 + $0x18] sm:$0xff]
    %v11976 = vld [vmem:[%s11971 + $0x20] sm:$0xff]
    %v11977 = vld [vmem:[%s11971 + $0x28] sm:$0xff]
    %v11978 = vld [vmem:[%s11971 + $0x30] sm:$0xff]
    %v11979 = vld [vmem:[%s11971 + $0x38] sm:$0xff]
    %v11980 = vld [vmem:[%s11971 + $0x40] sm:$0xff]
    %v11981 = vld [vmem:[%s11971 + $0x48] sm:$0xff]
    %v11982 = vld [vmem:[%s11971 + $0x50] sm:$0xff]
    %v11983 = vld [vmem:[%s11971 + $0x58] sm:$0xff]
    %v11984 = vld [vmem:[%s11971 + $0x60] sm:$0xff]
    %v11985 = vld [vmem:[%s11971 + $0x68] sm:$0xff]
    %v11986 = vld [vmem:[%s11971 + $0x70] sm:$0xff]
    %v11987 = vld [vmem:[%s11971 + $0x78] sm:$0xff]
    %v11990 = vcombine.low %v11748, %v11756
    %v11992 = vunpack.c.l.s4 1966171168
    %v11993 = vunpack.c.0.s8 %v11992
    %v11994 = vlaneseq
    %v11995 = vshrl.u32 %v11994, 7
    %v11996 = vsub.s32 %v11993, %v11995
    %v11997 = vrot.slane %v11990, %v11996
    %v11999 = vunpack.c.l.s4 1966171168
    %v12000 = vunpack.c.0.s8 %v11999
    %v12001 = vlaneseq
    %v12002 = vshrl.u32 %v12001, 7
    %v12003 = vsub.s32 %v12000, %v12002
    %v12004 = vrot.slane %v11997, %v12003
    %12006 = vmatprep.subr.mxu0 0.0
    %12007 = vmatpush1.msra.mxu0 %v11972
    %12008 = vmatprep.subr.mxu0 0.0
    %12009 = vmatpush1.msra.mxu0 %v11973
    %12010 = vmatprep.subr.mxu0 0.0
    %12011 = vmatpush1.msra.mxu0 %v11974
    %12012 = vmatprep.subr.mxu0 0.0
    %12013 = vmatpush1.msra.mxu0 %v11975
    %12014 = vmatprep.subr.mxu0 0.0
    %12015 = vmatpush1.msra.mxu0 %v11976
    %12016 = vmatprep.subr.mxu0 0.0
    %12017 = vmatpush1.msra.mxu0 %v11977
    %12018 = vmatprep.subr.mxu0 0.0
    %12019 = vmatpush1.msra.mxu0 %v11978
    %12020 = vmatprep.subr.mxu0 0.0
    %12021 = vmatpush1.msra.mxu0 %v11979
    %12022 = vmatprep.subr.mxu0 0.0
    %12023 = vmatpush1.msra.mxu0 %v11980
    %12024 = vmatprep.subr.mxu0 0.0
    %12025 = vmatpush1.msra.mxu0 %v11981
    %12026 = vmatprep.subr.mxu0 0.0
    %12027 = vmatpush1.msra.mxu0 %v11982
    %12028 = vmatprep.subr.mxu0 0.0
    %12029 = vmatpush1.msra.mxu0 %v11983
    %12030 = vmatprep.subr.mxu0 0.0
    %12031 = vmatpush1.msra.mxu0 %v11984
    %12032 = vmatprep.subr.mxu0 0.0
    %12033 = vmatpush1.msra.mxu0 %v11985
    %12034 = vmatprep.subr.mxu0 0.0
    %12035 = vmatpush1.msra.mxu0 %v11986
    %12036 = vmatprep.subr.mxu0 0.0
    %12037 = vmatpush1.msra.mxu0 %v11987
    %12038 = vmatprep.subr.mxu0 0.0
    %12039 = vmatpush1.msra.mxu0 0.0
    %12040 = vmatprep.subr.mxu0 0.0
    %12041 = vmatpush1.msra.mxu0 0.0
    %12042 = vmatprep.subr.mxu0 0.0
    %12043 = vmatpush1.msra.mxu0 0.0
    %12044 = vmatprep.subr.mxu0 0.0
    %12045 = vmatpush1.msra.mxu0 0.0
    %12046 = vmatprep.subr.mxu0 0.0
    %12047 = vmatpush1.msra.mxu0 0.0
    %12048 = vmatprep.subr.mxu0 0.0
    %12049 = vmatpush1.msra.mxu0 0.0
    %12050 = vmatprep.subr.mxu0 0.0
    %12051 = vmatpush1.msra.mxu0 0.0
    %12052 = vmatprep.subr.mxu0 0.0
    %12053 = vmatpush1.msra.mxu0 0.0
    %12054 = vmatprep.subr.mxu0 0.0
    %12055 = vmatpush1.msra.mxu0 0.0
    %12056 = vmatprep.subr.mxu0 0.0
    %12057 = vmatpush1.msra.mxu0 0.0
    %12058 = vmatprep.subr.mxu0 0.0
    %12059 = vmatpush1.msra.mxu0 0.0
    %12060 = vmatprep.subr.mxu0 0.0
    %12061 = vmatpush1.msra.mxu0 0.0
    %12062 = vmatprep.subr.mxu0 0.0
    %12063 = vmatpush1.msra.mxu0 0.0
    %12064 = vmatprep.subr.mxu0 0.0
    %12065 = vmatpush1.msra.mxu0 0.0
    %12066 = vmatprep.subr.mxu0 0.0
    %12067 = vmatpush1.msra.mxu0 0.0
    %12068 = vmatprep.subr.mxu0 0.0
    %12069 = vmatpush1.msra.mxu0 0.0
    %12070 = vmatprep.mubr.f32.mxu0 0.0
    %12071 = vmatmul.mubr.f32.gmra.mrb[0].mxu0 %v12004
    %v12072 = vpop.f32.mrb[0].mxu0
    %v12073 = vadd.f32 0.0, %v12072
    %v12074 = vpop.f32.mrb[0].mxu0
    %12075 = vdwg.mxu0
    %v12076 = vadd.f32 %v11968, %v12073
    %s12077 = scalar_lea.vmem %s5, 384
    %v12078 = vld [vmem:[%s12077] sm:$0xff]
    %v12079 = vld [vmem:[%s12077 + $0x8] sm:$0xff]
    %v12080 = vld [vmem:[%s12077 + $0x10] sm:$0xff]
    %v12081 = vld [vmem:[%s12077 + $0x18] sm:$0xff]
    %v12082 = vld [vmem:[%s12077 + $0x20] sm:$0xff]
    %v12083 = vld [vmem:[%s12077 + $0x28] sm:$0xff]
    %v12084 = vld [vmem:[%s12077 + $0x30] sm:$0xff]
    %v12085 = vld [vmem:[%s12077 + $0x38] sm:$0xff]
    %v12086 = vld [vmem:[%s12077 + $0x40] sm:$0xff]
    %v12087 = vld [vmem:[%s12077 + $0x48] sm:$0xff]
    %v12088 = vld [vmem:[%s12077 + $0x50] sm:$0xff]
    %v12089 = vld [vmem:[%s12077 + $0x58] sm:$0xff]
    %v12090 = vld [vmem:[%s12077 + $0x60] sm:$0xff]
    %v12091 = vld [vmem:[%s12077 + $0x68] sm:$0xff]
    %v12092 = vld [vmem:[%s12077 + $0x70] sm:$0xff]
    %v12093 = vld [vmem:[%s12077 + $0x78] sm:$0xff]
    %v12096 = vcombine.low %v11749, %v11757
    %v12098 = vunpack.c.l.s4 1966171168
    %v12099 = vunpack.c.0.s8 %v12098
    %v12100 = vlaneseq
    %v12101 = vshrl.u32 %v12100, 7
    %v12102 = vsub.s32 %v12099, %v12101
    %v12103 = vrot.slane %v12096, %v12102
    %v12105 = vunpack.c.l.s4 1966171168
    %v12106 = vunpack.c.0.s8 %v12105
    %v12107 = vlaneseq
    %v12108 = vshrl.u32 %v12107, 7
    %v12109 = vsub.s32 %v12106, %v12108
    %v12110 = vrot.slane %v12103, %v12109
    %12112 = vmatprep.subr.mxu0 0.0
    %12113 = vmatpush1.msra.mxu0 %v12078
    %12114 = vmatprep.subr.mxu0 0.0
    %12115 = vmatpush1.msra.mxu0 %v12079
    %12116 = vmatprep.subr.mxu0 0.0
    %12117 = vmatpush1.msra.mxu0 %v12080
    %12118 = vmatprep.subr.mxu0 0.0
    %12119 = vmatpush1.msra.mxu0 %v12081
    %12120 = vmatprep.subr.mxu0 0.0
    %12121 = vmatpush1.msra.mxu0 %v12082
    %12122 = vmatprep.subr.mxu0 0.0
    %12123 = vmatpush1.msra.mxu0 %v12083
    %12124 = vmatprep.subr.mxu0 0.0
    %12125 = vmatpush1.msra.mxu0 %v12084
    %12126 = vmatprep.subr.mxu0 0.0
    %12127 = vmatpush1.msra.mxu0 %v12085
    %12128 = vmatprep.subr.mxu0 0.0
    %12129 = vmatpush1.msra.mxu0 %v12086
    %12130 = vmatprep.subr.mxu0 0.0
    %12131 = vmatpush1.msra.mxu0 %v12087
    %12132 = vmatprep.subr.mxu0 0.0
    %12133 = vmatpush1.msra.mxu0 %v12088
    %12134 = vmatprep.subr.mxu0 0.0
    %12135 = vmatpush1.msra.mxu0 %v12089
    %12136 = vmatprep.subr.mxu0 0.0
    %12137 = vmatpush1.msra.mxu0 %v12090
    %12138 = vmatprep.subr.mxu0 0.0
    %12139 = vmatpush1.msra.mxu0 %v12091
    %12140 = vmatprep.subr.mxu0 0.0
    %12141 = vmatpush1.msra.mxu0 %v12092
    %12142 = vmatprep.subr.mxu0 0.0
    %12143 = vmatpush1.msra.mxu0 %v12093
    %12144 = vmatprep.subr.mxu0 0.0
    %12145 = vmatpush1.msra.mxu0 0.0
    %12146 = vmatprep.subr.mxu0 0.0
    %12147 = vmatpush1.msra.mxu0 0.0
    %12148 = vmatprep.subr.mxu0 0.0
    %12149 = vmatpush1.msra.mxu0 0.0
    %12150 = vmatprep.subr.mxu0 0.0
    %12151 = vmatpush1.msra.mxu0 0.0
    %12152 = vmatprep.subr.mxu0 0.0
    %12153 = vmatpush1.msra.mxu0 0.0
    %12154 = vmatprep.subr.mxu0 0.0
    %12155 = vmatpush1.msra.mxu0 0.0
    %12156 = vmatprep.subr.mxu0 0.0
    %12157 = vmatpush1.msra.mxu0 0.0
    %12158 = vmatprep.subr.mxu0 0.0
    %12159 = vmatpush1.msra.mxu0 0.0
    %12160 = vmatprep.subr.mxu0 0.0
    %12161 = vmatpush1.msra.mxu0 0.0
    %12162 = vmatprep.subr.mxu0 0.0
    %12163 = vmatpush1.msra.mxu0 0.0
    %12164 = vmatprep.subr.mxu0 0.0
    %12165 = vmatpush1.msra.mxu0 0.0
    %12166 = vmatprep.subr.mxu0 0.0
    %12167 = vmatpush1.msra.mxu0 0.0
    %12168 = vmatprep.subr.mxu0 0.0
    %12169 = vmatpush1.msra.mxu0 0.0
    %12170 = vmatprep.subr.mxu0 0.0
    %12171 = vmatpush1.msra.mxu0 0.0
    %12172 = vmatprep.subr.mxu0 0.0
    %12173 = vmatpush1.msra.mxu0 0.0
    %12174 = vmatprep.subr.mxu0 0.0
    %12175 = vmatpush1.msra.mxu0 0.0
    %12176 = vmatprep.mubr.f32.mxu0 0.0
    %12177 = vmatmul.mubr.f32.gmra.mrb[0].mxu0 %v12110
    %v12178 = vpop.f32.mrb[0].mxu0
    %v12179 = vadd.f32 0.0, %v12178
    %v12180 = vpop.f32.mrb[0].mxu0
    %12181 = vdwg.mxu0
    %v12182 = vadd.f32 %v12076, %v12179
    %s12183 = scalar_lea.vmem %s5, 512
    %v12184 = vld [vmem:[%s12183] sm:$0xff]
    %v12185 = vld [vmem:[%s12183 + $0x8] sm:$0xff]
    %v12186 = vld [vmem:[%s12183 + $0x10] sm:$0xff]
    %v12187 = vld [vmem:[%s12183 + $0x18] sm:$0xff]
    %v12188 = vld [vmem:[%s12183 + $0x20] sm:$0xff]
    %v12189 = vld [vmem:[%s12183 + $0x28] sm:$0xff]
    %v12190 = vld [vmem:[%s12183 + $0x30] sm:$0xff]
    %v12191 = vld [vmem:[%s12183 + $0x38] sm:$0xff]
    %v12192 = vld [vmem:[%s12183 + $0x40] sm:$0xff]
    %v12193 = vld [vmem:[%s12183 + $0x48] sm:$0xff]
    %v12194 = vld [vmem:[%s12183 + $0x50] sm:$0xff]
    %v12195 = vld [vmem:[%s12183 + $0x58] sm:$0xff]
    %v12196 = vld [vmem:[%s12183 + $0x60] sm:$0xff]
    %v12197 = vld [vmem:[%s12183 + $0x68] sm:$0xff]
    %v12198 = vld [vmem:[%s12183 + $0x70] sm:$0xff]
    %v12199 = vld [vmem:[%s12183 + $0x78] sm:$0xff]
    %v12202 = vcombine.low %v11750, %v11758
    %v12204 = vunpack.c.l.s4 1966171168
    %v12205 = vunpack.c.0.s8 %v12204
    %v12206 = vlaneseq
    %v12207 = vshrl.u32 %v12206, 7
    %v12208 = vsub.s32 %v12205, %v12207
    %v12209 = vrot.slane %v12202, %v12208
    %v12211 = vunpack.c.l.s4 1966171168
    %v12212 = vunpack.c.0.s8 %v12211
    %v12213 = vlaneseq
    %v12214 = vshrl.u32 %v12213, 7
    %v12215 = vsub.s32 %v12212, %v12214
    %v12216 = vrot.slane %v12209, %v12215
    %12218 = vmatprep.subr.mxu0 0.0
    %12219 = vmatpush1.msra.mxu0 %v12184
    %12220 = vmatprep.subr.mxu0 0.0
    %12221 = vmatpush1.msra.mxu0 %v12185
    %12222 = vmatprep.subr.mxu0 0.0
    %12223 = vmatpush1.msra.mxu0 %v12186
    %12224 = vmatprep.subr.mxu0 0.0
    %12225 = vmatpush1.msra.mxu0 %v12187
    %12226 = vmatprep.subr.mxu0 0.0
    %12227 = vmatpush1.msra.mxu0 %v12188
    %12228 = vmatprep.subr.mxu0 0.0
    %12229 = vmatpush1.msra.mxu0 %v12189
    %12230 = vmatprep.subr.mxu0 0.0
    %12231 = vmatpush1.msra.mxu0 %v12190
    %12232 = vmatprep.subr.mxu0 0.0
    %12233 = vmatpush1.msra.mxu0 %v12191
    %12234 = vmatprep.subr.mxu0 0.0
    %12235 = vmatpush1.msra.mxu0 %v12192
    %12236 = vmatprep.subr.mxu0 0.0
    %12237 = vmatpush1.msra.mxu0 %v12193
    %12238 = vmatprep.subr.mxu0 0.0
    %12239 = vmatpush1.msra.mxu0 %v12194
    %12240 = vmatprep.subr.mxu0 0.0
    %12241 = vmatpush1.msra.mxu0 %v12195
    %12242 = vmatprep.subr.mxu0 0.0
    %12243 = vmatpush1.msra.mxu0 %v12196
    %12244 = vmatprep.subr.mxu0 0.0
    %12245 = vmatpush1.msra.mxu0 %v12197
    %12246 = vmatprep.subr.mxu0 0.0
    %12247 = vmatpush1.msra.mxu0 %v12198
    %12248 = vmatprep.subr.mxu0 0.0
    %12249 = vmatpush1.msra.mxu0 %v12199
    %12250 = vmatprep.subr.mxu0 0.0
    %12251 = vmatpush1.msra.mxu0 0.0
    %12252 = vmatprep.subr.mxu0 0.0
    %12253 = vmatpush1.msra.mxu0 0.0
    %12254 = vmatprep.subr.mxu0 0.0
    %12255 = vmatpush1.msra.mxu0 0.0
    %12256 = vmatprep.subr.mxu0 0.0
    %12257 = vmatpush1.msra.mxu0 0.0
    %12258 = vmatprep.subr.mxu0 0.0
    %12259 = vmatpush1.msra.mxu0 0.0
    %12260 = vmatprep.subr.mxu0 0.0
    %12261 = vmatpush1.msra.mxu0 0.0
    %12262 = vmatprep.subr.mxu0 0.0
    %12263 = vmatpush1.msra.mxu0 0.0
    %12264 = vmatprep.subr.mxu0 0.0
    %12265 = vmatpush1.msra.mxu0 0.0
    %12266 = vmatprep.subr.mxu0 0.0
    %12267 = vmatpush1.msra.mxu0 0.0
    %12268 = vmatprep.subr.mxu0 0.0
    %12269 = vmatpush1.msra.mxu0 0.0
    %12270 = vmatprep.subr.mxu0 0.0
    %12271 = vmatpush1.msra.mxu0 0.0
    %12272 = vmatprep.subr.mxu0 0.0
    %12273 = vmatpush1.msra.mxu0 0.0
    %12274 = vmatprep.subr.mxu0 0.0
    %12275 = vmatpush1.msra.mxu0 0.0
    %12276 = vmatprep.subr.mxu0 0.0
    %12277 = vmatpush1.msra.mxu0 0.0
    %12278 = vmatprep.subr.mxu0 0.0
    %12279 = vmatpush1.msra.mxu0 0.0
    %12280 = vmatprep.subr.mxu0 0.0
    %12281 = vmatpush1.msra.mxu0 0.0
    %12282 = vmatprep.mubr.f32.mxu0 0.0
    %12283 = vmatmul.mubr.f32.gmra.mrb[0].mxu0 %v12216
    %v12284 = vpop.f32.mrb[0].mxu0
    %v12285 = vadd.f32 0.0, %v12284
    %v12286 = vpop.f32.mrb[0].mxu0
    %12287 = vdwg.mxu0
    %v12288 = vadd.f32 %v12182, %v12285
    %s12289 = scalar_lea.vmem %s5, 640
    %v12290 = vld [vmem:[%s12289] sm:$0xff]
    %v12291 = vld [vmem:[%s12289 + $0x8] sm:$0xff]
    %v12292 = vld [vmem:[%s12289 + $0x10] sm:$0xff]
    %v12293 = vld [vmem:[%s12289 + $0x18] sm:$0xff]
    %v12294 = vld [vmem:[%s12289 + $0x20] sm:$0xff]
    %v12295 = vld [vmem:[%s12289 + $0x28] sm:$0xff]
    %v12296 = vld [vmem:[%s12289 + $0x30] sm:$0xff]
    %v12297 = vld [vmem:[%s12289 + $0x38] sm:$0xff]
    %v12298 = vld [vmem:[%s12289 + $0x40] sm:$0xff]
    %v12299 = vld [vmem:[%s12289 + $0x48] sm:$0xff]
    %v12300 = vld [vmem:[%s12289 + $0x50] sm:$0xff]
    %v12301 = vld [vmem:[%s12289 + $0x58] sm:$0xff]
    %v12302 = vld [vmem:[%s12289 + $0x60] sm:$0xff]
    %v12303 = vld [vmem:[%s12289 + $0x68] sm:$0xff]
    %v12304 = vld [vmem:[%s12289 + $0x70] sm:$0xff]
    %v12305 = vld [vmem:[%s12289 + $0x78] sm:$0xff]
    %v12308 = vcombine.low %v11751, %v11759
    %v12310 = vunpack.c.l.s4 1966171168
    %v12311 = vunpack.c.0.s8 %v12310
    %v12312 = vlaneseq
    %v12313 = vshrl.u32 %v12312, 7
    %v12314 = vsub.s32 %v12311, %v12313
    %v12315 = vrot.slane %v12308, %v12314
    %v12317 = vunpack.c.l.s4 1966171168
    %v12318 = vunpack.c.0.s8 %v12317
    %v12319 = vlaneseq
    %v12320 = vshrl.u32 %v12319, 7
    %v12321 = vsub.s32 %v12318, %v12320
    %v12322 = vrot.slane %v12315, %v12321
    %12324 = vmatprep.subr.mxu0 0.0
    %12325 = vmatpush1.msra.mxu0 %v12290
    %12326 = vmatprep.subr.mxu0 0.0
    %12327 = vmatpush1.msra.mxu0 %v12291
    %12328 = vmatprep.subr.mxu0 0.0
    %12329 = vmatpush1.msra.mxu0 %v12292
    %12330 = vmatprep.subr.mxu0 0.0
    %12331 = vmatpush1.msra.mxu0 %v12293
    %12332 = vmatprep.subr.mxu0 0.0
    %12333 = vmatpush1.msra.mxu0 %v12294
    %12334 = vmatprep.subr.mxu0 0.0
    %12335 = vmatpush1.msra.mxu0 %v12295
    %12336 = vmatprep.subr.mxu0 0.0
    %12337 = vmatpush1.msra.mxu0 %v12296
    %12338 = vmatprep.subr.mxu0 0.0
    %12339 = vmatpush1.msra.mxu0 %v12297
    %12340 = vmatprep.subr.mxu0 0.0
    %12341 = vmatpush1.msra.mxu0 %v12298
    %12342 = vmatprep.subr.mxu0 0.0
    %12343 = vmatpush1.msra.mxu0 %v12299
    %12344 = vmatprep.subr.mxu0 0.0
    %12345 = vmatpush1.msra.mxu0 %v12300
    %12346 = vmatprep.subr.mxu0 0.0
    %12347 = vmatpush1.msra.mxu0 %v12301
    %12348 = vmatprep.subr.mxu0 0.0
    %12349 = vmatpush1.msra.mxu0 %v12302
    %12350 = vmatprep.subr.mxu0 0.0
    %12351 = vmatpush1.msra.mxu0 %v12303
    %12352 = vmatprep.subr.mxu0 0.0
    %12353 = vmatpush1.msra.mxu0 %v12304
    %12354 = vmatprep.subr.mxu0 0.0
    %12355 = vmatpush1.msra.mxu0 %v12305
    %12356 = vmatprep.subr.mxu0 0.0
    %12357 = vmatpush1.msra.mxu0 0.0
    %12358 = vmatprep.subr.mxu0 0.0
    %12359 = vmatpush1.msra.mxu0 0.0
    %12360 = vmatprep.subr.mxu0 0.0
    %12361 = vmatpush1.msra.mxu0 0.0
    %12362 = vmatprep.subr.mxu0 0.0
    %12363 = vmatpush1.msra.mxu0 0.0
    %12364 = vmatprep.subr.mxu0 0.0
    %12365 = vmatpush1.msra.mxu0 0.0
    %12366 = vmatprep.subr.mxu0 0.0
    %12367 = vmatpush1.msra.mxu0 0.0
    %12368 = vmatprep.subr.mxu0 0.0
    %12369 = vmatpush1.msra.mxu0 0.0
    %12370 = vmatprep.subr.mxu0 0.0
    %12371 = vmatpush1.msra.mxu0 0.0
    %12372 = vmatprep.subr.mxu0 0.0
    %12373 = vmatpush1.msra.mxu0 0.0
    %12374 = vmatprep.subr.mxu0 0.0
    %12375 = vmatpush1.msra.mxu0 0.0
    %12376 = vmatprep.subr.mxu0 0.0
    %12377 = vmatpush1.msra.mxu0 0.0
    %12378 = vmatprep.subr.mxu0 0.0
    %12379 = vmatpush1.msra.mxu0 0.0
    %12380 = vmatprep.subr.mxu0 0.0
    %12381 = vmatpush1.msra.mxu0 0.0
    %12382 = vmatprep.subr.mxu0 0.0
    %12383 = vmatpush1.msra.mxu0 0.0
    %12384 = vmatprep.subr.mxu0 0.0
    %12385 = vmatpush1.msra.mxu0 0.0
    %12386 = vmatprep.subr.mxu0 0.0
    %12387 = vmatpush1.msra.mxu0 0.0
    %12388 = vmatprep.mubr.f32.mxu0 0.0
    %12389 = vmatmul.mubr.f32.gmra.mrb[0].mxu0 %v12322
    %v12390 = vpop.f32.mrb[0].mxu0
    %v12391 = vadd.f32 0.0, %v12390
    %v12392 = vpop.f32.mrb[0].mxu0
    %12393 = vdwg.mxu0
    %v12394 = vadd.f32 %v12288, %v12391
    %s12395 = scalar_lea.vmem %s5, 768
    %v12396 = vld [vmem:[%s12395] sm:$0xff]
    %v12397 = vld [vmem:[%s12395 + $0x8] sm:$0xff]
    %v12398 = vld [vmem:[%s12395 + $0x10] sm:$0xff]
    %v12399 = vld [vmem:[%s12395 + $0x18] sm:$0xff]
    %v12400 = vld [vmem:[%s12395 + $0x20] sm:$0xff]
    %v12401 = vld [vmem:[%s12395 + $0x28] sm:$0xff]
    %v12402 = vld [vmem:[%s12395 + $0x30] sm:$0xff]
    %v12403 = vld [vmem:[%s12395 + $0x38] sm:$0xff]
    %v12404 = vld [vmem:[%s12395 + $0x40] sm:$0xff]
    %v12405 = vld [vmem:[%s12395 + $0x48] sm:$0xff]
    %v12406 = vld [vmem:[%s12395 + $0x50] sm:$0xff]
    %v12407 = vld [vmem:[%s12395 + $0x58] sm:$0xff]
    %v12408 = vld [vmem:[%s12395 + $0x60] sm:$0xff]
    %v12409 = vld [vmem:[%s12395 + $0x68] sm:$0xff]
    %v12410 = vld [vmem:[%s12395 + $0x70] sm:$0xff]
    %v12411 = vld [vmem:[%s12395 + $0x78] sm:$0xff]
    %v12414 = vcombine.low %v11752, %v11760
    %v12416 = vunpack.c.l.s4 1966171168
    %v12417 = vunpack.c.0.s8 %v12416
    %v12418 = vlaneseq
    %v12419 = vshrl.u32 %v12418, 7
    %v12420 = vsub.s32 %v12417, %v12419
    %v12421 = vrot.slane %v12414, %v12420
    %v12423 = vunpack.c.l.s4 1966171168
    %v12424 = vunpack.c.0.s8 %v12423
    %v12425 = vlaneseq
    %v12426 = vshrl.u32 %v12425, 7
    %v12427 = vsub.s32 %v12424, %v12426
    %v12428 = vrot.slane %v12421, %v12427
    %12430 = vmatprep.subr.mxu0 0.0
    %12431 = vmatpush1.msra.mxu0 %v12396
    %12432 = vmatprep.subr.mxu0 0.0
    %12433 = vmatpush1.msra.mxu0 %v12397
    %12434 = vmatprep.subr.mxu0 0.0
    %12435 = vmatpush1.msra.mxu0 %v12398
    %12436 = vmatprep.subr.mxu0 0.0
    %12437 = vmatpush1.msra.mxu0 %v12399
    %12438 = vmatprep.subr.mxu0 0.0
    %12439 = vmatpush1.msra.mxu0 %v12400
    %12440 = vmatprep.subr.mxu0 0.0
    %12441 = vmatpush1.msra.mxu0 %v12401
    %12442 = vmatprep.subr.mxu0 0.0
    %12443 = vmatpush1.msra.mxu0 %v12402
    %12444 = vmatprep.subr.mxu0 0.0
    %12445 = vmatpush1.msra.mxu0 %v12403
    %12446 = vmatprep.subr.mxu0 0.0
    %12447 = vmatpush1.msra.mxu0 %v12404
    %12448 = vmatprep.subr.mxu0 0.0
    %12449 = vmatpush1.msra.mxu0 %v12405
    %12450 = vmatprep.subr.mxu0 0.0
    %12451 = vmatpush1.msra.mxu0 %v12406
    %12452 = vmatprep.subr.mxu0 0.0
    %12453 = vmatpush1.msra.mxu0 %v12407
    %12454 = vmatprep.subr.mxu0 0.0
    %12455 = vmatpush1.msra.mxu0 %v12408
    %12456 = vmatprep.subr.mxu0 0.0
    %12457 = vmatpush1.msra.mxu0 %v12409
    %12458 = vmatprep.subr.mxu0 0.0
    %12459 = vmatpush1.msra.mxu0 %v12410
    %12460 = vmatprep.subr.mxu0 0.0
    %12461 = vmatpush1.msra.mxu0 %v12411
    %12462 = vmatprep.subr.mxu0 0.0
    %12463 = vmatpush1.msra.mxu0 0.0
    %12464 = vmatprep.subr.mxu0 0.0
    %12465 = vmatpush1.msra.mxu0 0.0
    %12466 = vmatprep.subr.mxu0 0.0
    %12467 = vmatpush1.msra.mxu0 0.0
    %12468 = vmatprep.subr.mxu0 0.0
    %12469 = vmatpush1.msra.mxu0 0.0
    %12470 = vmatprep.subr.mxu0 0.0
    %12471 = vmatpush1.msra.mxu0 0.0
    %12472 = vmatprep.subr.mxu0 0.0
    %12473 = vmatpush1.msra.mxu0 0.0
    %12474 = vmatprep.subr.mxu0 0.0
    %12475 = vmatpush1.msra.mxu0 0.0
    %12476 = vmatprep.subr.mxu0 0.0
    %12477 = vmatpush1.msra.mxu0 0.0
    %12478 = vmatprep.subr.mxu0 0.0
    %12479 = vmatpush1.msra.mxu0 0.0
    %12480 = vmatprep.subr.mxu0 0.0
    %12481 = vmatpush1.msra.mxu0 0.0
    %12482 = vmatprep.subr.mxu0 0.0
    %12483 = vmatpush1.msra.mxu0 0.0
    %12484 = vmatprep.subr.mxu0 0.0
    %12485 = vmatpush1.msra.mxu0 0.0
    %12486 = vmatprep.subr.mxu0 0.0
    %12487 = vmatpush1.msra.mxu0 0.0
    %12488 = vmatprep.subr.mxu0 0.0
    %12489 = vmatpush1.msra.mxu0 0.0
    %12490 = vmatprep.subr.mxu0 0.0
    %12491 = vmatpush1.msra.mxu0 0.0
    %12492 = vmatprep.subr.mxu0 0.0
    %12493 = vmatpush1.msra.mxu0 0.0
    %12494 = vmatprep.mubr.f32.mxu0 0.0
    %12495 = vmatmul.mubr.f32.gmra.mrb[0].mxu0 %v12428
    %v12496 = vpop.f32.mrb[0].mxu0
    %v12497 = vadd.f32 0.0, %v12496
    %v12498 = vpop.f32.mrb[0].mxu0
    %12499 = vdwg.mxu0
    %v12500 = vadd.f32 %v12394, %v12497
    %s12501 = scalar_lea.vmem %s5, 896
    %v12502 = vld [vmem:[%s12501] sm:$0xff]
    %v12503 = vld [vmem:[%s12501 + $0x8] sm:$0xff]
    %v12504 = vld [vmem:[%s12501 + $0x10] sm:$0xff]
    %v12505 = vld [vmem:[%s12501 + $0x18] sm:$0xff]
    %v12506 = vld [vmem:[%s12501 + $0x20] sm:$0xff]
    %v12507 = vld [vmem:[%s12501 + $0x28] sm:$0xff]
    %v12508 = vld [vmem:[%s12501 + $0x30] sm:$0xff]
    %v12509 = vld [vmem:[%s12501 + $0x38] sm:$0xff]
    %v12510 = vld [vmem:[%s12501 + $0x40] sm:$0xff]
    %v12511 = vld [vmem:[%s12501 + $0x48] sm:$0xff]
    %v12512 = vld [vmem:[%s12501 + $0x50] sm:$0xff]
    %v12513 = vld [vmem:[%s12501 + $0x58] sm:$0xff]
    %v12514 = vld [vmem:[%s12501 + $0x60] sm:$0xff]
    %v12515 = vld [vmem:[%s12501 + $0x68] sm:$0xff]
    %v12516 = vld [vmem:[%s12501 + $0x70] sm:$0xff]
    %v12517 = vld [vmem:[%s12501 + $0x78] sm:$0xff]
    %v12520 = vcombine.low %v11753, %v11761
    %v12522 = vunpack.c.l.s4 1966171168
    %v12523 = vunpack.c.0.s8 %v12522
    %v12524 = vlaneseq
    %v12525 = vshrl.u32 %v12524, 7
    %v12526 = vsub.s32 %v12523, %v12525
    %v12527 = vrot.slane %v12520, %v12526
    %v12529 = vunpack.c.l.s4 1966171168
    %v12530 = vunpack.c.0.s8 %v12529
    %v12531 = vlaneseq
    %v12532 = vshrl.u32 %v12531, 7
    %v12533 = vsub.s32 %v12530, %v12532
    %v12534 = vrot.slane %v12527, %v12533
    %12536 = vmatprep.subr.mxu0 0.0
    %12537 = vmatpush1.msra.mxu0 %v12502
    %12538 = vmatprep.subr.mxu0 0.0
    %12539 = vmatpush1.msra.mxu0 %v12503
    %12540 = vmatprep.subr.mxu0 0.0
    %12541 = vmatpush1.msra.mxu0 %v12504
    %12542 = vmatprep.subr.mxu0 0.0
    %12543 = vmatpush1.msra.mxu0 %v12505
    %12544 = vmatprep.subr.mxu0 0.0
    %12545 = vmatpush1.msra.mxu0 %v12506
    %12546 = vmatprep.subr.mxu0 0.0
    %12547 = vmatpush1.msra.mxu0 %v12507
    %12548 = vmatprep.subr.mxu0 0.0
    %12549 = vmatpush1.msra.mxu0 %v12508
    %12550 = vmatprep.subr.mxu0 0.0
    %12551 = vmatpush1.msra.mxu0 %v12509
    %12552 = vmatprep.subr.mxu0 0.0
    %12553 = vmatpush1.msra.mxu0 %v12510
    %12554 = vmatprep.subr.mxu0 0.0
    %12555 = vmatpush1.msra.mxu0 %v12511
    %12556 = vmatprep.subr.mxu0 0.0
    %12557 = vmatpush1.msra.mxu0 %v12512
    %12558 = vmatprep.subr.mxu0 0.0
    %12559 = vmatpush1.msra.mxu0 %v12513
    %12560 = vmatprep.subr.mxu0 0.0
    %12561 = vmatpush1.msra.mxu0 %v12514
    %12562 = vmatprep.subr.mxu0 0.0
    %12563 = vmatpush1.msra.mxu0 %v12515
    %12564 = vmatprep.subr.mxu0 0.0
    %12565 = vmatpush1.msra.mxu0 %v12516
    %12566 = vmatprep.subr.mxu0 0.0
    %12567 = vmatpush1.msra.mxu0 %v12517
    %12568 = vmatprep.subr.mxu0 0.0
    %12569 = vmatpush1.msra.mxu0 0.0
    %12570 = vmatprep.subr.mxu0 0.0
    %12571 = vmatpush1.msra.mxu0 0.0
    %12572 = vmatprep.subr.mxu0 0.0
    %12573 = vmatpush1.msra.mxu0 0.0
    %12574 = vmatprep.subr.mxu0 0.0
    %12575 = vmatpush1.msra.mxu0 0.0
    %12576 = vmatprep.subr.mxu0 0.0
    %12577 = vmatpush1.msra.mxu0 0.0
    %12578 = vmatprep.subr.mxu0 0.0
    %12579 = vmatpush1.msra.mxu0 0.0
    %12580 = vmatprep.subr.mxu0 0.0
    %12581 = vmatpush1.msra.mxu0 0.0
    %12582 = vmatprep.subr.mxu0 0.0
    %12583 = vmatpush1.msra.mxu0 0.0
    %12584 = vmatprep.subr.mxu0 0.0
    %12585 = vmatpush1.msra.mxu0 0.0
    %12586 = vmatprep.subr.mxu0 0.0
    %12587 = vmatpush1.msra.mxu0 0.0
    %12588 = vmatprep.subr.mxu0 0.0
    %12589 = vmatpush1.msra.mxu0 0.0
    %12590 = vmatprep.subr.mxu0 0.0
    %12591 = vmatpush1.msra.mxu0 0.0
    %12592 = vmatprep.subr.mxu0 0.0
    %12593 = vmatpush1.msra.mxu0 0.0
    %12594 = vmatprep.subr.mxu0 0.0
    %12595 = vmatpush1.msra.mxu0 0.0
    %12596 = vmatprep.subr.mxu0 0.0
    %12597 = vmatpush1.msra.mxu0 0.0
    %12598 = vmatprep.subr.mxu0 0.0
    %12599 = vmatpush1.msra.mxu0 0.0
    %12600 = vmatprep.mubr.f32.mxu0 0.0
    %12601 = vmatmul.mubr.f32.gmra.mrb[0].mxu0 %v12534
    %v12602 = vpop.f32.mrb[0].mxu0
    %v12603 = vadd.f32 0.0, %v12602
    %v12604 = vpop.f32.mrb[0].mxu0
    %12605 = vdwg.mxu0
    %v12606 = vadd.f32 %v12500, %v12603
    %v12607 = vld [vmem:[%s6] sm:$0x1]
    %v12609 = vlaneseq
    %v12610 = vshrl.u32 %v12609, 7
    %v12611 = vsub.s32 0, %v12610
    %v12612 = vrot.slane %v12607, %v12611
    %v12614 = vadd.f32 %v12606, %v12612
    %v12615 = vmax.f32 %v12614, 0.0
    %v12616 = vld [vmem:[%s7] sm:$0xff]
    %v12617 = vld [vmem:[%s7 + $0x8] sm:$0xff]
    %v12618 = vld [vmem:[%s7 + $0x10] sm:$0xff]
    %v12619 = vld [vmem:[%s7 + $0x18] sm:$0xff]
    %v12620 = vld [vmem:[%s7 + $0x20] sm:$0xff]
    %v12621 = vld [vmem:[%s7 + $0x28] sm:$0xff]
    %v12622 = vld [vmem:[%s7 + $0x30] sm:$0xff]
    %v12623 = vld [vmem:[%s7 + $0x38] sm:$0xff]
    %v12624 = vld [vmem:[%s7 + $0x40] sm:$0xff]
    %v12625 = vld [vmem:[%s7 + $0x48] sm:$0xff]
    %v12626 = vld [vmem:[%s7 + $0x50] sm:$0xff]
    %v12627 = vld [vmem:[%s7 + $0x58] sm:$0xff]
    %v12628 = vld [vmem:[%s7 + $0x60] sm:$0xff]
    %v12629 = vld [vmem:[%s7 + $0x68] sm:$0xff]
    %v12630 = vld [vmem:[%s7 + $0x70] sm:$0xff]
    %v12631 = vld [vmem:[%s7 + $0x78] sm:$0xff]
    %v12632 = vld [vmem:[%s8] sm:$0x1]
    %v12634 = vlaneseq
    %v12635 = vshrl.u32 %v12634, 7
    %v12636 = vsub.s32 0, %v12635
    %v12637 = vrot.slane %v12632, %v12636
    %12639 = vmatprep.subr.mxu0 0.0
    %12640 = vmatpush1.msra.mxu0 %v12616
    %12641 = vmatprep.subr.mxu0 0.0
    %12642 = vmatpush1.msra.mxu0 %v12617
    %12643 = vmatprep.subr.mxu0 0.0
    %12644 = vmatpush1.msra.mxu0 %v12618
    %12645 = vmatprep.subr.mxu0 0.0
    %12646 = vmatpush1.msra.mxu0 %v12619
    %12647 = vmatprep.subr.mxu0 0.0
    %12648 = vmatpush1.msra.mxu0 %v12620
    %12649 = vmatprep.subr.mxu0 0.0
    %12650 = vmatpush1.msra.mxu0 %v12621
    %12651 = vmatprep.subr.mxu0 0.0
    %12652 = vmatpush1.msra.mxu0 %v12622
    %12653 = vmatprep.subr.mxu0 0.0
    %12654 = vmatpush1.msra.mxu0 %v12623
    %12655 = vmatprep.subr.mxu0 0.0
    %12656 = vmatpush1.msra.mxu0 %v12624
    %12657 = vmatprep.subr.mxu0 0.0
    %12658 = vmatpush1.msra.mxu0 %v12625
    %12659 = vmatprep.subr.mxu0 0.0
    %12660 = vmatpush1.msra.mxu0 %v12626
    %12661 = vmatprep.subr.mxu0 0.0
    %12662 = vmatpush1.msra.mxu0 %v12627
    %12663 = vmatprep.subr.mxu0 0.0
    %12664 = vmatpush1.msra.mxu0 %v12628
    %12665 = vmatprep.subr.mxu0 0.0
    %12666 = vmatpush1.msra.mxu0 %v12629
    %12667 = vmatprep.subr.mxu0 0.0
    %12668 = vmatpush1.msra.mxu0 %v12630
    %12669 = vmatprep.subr.mxu0 0.0
    %12670 = vmatpush1.msra.mxu0 %v12631
    %12671 = vmatprep.subr.mxu0 0.0
    %12672 = vmatpush1.msra.mxu0 0.0
    %12673 = vmatprep.subr.mxu0 0.0
    %12674 = vmatpush1.msra.mxu0 0.0
    %12675 = vmatprep.subr.mxu0 0.0
    %12676 = vmatpush1.msra.mxu0 0.0
    %12677 = vmatprep.subr.mxu0 0.0
    %12678 = vmatpush1.msra.mxu0 0.0
    %12679 = vmatprep.subr.mxu0 0.0
    %12680 = vmatpush1.msra.mxu0 0.0
    %12681 = vmatprep.subr.mxu0 0.0
    %12682 = vmatpush1.msra.mxu0 0.0
    %12683 = vmatprep.subr.mxu0 0.0
    %12684 = vmatpush1.msra.mxu0 0.0
    %12685 = vmatprep.subr.mxu0 0.0
    %12686 = vmatpush1.msra.mxu0 0.0
    %12687 = vmatprep.subr.mxu0 0.0
    %12688 = vmatpush1.msra.mxu0 0.0
    %12689 = vmatprep.subr.mxu0 0.0
    %12690 = vmatpush1.msra.mxu0 0.0
    %12691 = vmatprep.subr.mxu0 0.0
    %12692 = vmatpush1.msra.mxu0 0.0
    %12693 = vmatprep.subr.mxu0 0.0
    %12694 = vmatpush1.msra.mxu0 0.0
    %12695 = vmatprep.subr.mxu0 0.0
    %12696 = vmatpush1.msra.mxu0 0.0
    %12697 = vmatprep.subr.mxu0 0.0
    %12698 = vmatpush1.msra.mxu0 0.0
    %12699 = vmatprep.subr.mxu0 0.0
    %12700 = vmatpush1.msra.mxu0 0.0
    %12701 = vmatprep.subr.mxu0 0.0
    %12702 = vmatpush1.msra.mxu0 0.0
    %12703 = vmatprep.mubr.f32.mxu0 0.0
    %12704 = vmatmul.mubr.f32.gmra.mrb[0].mxu0 %v12615
    %v12705 = vpop.f32.mrb[0].mxu0
    %v12706 = vadd.f32 %v12637, %v12705
    %v12707 = vpop.f32.mrb[0].mxu0
    %12708 = vdwg.mxu0
    %v12709 = vlaneseq
    %v12710 = vand.u32 %v12709, 127
    %vm12711 = vcmp.lt.s32.totalorder %v12710, 10
    %v12712 = vsel %vm12711, %v12706, -1e+30
    %vm12713 = vcmask 1041408
    %v12714 = vsel %vm12713, %v12712, -inf
    %12715 = vmax.xlane.f32.xlu0 %v12714
    %v12716 = vpop.xlane.xlu0 %12715
    %v12717 = vsub.f32 %v12712, %v12716
    %v12718 = vmul.f32 %v12717, 1.442695
    %v12719 = vpow.pop %v12718
    %v12720 = vsel %vm12713, %v12719, 0.0
    %12721 = vadd.xlane.f32.xlu0 %v12720
    %v12722 = vpop.xlane.xlu0 %12721
    %v12723 = vlog2.pop %v12722
    %v12724 = vmul.f32 %v12723, 0.6931472
    %v12725 = vsub.f32 %v12717, %v12724
    %v12726 = vsel %vm12711, %v12725, 0.0
    %12727 = vst [vmem:[#allocation2] sm:$0x3] %v12726
    // Predicated region
    $region38: #{net_forward.1} parent=1 // pred_check
      _
    $region39: #{net_forward.1} parent=1 // pred_check_branch
      %12729 = sbr.rel (0) target = $region41
    $region40: #{net_forward.1} parent=1 // pred_region
      %s12731 = ssub.s32 32, 32
      %12732 = vsyncadd [#allocation3], %s12731
      %s12734 = sshll.u32 [#allocation2], 4
      %s12735 = int_to_ptr.vmem [resolvable:$true] %s12734
      %12737 = dma.vmem_to_hbm [thread:$0]  %s12735, 32, %s9, [#allocation3]
    $region41: #{net_forward.1} parent=1 // pred_fallthru
      _
    // Predicated region
    $region42: #{net_forward.1} parent=1 // pred_check
      _
    $region43: #{net_forward.1} parent=1 // pred_check_branch
      %12739 = sbr.rel (0) target = $region45
    $region44: #{net_forward.1} parent=1 // pred_region
      %12740 = dma.done [#allocation3], 32
    $region45: #{net_forward.1} parent=1 // pred_fallthru
      _
    %12741 = vsyncpa [#allocation3], 1

</llo_original>
